<compile_context>
chip_gen: v7x
topology: tpu7x:2x2x1
jax: 0.10.0
libtpu: 0.0.40
codegen_flags: <defaults>
</compile_context>

<pallas_src>
import functools

import jax
import jax.numpy as jnp
from jax.experimental import pallas as pl
from jax.experimental.pallas import tpu as pltpu


# ------------------------------- helpers ------------------------------------- #
def _ceil_to(v, m):
    return -(-v // m) * m


def _tile_pad_bytes(shape, dtype):
    """Approximate VMEM footprint of one buffer incl. (sublane, lane) tile padding."""
    itemsize = jnp.dtype(dtype).itemsize
    sub = {4: 8, 2: 16, 1: 32}.get(itemsize, 8)
    s = (1, 1) + tuple(int(d) for d in shape)
    lead = 1
    for d in s[:-2]:
        lead *= d
    return lead * _ceil_to(s[-2], sub) * _ceil_to(s[-1], 128) * itemsize


def _pick_row_tile(H, W, Wh, C1, C2, budget_bytes=4 << 20):
    """Largest row tile (multiple of 8 dividing H, >=2 tiles) whose per-step f32
    accumulators + y1 scratch fit in `budget_bytes` (VMEM-aware, per review)."""
    c1p, c2p = _ceil_to(C1, 128), _ceil_to(C2, 128)

    def step_bytes(th):
        rows1 = th + 2
        return (4 * rows1 * Wh * c1p          # conv1 f32 accumulator
                + 4 * th * W * c2p            # conv2 f32 accumulator
                + 2 * rows1 * Wh * c1p)       # y1 bf16 scratch

    for th in (64, 32, 16, 8):
        if H % th == 0 and H // th >= 2 and step_bytes(th) <= budget_bytes:
            return th
    for th in (8, 16, 32, 64):                # nothing fits the budget: take the smallest
        if H % th == 0 and H // th >= 2:
            return th
    return H


def _vmem_limit_bytes(H, W, Wh, TH, Cin, C1, C2, out_dtype):
    """Scoped-VMEM request sized from the actual blocks (don't rely on per-chip defaults)."""
    rows1 = TH + 2
    est = (
        2 * _tile_pad_bytes((H + 4, Wh + 2, Cin), jnp.bfloat16)      # image (worst case 2 bufs)
        + 2 * _tile_pad_bytes((3, 3 * Cin, C1), jnp.bfloat16)        # w1
        + 2 * _tile_pad_bytes((3, 3 * C1, C2), jnp.bfloat16)         # w2
        + 2 * _tile_pad_bytes((3, C1), jnp.float32)
        + 2 * _tile_pad_bytes((3, C2), jnp.float32)
        + 2 * _tile_pad_bytes((TH * W, C2), out_dtype)               # output tile (dbl buf)
        + _tile_pad_bytes((rows1, Wh, C1), jnp.bfloat16)             # y1 scratch
        # in-kernel f32 accumulators and bf16 K-packed LHS (compiler-managed):
        + _tile_pad_bytes((rows1 * Wh, C1), jnp.float32)
        + _tile_pad_bytes((TH * W, C2), jnp.float32)
        + _tile_pad_bytes((rows1 * Wh, 3 * Cin), jnp.bfloat16)
        + _tile_pad_bytes((TH * W, 3 * C1), jnp.bfloat16)
    )
    # 1.75x headroom for relayout temporaries; clamp to [32 MiB, 64 MiB] so the request is
    # never below any chip's default scoped limit and never above v7x's 64 MiB physical VMEM.
    return int(max(32 << 20, min(64 << 20, int(1.75 * est))))


# ----------------------------- Pallas kernel -------------------------------- #
def _fused_conv_block_kernel(x_ref, w1_ref, w2_ref, p1_ref, p2_ref, o_ref, y1_ref,
                             *, H, W, Wh, TH, nH, Cin, C1, C2):
    """One (batch element, row-tile) step of Conv-ReLU-BN-Conv-ReLU-BN.

    x_ref:  (H+4, Wh+2, Cin) bf16  zero-padded NHWC input, resident per batch element
    w1_ref: (3, 3*Cin, C1)   bf16  conv1 taps, K-packed over (dx, cin); row index = dy
    w2_ref: (3, 3*C1,  C2)   bf16  conv2 taps, K-packed over (dx, c1)
    p1_ref: (3, C1)          f32   rows = [bias, bn_scale, bn_shift] for layer 1
    p2_ref: (3, C2)          f32   rows = [bias, bn_scale, bn_shift] for layer 2
    o_ref:  (TH*W, C2)             output rows [h*TH, (h+1)*TH) flattened over (row, col)
    y1_ref: (TH+2, Wh, C1)   bf16  VMEM scratch: conv1 output + conv2's zero-pad halo
    """
    h = pl.program_id(1)
    r0 = h * TH                    # first output row of this tile
    rows1 = TH + 2                 # conv1 rows: TH output rows + 1-row halo each side

    def conv3x3(load_slab, w_ref, rows, wout, cin, cout):
        # Per-dy K-packed 3x3 conv: LHS = [dx=0 | dx=1 | dx=2] slabs concatenated along
        # the channel (lane) axis -> (rows*wout, 3*cin); one MXU matmul per dy with f32
        # accumulation.  fori_loop(unroll=True) keeps at most one slab live per step.
        def body(dy, acc):
            slab = load_slab(dy)                                     # (rows, >= wout+2, cin)
            parts = [slab[:, dx:dx + wout, :].reshape(rows * wout, cin) for dx in range(3)]
            lhs = jnp.concatenate(parts, axis=-1)                    # (rows*wout, 3*cin)
            return acc + jnp.dot(lhs, w_ref[dy], preferred_element_type=jnp.float32)
        return jax.lax.fori_loop(0, 3, body,
                                 jnp.zeros((rows * wout, cout), jnp.float32),
                                 unroll=True)

    # ---- conv1 (3x3, pad=1) + bias + ReLU + BN over the halo'd (rows1 x Wh) window ----
    acc1 = conv3x3(lambda dy: x_ref[pl.ds(r0 + dy, rows1), :, :], w1_ref,
                   rows1, Wh, Cin, C1)
    z1 = jnp.maximum(acc1 + p1_ref[0:1, :], 0.0)                     # bias + ReLU
    z1 = z1 * p1_ref[1:2, :] + p1_ref[2:3, :]                        # folded BatchNorm (eval)
    y1_ref[...] = z1.reshape(rows1, Wh, C1).astype(y1_ref.dtype)     # stays in VMEM only

    # conv2's zero padding: thin strip stores instead of a full-tile iota/compare/select.
    #   columns 0 and W+1.. are outside the image for every tile (grid-invariant);
    #   rows 0 / rows1-1 are outside the image only on the first / last row-tile.
    y1_ref[:, 0:1, :] = jnp.zeros((rows1, 1, C1), y1_ref.dtype)
    y1_ref[:, W + 1:Wh, :] = jnp.zeros((rows1, Wh - W - 1, C1), y1_ref.dtype)

    @pl.when(h == 0)
    def _():
        y1_ref[0:1, :, :] = jnp.zeros((1, Wh, C1), y1_ref.dtype)

    @pl.when(h == nH - 1)
    def _():
        y1_ref[rows1 - 1:rows1, :, :] = jnp.zeros((1, Wh, C1), y1_ref.dtype)

    # ---- conv2 (3x3, pad=1) + bias + ReLU + BN over the TH x W output tile ----
    acc2 = conv3x3(lambda dy: y1_ref[pl.ds(dy, TH), :, :], w2_ref, TH, W, C1, C2)
    z2 = jnp.maximum(acc2 + p2_ref[0:1, :], 0.0)
    z2 = z2 * p2_ref[1:2, :] + p2_ref[2:3, :]
    o_ref[...] = z2.astype(o_ref.dtype)


# ------------------------------ JAX wrapper ---------------------------------- #
def unet_conv_block_forward(x, params, padding=True, *,
                            out_dtype=jnp.float32, data_format="NCHW"):
    """Forward of UNetConvBlock(in_chans, out_chans, padding, batch_norm=True)."""
    if int(padding) != 1:
        raise NotImplementedError("fused kernel implements padding=True only")

    w1, b1, s1, t1 = params["conv1"]          # w: (3, 3, Cin, C1) HWIO
    w2, b2, s2, t2 = params["conv2"]
    if data_format == "NCHW":
        x = jnp.transpose(x, (0, 2, 3, 1))    # boundary only; use data_format="NHWC" to skip
    N, H, W, Cin = x.shape
    C1, C2 = w1.shape[-1], w2.shape[-1]

    # Halo'd conv1 width, rounded to a multiple of 16 so bf16 reshapes are layout-preserving.
    Wh = _ceil_to(W + 2, 16)
    Wp = Wh + 2
    TH = _pick_row_tile(H, W, Wh, C1, C2)
    nH = H // TH

    # Zero-pad spatially: 2 rows top/bottom, 2 cols left (conv1 pad + conv2 halo),
    # Wh - W cols right (halo + alignment); cast to bf16 for the MXU in the same pass.
    xp = jnp.pad(x.astype(jnp.bfloat16), ((0, 0), (2, 2), (2, Wh - W), (0, 0)))

    w1p = w1.reshape(3, 3 * Cin, C1).astype(jnp.bfloat16)    # K packed over (dx, cin)
    w2p = w2.reshape(3, 3 * C1, C2).astype(jnp.bfloat16)
    p1 = jnp.stack([b1, s1, t1]).astype(jnp.float32)         # (3, C1)
    p2 = jnp.stack([b2, s2, t2]).astype(jnp.float32)         # (3, C2)

    kernel = functools.partial(_fused_conv_block_kernel,
                               H=H, W=W, Wh=Wh, TH=TH, nH=nH, Cin=Cin, C1=C1, C2=C2)
    vmem_limit = _vmem_limit_bytes(H, W, Wh, TH, Cin, C1, C2, out_dtype)
    # v7x megacore: shard the batch axis when N>=2 so the two TensorCores don't each keep a
    # duplicate copy of the padded image; shard the row-tile axis when N==1.
    dims = ("parallel", "arbitrary") if N >= 2 else ("arbitrary", "parallel")

    def image_spec(single_buffered):
        args = ((None, H + 4, Wp, Cin), lambda n, h: (n, 0, 0, 0))
        if single_buffered and hasattr(pl, "Buffered"):
            # The image block index only changes with n -> double-buffering it is pure
            # VMEM waste; request a single buffer.
            return pl.BlockSpec(*args, pipeline_mode=pl.Buffered(1))
        return pl.BlockSpec(*args)

    def run(single_buffer_image):
        return pl.pallas_call(
            kernel,
            out_shape=jax.ShapeDtypeStruct((N, H * W, C2), out_dtype),
            grid_spec=pltpu.PrefetchScalarGridSpec(
                num_scalar_prefetch=0,
                grid=(N, nH),
                in_specs=[
                    image_spec(single_buffer_image),
                    pl.BlockSpec((3, 3 * Cin, C1), lambda n, h: (0, 0, 0)),
                    pl.BlockSpec((3, 3 * C1, C2), lambda n, h: (0, 0, 0)),
                    pl.BlockSpec((3, C1), lambda n, h: (0, 0)),
                    pl.BlockSpec((3, C2), lambda n, h: (0, 0)),
                ],
                # Output row-tile flattened over (row, col) so stores pipeline per step.
                out_specs=pl.BlockSpec((None, TH * W, C2), lambda n, h: (n, h, 0)),
                # conv1 activations (+ conv2's zero-pad halo) never leave VMEM.
                scratch_shapes=[pltpu.VMEM((TH + 2, Wh, C1), jnp.bfloat16)],
            ),
            compiler_params=pltpu.CompilerParams(
                dimension_semantics=dims,
                vmem_limit_bytes=vmem_limit),
        )(xp, w1p, w2p, p1, p2)

    try:
        out = run(True)
    except Exception:
        # Pallas version without BlockSpec.pipeline_mode / pl.Buffered(1): fall back to the
        # default double-buffered resident image (costs VMEM, not correctness).
        out = run(False)

    out = out.reshape(N, H, W, C2)
    if data_format == "NCHW":
        out = jnp.transpose(out, (0, 3, 1, 2))
    return out


# ---------------------------- Reference (JAX) -------------------------------- #
def _reference_forward(x_nchw, params, padding=True, match_bf16=False):
    """Plain-XLA reference. match_bf16=True mirrors the kernel's bf16-in/f32-accum policy."""
    pad = int(padding)
    h = x_nchw
    for layer in ("conv1", "conv2"):
        w, b, scale, shift = params[layer]
        lhs, rhs = h, w
        if match_bf16:
            lhs, rhs = lhs.astype(jnp.bfloat16), rhs.astype(jnp.bfloat16)
        y = jax.lax.conv_general_dilated(
            lhs, rhs, window_strides=(1, 1), padding=[(pad, pad), (pad, pad)],
            dimension_numbers=("NCHW", "HWIO", "NCHW"),
            preferred_element_type=jnp.float32)
        y = jnp.maximum(y + b[None, :, None, None], 0.0)
        y = y * scale[None, :, None, None] + shift[None, :, None, None]
        if match_bf16 and layer == "conv1":
            y = y.astype(jnp.bfloat16).astype(jnp.float32)
        h = y
    return h


# --------------------------- Parameter setup --------------------------------- #
def init_params(key, in_chans, out_chans, eps=1e-5):
    """Deterministic synthetic parameters (shapes follow nn.Conv2d / nn.BatchNorm2d)."""
    params = {}
    cin = in_chans
    for layer in ("conv1", "conv2"):
        kw, kb, kg, kbeta, km, kv, key = jax.random.split(key, 7)
        w = 0.1 * jax.random.normal(kw, (3, 3, cin, out_chans), dtype=jnp.float32)
        b = 0.1 * jax.random.normal(kb, (out_chans,), dtype=jnp.float32)
        gamma = 1.0 + 0.1 * jax.random.normal(kg, (out_chans,), dtype=jnp.float32)
        beta = 0.1 * jax.random.normal(kbeta, (out_chans,), dtype=jnp.float32)
        running_mean = 0.1 * jax.random.normal(km, (out_chans,), dtype=jnp.float32)
        running_var = jnp.abs(1.0 + 0.1 * jax.random.normal(kv, (out_chans,), dtype=jnp.float32))
        scale = gamma / jnp.sqrt(running_var + eps)      # eval-mode BN folded
        shift = beta - running_mean * scale
        params[layer] = (w, b, scale, shift)
        cin = out_chans
    return params


# --------------------------------- Main --------------------------------------- #
if __name__ == "__main__":
    key = jax.random.PRNGKey(0)
    kx, kp = jax.random.split(key)

    N, C_in, H, W = 2, 4, 16, 16
    C_out = 8
    x = jax.random.normal(kx, (N, C_in, H, W), dtype=jnp.float32)
    params = init_params(kp, C_in, C_out)

    out = jax.block_until_ready(unet_conv_block_forward(x, params, padding=True))
    assert out.shape == (N, C_out, H, W), out.shape

    # Tight check against a reference that mirrors the kernel's bf16-in / f32-accumulate
    # policy (verifies conv indexing, K-packing order, halo zeroing and ReLU/BN epilogues).
    ref_bf16 = jax.block_until_ready(_reference_forward(x, params, True, match_bf16=True))
    assert jnp.allclose(out, ref_bf16, atol=2e-3, rtol=2e-3), \
        float(jnp.max(jnp.abs(out - ref_bf16)))

    # Looser check against the full-f32 module semantics (tolerance sized for bf16 MXU inputs).
    ref_f32 = jax.block_until_ready(_reference_forward(x, params, True, match_bf16=False))
    assert jnp.allclose(out, ref_f32, atol=1e-1, rtol=1e-1), \
        float(jnp.max(jnp.abs(out - ref_f32)))

    # Production path: bf16 output halves HBM writeback and output VMEM (per review).
    out_bf16 = jax.block_until_ready(
        unet_conv_block_forward(x, params, padding=True, out_dtype=jnp.bfloat16))
    assert out_bf16.dtype == jnp.bfloat16
    assert jnp.allclose(out_bf16.astype(jnp.float32), ref_bf16, atol=5e-2, rtol=5e-2), \
        float(jnp.max(jnp.abs(out_bf16.astype(jnp.float32) - ref_bf16)))

    print("KERNEL_OK")
</pallas_src>

<mosaic_0001>
module attributes {stable_mosaic.version = 11 : i64} {
  func.func @_fused_conv_block_kernel(%arg0: i32, %arg1: i32, %arg2: memref<1x20x34x4xbf16, #tpu.memory_space<vmem>>, %arg3: memref<3x12x8xbf16, #tpu.memory_space<vmem>>, %arg4: memref<3x24x8xbf16, #tpu.memory_space<vmem>>, %arg5: memref<3x8xf32, #tpu.memory_space<vmem>>, %arg6: memref<3x8xf32, #tpu.memory_space<vmem>>, %arg7: memref<1x128x8xf32, #tpu.memory_space<vmem>>, %arg8: memref<10x32x8xbf16, #tpu.memory_space<vmem>>) attributes {dimension_semantics = [#tpu.dimension_semantics<parallel>, #tpu.dimension_semantics<arbitrary>], iteration_bounds = array<i64: 2, 2>, scalar_prefetch = 0 : i64, scratch_operands = 1 : i64, tpu.core_type = #tpu.core_type<tc>, window_params = [{pipeline_mode = #tpu.pipeline_mode<synchronous>, transform_indices = @transform_0, window_bounds = array<i64: 1, 20, 34, 4>}, {pipeline_mode = #tpu.pipeline_mode<synchronous>, transform_indices = @transform_1, window_bounds = array<i64: 3, 12, 8>}, {pipeline_mode = #tpu.pipeline_mode<synchronous>, transform_indices = @transform_2, window_bounds = array<i64: 3, 24, 8>}, {pipeline_mode = #tpu.pipeline_mode<synchronous>, transform_indices = @transform_3, window_bounds = array<i64: 3, 8>}, {pipeline_mode = #tpu.pipeline_mode<synchronous>, transform_indices = @transform_4, window_bounds = array<i64: 3, 8>}, {transform_indices = @transform_5, window_bounds = array<i64: 1, 128, 8>}]} {
    %c8_i32 = arith.constant 8 : i32
    %0 = arith.muli %arg1, %c8_i32 : i32
    %cst = arith.constant 0.000000e+00 : f32
    %1 = vector.broadcast %cst : f32 to vector<320x8xf32>
    %c0_i32 = arith.constant 0 : i32
    %2 = arith.addi %0, %c0_i32 : i32
    %c0 = arith.constant 0 : index
    %3 = arith.index_cast %2 : i32 to index
    %c0_0 = arith.constant 0 : index
    %c0_1 = arith.constant 0 : index
    %4 = vector.load %arg2[%c0, %3, %c0_0, %c0_1] : memref<1x20x34x4xbf16, #tpu.memory_space<vmem>>, vector<1x10x34x4xbf16>
    %5 = vector.shape_cast %4 : vector<1x10x34x4xbf16> to vector<10x34x4xbf16>
    %6 = vector.extract_strided_slice %5 {offsets = [0, 0, 0], sizes = [10, 32, 4], strides = [1, 1, 1]} : vector<10x34x4xbf16> to vector<10x32x4xbf16>
    %7 = vector.shape_cast %6 : vector<10x32x4xbf16> to vector<320x4xbf16>
    %8 = vector.extract_strided_slice %5 {offsets = [0, 1, 0], sizes = [10, 32, 4], strides = [1, 1, 1]} : vector<10x34x4xbf16> to vector<10x32x4xbf16>
    %9 = vector.shape_cast %8 : vector<10x32x4xbf16> to vector<320x4xbf16>
    %10 = vector.extract_strided_slice %5 {offsets = [0, 2, 0], sizes = [10, 32, 4], strides = [1, 1, 1]} : vector<10x34x4xbf16> to vector<10x32x4xbf16>
    %11 = vector.shape_cast %10 : vector<10x32x4xbf16> to vector<320x4xbf16>
    %12 = tpu.concatenate %7, %9, %11 in 1 : vector<320x4xbf16>, vector<320x4xbf16>, vector<320x4xbf16> -> vector<320x12xbf16>
    %13 = arith.index_cast %c0_i32 : i32 to index
    %c0_2 = arith.constant 0 : index
    %c0_3 = arith.constant 0 : index
    %14 = vector.load %arg3[%13, %c0_2, %c0_3] : memref<3x12x8xbf16, #tpu.memory_space<vmem>>, vector<1x12x8xbf16>
    %15 = vector.shape_cast %14 : vector<1x12x8xbf16> to vector<12x8xbf16>
    %cst_4 = arith.constant dense<0.000000e+00> : vector<320x8xf32>
    %16 = tpu.matmul %12, %15, %cst_4 {dimension_numbers = #tpu.dot_dimension_numbers<[1], [0], [0], [1], [0, 0, 1, 1], [], []>} : vector<320x12xbf16>, vector<12x8xbf16>, vector<320x8xf32> -> vector<320x8xf32>
    %17 = arith.addf %1, %16 : vector<320x8xf32>
    %c1_i32 = arith.constant 1 : i32
    %18 = arith.addi %0, %c1_i32 : i32
    %c0_5 = arith.constant 0 : index
    %19 = arith.index_cast %18 : i32 to index
    %c0_6 = arith.constant 0 : index
    %c0_7 = arith.constant 0 : index
    %20 = vector.load %arg2[%c0_5, %19, %c0_6, %c0_7] : memref<1x20x34x4xbf16, #tpu.memory_space<vmem>>, vector<1x10x34x4xbf16>
    %21 = vector.shape_cast %20 : vector<1x10x34x4xbf16> to vector<10x34x4xbf16>
    %22 = vector.extract_strided_slice %21 {offsets = [0, 0, 0], sizes = [10, 32, 4], strides = [1, 1, 1]} : vector<10x34x4xbf16> to vector<10x32x4xbf16>
    %23 = vector.shape_cast %22 : vector<10x32x4xbf16> to vector<320x4xbf16>
    %24 = vector.extract_strided_slice %21 {offsets = [0, 1, 0], sizes = [10, 32, 4], strides = [1, 1, 1]} : vector<10x34x4xbf16> to vector<10x32x4xbf16>
    %25 = vector.shape_cast %24 : vector<10x32x4xbf16> to vector<320x4xbf16>
    %26 = vector.extract_strided_slice %21 {offsets = [0, 2, 0], sizes = [10, 32, 4], strides = [1, 1, 1]} : vector<10x34x4xbf16> to vector<10x32x4xbf16>
    %27 = vector.shape_cast %26 : vector<10x32x4xbf16> to vector<320x4xbf16>
    %28 = tpu.concatenate %23, %25, %27 in 1 : vector<320x4xbf16>, vector<320x4xbf16>, vector<320x4xbf16> -> vector<320x12xbf16>
    %29 = arith.index_cast %c1_i32 : i32 to index
    %c0_8 = arith.constant 0 : index
    %c0_9 = arith.constant 0 : index
    %30 = vector.load %arg3[%29, %c0_8, %c0_9] : memref<3x12x8xbf16, #tpu.memory_space<vmem>>, vector<1x12x8xbf16>
    %31 = vector.shape_cast %30 : vector<1x12x8xbf16> to vector<12x8xbf16>
    %cst_10 = arith.constant dense<0.000000e+00> : vector<320x8xf32>
    %32 = tpu.matmul %28, %31, %cst_10 {dimension_numbers = #tpu.dot_dimension_numbers<[1], [0], [0], [1], [0, 0, 1, 1], [], []>} : vector<320x12xbf16>, vector<12x8xbf16>, vector<320x8xf32> -> vector<320x8xf32>
    %33 = arith.addf %17, %32 : vector<320x8xf32>
    %c2_i32 = arith.constant 2 : i32
    %34 = arith.addi %0, %c2_i32 : i32
    %c0_11 = arith.constant 0 : index
    %35 = arith.index_cast %34 : i32 to index
    %c0_12 = arith.constant 0 : index
    %c0_13 = arith.constant 0 : index
    %36 = vector.load %arg2[%c0_11, %35, %c0_12, %c0_13] : memref<1x20x34x4xbf16, #tpu.memory_space<vmem>>, vector<1x10x34x4xbf16>
    %37 = vector.shape_cast %36 : vector<1x10x34x4xbf16> to vector<10x34x4xbf16>
    %38 = vector.extract_strided_slice %37 {offsets = [0, 0, 0], sizes = [10, 32, 4], strides = [1, 1, 1]} : vector<10x34x4xbf16> to vector<10x32x4xbf16>
    %39 = vector.shape_cast %38 : vector<10x32x4xbf16> to vector<320x4xbf16>
    %40 = vector.extract_strided_slice %37 {offsets = [0, 1, 0], sizes = [10, 32, 4], strides = [1, 1, 1]} : vector<10x34x4xbf16> to vector<10x32x4xbf16>
    %41 = vector.shape_cast %40 : vector<10x32x4xbf16> to vector<320x4xbf16>
    %42 = vector.extract_strided_slice %37 {offsets = [0, 2, 0], sizes = [10, 32, 4], strides = [1, 1, 1]} : vector<10x34x4xbf16> to vector<10x32x4xbf16>
    %43 = vector.shape_cast %42 : vector<10x32x4xbf16> to vector<320x4xbf16>
    %44 = tpu.concatenate %39, %41, %43 in 1 : vector<320x4xbf16>, vector<320x4xbf16>, vector<320x4xbf16> -> vector<320x12xbf16>
    %45 = arith.index_cast %c2_i32 : i32 to index
    %c0_14 = arith.constant 0 : index
    %c0_15 = arith.constant 0 : index
    %46 = vector.load %arg3[%45, %c0_14, %c0_15] : memref<3x12x8xbf16, #tpu.memory_space<vmem>>, vector<1x12x8xbf16>
    %47 = vector.shape_cast %46 : vector<1x12x8xbf16> to vector<12x8xbf16>
    %cst_16 = arith.constant dense<0.000000e+00> : vector<320x8xf32>
    %48 = tpu.matmul %44, %47, %cst_16 {dimension_numbers = #tpu.dot_dimension_numbers<[1], [0], [0], [1], [0, 0, 1, 1], [], []>} : vector<320x12xbf16>, vector<12x8xbf16>, vector<320x8xf32> -> vector<320x8xf32>
    %49 = arith.addf %33, %48 : vector<320x8xf32>
    %c3_i32 = arith.constant 3 : i32
    %c0_17 = arith.constant 0 : index
    %c0_18 = arith.constant 0 : index
    %50 = vector.load %arg5[%c0_17, %c0_18] : memref<3x8xf32, #tpu.memory_space<vmem>>, vector<1x8xf32>
    %51 = vector.broadcast %50 : vector<1x8xf32> to vector<320x8xf32>
    %52 = arith.addf %49, %51 : vector<320x8xf32>
    %cst_19 = arith.constant 0.000000e+00 : f32
    %53 = vector.broadcast %cst_19 : f32 to vector<320x8xf32>
    %54 = arith.maximumf %52, %53 : vector<320x8xf32>
    %c1 = arith.constant 1 : index
    %c0_20 = arith.constant 0 : index
    %55 = vector.load %arg5[%c1, %c0_20] : memref<3x8xf32, #tpu.memory_space<vmem>>, vector<1x8xf32>
    %56 = vector.broadcast %55 : vector<1x8xf32> to vector<320x8xf32>
    %57 = arith.mulf %54, %56 : vector<320x8xf32>
    %c2 = arith.constant 2 : index
    %c0_21 = arith.constant 0 : index
    %58 = vector.load %arg5[%c2, %c0_21] : memref<3x8xf32, #tpu.memory_space<vmem>>, vector<1x8xf32>
    %59 = vector.broadcast %58 : vector<1x8xf32> to vector<320x8xf32>
    %60 = arith.addf %57, %59 : vector<320x8xf32>
    %61 = vector.shape_cast %60 : vector<320x8xf32> to vector<10x32x8xf32>
    %62 = arith.truncf %61 : vector<10x32x8xf32> to vector<10x32x8xbf16>
    %c0_22 = arith.constant 0 : index
    %c0_23 = arith.constant 0 : index
    %c0_24 = arith.constant 0 : index
    %63 = vector.load %arg8[%c0_22, %c0_23, %c0_24] : memref<10x32x8xbf16, #tpu.memory_space<vmem>>, vector<10x32x8xbf16>
    tpu.vector_store %arg8[%c0_22, %c0_23, %c0_24], %62 {strides = array<i32>} : memref<10x32x8xbf16, #tpu.memory_space<vmem>>, vector<10x32x8xbf16>,
    %cst_25 = arith.constant 0.000000e+00 : bf16
    %64 = vector.broadcast %cst_25 : bf16 to vector<10x1x8xbf16>
    %c0_26 = arith.constant 0 : index
    %c0_27 = arith.constant 0 : index
    %c0_28 = arith.constant 0 : index
    %65 = vector.load %arg8[%c0_26, %c0_27, %c0_28] : memref<10x32x8xbf16, #tpu.memory_space<vmem>>, vector<10x1x8xbf16>
    tpu.vector_store %arg8[%c0_26, %c0_27, %c0_28], %64 {strides = array<i32>} : memref<10x32x8xbf16, #tpu.memory_space<vmem>>, vector<10x1x8xbf16>,
    %cst_29 = arith.constant 0.000000e+00 : bf16
    %66 = vector.broadcast %cst_29 : bf16 to vector<10x15x8xbf16>
    %c0_30 = arith.constant 0 : index
    %c17 = arith.constant 17 : index
    %c0_31 = arith.constant 0 : index
    %67 = vector.load %arg8[%c0_30, %c17, %c0_31] : memref<10x32x8xbf16, #tpu.memory_space<vmem>>, vector<10x15x8xbf16>
    tpu.vector_store %arg8[%c0_30, %c17, %c0_31], %66 {strides = array<i32>} : memref<10x32x8xbf16, #tpu.memory_space<vmem>>, vector<10x15x8xbf16>,
    %c0_i32_32 = arith.constant 0 : i32
    %68 = arith.cmpi eq, %arg1, %c0_i32_32 : i32
    %69 = arith.extui %68 : i1 to i32
    %c0_i32_33 = arith.constant 0 : i32
    %70 = arith.cmpi ne, %69, %c0_i32_33 : i32
    scf.if %70 {
      %cst_66 = arith.constant 0.000000e+00 : bf16
      %131 = vector.broadcast %cst_66 : bf16 to vector<1x32x8xbf16>
      %c0_67 = arith.constant 0 : index
      %c0_68 = arith.constant 0 : index
      %c0_69 = arith.constant 0 : index
      %132 = vector.load %arg8[%c0_67, %c0_68, %c0_69] : memref<10x32x8xbf16, #tpu.memory_space<vmem>>, vector<1x32x8xbf16>
      tpu.vector_store %arg8[%c0_67, %c0_68, %c0_69], %131 {strides = array<i32>} : memref<10x32x8xbf16, #tpu.memory_space<vmem>>, vector<1x32x8xbf16>,
    } else {
    }
    %c1_i32_34 = arith.constant 1 : i32
    %71 = arith.cmpi eq, %arg1, %c1_i32_34 : i32
    %72 = arith.extui %71 : i1 to i32
    %c0_i32_35 = arith.constant 0 : i32
    %73 = arith.cmpi ne, %72, %c0_i32_35 : i32
    scf.if %73 {
      %cst_66 = arith.constant 0.000000e+00 : bf16
      %131 = vector.broadcast %cst_66 : bf16 to vector<1x32x8xbf16>
      %c9 = arith.constant 9 : index
      %c0_67 = arith.constant 0 : index
      %c0_68 = arith.constant 0 : index
      %132 = vector.load %arg8[%c9, %c0_67, %c0_68] : memref<10x32x8xbf16, #tpu.memory_space<vmem>>, vector<1x32x8xbf16>
      tpu.vector_store %arg8[%c9, %c0_67, %c0_68], %131 {strides = array<i32>} : memref<10x32x8xbf16, #tpu.memory_space<vmem>>, vector<1x32x8xbf16>,
    } else {
    }
    %cst_36 = arith.constant 0.000000e+00 : f32
    %74 = vector.broadcast %cst_36 : f32 to vector<128x8xf32>
    %c0_i32_37 = arith.constant 0 : i32
    %75 = arith.index_cast %c0_i32_37 : i32 to index
    %c0_38 = arith.constant 0 : index
    %c0_39 = arith.constant 0 : index
    %76 = vector.load %arg8[%75, %c0_38, %c0_39] : memref<10x32x8xbf16, #tpu.memory_space<vmem>>, vector<8x32x8xbf16>
    %77 = vector.extract_strided_slice %76 {offsets = [0, 0, 0], sizes = [8, 16, 8], strides = [1, 1, 1]} : vector<8x32x8xbf16> to vector<8x16x8xbf16>
    %78 = vector.shape_cast %77 : vector<8x16x8xbf16> to vector<128x8xbf16>
    %79 = vector.extract_strided_slice %76 {offsets = [0, 1, 0], sizes = [8, 16, 8], strides = [1, 1, 1]} : vector<8x32x8xbf16> to vector<8x16x8xbf16>
    %80 = vector.shape_cast %79 : vector<8x16x8xbf16> to vector<128x8xbf16>
    %81 = vector.extract_strided_slice %76 {offsets = [0, 2, 0], sizes = [8, 16, 8], strides = [1, 1, 1]} : vector<8x32x8xbf16> to vector<8x16x8xbf16>
    %82 = vector.shape_cast %81 : vector<8x16x8xbf16> to vector<128x8xbf16>
    %83 = tpu.concatenate %78, %80, %82 in 1 : vector<128x8xbf16>, vector<128x8xbf16>, vector<128x8xbf16> -> vector<128x24xbf16>
    %84 = arith.index_cast %c0_i32_37 : i32 to index
    %c0_40 = arith.constant 0 : index
    %c0_41 = arith.constant 0 : index
    %85 = vector.load %arg4[%84, %c0_40, %c0_41] : memref<3x24x8xbf16, #tpu.memory_space<vmem>>, vector<1x24x8xbf16>
    %86 = vector.shape_cast %85 : vector<1x24x8xbf16> to vector<24x8xbf16>
    %cst_42 = arith.constant dense<0.000000e+00> : vector<128x8xf32>
    %87 = tpu.matmul %83, %86, %cst_42 {dimension_numbers = #tpu.dot_dimension_numbers<[1], [0], [0], [1], [0, 0, 1, 1], [], []>} : vector<128x24xbf16>, vector<24x8xbf16>, vector<128x8xf32> -> vector<128x8xf32>
    %88 = arith.addf %74, %87 : vector<128x8xf32>
    %c1_i32_43 = arith.constant 1 : i32
    %89 = arith.index_cast %c1_i32_43 : i32 to index
    %c0_44 = arith.constant 0 : index
    %c0_45 = arith.constant 0 : index
    %90 = vector.load %arg8[%89, %c0_44, %c0_45] : memref<10x32x8xbf16, #tpu.memory_space<vmem>>, vector<8x32x8xbf16>
    %91 = vector.extract_strided_slice %90 {offsets = [0, 0, 0], sizes = [8, 16, 8], strides = [1, 1, 1]} : vector<8x32x8xbf16> to vector<8x16x8xbf16>
    %92 = vector.shape_cast %91 : vector<8x16x8xbf16> to vector<128x8xbf16>
    %93 = vector.extract_strided_slice %90 {offsets = [0, 1, 0], sizes = [8, 16, 8], strides = [1, 1, 1]} : vector<8x32x8xbf16> to vector<8x16x8xbf16>
    %94 = vector.shape_cast %93 : vector<8x16x8xbf16> to vector<128x8xbf16>
    %95 = vector.extract_strided_slice %90 {offsets = [0, 2, 0], sizes = [8, 16, 8], strides = [1, 1, 1]} : vector<8x32x8xbf16> to vector<8x16x8xbf16>
    %96 = vector.shape_cast %95 : vector<8x16x8xbf16> to vector<128x8xbf16>
    %97 = tpu.concatenate %92, %94, %96 in 1 : vector<128x8xbf16>, vector<128x8xbf16>, vector<128x8xbf16> -> vector<128x24xbf16>
    %98 = arith.index_cast %c1_i32_43 : i32 to index
    %c0_46 = arith.constant 0 : index
    %c0_47 = arith.constant 0 : index
    %99 = vector.load %arg4[%98, %c0_46, %c0_47] : memref<3x24x8xbf16, #tpu.memory_space<vmem>>, vector<1x24x8xbf16>
    %100 = vector.shape_cast %99 : vector<1x24x8xbf16> to vector<24x8xbf16>
    %cst_48 = arith.constant dense<0.000000e+00> : vector<128x8xf32>
    %101 = tpu.matmul %97, %100, %cst_48 {dimension_numbers = #tpu.dot_dimension_numbers<[1], [0], [0], [1], [0, 0, 1, 1], [], []>} : vector<128x24xbf16>, vector<24x8xbf16>, vector<128x8xf32> -> vector<128x8xf32>
    %102 = arith.addf %88, %101 : vector<128x8xf32>
    %c2_i32_49 = arith.constant 2 : i32
    %103 = arith.index_cast %c2_i32_49 : i32 to index
    %c0_50 = arith.constant 0 : index
    %c0_51 = arith.constant 0 : index
    %104 = vector.load %arg8[%103, %c0_50, %c0_51] : memref<10x32x8xbf16, #tpu.memory_space<vmem>>, vector<8x32x8xbf16>
    %105 = vector.extract_strided_slice %104 {offsets = [0, 0, 0], sizes = [8, 16, 8], strides = [1, 1, 1]} : vector<8x32x8xbf16> to vector<8x16x8xbf16>
    %106 = vector.shape_cast %105 : vector<8x16x8xbf16> to vector<128x8xbf16>
    %107 = vector.extract_strided_slice %104 {offsets = [0, 1, 0], sizes = [8, 16, 8], strides = [1, 1, 1]} : vector<8x32x8xbf16> to vector<8x16x8xbf16>
    %108 = vector.shape_cast %107 : vector<8x16x8xbf16> to vector<128x8xbf16>
    %109 = vector.extract_strided_slice %104 {offsets = [0, 2, 0], sizes = [8, 16, 8], strides = [1, 1, 1]} : vector<8x32x8xbf16> to vector<8x16x8xbf16>
    %110 = vector.shape_cast %109 : vector<8x16x8xbf16> to vector<128x8xbf16>
    %111 = tpu.concatenate %106, %108, %110 in 1 : vector<128x8xbf16>, vector<128x8xbf16>, vector<128x8xbf16> -> vector<128x24xbf16>
    %112 = arith.index_cast %c2_i32_49 : i32 to index
    %c0_52 = arith.constant 0 : index
    %c0_53 = arith.constant 0 : index
    %113 = vector.load %arg4[%112, %c0_52, %c0_53] : memref<3x24x8xbf16, #tpu.memory_space<vmem>>, vector<1x24x8xbf16>
    %114 = vector.shape_cast %113 : vector<1x24x8xbf16> to vector<24x8xbf16>
    %cst_54 = arith.constant dense<0.000000e+00> : vector<128x8xf32>
    %115 = tpu.matmul %111, %114, %cst_54 {dimension_numbers = #tpu.dot_dimension_numbers<[1], [0], [0], [1], [0, 0, 1, 1], [], []>} : vector<128x24xbf16>, vector<24x8xbf16>, vector<128x8xf32> -> vector<128x8xf32>
    %116 = arith.addf %102, %115 : vector<128x8xf32>
    %c3_i32_55 = arith.constant 3 : i32
    %c0_56 = arith.constant 0 : index
    %c0_57 = arith.constant 0 : index
    %117 = vector.load %arg6[%c0_56, %c0_57] : memref<3x8xf32, #tpu.memory_space<vmem>>, vector<1x8xf32>
    %118 = vector.broadcast %117 : vector<1x8xf32> to vector<128x8xf32>
    %119 = arith.addf %116, %118 : vector<128x8xf32>
    %cst_58 = arith.constant 0.000000e+00 : f32
    %120 = vector.broadcast %cst_58 : f32 to vector<128x8xf32>
    %121 = arith.maximumf %119, %120 : vector<128x8xf32>
    %c1_59 = arith.constant 1 : index
    %c0_60 = arith.constant 0 : index
    %122 = vector.load %arg6[%c1_59, %c0_60] : memref<3x8xf32, #tpu.memory_space<vmem>>, vector<1x8xf32>
    %123 = vector.broadcast %122 : vector<1x8xf32> to vector<128x8xf32>
    %124 = arith.mulf %121, %123 : vector<128x8xf32>
    %c2_61 = arith.constant 2 : index
    %c0_62 = arith.constant 0 : index
    %125 = vector.load %arg6[%c2_61, %c0_62] : memref<3x8xf32, #tpu.memory_space<vmem>>, vector<1x8xf32>
    %126 = vector.broadcast %125 : vector<1x8xf32> to vector<128x8xf32>
    %127 = arith.addf %124, %126 : vector<128x8xf32>
    %c0_63 = arith.constant 0 : index
    %c0_64 = arith.constant 0 : index
    %c0_65 = arith.constant 0 : index
    %128 = vector.load %arg7[%c0_63, %c0_64, %c0_65] : memref<1x128x8xf32, #tpu.memory_space<vmem>>, vector<1x128x8xf32>
    %129 = vector.shape_cast %128 : vector<1x128x8xf32> to vector<128x8xf32>
    %130 = vector.shape_cast %127 : vector<128x8xf32> to vector<1x128x8xf32>
    tpu.vector_store %arg7[%c0_63, %c0_64, %c0_65], %130 {strides = array<i32>} : memref<1x128x8xf32, #tpu.memory_space<vmem>>, vector<1x128x8xf32>,
    return
  }
  func.func @transform_0(%arg0: i32, %arg1: i32) -> (i32, i32, i32, i32) {
    %c0_i32 = arith.constant 0 : i32
    %c0_i32_0 = arith.constant 0 : i32
    %c0_i32_1 = arith.constant 0 : i32
    %c0_i32_2 = arith.constant 0 : i32
    return %arg0, %c0_i32, %c0_i32_0, %c0_i32_1 : i32, i32, i32, i32
  }
  func.func @transform_1(%arg0: i32, %arg1: i32) -> (i32, i32, i32) {
    %c0_i32 = arith.constant 0 : i32
    %c0_i32_0 = arith.constant 0 : i32
    %c0_i32_1 = arith.constant 0 : i32
    %c0_i32_2 = arith.constant 0 : i32
    return %c0_i32, %c0_i32_0, %c0_i32_1 : i32, i32, i32
  }
  func.func @transform_2(%arg0: i32, %arg1: i32) -> (i32, i32, i32) {
    %c0_i32 = arith.constant 0 : i32
    %c0_i32_0 = arith.constant 0 : i32
    %c0_i32_1 = arith.constant 0 : i32
    %c0_i32_2 = arith.constant 0 : i32
    return %c0_i32, %c0_i32_0, %c0_i32_1 : i32, i32, i32
  }
  func.func @transform_3(%arg0: i32, %arg1: i32) -> (i32, i32) {
    %c0_i32 = arith.constant 0 : i32
    %c0_i32_0 = arith.constant 0 : i32
    %c0_i32_1 = arith.constant 0 : i32
    return %c0_i32, %c0_i32_0 : i32, i32
  }
  func.func @transform_4(%arg0: i32, %arg1: i32) -> (i32, i32) {
    %c0_i32 = arith.constant 0 : i32
    %c0_i32_0 = arith.constant 0 : i32
    %c0_i32_1 = arith.constant 0 : i32
    return %c0_i32, %c0_i32_0 : i32, i32
  }
  func.func @transform_5(%arg0: i32, %arg1: i32) -> (i32, i32, i32) {
    %c0_i32 = arith.constant 0 : i32
    %c0_i32_0 = arith.constant 0 : i32
    return %arg0, %arg1, %c0_i32 : i32, i32, i32
  }
}

module attributes {stable_mosaic.version = 11 : i64} {
  func.func @_fused_conv_block_kernel(%arg0: i32, %arg1: i32, %arg2: memref<1x20x34x4xbf16, #tpu.memory_space<vmem>>, %arg3: memref<3x12x8xbf16, #tpu.memory_space<vmem>>, %arg4: memref<3x24x8xbf16, #tpu.memory_space<vmem>>, %arg5: memref<3x8xf32, #tpu.memory_space<vmem>>, %arg6: memref<3x8xf32, #tpu.memory_space<vmem>>, %arg7: memref<1x128x8xf32, #tpu.memory_space<vmem>>, %arg8: memref<10x32x8xbf16, #tpu.memory_space<vmem>>) attributes {dimension_semantics = [#tpu.dimension_semantics<parallel>, #tpu.dimension_semantics<arbitrary>], iteration_bounds = array<i64: 2, 2>, scalar_prefetch = 0 : i64, scratch_operands = 1 : i64, tpu.core_type = #tpu.core_type<tc>, window_params = [{transform_indices = @transform_0, window_bounds = array<i64: 1, 20, 34, 4>}, {pipeline_mode = #tpu.pipeline_mode<synchronous>, transform_indices = @transform_1, window_bounds = array<i64: 3, 12, 8>}, {pipeline_mode = #tpu.pipeline_mode<synchronous>, transform_indices = @transform_2, window_bounds = array<i64: 3, 24, 8>}, {pipeline_mode = #tpu.pipeline_mode<synchronous>, transform_indices = @transform_3, window_bounds = array<i64: 3, 8>}, {pipeline_mode = #tpu.pipeline_mode<synchronous>, transform_indices = @transform_4, window_bounds = array<i64: 3, 8>}, {transform_indices = @transform_5, window_bounds = array<i64: 1, 128, 8>}]} {
    %c8_i32 = arith.constant 8 : i32
    %0 = arith.muli %arg1, %c8_i32 : i32
    %cst = arith.constant 0.000000e+00 : f32
    %1 = vector.broadcast %cst : f32 to vector<320x8xf32>
    %c0_i32 = arith.constant 0 : i32
    %2 = arith.addi %0, %c0_i32 : i32
    %c0 = arith.constant 0 : index
    %3 = arith.index_cast %2 : i32 to index
    %c0_0 = arith.constant 0 : index
    %c0_1 = arith.constant 0 : index
    %4 = vector.load %arg2[%c0, %3, %c0_0, %c0_1] : memref<1x20x34x4xbf16, #tpu.memory_space<vmem>>, vector<1x10x34x4xbf16>
    %5 = vector.shape_cast %4 : vector<1x10x34x4xbf16> to vector<10x34x4xbf16>
    %6 = vector.extract_strided_slice %5 {offsets = [0, 0, 0], sizes = [10, 32, 4], strides = [1, 1, 1]} : vector<10x34x4xbf16> to vector<10x32x4xbf16>
    %7 = vector.shape_cast %6 : vector<10x32x4xbf16> to vector<320x4xbf16>
    %8 = vector.extract_strided_slice %5 {offsets = [0, 1, 0], sizes = [10, 32, 4], strides = [1, 1, 1]} : vector<10x34x4xbf16> to vector<10x32x4xbf16>
    %9 = vector.shape_cast %8 : vector<10x32x4xbf16> to vector<320x4xbf16>
    %10 = vector.extract_strided_slice %5 {offsets = [0, 2, 0], sizes = [10, 32, 4], strides = [1, 1, 1]} : vector<10x34x4xbf16> to vector<10x32x4xbf16>
    %11 = vector.shape_cast %10 : vector<10x32x4xbf16> to vector<320x4xbf16>
    %12 = tpu.concatenate %7, %9, %11 in 1 : vector<320x4xbf16>, vector<320x4xbf16>, vector<320x4xbf16> -> vector<320x12xbf16>
    %13 = arith.index_cast %c0_i32 : i32 to index
    %c0_2 = arith.constant 0 : index
    %c0_3 = arith.constant 0 : index
    %14 = vector.load %arg3[%13, %c0_2, %c0_3] : memref<3x12x8xbf16, #tpu.memory_space<vmem>>, vector<1x12x8xbf16>
    %15 = vector.shape_cast %14 : vector<1x12x8xbf16> to vector<12x8xbf16>
    %cst_4 = arith.constant dense<0.000000e+00> : vector<320x8xf32>
    %16 = tpu.matmul %12, %15, %cst_4 {dimension_numbers = #tpu.dot_dimension_numbers<[1], [0], [0], [1], [0, 0, 1, 1], [], []>} : vector<320x12xbf16>, vector<12x8xbf16>, vector<320x8xf32> -> vector<320x8xf32>
    %17 = arith.addf %1, %16 : vector<320x8xf32>
    %c1_i32 = arith.constant 1 : i32
    %18 = arith.addi %0, %c1_i32 : i32
    %c0_5 = arith.constant 0 : index
    %19 = arith.index_cast %18 : i32 to index
    %c0_6 = arith.constant 0 : index
    %c0_7 = arith.constant 0 : index
    %20 = vector.load %arg2[%c0_5, %19, %c0_6, %c0_7] : memref<1x20x34x4xbf16, #tpu.memory_space<vmem>>, vector<1x10x34x4xbf16>
    %21 = vector.shape_cast %20 : vector<1x10x34x4xbf16> to vector<10x34x4xbf16>
    %22 = vector.extract_strided_slice %21 {offsets = [0, 0, 0], sizes = [10, 32, 4], strides = [1, 1, 1]} : vector<10x34x4xbf16> to vector<10x32x4xbf16>
    %23 = vector.shape_cast %22 : vector<10x32x4xbf16> to vector<320x4xbf16>
    %24 = vector.extract_strided_slice %21 {offsets = [0, 1, 0], sizes = [10, 32, 4], strides = [1, 1, 1]} : vector<10x34x4xbf16> to vector<10x32x4xbf16>
    %25 = vector.shape_cast %24 : vector<10x32x4xbf16> to vector<320x4xbf16>
    %26 = vector.extract_strided_slice %21 {offsets = [0, 2, 0], sizes = [10, 32, 4], strides = [1, 1, 1]} : vector<10x34x4xbf16> to vector<10x32x4xbf16>
    %27 = vector.shape_cast %26 : vector<10x32x4xbf16> to vector<320x4xbf16>
    %28 = tpu.concatenate %23, %25, %27 in 1 : vector<320x4xbf16>, vector<320x4xbf16>, vector<320x4xbf16> -> vector<320x12xbf16>
    %29 = arith.index_cast %c1_i32 : i32 to index
    %c0_8 = arith.constant 0 : index
    %c0_9 = arith.constant 0 : index
    %30 = vector.load %arg3[%29, %c0_8, %c0_9] : memref<3x12x8xbf16, #tpu.memory_space<vmem>>, vector<1x12x8xbf16>
    %31 = vector.shape_cast %30 : vector<1x12x8xbf16> to vector<12x8xbf16>
    %cst_10 = arith.constant dense<0.000000e+00> : vector<320x8xf32>
    %32 = tpu.matmul %28, %31, %cst_10 {dimension_numbers = #tpu.dot_dimension_numbers<[1], [0], [0], [1], [0, 0, 1, 1], [], []>} : vector<320x12xbf16>, vector<12x8xbf16>, vector<320x8xf32> -> vector<320x8xf32>
    %33 = arith.addf %17, %32 : vector<320x8xf32>
    %c2_i32 = arith.constant 2 : i32
    %34 = arith.addi %0, %c2_i32 : i32
    %c0_11 = arith.constant 0 : index
    %35 = arith.index_cast %34 : i32 to index
    %c0_12 = arith.constant 0 : index
    %c0_13 = arith.constant 0 : index
    %36 = vector.load %arg2[%c0_11, %35, %c0_12, %c0_13] : memref<1x20x34x4xbf16, #tpu.memory_space<vmem>>, vector<1x10x34x4xbf16>
    %37 = vector.shape_cast %36 : vector<1x10x34x4xbf16> to vector<10x34x4xbf16>
    %38 = vector.extract_strided_slice %37 {offsets = [0, 0, 0], sizes = [10, 32, 4], strides = [1, 1, 1]} : vector<10x34x4xbf16> to vector<10x32x4xbf16>
    %39 = vector.shape_cast %38 : vector<10x32x4xbf16> to vector<320x4xbf16>
    %40 = vector.extract_strided_slice %37 {offsets = [0, 1, 0], sizes = [10, 32, 4], strides = [1, 1, 1]} : vector<10x34x4xbf16> to vector<10x32x4xbf16>
    %41 = vector.shape_cast %40 : vector<10x32x4xbf16> to vector<320x4xbf16>
    %42 = vector.extract_strided_slice %37 {offsets = [0, 2, 0], sizes = [10, 32, 4], strides = [1, 1, 1]} : vector<10x34x4xbf16> to vector<10x32x4xbf16>
    %43 = vector.shape_cast %42 : vector<10x32x4xbf16> to vector<320x4xbf16>
    %44 = tpu.concatenate %39, %41, %43 in 1 : vector<320x4xbf16>, vector<320x4xbf16>, vector<320x4xbf16> -> vector<320x12xbf16>
    %45 = arith.index_cast %c2_i32 : i32 to index
    %c0_14 = arith.constant 0 : index
    %c0_15 = arith.constant 0 : index
    %46 = vector.load %arg3[%45, %c0_14, %c0_15] : memref<3x12x8xbf16, #tpu.memory_space<vmem>>, vector<1x12x8xbf16>
    %47 = vector.shape_cast %46 : vector<1x12x8xbf16> to vector<12x8xbf16>
    %cst_16 = arith.constant dense<0.000000e+00> : vector<320x8xf32>
    %48 = tpu.matmul %44, %47, %cst_16 {dimension_numbers = #tpu.dot_dimension_numbers<[1], [0], [0], [1], [0, 0, 1, 1], [], []>} : vector<320x12xbf16>, vector<12x8xbf16>, vector<320x8xf32> -> vector<320x8xf32>
    %49 = arith.addf %33, %48 : vector<320x8xf32>
    %c3_i32 = arith.constant 3 : i32
    %c0_17 = arith.constant 0 : index
    %c0_18 = arith.constant 0 : index
    %50 = vector.load %arg5[%c0_17, %c0_18] : memref<3x8xf32, #tpu.memory_space<vmem>>, vector<1x8xf32>
    %51 = vector.broadcast %50 : vector<1x8xf32> to vector<320x8xf32>
    %52 = arith.addf %49, %51 : vector<320x8xf32>
    %cst_19 = arith.constant 0.000000e+00 : f32
    %53 = vector.broadcast %cst_19 : f32 to vector<320x8xf32>
    %54 = arith.maximumf %52, %53 : vector<320x8xf32>
    %c1 = arith.constant 1 : index
    %c0_20 = arith.constant 0 : index
    %55 = vector.load %arg5[%c1, %c0_20] : memref<3x8xf32, #tpu.memory_space<vmem>>, vector<1x8xf32>
    %56 = vector.broadcast %55 : vector<1x8xf32> to vector<320x8xf32>
    %57 = arith.mulf %54, %56 : vector<320x8xf32>
    %c2 = arith.constant 2 : index
    %c0_21 = arith.constant 0 : index
    %58 = vector.load %arg5[%c2, %c0_21] : memref<3x8xf32, #tpu.memory_space<vmem>>, vector<1x8xf32>
    %59 = vector.broadcast %58 : vector<1x8xf32> to vector<320x8xf32>
    %60 = arith.addf %57, %59 : vector<320x8xf32>
    %61 = vector.shape_cast %60 : vector<320x8xf32> to vector<10x32x8xf32>
    %62 = arith.truncf %61 : vector<10x32x8xf32> to vector<10x32x8xbf16>
    %c0_22 = arith.constant 0 : index
    %c0_23 = arith.constant 0 : index
    %c0_24 = arith.constant 0 : index
    %63 = vector.load %arg8[%c0_22, %c0_23, %c0_24] : memref<10x32x8xbf16, #tpu.memory_space<vmem>>, vector<10x32x8xbf16>
    tpu.vector_store %arg8[%c0_22, %c0_23, %c0_24], %62 {strides = array<i32>} : memref<10x32x8xbf16, #tpu.memory_space<vmem>>, vector<10x32x8xbf16>,
    %cst_25 = arith.constant 0.000000e+00 : bf16
    %64 = vector.broadcast %cst_25 : bf16 to vector<10x1x8xbf16>
    %c0_26 = arith.constant 0 : index
    %c0_27 = arith.constant 0 : index
    %c0_28 = arith.constant 0 : index
    %65 = vector.load %arg8[%c0_26, %c0_27, %c0_28] : memref<10x32x8xbf16, #tpu.memory_space<vmem>>, vector<10x1x8xbf16>
    tpu.vector_store %arg8[%c0_26, %c0_27, %c0_28], %64 {strides = array<i32>} : memref<10x32x8xbf16, #tpu.memory_space<vmem>>, vector<10x1x8xbf16>,
    %cst_29 = arith.constant 0.000000e+00 : bf16
    %66 = vector.broadcast %cst_29 : bf16 to vector<10x15x8xbf16>
    %c0_30 = arith.constant 0 : index
    %c17 = arith.constant 17 : index
    %c0_31 = arith.constant 0 : index
    %67 = vector.load %arg8[%c0_30, %c17, %c0_31] : memref<10x32x8xbf16, #tpu.memory_space<vmem>>, vector<10x15x8xbf16>
    tpu.vector_store %arg8[%c0_30, %c17, %c0_31], %66 {strides = array<i32>} : memref<10x32x8xbf16, #tpu.memory_space<vmem>>, vector<10x15x8xbf16>,
    %c0_i32_32 = arith.constant 0 : i32
    %68 = arith.cmpi eq, %arg1, %c0_i32_32 : i32
    %69 = arith.extui %68 : i1 to i32
    %c0_i32_33 = arith.constant 0 : i32
    %70 = arith.cmpi ne, %69, %c0_i32_33 : i32
    scf.if %70 {
      %cst_66 = arith.constant 0.000000e+00 : bf16
      %131 = vector.broadcast %cst_66 : bf16 to vector<1x32x8xbf16>
      %c0_67 = arith.constant 0 : index
      %c0_68 = arith.constant 0 : index
      %c0_69 = arith.constant 0 : index
      %132 = vector.load %arg8[%c0_67, %c0_68, %c0_69] : memref<10x32x8xbf16, #tpu.memory_space<vmem>>, vector<1x32x8xbf16>
      tpu.vector_store %arg8[%c0_67, %c0_68, %c0_69], %131 {strides = array<i32>} : memref<10x32x8xbf16, #tpu.memory_space<vmem>>, vector<1x32x8xbf16>,
    } else {
    }
    %c1_i32_34 = arith.constant 1 : i32
    %71 = arith.cmpi eq, %arg1, %c1_i32_34 : i32
    %72 = arith.extui %71 : i1 to i32
    %c0_i32_35 = arith.constant 0 : i32
    %73 = arith.cmpi ne, %72, %c0_i32_35 : i32
    scf.if %73 {
      %cst_66 = arith.constant 0.000000e+00 : bf16
      %131 = vector.broadcast %cst_66 : bf16 to vector<1x32x8xbf16>
      %c9 = arith.constant 9 : index
      %c0_67 = arith.constant 0 : index
      %c0_68 = arith.constant 0 : index
      %132 = vector.load %arg8[%c9, %c0_67, %c0_68] : memref<10x32x8xbf16, #tpu.memory_space<vmem>>, vector<1x32x8xbf16>
      tpu.vector_store %arg8[%c9, %c0_67, %c0_68], %131 {strides = array<i32>} : memref<10x32x8xbf16, #tpu.memory_space<vmem>>, vector<1x32x8xbf16>,
    } else {
    }
    %cst_36 = arith.constant 0.000000e+00 : f32
    %74 = vector.broadcast %cst_36 : f32 to vector<128x8xf32>
    %c0_i32_37 = arith.constant 0 : i32
    %75 = arith.index_cast %c0_i32_37 : i32 to index
    %c0_38 = arith.constant 0 : index
    %c0_39 = arith.constant 0 : index
    %76 = vector.load %arg8[%75, %c0_38, %c0_39] : memref<10x32x8xbf16, #tpu.memory_space<vmem>>, vector<8x32x8xbf16>
    %77 = vector.extract_strided_slice %76 {offsets = [0, 0, 0], sizes = [8, 16, 8], strides = [1, 1, 1]} : vector<8x32x8xbf16> to vector<8x16x8xbf16>
    %78 = vector.shape_cast %77 : vector<8x16x8xbf16> to vector<128x8xbf16>
    %79 = vector.extract_strided_slice %76 {offsets = [0, 1, 0], sizes = [8, 16, 8], strides = [1, 1, 1]} : vector<8x32x8xbf16> to vector<8x16x8xbf16>
    %80 = vector.shape_cast %79 : vector<8x16x8xbf16> to vector<128x8xbf16>
    %81 = vector.extract_strided_slice %76 {offsets = [0, 2, 0], sizes = [8, 16, 8], strides = [1, 1, 1]} : vector<8x32x8xbf16> to vector<8x16x8xbf16>
    %82 = vector.shape_cast %81 : vector<8x16x8xbf16> to vector<128x8xbf16>
    %83 = tpu.concatenate %78, %80, %82 in 1 : vector<128x8xbf16>, vector<128x8xbf16>, vector<128x8xbf16> -> vector<128x24xbf16>
    %84 = arith.index_cast %c0_i32_37 : i32 to index
    %c0_40 = arith.constant 0 : index
    %c0_41 = arith.constant 0 : index
    %85 = vector.load %arg4[%84, %c0_40, %c0_41] : memref<3x24x8xbf16, #tpu.memory_space<vmem>>, vector<1x24x8xbf16>
    %86 = vector.shape_cast %85 : vector<1x24x8xbf16> to vector<24x8xbf16>
    %cst_42 = arith.constant dense<0.000000e+00> : vector<128x8xf32>
    %87 = tpu.matmul %83, %86, %cst_42 {dimension_numbers = #tpu.dot_dimension_numbers<[1], [0], [0], [1], [0, 0, 1, 1], [], []>} : vector<128x24xbf16>, vector<24x8xbf16>, vector<128x8xf32> -> vector<128x8xf32>
    %88 = arith.addf %74, %87 : vector<128x8xf32>
    %c1_i32_43 = arith.constant 1 : i32
    %89 = arith.index_cast %c1_i32_43 : i32 to index
    %c0_44 = arith.constant 0 : index
    %c0_45 = arith.constant 0 : index
    %90 = vector.load %arg8[%89, %c0_44, %c0_45] : memref<10x32x8xbf16, #tpu.memory_space<vmem>>, vector<8x32x8xbf16>
    %91 = vector.extract_strided_slice %90 {offsets = [0, 0, 0], sizes = [8, 16, 8], strides = [1, 1, 1]} : vector<8x32x8xbf16> to vector<8x16x8xbf16>
    %92 = vector.shape_cast %91 : vector<8x16x8xbf16> to vector<128x8xbf16>
    %93 = vector.extract_strided_slice %90 {offsets = [0, 1, 0], sizes = [8, 16, 8], strides = [1, 1, 1]} : vector<8x32x8xbf16> to vector<8x16x8xbf16>
    %94 = vector.shape_cast %93 : vector<8x16x8xbf16> to vector<128x8xbf16>
    %95 = vector.extract_strided_slice %90 {offsets = [0, 2, 0], sizes = [8, 16, 8], strides = [1, 1, 1]} : vector<8x32x8xbf16> to vector<8x16x8xbf16>
    %96 = vector.shape_cast %95 : vector<8x16x8xbf16> to vector<128x8xbf16>
    %97 = tpu.concatenate %92, %94, %96 in 1 : vector<128x8xbf16>, vector<128x8xbf16>, vector<128x8xbf16> -> vector<128x24xbf16>
    %98 = arith.index_cast %c1_i32_43 : i32 to index
    %c0_46 = arith.constant 0 : index
    %c0_47 = arith.constant 0 : index
    %99 = vector.load %arg4[%98, %c0_46, %c0_47] : memref<3x24x8xbf16, #tpu.memory_space<vmem>>, vector<1x24x8xbf16>
    %100 = vector.shape_cast %99 : vector<1x24x8xbf16> to vector<24x8xbf16>
    %cst_48 = arith.constant dense<0.000000e+00> : vector<128x8xf32>
    %101 = tpu.matmul %97, %100, %cst_48 {dimension_numbers = #tpu.dot_dimension_numbers<[1], [0], [0], [1], [0, 0, 1, 1], [], []>} : vector<128x24xbf16>, vector<24x8xbf16>, vector<128x8xf32> -> vector<128x8xf32>
    %102 = arith.addf %88, %101 : vector<128x8xf32>
    %c2_i32_49 = arith.constant 2 : i32
    %103 = arith.index_cast %c2_i32_49 : i32 to index
    %c0_50 = arith.constant 0 : index
    %c0_51 = arith.constant 0 : index
    %104 = vector.load %arg8[%103, %c0_50, %c0_51] : memref<10x32x8xbf16, #tpu.memory_space<vmem>>, vector<8x32x8xbf16>
    %105 = vector.extract_strided_slice %104 {offsets = [0, 0, 0], sizes = [8, 16, 8], strides = [1, 1, 1]} : vector<8x32x8xbf16> to vector<8x16x8xbf16>
    %106 = vector.shape_cast %105 : vector<8x16x8xbf16> to vector<128x8xbf16>
    %107 = vector.extract_strided_slice %104 {offsets = [0, 1, 0], sizes = [8, 16, 8], strides = [1, 1, 1]} : vector<8x32x8xbf16> to vector<8x16x8xbf16>
    %108 = vector.shape_cast %107 : vector<8x16x8xbf16> to vector<128x8xbf16>
    %109 = vector.extract_strided_slice %104 {offsets = [0, 2, 0], sizes = [8, 16, 8], strides = [1, 1, 1]} : vector<8x32x8xbf16> to vector<8x16x8xbf16>
    %110 = vector.shape_cast %109 : vector<8x16x8xbf16> to vector<128x8xbf16>
    %111 = tpu.concatenate %106, %108, %110 in 1 : vector<128x8xbf16>, vector<128x8xbf16>, vector<128x8xbf16> -> vector<128x24xbf16>
    %112 = arith.index_cast %c2_i32_49 : i32 to index
    %c0_52 = arith.constant 0 : index
    %c0_53 = arith.constant 0 : index
    %113 = vector.load %arg4[%112, %c0_52, %c0_53] : memref<3x24x8xbf16, #tpu.memory_space<vmem>>, vector<1x24x8xbf16>
    %114 = vector.shape_cast %113 : vector<1x24x8xbf16> to vector<24x8xbf16>
    %cst_54 = arith.constant dense<0.000000e+00> : vector<128x8xf32>
    %115 = tpu.matmul %111, %114, %cst_54 {dimension_numbers = #tpu.dot_dimension_numbers<[1], [0], [0], [1], [0, 0, 1, 1], [], []>} : vector<128x24xbf16>, vector<24x8xbf16>, vector<128x8xf32> -> vector<128x8xf32>
    %116 = arith.addf %102, %115 : vector<128x8xf32>
    %c3_i32_55 = arith.constant 3 : i32
    %c0_56 = arith.constant 0 : index
    %c0_57 = arith.constant 0 : index
    %117 = vector.load %arg6[%c0_56, %c0_57] : memref<3x8xf32, #tpu.memory_space<vmem>>, vector<1x8xf32>
    %118 = vector.broadcast %117 : vector<1x8xf32> to vector<128x8xf32>
    %119 = arith.addf %116, %118 : vector<128x8xf32>
    %cst_58 = arith.constant 0.000000e+00 : f32
    %120 = vector.broadcast %cst_58 : f32 to vector<128x8xf32>
    %121 = arith.maximumf %119, %120 : vector<128x8xf32>
    %c1_59 = arith.constant 1 : index
    %c0_60 = arith.constant 0 : index
    %122 = vector.load %arg6[%c1_59, %c0_60] : memref<3x8xf32, #tpu.memory_space<vmem>>, vector<1x8xf32>
    %123 = vector.broadcast %122 : vector<1x8xf32> to vector<128x8xf32>
    %124 = arith.mulf %121, %123 : vector<128x8xf32>
    %c2_61 = arith.constant 2 : index
    %c0_62 = arith.constant 0 : index
    %125 = vector.load %arg6[%c2_61, %c0_62] : memref<3x8xf32, #tpu.memory_space<vmem>>, vector<1x8xf32>
    %126 = vector.broadcast %125 : vector<1x8xf32> to vector<128x8xf32>
    %127 = arith.addf %124, %126 : vector<128x8xf32>
    %c0_63 = arith.constant 0 : index
    %c0_64 = arith.constant 0 : index
    %c0_65 = arith.constant 0 : index
    %128 = vector.load %arg7[%c0_63, %c0_64, %c0_65] : memref<1x128x8xf32, #tpu.memory_space<vmem>>, vector<1x128x8xf32>
    %129 = vector.shape_cast %128 : vector<1x128x8xf32> to vector<128x8xf32>
    %130 = vector.shape_cast %127 : vector<128x8xf32> to vector<1x128x8xf32>
    tpu.vector_store %arg7[%c0_63, %c0_64, %c0_65], %130 {strides = array<i32>} : memref<1x128x8xf32, #tpu.memory_space<vmem>>, vector<1x128x8xf32>,
    return
  }
  func.func @transform_0(%arg0: i32, %arg1: i32) -> (i32, i32, i32, i32) {
    %c0_i32 = arith.constant 0 : i32
    %c0_i32_0 = arith.constant 0 : i32
    %c0_i32_1 = arith.constant 0 : i32
    %c0_i32_2 = arith.constant 0 : i32
    return %arg0, %c0_i32, %c0_i32_0, %c0_i32_1 : i32, i32, i32, i32
  }
  func.func @transform_1(%arg0: i32, %arg1: i32) -> (i32, i32, i32) {
    %c0_i32 = arith.constant 0 : i32
    %c0_i32_0 = arith.constant 0 : i32
    %c0_i32_1 = arith.constant 0 : i32
    %c0_i32_2 = arith.constant 0 : i32
    return %c0_i32, %c0_i32_0, %c0_i32_1 : i32, i32, i32
  }
  func.func @transform_2(%arg0: i32, %arg1: i32) -> (i32, i32, i32) {
    %c0_i32 = arith.constant 0 : i32
    %c0_i32_0 = arith.constant 0 : i32
    %c0_i32_1 = arith.constant 0 : i32
    %c0_i32_2 = arith.constant 0 : i32
    return %c0_i32, %c0_i32_0, %c0_i32_1 : i32, i32, i32
  }
  func.func @transform_3(%arg0: i32, %arg1: i32) -> (i32, i32) {
    %c0_i32 = arith.constant 0 : i32
    %c0_i32_0 = arith.constant 0 : i32
    %c0_i32_1 = arith.constant 0 : i32
    return %c0_i32, %c0_i32_0 : i32, i32
  }
  func.func @transform_4(%arg0: i32, %arg1: i32) -> (i32, i32) {
    %c0_i32 = arith.constant 0 : i32
    %c0_i32_0 = arith.constant 0 : i32
    %c0_i32_1 = arith.constant 0 : i32
    return %c0_i32, %c0_i32_0 : i32, i32
  }
  func.func @transform_5(%arg0: i32, %arg1: i32) -> (i32, i32, i32) {
    %c0_i32 = arith.constant 0 : i32
    %c0_i32_0 = arith.constant 0 : i32
    return %arg0, %arg1, %c0_i32 : i32, i32, i32
  }
}

</mosaic_0001>

<llo_original>
// kernel: tpu_custom_call.1
$region0: #{tpu_custom_call.1}
  #allocation0 [shape = 'u32[]', space=smem, size = 0x4, offset = 0x4, fixed_abs, tag = 'smem constant byte address 0x4 - core index']
  #allocation1 [shape = 'u32[144,128]{1,0:T(1,128)}', space=vmem, size = 0x12000, scoped, tag = 'internal scratch']
  #allocation2 [shape = 'bf16[10,32,8]{2,1,0:T(16,128)(2,1)}', space=vmem, size = 0x14000, scoped, tag = 'scratch operand']
  %s0 = inlined_call_operand.vmem [shape: bf16[2,20,34,4], index: 0, kind: input, shape index: {}]
  %s1 = inlined_call_operand.vmem [shape: bf16[3,12,8], index: 1, kind: input, shape index: {}]
  %s2 = inlined_call_operand.vmem [shape: bf16[3,24,8], index: 2, kind: input, shape index: {}]
  %s3 = inlined_call_operand.vmem [shape: f32[3,8], index: 3, kind: input, shape index: {}]
  %s4 = inlined_call_operand.vmem [shape: f32[3,8], index: 4, kind: input, shape index: {}]
  %s5 = inlined_call_operand.vmem [shape: f32[2,256,8], index: 5, kind: output, shape index: {}]
  %s6 = sld [smem:[#allocation0]]
  $region61: #{tpu_custom_call.1} parent=0
    _
  %s8 = ssub.s32 1, %s6
  %s9 = scalar_select 0, %s8, %s6
  loop: start=0, step=1, limit=6
  $region2: #{tpu_custom_call.1} parent=0 // loop_pre_header
    _
  $region3: #{tpu_custom_call.1} parent=0 // loop_header
    %s11 = sphi 0, %s15
    %p12 = scmp.ge.s32.totalorder %s11, 6
    %s18 = sphi 0, %s30
    %s19 = sphi 0, %s26
    %s20 = sphi 0, %s18
    %s21 = sphi 0, %s19
    %s22 = sphi 0, %s20
    %s23 = sphi 0, %s21
    %s33 = sphi 0, %s35
    %s36 = sphi 0, %s33
    %s37 = sphi 0, %s36
    %s53 = sphi 0, %s37
    %s57 = sphi 0, %s57
    %s59 = sphi 0, %s57
    %s60 = sphi 0, %s59
    %s74 = sphi 0, %s60
    %s78 = sphi 0, %s78
    %s80 = sphi 0, %s78
    %s81 = sphi 0, %s80
    %s95 = sphi 0, %s81
    %s99 = sphi 0, %s99
    %s101 = sphi 0, %s99
    %s102 = sphi 0, %s101
    %s116 = sphi 0, %s102
    %s120 = sphi 0, %s120
    %s122 = sphi 0, %s120
    %s123 = sphi 0, %s122
    %s137 = sphi 0, %s123
    %s145 = sphi 0, %s147
    %s148 = sphi 0, %s145
    %s149 = sphi 0, %s148
    %s165 = sphi 0, %s149
  $region4: #{tpu_custom_call.1} parent=0 // loop_header_branch
    %14 = sbr.rel (%p12) target = $region8
  $region5: #{tpu_custom_call.1} parent=0 // loop_body
    %s16 = ssub.s32 %s11, 1
    %s17 = ssub.s32 %s11, 2
    %s24 = sadd.s32 1, %s19
    %p25 = scmp.ge.s32.totalorder %s24, 2
    %s26 = scalar_select %p25, 0, %s24
    %s27 = sadd.s32 1, %s18
    %s28 = scalar_select %p25, %s27, %s18
    %p29 = scmp.ge.s32.totalorder %s28, 2
    %s30 = scalar_select %p29, 0, %s28
    %s31 = ssub.s32 %s18, %s30
    %p32 = scmp.eq.s32.totalorder %s31, 0
    %s34 = sadd.s32 %s33, 1
    %s35 = scalar_select %p32, %s33, %s34
    %p38 = pneg %p32
    %p39 = scmp.eq.s32.totalorder %s11, 3
    %p40 = por %p38, %p39
    %p41 = scmp.ne.s32.totalorder %s33, %s36
    %p42 = scmp.eq.s32.totalorder %s11, 0
    %p43 = por %p41, %p42
    %p44 = scmp.ne.s32.totalorder %s33, %s36
    %p45 = scmp.eq.s32.totalorder %s16, 3
    %p46 = por %p44, %p45
    %p47 = scmp.ne.s32.totalorder %s36, %s37
    %p48 = scmp.eq.s32.totalorder %s16, 0
    %p49 = por %p47, %p48
    %p50 = scmp.ne.s32.totalorder %s36, %s37
    %p51 = scmp.eq.s32.totalorder %s17, 3
    %p52 = por %p50, %p51
    %p54 = scmp.ne.s32.totalorder %s37, %s53
    %p55 = scmp.eq.s32.totalorder %s17, 0
    %p56 = por %p54, %p55
    %s58 = sadd.s32 %s57, 1
    %p61 = scmp.eq.s32.totalorder %s11, 3
    %p62 = scmp.ne.s32.totalorder %s57, %s59
    %p63 = scmp.eq.s32.totalorder %s11, 0
    %p64 = por %p62, %p63
    %p65 = scmp.ne.s32.totalorder %s57, %s59
    %p66 = scmp.eq.s32.totalorder %s16, 3
    %p67 = por %p65, %p66
    %p68 = scmp.ne.s32.totalorder %s59, %s60
    %p69 = scmp.eq.s32.totalorder %s16, 0
    %p70 = por %p68, %p69
    %p71 = scmp.ne.s32.totalorder %s59, %s60
    %p72 = scmp.eq.s32.totalorder %s17, 3
    %p73 = por %p71, %p72
    %p75 = scmp.ne.s32.totalorder %s60, %s74
    %p76 = scmp.eq.s32.totalorder %s17, 0
    %p77 = por %p75, %p76
    %s79 = sadd.s32 %s78, 1
    %p82 = scmp.eq.s32.totalorder %s11, 3
    %p83 = scmp.ne.s32.totalorder %s78, %s80
    %p84 = scmp.eq.s32.totalorder %s11, 0
    %p85 = por %p83, %p84
    %p86 = scmp.ne.s32.totalorder %s78, %s80
    %p87 = scmp.eq.s32.totalorder %s16, 3
    %p88 = por %p86, %p87
    %p89 = scmp.ne.s32.totalorder %s80, %s81
    %p90 = scmp.eq.s32.totalorder %s16, 0
    %p91 = por %p89, %p90
    %p92 = scmp.ne.s32.totalorder %s80, %s81
    %p93 = scmp.eq.s32.totalorder %s17, 3
    %p94 = por %p92, %p93
    %p96 = scmp.ne.s32.totalorder %s81, %s95
    %p97 = scmp.eq.s32.totalorder %s17, 0
    %p98 = por %p96, %p97
    %s100 = sadd.s32 %s99, 1
    %p103 = scmp.eq.s32.totalorder %s11, 3
    %p104 = scmp.ne.s32.totalorder %s99, %s101
    %p105 = scmp.eq.s32.totalorder %s11, 0
    %p106 = por %p104, %p105
    %p107 = scmp.ne.s32.totalorder %s99, %s101
    %p108 = scmp.eq.s32.totalorder %s16, 3
    %p109 = por %p107, %p108
    %p110 = scmp.ne.s32.totalorder %s101, %s102
    %p111 = scmp.eq.s32.totalorder %s16, 0
    %p112 = por %p110, %p111
    %p113 = scmp.ne.s32.totalorder %s101, %s102
    %p114 = scmp.eq.s32.totalorder %s17, 3
    %p115 = por %p113, %p114
    %p117 = scmp.ne.s32.totalorder %s102, %s116
    %p118 = scmp.eq.s32.totalorder %s17, 0
    %p119 = por %p117, %p118
    %s121 = sadd.s32 %s120, 1
    %p124 = scmp.eq.s32.totalorder %s11, 3
    %p125 = scmp.ne.s32.totalorder %s120, %s122
    %p126 = scmp.eq.s32.totalorder %s11, 0
    %p127 = por %p125, %p126
    %p128 = scmp.ne.s32.totalorder %s120, %s122
    %p129 = scmp.eq.s32.totalorder %s16, 3
    %p130 = por %p128, %p129
    %p131 = scmp.ne.s32.totalorder %s122, %s123
    %p132 = scmp.eq.s32.totalorder %s16, 0
    %p133 = por %p131, %p132
    %p134 = scmp.ne.s32.totalorder %s122, %s123
    %p135 = scmp.eq.s32.totalorder %s17, 3
    %p136 = por %p134, %p135
    %p138 = scmp.ne.s32.totalorder %s123, %s137
    %p139 = scmp.eq.s32.totalorder %s17, 0
    %p140 = por %p138, %p139
    %s141 = ssub.s32 %s18, %s30
    %s142 = ssub.s32 %s19, %s26
    %s143 = sor.u32 %s141, %s142
    %p144 = scmp.eq.s32.totalorder %s143, 0
    %s146 = sadd.s32 %s145, 1
    %s147 = scalar_select %p144, %s145, %s146
    %p150 = pneg %p144
    %p151 = scmp.eq.s32.totalorder %s11, 3
    %p152 = por %p150, %p151
    %p153 = scmp.ne.s32.totalorder %s145, %s148
    %p154 = scmp.eq.s32.totalorder %s11, 0
    %p155 = por %p153, %p154
    %p156 = scmp.ne.s32.totalorder %s145, %s148
    %p157 = scmp.eq.s32.totalorder %s16, 3
    %p158 = por %p156, %p157
    %p159 = scmp.ne.s32.totalorder %s148, %s149
    %p160 = scmp.eq.s32.totalorder %s16, 0
    %p161 = por %p159, %p160
    %p162 = scmp.ne.s32.totalorder %s148, %s149
    %p163 = scmp.eq.s32.totalorder %s17, 3
    %p164 = por %p162, %p163
    %p166 = scmp.ne.s32.totalorder %s149, %s165
    %p167 = scmp.eq.s32.totalorder %s17, 0
    %p168 = por %p166, %p167
    %p169 = scmp.le.s32.totalorder 1, %s11
    %p170 = scmp.lt.s32.totalorder %s11, 5
    %p171 = pnand %p169, %p170
    %p172 = pneg %p171
    // Predicated region
    $region9: #{tpu_custom_call.1} parent=5 // pred_check
      _
    $region10: #{tpu_custom_call.1} parent=5 // pred_check_branch
      %174 = sbr.rel (%p171) target = $region12
    $region11: #{tpu_custom_call.1} parent=5 // pred_region
      %s175 = ssub.s32 %s11, 1
      // Predicated region
      $region13: #{tpu_custom_call.1} parent=11 // pred_check
        %p176 = pneg %p49
      $region14: #{tpu_custom_call.1} parent=11 // pred_check_branch
        %178 = sbr.rel (%p176) target = $region16
      $region15: #{tpu_custom_call.1} parent=11 // pred_region
        %p179 = scmp.lt.s32.totalorder %s20, 1
        %s180 = scalar_select %p179, %s20, 1
        %s181 = smul.addr %s180, 100
        %s182 = smul.addr %s181, 4
        %s183 = scalar_lea.vmem %s0, %s182
      $region16: #{tpu_custom_call.1} parent=11 // pred_fallthru
        _
      // Predicated region
      $region17: #{tpu_custom_call.1} parent=11 // pred_check
        %p184 = pneg %p70
      $region18: #{tpu_custom_call.1} parent=11 // pred_check_branch
        %186 = sbr.rel (%p184) target = $region20
      $region19: #{tpu_custom_call.1} parent=11 // pred_region
        _
      $region20: #{tpu_custom_call.1} parent=11 // pred_fallthru
        _
      // Predicated region
      $region21: #{tpu_custom_call.1} parent=11 // pred_check
        %p187 = pneg %p91
      $region22: #{tpu_custom_call.1} parent=11 // pred_check_branch
        %189 = sbr.rel (%p187) target = $region24
      $region23: #{tpu_custom_call.1} parent=11 // pred_region
        _
      $region24: #{tpu_custom_call.1} parent=11 // pred_fallthru
        _
      // Predicated region
      $region25: #{tpu_custom_call.1} parent=11 // pred_check
        %p190 = pneg %p112
      $region26: #{tpu_custom_call.1} parent=11 // pred_check_branch
        %192 = sbr.rel (%p190) target = $region28
      $region27: #{tpu_custom_call.1} parent=11 // pred_region
        _
      $region28: #{tpu_custom_call.1} parent=11 // pred_fallthru
        _
      // Predicated region
      $region29: #{tpu_custom_call.1} parent=11 // pred_check
        %p193 = pneg %p133
      $region30: #{tpu_custom_call.1} parent=11 // pred_check_branch
        %195 = sbr.rel (%p193) target = $region32
      $region31: #{tpu_custom_call.1} parent=11 // pred_region
        _
      $region32: #{tpu_custom_call.1} parent=11 // pred_fallthru
        _
    $region12: #{tpu_custom_call.1} parent=5 // pred_fallthru
      _
    %p196 = scmp.lt.s32.totalorder %s11, 4
    // Predicated region
    $region33: #{tpu_custom_call.1} parent=5 // pred_check
      %p197 = pneg %p196
    $region34: #{tpu_custom_call.1} parent=5 // pred_check_branch
      %199 = sbr.rel (%p197) target = $region36
    $region35: #{tpu_custom_call.1} parent=5 // pred_region
      _
    $region36: #{tpu_custom_call.1} parent=5 // pred_fallthru
      _
    %p200 = scmp.le.s32.totalorder 1, %s11
    %p201 = scmp.lt.s32.totalorder %s11, 5
    %p202 = pnand %p200, %p201
    %p203 = pneg %p202
    // Predicated region
    $region37: #{tpu_custom_call.1} parent=5 // pred_check
      _
    $region38: #{tpu_custom_call.1} parent=5 // pred_check_branch
      %205 = sbr.rel (%p202) target = $region40
    $region39: #{tpu_custom_call.1} parent=5 // pred_region
      %s206 = ssub.s32 %s11, 1
      %p207 = scmp.lt.s32.totalorder %s20, 1
      %s208 = scalar_select %p207, %s20, 1
      %s209 = smul.addr %s208, 100
      %s210 = smul.addr %s209, 4
      %s211 = scalar_lea.vmem %s0, %s210
      %p212 = pneg %p49
      %p213 = pneg %p46
      %p214 = pneg %p70
      %p215 = pneg %p67
      %p216 = pneg %p91
      %p217 = pneg %p88
      %p218 = pneg %p112
      %p219 = pneg %p109
      %p220 = pneg %p133
      %p221 = pneg %p130
      %p222 = pneg %p161
      %p223 = pneg %p158
      %s224 = smul.u32 16, %s21
      %p225 = scmp.lt.s32.totalorder %s20, 1
      %s226 = scalar_select %p225, %s20, 1
      %p227 = scmp.lt.s32.totalorder %s224, 31
      %s228 = scalar_select %p227, %s224, 31
      %s229 = smul.addr %s226, 32
      %s230 = sadd.s32 %s228, %s229
      %s231 = smul.addr %s230, 8
      %s232 = scalar_lea.vmem %s5, %s231
      %p233 = scmp.lt.s32.totalorder %s20, 1
      %s234 = scalar_select %p233, %s20, 1
      %s235 = smul.addr %s234, 100
      %s236 = smul.addr %s235, 4
      %s237 = scalar_lea.vmem %s0, %s236
      %s238 = smul.u32 16, %s21
      %p239 = scmp.lt.s32.totalorder %s20, 1
      %s240 = scalar_select %p239, %s20, 1
      %p241 = scmp.lt.s32.totalorder %s238, 31
      %s242 = scalar_select %p241, %s238, 31
      %s243 = smul.addr %s240, 32
      %s244 = sadd.s32 %s242, %s243
      %s245 = smul.addr %s244, 8
      %s246 = scalar_lea.vmem %s5, %s245
      %s247 = smul.u32 16, %s21
      %s249 = smul.u32 %s21, 8
      %s250 = smul.u32 %s249, 5
      %s251 = smul.addr %s250, 4
      %s252 = scalar_lea.vmem %s237, %s251
      %v253 = vld [vmem:[%s252] sm:$0xf]
      %v254 = vld [vmem:[%s252 + $0x4] sm:$0xf]
      %v255 = vld [vmem:[%s252 + $0x8] sm:$0xf]
      %v256 = vld [vmem:[%s252 + $0xc] sm:$0xf]
      %v257 = vld [vmem:[%s252 + $0x10] sm:$0x1]
      %v258 = vld [vmem:[%s252 + $0x14] sm:$0xf]
      %v259 = vld [vmem:[%s252 + $0x18] sm:$0xf]
      %v260 = vld [vmem:[%s252 + $0x1c] sm:$0xf]
      %v261 = vld [vmem:[%s252 + $0x20] sm:$0xf]
      %v262 = vld [vmem:[%s252 + $0x24] sm:$0x1]
      %v263 = vld [vmem:[%s252 + $0x28] sm:$0xf]
      %v264 = vld [vmem:[%s252 + $0x2c] sm:$0xf]
      %v265 = vld [vmem:[%s252 + $0x30] sm:$0xf]
      %v266 = vld [vmem:[%s252 + $0x34] sm:$0xf]
      %v267 = vld [vmem:[%s252 + $0x38] sm:$0x1]
      %v268 = vld [vmem:[%s252 + $0x3c] sm:$0xf]
      %v269 = vld [vmem:[%s252 + $0x40] sm:$0xf]
      %v270 = vld [vmem:[%s252 + $0x44] sm:$0xf]
      %v271 = vld [vmem:[%s252 + $0x48] sm:$0xf]
      %v272 = vld [vmem:[%s252 + $0x4c] sm:$0x1]
      %v273 = vld [vmem:[%s252 + $0x50] sm:$0xf]
      %v274 = vld [vmem:[%s252 + $0x54] sm:$0xf]
      %v275 = vld [vmem:[%s252 + $0x58] sm:$0xf]
      %v276 = vld [vmem:[%s252 + $0x5c] sm:$0xf]
      %v277 = vld [vmem:[%s252 + $0x60] sm:$0x1]
      %v278 = vld [vmem:[%s252 + $0x64] sm:$0xf]
      %v279 = vld [vmem:[%s252 + $0x68] sm:$0xf]
      %v280 = vld [vmem:[%s252 + $0x6c] sm:$0xf]
      %v281 = vld [vmem:[%s252 + $0x70] sm:$0xf]
      %v282 = vld [vmem:[%s252 + $0x74] sm:$0x1]
      %v283 = vld [vmem:[%s252 + $0x78] sm:$0xf]
      %v284 = vld [vmem:[%s252 + $0x7c] sm:$0xf]
      %v285 = vld [vmem:[%s252 + $0x80] sm:$0xf]
      %v286 = vld [vmem:[%s252 + $0x84] sm:$0xf]
      %v287 = vld [vmem:[%s252 + $0x88] sm:$0x1]
      %v288 = vld [vmem:[%s252 + $0x8c] sm:$0xf]
      %v289 = vld [vmem:[%s252 + $0x90] sm:$0xf]
      %v290 = vld [vmem:[%s252 + $0x94] sm:$0xf]
      %v291 = vld [vmem:[%s252 + $0x98] sm:$0xf]
      %v292 = vld [vmem:[%s252 + $0x9c] sm:$0x1]
      %v293 = vld [vmem:[%s252 + $0xa0] sm:$0xf]
      %v294 = vld [vmem:[%s252 + $0xa4] sm:$0xf]
      %v295 = vld [vmem:[%s252 + $0xa8] sm:$0xf]
      %v296 = vld [vmem:[%s252 + $0xac] sm:$0xf]
      %v297 = vld [vmem:[%s252 + $0xb0] sm:$0x1]
      %v298 = vld [vmem:[%s252 + $0xb4] sm:$0xf]
      %v299 = vld [vmem:[%s252 + $0xb8] sm:$0xf]
      %v300 = vld [vmem:[%s252 + $0xbc] sm:$0xf]
      %v301 = vld [vmem:[%s252 + $0xc0] sm:$0xf]
      %v302 = vld [vmem:[%s252 + $0xc4] sm:$0x1]
      %vm303 = vsmask.f32 3328
      %vm304 = vsmask.f32 7440
      %vm305 = vmor %vm303, %vm304
      %v307 = vshrl.u32 %v253, 16
      %v309 = vrot.slane %v307, 4
      %v310 = vshll.u32 %v253, 16
      %v312 = vrot.slane %v310, 5
      %v313 = vor.u32 %v309, %v312
      %v314 = vrot.slane %v313, 4
      %v316 = vshll.u32 %v254, 16
      %v318 = vrot.slane %v316, 5
      %v319 = vsel %vm305, %v314, %v318
      %v320 = vshrl.u32 %v254, 16
      %v322 = vrot.slane %v320, 4
      %v323 = vor.u32 %v322, %v318
      %v324 = vrot.slane %v323, 4
      %v326 = vshll.u32 %v255, 16
      %v328 = vrot.slane %v326, 5
      %v329 = vsel %vm305, %v324, %v328
      %v330 = vshrl.u32 %v255, 16
      %v332 = vrot.slane %v330, 4
      %v333 = vor.u32 %v332, %v328
      %v334 = vrot.slane %v333, 4
      %v336 = vshll.u32 %v256, 16
      %v338 = vrot.slane %v336, 5
      %v339 = vsel %vm305, %v334, %v338
      %v340 = vshrl.u32 %v256, 16
      %v342 = vrot.slane %v340, 4
      %v343 = vor.u32 %v342, %v338
      %v344 = vrot.slane %v343, 4
      %v346 = vshll.u32 %v257, 16
      %v348 = vrot.slane %v346, 5
      %v349 = vsel %vm305, %v344, %v348
      %v351 = vshrl.u32 %v258, 16
      %v353 = vrot.slane %v351, 4
      %v354 = vshll.u32 %v258, 16
      %v356 = vrot.slane %v354, 5
      %v357 = vor.u32 %v353, %v356
      %v358 = vrot.slane %v357, 4
      %v360 = vshll.u32 %v259, 16
      %v362 = vrot.slane %v360, 5
      %v363 = vsel %vm305, %v358, %v362
      %v364 = vshrl.u32 %v259, 16
      %v366 = vrot.slane %v364, 4
      %v367 = vor.u32 %v366, %v362
      %v368 = vrot.slane %v367, 4
      %v370 = vshll.u32 %v260, 16
      %v372 = vrot.slane %v370, 5
      %v373 = vsel %vm305, %v368, %v372
      %v374 = vshrl.u32 %v260, 16
      %v376 = vrot.slane %v374, 4
      %v377 = vor.u32 %v376, %v372
      %v378 = vrot.slane %v377, 4
      %v380 = vshll.u32 %v261, 16
      %v382 = vrot.slane %v380, 5
      %v383 = vsel %vm305, %v378, %v382
      %v384 = vshrl.u32 %v261, 16
      %v386 = vrot.slane %v384, 4
      %v387 = vor.u32 %v386, %v382
      %v388 = vrot.slane %v387, 4
      %v390 = vshll.u32 %v262, 16
      %v392 = vrot.slane %v390, 5
      %v393 = vsel %vm305, %v388, %v392
      %v395 = vshrl.u32 %v263, 16
      %v397 = vrot.slane %v395, 4
      %v398 = vshll.u32 %v263, 16
      %v400 = vrot.slane %v398, 5
      %v401 = vor.u32 %v397, %v400
      %v402 = vrot.slane %v401, 4
      %v404 = vshll.u32 %v264, 16
      %v406 = vrot.slane %v404, 5
      %v407 = vsel %vm305, %v402, %v406
      %v408 = vshrl.u32 %v264, 16
      %v410 = vrot.slane %v408, 4
      %v411 = vor.u32 %v410, %v406
      %v412 = vrot.slane %v411, 4
      %v414 = vshll.u32 %v265, 16
      %v416 = vrot.slane %v414, 5
      %v417 = vsel %vm305, %v412, %v416
      %v418 = vshrl.u32 %v265, 16
      %v420 = vrot.slane %v418, 4
      %v421 = vor.u32 %v420, %v416
      %v422 = vrot.slane %v421, 4
      %v424 = vshll.u32 %v266, 16
      %v426 = vrot.slane %v424, 5
      %v427 = vsel %vm305, %v422, %v426
      %v428 = vshrl.u32 %v266, 16
      %v430 = vrot.slane %v428, 4
      %v431 = vor.u32 %v430, %v426
      %v432 = vrot.slane %v431, 4
      %v434 = vshll.u32 %v267, 16
      %v436 = vrot.slane %v434, 5
      %v437 = vsel %vm305, %v432, %v436
      %v439 = vshrl.u32 %v268, 16
      %v441 = vrot.slane %v439, 4
      %v442 = vshll.u32 %v268, 16
      %v444 = vrot.slane %v442, 5
      %v445 = vor.u32 %v441, %v444
      %v446 = vrot.slane %v445, 4
      %v448 = vshll.u32 %v269, 16
      %v450 = vrot.slane %v448, 5
      %v451 = vsel %vm305, %v446, %v450
      %v452 = vshrl.u32 %v269, 16
      %v454 = vrot.slane %v452, 4
      %v455 = vor.u32 %v454, %v450
      %v456 = vrot.slane %v455, 4
      %v458 = vshll.u32 %v270, 16
      %v460 = vrot.slane %v458, 5
      %v461 = vsel %vm305, %v456, %v460
      %v462 = vshrl.u32 %v270, 16
      %v464 = vrot.slane %v462, 4
      %v465 = vor.u32 %v464, %v460
      %v466 = vrot.slane %v465, 4
      %v468 = vshll.u32 %v271, 16
      %v470 = vrot.slane %v468, 5
      %v471 = vsel %vm305, %v466, %v470
      %v472 = vshrl.u32 %v271, 16
      %v474 = vrot.slane %v472, 4
      %v475 = vor.u32 %v474, %v470
      %v476 = vrot.slane %v475, 4
      %v478 = vshll.u32 %v272, 16
      %v480 = vrot.slane %v478, 5
      %v481 = vsel %vm305, %v476, %v480
      %v483 = vshrl.u32 %v273, 16
      %v485 = vrot.slane %v483, 4
      %v486 = vshll.u32 %v273, 16
      %v488 = vrot.slane %v486, 5
      %v489 = vor.u32 %v485, %v488
      %v490 = vrot.slane %v489, 4
      %v492 = vshll.u32 %v274, 16
      %v494 = vrot.slane %v492, 5
      %v495 = vsel %vm305, %v490, %v494
      %v496 = vshrl.u32 %v274, 16
      %v498 = vrot.slane %v496, 4
      %v499 = vor.u32 %v498, %v494
      %v500 = vrot.slane %v499, 4
      %v502 = vshll.u32 %v275, 16
      %v504 = vrot.slane %v502, 5
      %v505 = vsel %vm305, %v500, %v504
      %v506 = vshrl.u32 %v275, 16
      %v508 = vrot.slane %v506, 4
      %v509 = vor.u32 %v508, %v504
      %v510 = vrot.slane %v509, 4
      %v512 = vshll.u32 %v276, 16
      %v514 = vrot.slane %v512, 5
      %v515 = vsel %vm305, %v510, %v514
      %v516 = vshrl.u32 %v276, 16
      %v518 = vrot.slane %v516, 4
      %v519 = vor.u32 %v518, %v514
      %v520 = vrot.slane %v519, 4
      %v522 = vshll.u32 %v277, 16
      %v524 = vrot.slane %v522, 5
      %v525 = vsel %vm305, %v520, %v524
      %v527 = vshrl.u32 %v278, 16
      %v529 = vrot.slane %v527, 4
      %v530 = vshll.u32 %v278, 16
      %v532 = vrot.slane %v530, 5
      %v533 = vor.u32 %v529, %v532
      %v534 = vrot.slane %v533, 4
      %v536 = vshll.u32 %v279, 16
      %v538 = vrot.slane %v536, 5
      %v539 = vsel %vm305, %v534, %v538
      %v540 = vshrl.u32 %v279, 16
      %v542 = vrot.slane %v540, 4
      %v543 = vor.u32 %v542, %v538
      %v544 = vrot.slane %v543, 4
      %v546 = vshll.u32 %v280, 16
      %v548 = vrot.slane %v546, 5
      %v549 = vsel %vm305, %v544, %v548
      %v550 = vshrl.u32 %v280, 16
      %v552 = vrot.slane %v550, 4
      %v553 = vor.u32 %v552, %v548
      %v554 = vrot.slane %v553, 4
      %v556 = vshll.u32 %v281, 16
      %v558 = vrot.slane %v556, 5
      %v559 = vsel %vm305, %v554, %v558
      %v560 = vshrl.u32 %v281, 16
      %v562 = vrot.slane %v560, 4
      %v563 = vor.u32 %v562, %v558
      %v564 = vrot.slane %v563, 4
      %v566 = vshll.u32 %v282, 16
      %v568 = vrot.slane %v566, 5
      %v569 = vsel %vm305, %v564, %v568
      %v571 = vshrl.u32 %v283, 16
      %v573 = vrot.slane %v571, 4
      %v574 = vshll.u32 %v283, 16
      %v576 = vrot.slane %v574, 5
      %v577 = vor.u32 %v573, %v576
      %v578 = vrot.slane %v577, 4
      %v580 = vshll.u32 %v284, 16
      %v582 = vrot.slane %v580, 5
      %v583 = vsel %vm305, %v578, %v582
      %v584 = vshrl.u32 %v284, 16
      %v586 = vrot.slane %v584, 4
      %v587 = vor.u32 %v586, %v582
      %v588 = vrot.slane %v587, 4
      %v590 = vshll.u32 %v285, 16
      %v592 = vrot.slane %v590, 5
      %v593 = vsel %vm305, %v588, %v592
      %v594 = vshrl.u32 %v285, 16
      %v596 = vrot.slane %v594, 4
      %v597 = vor.u32 %v596, %v592
      %v598 = vrot.slane %v597, 4
      %v600 = vshll.u32 %v286, 16
      %v602 = vrot.slane %v600, 5
      %v603 = vsel %vm305, %v598, %v602
      %v604 = vshrl.u32 %v286, 16
      %v606 = vrot.slane %v604, 4
      %v607 = vor.u32 %v606, %v602
      %v608 = vrot.slane %v607, 4
      %v610 = vshll.u32 %v287, 16
      %v612 = vrot.slane %v610, 5
      %v613 = vsel %vm305, %v608, %v612
      %v615 = vshrl.u32 %v288, 16
      %v617 = vrot.slane %v615, 4
      %v618 = vshll.u32 %v288, 16
      %v620 = vrot.slane %v618, 5
      %v621 = vor.u32 %v617, %v620
      %v622 = vrot.slane %v621, 4
      %v624 = vshll.u32 %v289, 16
      %v626 = vrot.slane %v624, 5
      %v627 = vsel %vm305, %v622, %v626
      %v628 = vshrl.u32 %v289, 16
      %v630 = vrot.slane %v628, 4
      %v631 = vor.u32 %v630, %v626
      %v632 = vrot.slane %v631, 4
      %v634 = vshll.u32 %v290, 16
      %v636 = vrot.slane %v634, 5
      %v637 = vsel %vm305, %v632, %v636
      %v638 = vshrl.u32 %v290, 16
      %v640 = vrot.slane %v638, 4
      %v641 = vor.u32 %v640, %v636
      %v642 = vrot.slane %v641, 4
      %v644 = vshll.u32 %v291, 16
      %v646 = vrot.slane %v644, 5
      %v647 = vsel %vm305, %v642, %v646
      %v648 = vshrl.u32 %v291, 16
      %v650 = vrot.slane %v648, 4
      %v651 = vor.u32 %v650, %v646
      %v652 = vrot.slane %v651, 4
      %v654 = vshll.u32 %v292, 16
      %v656 = vrot.slane %v654, 5
      %v657 = vsel %vm305, %v652, %v656
      %v659 = vshrl.u32 %v293, 16
      %v661 = vrot.slane %v659, 4
      %v662 = vshll.u32 %v293, 16
      %v664 = vrot.slane %v662, 5
      %v665 = vor.u32 %v661, %v664
      %v666 = vrot.slane %v665, 4
      %v668 = vshll.u32 %v294, 16
      %v670 = vrot.slane %v668, 5
      %v671 = vsel %vm305, %v666, %v670
      %v672 = vshrl.u32 %v294, 16
      %v674 = vrot.slane %v672, 4
      %v675 = vor.u32 %v674, %v670
      %v676 = vrot.slane %v675, 4
      %v678 = vshll.u32 %v295, 16
      %v680 = vrot.slane %v678, 5
      %v681 = vsel %vm305, %v676, %v680
      %v682 = vshrl.u32 %v295, 16
      %v684 = vrot.slane %v682, 4
      %v685 = vor.u32 %v684, %v680
      %v686 = vrot.slane %v685, 4
      %v688 = vshll.u32 %v296, 16
      %v690 = vrot.slane %v688, 5
      %v691 = vsel %vm305, %v686, %v690
      %v692 = vshrl.u32 %v296, 16
      %v694 = vrot.slane %v692, 4
      %v695 = vor.u32 %v694, %v690
      %v696 = vrot.slane %v695, 4
      %v698 = vshll.u32 %v297, 16
      %v700 = vrot.slane %v698, 5
      %v701 = vsel %vm305, %v696, %v700
      %v703 = vshrl.u32 %v298, 16
      %v705 = vrot.slane %v703, 4
      %v706 = vshll.u32 %v298, 16
      %v708 = vrot.slane %v706, 5
      %v709 = vor.u32 %v705, %v708
      %v710 = vrot.slane %v709, 4
      %v712 = vshll.u32 %v299, 16
      %v714 = vrot.slane %v712, 5
      %v715 = vsel %vm305, %v710, %v714
      %v716 = vshrl.u32 %v299, 16
      %v718 = vrot.slane %v716, 4
      %v719 = vor.u32 %v718, %v714
      %v720 = vrot.slane %v719, 4
      %v722 = vshll.u32 %v300, 16
      %v724 = vrot.slane %v722, 5
      %v725 = vsel %vm305, %v720, %v724
      %v726 = vshrl.u32 %v300, 16
      %v728 = vrot.slane %v726, 4
      %v729 = vor.u32 %v728, %v724
      %v730 = vrot.slane %v729, 4
      %v732 = vshll.u32 %v301, 16
      %v734 = vrot.slane %v732, 5
      %v735 = vsel %vm305, %v730, %v734
      %v736 = vshrl.u32 %v301, 16
      %v738 = vrot.slane %v736, 4
      %v739 = vor.u32 %v738, %v734
      %v740 = vrot.slane %v739, 4
      %v742 = vshll.u32 %v302, 16
      %v744 = vrot.slane %v742, 5
      %v745 = vsel %vm305, %v740, %v744
      %vm796 = vcmask 1042432
      %vm797 = vcmask 1046532
      %vm798 = vmor %vm796, %vm797
      %v799 = vrot.slane %v253, 5
      %v800 = vrot.slane %v799, 4
      %v801 = vrot.slane %v254, 5
      %v802 = vsel %vm798, %v800, %v801
      %v803 = vrot.slane %v801, 4
      %v804 = vrot.slane %v255, 5
      %v805 = vsel %vm798, %v803, %v804
      %v806 = vrot.slane %v804, 4
      %v807 = vrot.slane %v256, 5
      %v808 = vsel %vm798, %v806, %v807
      %v809 = vrot.slane %v807, 4
      %v810 = vrot.slane %v257, 5
      %v811 = vsel %vm798, %v809, %v810
      %v812 = vrot.slane %v258, 5
      %v813 = vrot.slane %v812, 4
      %v814 = vrot.slane %v259, 5
      %v815 = vsel %vm798, %v813, %v814
      %v816 = vrot.slane %v814, 4
      %v817 = vrot.slane %v260, 5
      %v818 = vsel %vm798, %v816, %v817
      %v819 = vrot.slane %v817, 4
      %v820 = vrot.slane %v261, 5
      %v821 = vsel %vm798, %v819, %v820
      %v822 = vrot.slane %v820, 4
      %v823 = vrot.slane %v262, 5
      %v824 = vsel %vm798, %v822, %v823
      %v825 = vrot.slane %v263, 5
      %v826 = vrot.slane %v825, 4
      %v827 = vrot.slane %v264, 5
      %v828 = vsel %vm798, %v826, %v827
      %v829 = vrot.slane %v827, 4
      %v830 = vrot.slane %v265, 5
      %v831 = vsel %vm798, %v829, %v830
      %v832 = vrot.slane %v830, 4
      %v833 = vrot.slane %v266, 5
      %v834 = vsel %vm798, %v832, %v833
      %v835 = vrot.slane %v833, 4
      %v836 = vrot.slane %v267, 5
      %v837 = vsel %vm798, %v835, %v836
      %v838 = vrot.slane %v268, 5
      %v839 = vrot.slane %v838, 4
      %v840 = vrot.slane %v269, 5
      %v841 = vsel %vm798, %v839, %v840
      %v842 = vrot.slane %v840, 4
      %v843 = vrot.slane %v270, 5
      %v844 = vsel %vm798, %v842, %v843
      %v845 = vrot.slane %v843, 4
      %v846 = vrot.slane %v271, 5
      %v847 = vsel %vm798, %v845, %v846
      %v848 = vrot.slane %v846, 4
      %v849 = vrot.slane %v272, 5
      %v850 = vsel %vm798, %v848, %v849
      %v851 = vrot.slane %v273, 5
      %v852 = vrot.slane %v851, 4
      %v853 = vrot.slane %v274, 5
      %v854 = vsel %vm798, %v852, %v853
      %v855 = vrot.slane %v853, 4
      %v856 = vrot.slane %v275, 5
      %v857 = vsel %vm798, %v855, %v856
      %v858 = vrot.slane %v856, 4
      %v859 = vrot.slane %v276, 5
      %v860 = vsel %vm798, %v858, %v859
      %v861 = vrot.slane %v859, 4
      %v862 = vrot.slane %v277, 5
      %v863 = vsel %vm798, %v861, %v862
      %v864 = vrot.slane %v278, 5
      %v865 = vrot.slane %v864, 4
      %v866 = vrot.slane %v279, 5
      %v867 = vsel %vm798, %v865, %v866
      %v868 = vrot.slane %v866, 4
      %v869 = vrot.slane %v280, 5
      %v870 = vsel %vm798, %v868, %v869
      %v871 = vrot.slane %v869, 4
      %v872 = vrot.slane %v281, 5
      %v873 = vsel %vm798, %v871, %v872
      %v874 = vrot.slane %v872, 4
      %v875 = vrot.slane %v282, 5
      %v876 = vsel %vm798, %v874, %v875
      %v877 = vrot.slane %v283, 5
      %v878 = vrot.slane %v877, 4
      %v879 = vrot.slane %v284, 5
      %v880 = vsel %vm798, %v878, %v879
      %v881 = vrot.slane %v879, 4
      %v882 = vrot.slane %v285, 5
      %v883 = vsel %vm798, %v881, %v882
      %v884 = vrot.slane %v882, 4
      %v885 = vrot.slane %v286, 5
      %v886 = vsel %vm798, %v884, %v885
      %v887 = vrot.slane %v885, 4
      %v888 = vrot.slane %v287, 5
      %v889 = vsel %vm798, %v887, %v888
      %v890 = vrot.slane %v288, 5
      %v891 = vrot.slane %v890, 4
      %v892 = vrot.slane %v289, 5
      %v893 = vsel %vm798, %v891, %v892
      %v894 = vrot.slane %v892, 4
      %v895 = vrot.slane %v290, 5
      %v896 = vsel %vm798, %v894, %v895
      %v897 = vrot.slane %v895, 4
      %v898 = vrot.slane %v291, 5
      %v899 = vsel %vm798, %v897, %v898
      %v900 = vrot.slane %v898, 4
      %v901 = vrot.slane %v292, 5
      %v902 = vsel %vm798, %v900, %v901
      %v903 = vrot.slane %v293, 5
      %v904 = vrot.slane %v903, 4
      %v905 = vrot.slane %v294, 5
      %v906 = vsel %vm798, %v904, %v905
      %v907 = vrot.slane %v905, 4
      %v908 = vrot.slane %v295, 5
      %v909 = vsel %vm798, %v907, %v908
      %v910 = vrot.slane %v908, 4
      %v911 = vrot.slane %v296, 5
      %v912 = vsel %vm798, %v910, %v911
      %v913 = vrot.slane %v911, 4
      %v914 = vrot.slane %v297, 5
      %v915 = vsel %vm798, %v913, %v914
      %v916 = vrot.slane %v298, 5
      %v917 = vrot.slane %v916, 4
      %v918 = vrot.slane %v299, 5
      %v919 = vsel %vm798, %v917, %v918
      %v920 = vrot.slane %v918, 4
      %v921 = vrot.slane %v300, 5
      %v922 = vsel %vm798, %v920, %v921
      %v923 = vrot.slane %v921, 4
      %v924 = vrot.slane %v301, 5
      %v925 = vsel %vm798, %v923, %v924
      %v926 = vrot.slane %v924, 4
      %v927 = vrot.slane %v302, 5
      %v928 = vsel %vm798, %v926, %v927
      %v929 = vunpack.c.l.b16 %v253
      %v930 = vunpack.c.l.b16 %v254
      %v931 = vunpack.c.l.b16 %v255
      %v932 = vunpack.c.l.b16 %v256
      %v933 = vunpack.c.l.b16 %v258
      %v934 = vunpack.c.l.b16 %v259
      %v935 = vunpack.c.l.b16 %v260
      %v936 = vunpack.c.l.b16 %v261
      %v937 = vunpack.c.l.b16 %v263
      %v938 = vunpack.c.l.b16 %v264
      %v939 = vunpack.c.l.b16 %v265
      %v940 = vunpack.c.l.b16 %v266
      %v941 = vunpack.c.l.b16 %v268
      %v942 = vunpack.c.l.b16 %v269
      %v943 = vunpack.c.l.b16 %v270
      %v944 = vunpack.c.l.b16 %v271
      %v945 = vunpack.c.l.b16 %v273
      %v946 = vunpack.c.l.b16 %v274
      %v947 = vunpack.c.l.b16 %v275
      %v948 = vunpack.c.l.b16 %v276
      %v949 = vunpack.c.l.b16 %v278
      %v950 = vunpack.c.l.b16 %v279
      %v951 = vunpack.c.l.b16 %v280
      %v952 = vunpack.c.l.b16 %v281
      %v953 = vunpack.c.l.b16 %v283
      %v954 = vunpack.c.l.b16 %v284
      %v955 = vunpack.c.l.b16 %v285
      %v956 = vunpack.c.l.b16 %v286
      %v957 = vunpack.c.l.b16 %v288
      %v958 = vunpack.c.l.b16 %v289
      %v959 = vunpack.c.l.b16 %v290
      %v960 = vunpack.c.l.b16 %v291
      %v961 = vunpack.c.l.b16 %v293
      %v962 = vunpack.c.l.b16 %v294
      %v963 = vunpack.c.l.b16 %v295
      %v964 = vunpack.c.l.b16 %v296
      %v965 = vunpack.c.l.b16 %v298
      %v966 = vunpack.c.l.b16 %v299
      %v967 = vunpack.c.l.b16 %v300
      %v968 = vunpack.c.l.b16 %v301
      %v969 = vpack.c.b16 %v930, %v929
      %v970 = vpack.c.b16 %v932, %v931
      %v971 = vpack.c.b16 %v934, %v933
      %v972 = vpack.c.b16 %v936, %v935
      %v973 = vpack.c.b16 %v938, %v937
      %v974 = vpack.c.b16 %v940, %v939
      %v975 = vpack.c.b16 %v942, %v941
      %v976 = vpack.c.b16 %v944, %v943
      %v977 = vpack.c.b16 %v946, %v945
      %v978 = vpack.c.b16 %v948, %v947
      %v979 = vpack.c.b16 %v950, %v949
      %v980 = vpack.c.b16 %v952, %v951
      %v981 = vpack.c.b16 %v954, %v953
      %v982 = vpack.c.b16 %v956, %v955
      %v983 = vpack.c.b16 %v958, %v957
      %v984 = vpack.c.b16 %v960, %v959
      %v985 = vpack.c.b16 %v962, %v961
      %v986 = vpack.c.b16 %v964, %v963
      %v987 = vpack.c.b16 %v966, %v965
      %v988 = vpack.c.b16 %v968, %v967
      %v989 = vunpack.c.l.b16 %v319
      %v990 = vunpack.c.l.b16 %v329
      %v991 = vunpack.c.l.b16 %v339
      %v992 = vunpack.c.l.b16 %v349
      %v993 = vunpack.c.l.b16 %v363
      %v994 = vunpack.c.l.b16 %v373
      %v995 = vunpack.c.l.b16 %v383
      %v996 = vunpack.c.l.b16 %v393
      %v997 = vunpack.c.l.b16 %v407
      %v998 = vunpack.c.l.b16 %v417
      %v999 = vunpack.c.l.b16 %v427
      %v1000 = vunpack.c.l.b16 %v437
      %v1001 = vunpack.c.l.b16 %v451
      %v1002 = vunpack.c.l.b16 %v461
      %v1003 = vunpack.c.l.b16 %v471
      %v1004 = vunpack.c.l.b16 %v481
      %v1005 = vunpack.c.l.b16 %v495
      %v1006 = vunpack.c.l.b16 %v505
      %v1007 = vunpack.c.l.b16 %v515
      %v1008 = vunpack.c.l.b16 %v525
      %v1009 = vunpack.c.l.b16 %v539
      %v1010 = vunpack.c.l.b16 %v549
      %v1011 = vunpack.c.l.b16 %v559
      %v1012 = vunpack.c.l.b16 %v569
      %v1013 = vunpack.c.l.b16 %v583
      %v1014 = vunpack.c.l.b16 %v593
      %v1015 = vunpack.c.l.b16 %v603
      %v1016 = vunpack.c.l.b16 %v613
      %v1017 = vunpack.c.l.b16 %v627
      %v1018 = vunpack.c.l.b16 %v637
      %v1019 = vunpack.c.l.b16 %v647
      %v1020 = vunpack.c.l.b16 %v657
      %v1021 = vunpack.c.l.b16 %v671
      %v1022 = vunpack.c.l.b16 %v681
      %v1023 = vunpack.c.l.b16 %v691
      %v1024 = vunpack.c.l.b16 %v701
      %v1025 = vunpack.c.l.b16 %v715
      %v1026 = vunpack.c.l.b16 %v725
      %v1027 = vunpack.c.l.b16 %v735
      %v1028 = vunpack.c.l.b16 %v745
      %v1029 = vpack.c.b16 %v990, %v989
      %v1030 = vpack.c.b16 %v992, %v991
      %v1031 = vpack.c.b16 %v994, %v993
      %v1032 = vpack.c.b16 %v996, %v995
      %v1033 = vpack.c.b16 %v998, %v997
      %v1034 = vpack.c.b16 %v1000, %v999
      %v1035 = vpack.c.b16 %v1002, %v1001
      %v1036 = vpack.c.b16 %v1004, %v1003
      %v1037 = vpack.c.b16 %v1006, %v1005
      %v1038 = vpack.c.b16 %v1008, %v1007
      %v1039 = vpack.c.b16 %v1010, %v1009
      %v1040 = vpack.c.b16 %v1012, %v1011
      %v1041 = vpack.c.b16 %v1014, %v1013
      %v1042 = vpack.c.b16 %v1016, %v1015
      %v1043 = vpack.c.b16 %v1018, %v1017
      %v1044 = vpack.c.b16 %v1020, %v1019
      %v1045 = vpack.c.b16 %v1022, %v1021
      %v1046 = vpack.c.b16 %v1024, %v1023
      %v1047 = vpack.c.b16 %v1026, %v1025
      %v1048 = vpack.c.b16 %v1028, %v1027
      %1049 = vrot.lane.b32.xlu0 %v1029, 4
      %v1050 = vpop.permute.xlu0 %1049
      %1051 = vrot.lane.b32.xlu0 %v1030, 4
      %v1052 = vpop.permute.xlu0 %1051
      %1053 = vrot.lane.b32.xlu0 %v1031, 4
      %v1054 = vpop.permute.xlu0 %1053
      %1055 = vrot.lane.b32.xlu0 %v1032, 4
      %v1056 = vpop.permute.xlu0 %1055
      %1057 = vrot.lane.b32.xlu0 %v1033, 4
      %v1058 = vpop.permute.xlu0 %1057
      %1059 = vrot.lane.b32.xlu0 %v1034, 4
      %v1060 = vpop.permute.xlu0 %1059
      %1061 = vrot.lane.b32.xlu0 %v1035, 4
      %v1062 = vpop.permute.xlu0 %1061
      %1063 = vrot.lane.b32.xlu0 %v1036, 4
      %v1064 = vpop.permute.xlu0 %1063
      %1065 = vrot.lane.b32.xlu0 %v1037, 4
      %v1066 = vpop.permute.xlu0 %1065
      %1067 = vrot.lane.b32.xlu0 %v1038, 4
      %v1068 = vpop.permute.xlu0 %1067
      %1069 = vrot.lane.b32.xlu0 %v1039, 4
      %v1070 = vpop.permute.xlu0 %1069
      %1071 = vrot.lane.b32.xlu0 %v1040, 4
      %v1072 = vpop.permute.xlu0 %1071
      %1073 = vrot.lane.b32.xlu0 %v1041, 4
      %v1074 = vpop.permute.xlu0 %1073
      %1075 = vrot.lane.b32.xlu0 %v1042, 4
      %v1076 = vpop.permute.xlu0 %1075
      %1077 = vrot.lane.b32.xlu0 %v1043, 4
      %v1078 = vpop.permute.xlu0 %1077
      %1079 = vrot.lane.b32.xlu0 %v1044, 4
      %v1080 = vpop.permute.xlu0 %1079
      %1081 = vrot.lane.b32.xlu0 %v1045, 4
      %v1082 = vpop.permute.xlu0 %1081
      %1083 = vrot.lane.b32.xlu0 %v1046, 4
      %v1084 = vpop.permute.xlu0 %1083
      %1085 = vrot.lane.b32.xlu0 %v1047, 4
      %v1086 = vpop.permute.xlu0 %1085
      %1087 = vrot.lane.b32.xlu0 %v1048, 4
      %v1088 = vpop.permute.xlu0 %1087
      %v1089 = vunpack.c.l.b16 %v802
      %v1090 = vunpack.c.l.b16 %v805
      %v1091 = vunpack.c.l.b16 %v808
      %v1092 = vunpack.c.l.b16 %v811
      %v1093 = vunpack.c.l.b16 %v815
      %v1094 = vunpack.c.l.b16 %v818
      %v1095 = vunpack.c.l.b16 %v821
      %v1096 = vunpack.c.l.b16 %v824
      %v1097 = vunpack.c.l.b16 %v828
      %v1098 = vunpack.c.l.b16 %v831
      %v1099 = vunpack.c.l.b16 %v834
      %v1100 = vunpack.c.l.b16 %v837
      %v1101 = vunpack.c.l.b16 %v841
      %v1102 = vunpack.c.l.b16 %v844
      %v1103 = vunpack.c.l.b16 %v847
      %v1104 = vunpack.c.l.b16 %v850
      %v1105 = vunpack.c.l.b16 %v854
      %v1106 = vunpack.c.l.b16 %v857
      %v1107 = vunpack.c.l.b16 %v860
      %v1108 = vunpack.c.l.b16 %v863
      %v1109 = vunpack.c.l.b16 %v867
      %v1110 = vunpack.c.l.b16 %v870
      %v1111 = vunpack.c.l.b16 %v873
      %v1112 = vunpack.c.l.b16 %v876
      %v1113 = vunpack.c.l.b16 %v880
      %v1114 = vunpack.c.l.b16 %v883
      %v1115 = vunpack.c.l.b16 %v886
      %v1116 = vunpack.c.l.b16 %v889
      %v1117 = vunpack.c.l.b16 %v893
      %v1118 = vunpack.c.l.b16 %v896
      %v1119 = vunpack.c.l.b16 %v899
      %v1120 = vunpack.c.l.b16 %v902
      %v1121 = vunpack.c.l.b16 %v906
      %v1122 = vunpack.c.l.b16 %v909
      %v1123 = vunpack.c.l.b16 %v912
      %v1124 = vunpack.c.l.b16 %v915
      %v1125 = vunpack.c.l.b16 %v919
      %v1126 = vunpack.c.l.b16 %v922
      %v1127 = vunpack.c.l.b16 %v925
      %v1128 = vunpack.c.l.b16 %v928
      %v1129 = vpack.c.b16 %v1090, %v1089
      %v1130 = vpack.c.b16 %v1092, %v1091
      %v1131 = vpack.c.b16 %v1094, %v1093
      %v1132 = vpack.c.b16 %v1096, %v1095
      %v1133 = vpack.c.b16 %v1098, %v1097
      %v1134 = vpack.c.b16 %v1100, %v1099
      %v1135 = vpack.c.b16 %v1102, %v1101
      %v1136 = vpack.c.b16 %v1104, %v1103
      %v1137 = vpack.c.b16 %v1106, %v1105
      %v1138 = vpack.c.b16 %v1108, %v1107
      %v1139 = vpack.c.b16 %v1110, %v1109
      %v1140 = vpack.c.b16 %v1112, %v1111
      %v1141 = vpack.c.b16 %v1114, %v1113
      %v1142 = vpack.c.b16 %v1116, %v1115
      %v1143 = vpack.c.b16 %v1118, %v1117
      %v1144 = vpack.c.b16 %v1120, %v1119
      %v1145 = vpack.c.b16 %v1122, %v1121
      %v1146 = vpack.c.b16 %v1124, %v1123
      %v1147 = vpack.c.b16 %v1126, %v1125
      %v1148 = vpack.c.b16 %v1128, %v1127
      %1149 = vrot.lane.b32.xlu0 %v1129, 8
      %v1150 = vpop.permute.xlu0 %1149
      %1151 = vrot.lane.b32.xlu0 %v1130, 8
      %v1152 = vpop.permute.xlu0 %1151
      %1153 = vrot.lane.b32.xlu0 %v1131, 8
      %v1154 = vpop.permute.xlu0 %1153
      %1155 = vrot.lane.b32.xlu0 %v1132, 8
      %v1156 = vpop.permute.xlu0 %1155
      %1157 = vrot.lane.b32.xlu0 %v1133, 8
      %v1158 = vpop.permute.xlu0 %1157
      %1159 = vrot.lane.b32.xlu0 %v1134, 8
      %v1160 = vpop.permute.xlu0 %1159
      %1161 = vrot.lane.b32.xlu0 %v1135, 8
      %v1162 = vpop.permute.xlu0 %1161
      %1163 = vrot.lane.b32.xlu0 %v1136, 8
      %v1164 = vpop.permute.xlu0 %1163
      %1165 = vrot.lane.b32.xlu0 %v1137, 8
      %v1166 = vpop.permute.xlu0 %1165
      %1167 = vrot.lane.b32.xlu0 %v1138, 8
      %v1168 = vpop.permute.xlu0 %1167
      %1169 = vrot.lane.b32.xlu0 %v1139, 8
      %v1170 = vpop.permute.xlu0 %1169
      %1171 = vrot.lane.b32.xlu0 %v1140, 8
      %v1172 = vpop.permute.xlu0 %1171
      %1173 = vrot.lane.b32.xlu0 %v1141, 8
      %v1174 = vpop.permute.xlu0 %1173
      %1175 = vrot.lane.b32.xlu0 %v1142, 8
      %v1176 = vpop.permute.xlu0 %1175
      %1177 = vrot.lane.b32.xlu0 %v1143, 8
      %v1178 = vpop.permute.xlu0 %1177
      %1179 = vrot.lane.b32.xlu0 %v1144, 8
      %v1180 = vpop.permute.xlu0 %1179
      %1181 = vrot.lane.b32.xlu0 %v1145, 8
      %v1182 = vpop.permute.xlu0 %1181
      %1183 = vrot.lane.b32.xlu0 %v1146, 8
      %v1184 = vpop.permute.xlu0 %1183
      %1185 = vrot.lane.b32.xlu0 %v1147, 8
      %v1186 = vpop.permute.xlu0 %1185
      %1187 = vrot.lane.b32.xlu0 %v1148, 8
      %v1188 = vpop.permute.xlu0 %1187
      %vm1189 = vcmask 31744
      %v1192 = vsel %vm1189, %v969, %v1050
      %v1195 = vsel %vm1189, %v970, %v1052
      %v1198 = vsel %vm1189, %v971, %v1054
      %v1201 = vsel %vm1189, %v972, %v1056
      %v1204 = vsel %vm1189, %v973, %v1058
      %v1207 = vsel %vm1189, %v974, %v1060
      %v1210 = vsel %vm1189, %v975, %v1062
      %v1213 = vsel %vm1189, %v976, %v1064
      %v1216 = vsel %vm1189, %v977, %v1066
      %v1219 = vsel %vm1189, %v978, %v1068
      %v1222 = vsel %vm1189, %v979, %v1070
      %v1225 = vsel %vm1189, %v980, %v1072
      %v1228 = vsel %vm1189, %v981, %v1074
      %v1231 = vsel %vm1189, %v982, %v1076
      %v1234 = vsel %vm1189, %v983, %v1078
      %v1237 = vsel %vm1189, %v984, %v1080
      %v1240 = vsel %vm1189, %v985, %v1082
      %v1243 = vsel %vm1189, %v986, %v1084
      %v1246 = vsel %vm1189, %v987, %v1086
      %v1249 = vsel %vm1189, %v988, %v1088
      %vm1250 = vcmask 64512
      %v1252 = vsel %vm1250, %v1192, %v1150
      %v1254 = vsel %vm1250, %v1195, %v1152
      %v1256 = vsel %vm1250, %v1198, %v1154
      %v1258 = vsel %vm1250, %v1201, %v1156
      %v1260 = vsel %vm1250, %v1204, %v1158
      %v1262 = vsel %vm1250, %v1207, %v1160
      %v1264 = vsel %vm1250, %v1210, %v1162
      %v1266 = vsel %vm1250, %v1213, %v1164
      %v1268 = vsel %vm1250, %v1216, %v1166
      %v1270 = vsel %vm1250, %v1219, %v1168
      %v1272 = vsel %vm1250, %v1222, %v1170
      %v1274 = vsel %vm1250, %v1225, %v1172
      %v1276 = vsel %vm1250, %v1228, %v1174
      %v1278 = vsel %vm1250, %v1231, %v1176
      %v1280 = vsel %vm1250, %v1234, %v1178
      %v1282 = vsel %vm1250, %v1237, %v1180
      %v1284 = vsel %vm1250, %v1240, %v1182
      %v1286 = vsel %vm1250, %v1243, %v1184
      %v1288 = vsel %vm1250, %v1246, %v1186
      %v1290 = vsel %vm1250, %v1249, %v1188
      %v1291 = vld [vmem:[%s1] sm:$0xf]
      %v1292 = vld [vmem:[%s1 + $0x4] sm:$0x3]
      %s1293 = sadd.s32 %s249, 1
      %s1294 = smul.u32 %s1293, 5
      %s1295 = smul.addr %s1294, 4
      %s1296 = scalar_lea.vmem %s237, %s1295
      %v1297 = vld [vmem:[%s1296] sm:$0xf]
      %v1298 = vld [vmem:[%s1296 + $0x4] sm:$0xf]
      %v1299 = vld [vmem:[%s1296 + $0x8] sm:$0xf]
      %v1300 = vld [vmem:[%s1296 + $0xc] sm:$0xf]
      %v1301 = vld [vmem:[%s1296 + $0x10] sm:$0x1]
      %v1302 = vld [vmem:[%s1296 + $0x14] sm:$0xf]
      %v1303 = vld [vmem:[%s1296 + $0x18] sm:$0xf]
      %v1304 = vld [vmem:[%s1296 + $0x1c] sm:$0xf]
      %v1305 = vld [vmem:[%s1296 + $0x20] sm:$0xf]
      %v1306 = vld [vmem:[%s1296 + $0x24] sm:$0x1]
      %v1307 = vld [vmem:[%s1296 + $0x28] sm:$0xf]
      %v1308 = vld [vmem:[%s1296 + $0x2c] sm:$0xf]
      %v1309 = vld [vmem:[%s1296 + $0x30] sm:$0xf]
      %v1310 = vld [vmem:[%s1296 + $0x34] sm:$0xf]
      %v1311 = vld [vmem:[%s1296 + $0x38] sm:$0x1]
      %v1312 = vld [vmem:[%s1296 + $0x3c] sm:$0xf]
      %v1313 = vld [vmem:[%s1296 + $0x40] sm:$0xf]
      %v1314 = vld [vmem:[%s1296 + $0x44] sm:$0xf]
      %v1315 = vld [vmem:[%s1296 + $0x48] sm:$0xf]
      %v1316 = vld [vmem:[%s1296 + $0x4c] sm:$0x1]
      %v1317 = vld [vmem:[%s1296 + $0x50] sm:$0xf]
      %v1318 = vld [vmem:[%s1296 + $0x54] sm:$0xf]
      %v1319 = vld [vmem:[%s1296 + $0x58] sm:$0xf]
      %v1320 = vld [vmem:[%s1296 + $0x5c] sm:$0xf]
      %v1321 = vld [vmem:[%s1296 + $0x60] sm:$0x1]
      %v1322 = vld [vmem:[%s1296 + $0x64] sm:$0xf]
      %v1323 = vld [vmem:[%s1296 + $0x68] sm:$0xf]
      %v1324 = vld [vmem:[%s1296 + $0x6c] sm:$0xf]
      %v1325 = vld [vmem:[%s1296 + $0x70] sm:$0xf]
      %v1326 = vld [vmem:[%s1296 + $0x74] sm:$0x1]
      %v1327 = vld [vmem:[%s1296 + $0x78] sm:$0xf]
      %v1328 = vld [vmem:[%s1296 + $0x7c] sm:$0xf]
      %v1329 = vld [vmem:[%s1296 + $0x80] sm:$0xf]
      %v1330 = vld [vmem:[%s1296 + $0x84] sm:$0xf]
      %v1331 = vld [vmem:[%s1296 + $0x88] sm:$0x1]
      %v1332 = vld [vmem:[%s1296 + $0x8c] sm:$0xf]
      %v1333 = vld [vmem:[%s1296 + $0x90] sm:$0xf]
      %v1334 = vld [vmem:[%s1296 + $0x94] sm:$0xf]
      %v1335 = vld [vmem:[%s1296 + $0x98] sm:$0xf]
      %v1336 = vld [vmem:[%s1296 + $0x9c] sm:$0x1]
      %v1337 = vld [vmem:[%s1296 + $0xa0] sm:$0xf]
      %v1338 = vld [vmem:[%s1296 + $0xa4] sm:$0xf]
      %v1339 = vld [vmem:[%s1296 + $0xa8] sm:$0xf]
      %v1340 = vld [vmem:[%s1296 + $0xac] sm:$0xf]
      %v1341 = vld [vmem:[%s1296 + $0xb0] sm:$0x1]
      %v1342 = vld [vmem:[%s1296 + $0xb4] sm:$0xf]
      %v1343 = vld [vmem:[%s1296 + $0xb8] sm:$0xf]
      %v1344 = vld [vmem:[%s1296 + $0xbc] sm:$0xf]
      %v1345 = vld [vmem:[%s1296 + $0xc0] sm:$0xf]
      %v1346 = vld [vmem:[%s1296 + $0xc4] sm:$0x1]
      %v1348 = vshrl.u32 %v1297, 16
      %v1350 = vrot.slane %v1348, 4
      %v1351 = vshll.u32 %v1297, 16
      %v1353 = vrot.slane %v1351, 5
      %v1354 = vor.u32 %v1350, %v1353
      %v1355 = vrot.slane %v1354, 4
      %v1357 = vshll.u32 %v1298, 16
      %v1359 = vrot.slane %v1357, 5
      %v1360 = vsel %vm305, %v1355, %v1359
      %v1361 = vshrl.u32 %v1298, 16
      %v1363 = vrot.slane %v1361, 4
      %v1364 = vor.u32 %v1363, %v1359
      %v1365 = vrot.slane %v1364, 4
      %v1367 = vshll.u32 %v1299, 16
      %v1369 = vrot.slane %v1367, 5
      %v1370 = vsel %vm305, %v1365, %v1369
      %v1371 = vshrl.u32 %v1299, 16
      %v1373 = vrot.slane %v1371, 4
      %v1374 = vor.u32 %v1373, %v1369
      %v1375 = vrot.slane %v1374, 4
      %v1377 = vshll.u32 %v1300, 16
      %v1379 = vrot.slane %v1377, 5
      %v1380 = vsel %vm305, %v1375, %v1379
      %v1381 = vshrl.u32 %v1300, 16
      %v1383 = vrot.slane %v1381, 4
      %v1384 = vor.u32 %v1383, %v1379
      %v1385 = vrot.slane %v1384, 4
      %v1387 = vshll.u32 %v1301, 16
      %v1389 = vrot.slane %v1387, 5
      %v1390 = vsel %vm305, %v1385, %v1389
      %v1392 = vshrl.u32 %v1302, 16
      %v1394 = vrot.slane %v1392, 4
      %v1395 = vshll.u32 %v1302, 16
      %v1397 = vrot.slane %v1395, 5
      %v1398 = vor.u32 %v1394, %v1397
      %v1399 = vrot.slane %v1398, 4
      %v1401 = vshll.u32 %v1303, 16
      %v1403 = vrot.slane %v1401, 5
      %v1404 = vsel %vm305, %v1399, %v1403
      %v1405 = vshrl.u32 %v1303, 16
      %v1407 = vrot.slane %v1405, 4
      %v1408 = vor.u32 %v1407, %v1403
      %v1409 = vrot.slane %v1408, 4
      %v1411 = vshll.u32 %v1304, 16
      %v1413 = vrot.slane %v1411, 5
      %v1414 = vsel %vm305, %v1409, %v1413
      %v1415 = vshrl.u32 %v1304, 16
      %v1417 = vrot.slane %v1415, 4
      %v1418 = vor.u32 %v1417, %v1413
      %v1419 = vrot.slane %v1418, 4
      %v1421 = vshll.u32 %v1305, 16
      %v1423 = vrot.slane %v1421, 5
      %v1424 = vsel %vm305, %v1419, %v1423
      %v1425 = vshrl.u32 %v1305, 16
      %v1427 = vrot.slane %v1425, 4
      %v1428 = vor.u32 %v1427, %v1423
      %v1429 = vrot.slane %v1428, 4
      %v1431 = vshll.u32 %v1306, 16
      %v1433 = vrot.slane %v1431, 5
      %v1434 = vsel %vm305, %v1429, %v1433
      %v1436 = vshrl.u32 %v1307, 16
      %v1438 = vrot.slane %v1436, 4
      %v1439 = vshll.u32 %v1307, 16
      %v1441 = vrot.slane %v1439, 5
      %v1442 = vor.u32 %v1438, %v1441
      %v1443 = vrot.slane %v1442, 4
      %v1445 = vshll.u32 %v1308, 16
      %v1447 = vrot.slane %v1445, 5
      %v1448 = vsel %vm305, %v1443, %v1447
      %v1449 = vshrl.u32 %v1308, 16
      %v1451 = vrot.slane %v1449, 4
      %v1452 = vor.u32 %v1451, %v1447
      %v1453 = vrot.slane %v1452, 4
      %v1455 = vshll.u32 %v1309, 16
      %v1457 = vrot.slane %v1455, 5
      %v1458 = vsel %vm305, %v1453, %v1457
      %v1459 = vshrl.u32 %v1309, 16
      %v1461 = vrot.slane %v1459, 4
      %v1462 = vor.u32 %v1461, %v1457
      %v1463 = vrot.slane %v1462, 4
      %v1465 = vshll.u32 %v1310, 16
      %v1467 = vrot.slane %v1465, 5
      %v1468 = vsel %vm305, %v1463, %v1467
      %v1469 = vshrl.u32 %v1310, 16
      %v1471 = vrot.slane %v1469, 4
      %v1472 = vor.u32 %v1471, %v1467
      %v1473 = vrot.slane %v1472, 4
      %v1475 = vshll.u32 %v1311, 16
      %v1477 = vrot.slane %v1475, 5
      %v1478 = vsel %vm305, %v1473, %v1477
      %v1480 = vshrl.u32 %v1312, 16
      %v1482 = vrot.slane %v1480, 4
      %v1483 = vshll.u32 %v1312, 16
      %v1485 = vrot.slane %v1483, 5
      %v1486 = vor.u32 %v1482, %v1485
      %v1487 = vrot.slane %v1486, 4
      %v1489 = vshll.u32 %v1313, 16
      %v1491 = vrot.slane %v1489, 5
      %v1492 = vsel %vm305, %v1487, %v1491
      %v1493 = vshrl.u32 %v1313, 16
      %v1495 = vrot.slane %v1493, 4
      %v1496 = vor.u32 %v1495, %v1491
      %v1497 = vrot.slane %v1496, 4
      %v1499 = vshll.u32 %v1314, 16
      %v1501 = vrot.slane %v1499, 5
      %v1502 = vsel %vm305, %v1497, %v1501
      %v1503 = vshrl.u32 %v1314, 16
      %v1505 = vrot.slane %v1503, 4
      %v1506 = vor.u32 %v1505, %v1501
      %v1507 = vrot.slane %v1506, 4
      %v1509 = vshll.u32 %v1315, 16
      %v1511 = vrot.slane %v1509, 5
      %v1512 = vsel %vm305, %v1507, %v1511
      %v1513 = vshrl.u32 %v1315, 16
      %v1515 = vrot.slane %v1513, 4
      %v1516 = vor.u32 %v1515, %v1511
      %v1517 = vrot.slane %v1516, 4
      %v1519 = vshll.u32 %v1316, 16
      %v1521 = vrot.slane %v1519, 5
      %v1522 = vsel %vm305, %v1517, %v1521
      %v1524 = vshrl.u32 %v1317, 16
      %v1526 = vrot.slane %v1524, 4
      %v1527 = vshll.u32 %v1317, 16
      %v1529 = vrot.slane %v1527, 5
      %v1530 = vor.u32 %v1526, %v1529
      %v1531 = vrot.slane %v1530, 4
      %v1533 = vshll.u32 %v1318, 16
      %v1535 = vrot.slane %v1533, 5
      %v1536 = vsel %vm305, %v1531, %v1535
      %v1537 = vshrl.u32 %v1318, 16
      %v1539 = vrot.slane %v1537, 4
      %v1540 = vor.u32 %v1539, %v1535
      %v1541 = vrot.slane %v1540, 4
      %v1543 = vshll.u32 %v1319, 16
      %v1545 = vrot.slane %v1543, 5
      %v1546 = vsel %vm305, %v1541, %v1545
      %v1547 = vshrl.u32 %v1319, 16
      %v1549 = vrot.slane %v1547, 4
      %v1550 = vor.u32 %v1549, %v1545
      %v1551 = vrot.slane %v1550, 4
      %v1553 = vshll.u32 %v1320, 16
      %v1555 = vrot.slane %v1553, 5
      %v1556 = vsel %vm305, %v1551, %v1555
      %v1557 = vshrl.u32 %v1320, 16
      %v1559 = vrot.slane %v1557, 4
      %v1560 = vor.u32 %v1559, %v1555
      %v1561 = vrot.slane %v1560, 4
      %v1563 = vshll.u32 %v1321, 16
      %v1565 = vrot.slane %v1563, 5
      %v1566 = vsel %vm305, %v1561, %v1565
      %v1568 = vshrl.u32 %v1322, 16
      %v1570 = vrot.slane %v1568, 4
      %v1571 = vshll.u32 %v1322, 16
      %v1573 = vrot.slane %v1571, 5
      %v1574 = vor.u32 %v1570, %v1573
      %v1575 = vrot.slane %v1574, 4
      %v1577 = vshll.u32 %v1323, 16
      %v1579 = vrot.slane %v1577, 5
      %v1580 = vsel %vm305, %v1575, %v1579
      %v1581 = vshrl.u32 %v1323, 16
      %v1583 = vrot.slane %v1581, 4
      %v1584 = vor.u32 %v1583, %v1579
      %v1585 = vrot.slane %v1584, 4
      %v1587 = vshll.u32 %v1324, 16
      %v1589 = vrot.slane %v1587, 5
      %v1590 = vsel %vm305, %v1585, %v1589
      %v1591 = vshrl.u32 %v1324, 16
      %v1593 = vrot.slane %v1591, 4
      %v1594 = vor.u32 %v1593, %v1589
      %v1595 = vrot.slane %v1594, 4
      %v1597 = vshll.u32 %v1325, 16
      %v1599 = vrot.slane %v1597, 5
      %v1600 = vsel %vm305, %v1595, %v1599
      %v1601 = vshrl.u32 %v1325, 16
      %v1603 = vrot.slane %v1601, 4
      %v1604 = vor.u32 %v1603, %v1599
      %v1605 = vrot.slane %v1604, 4
      %v1607 = vshll.u32 %v1326, 16
      %v1609 = vrot.slane %v1607, 5
      %v1610 = vsel %vm305, %v1605, %v1609
      %v1612 = vshrl.u32 %v1327, 16
      %v1614 = vrot.slane %v1612, 4
      %v1615 = vshll.u32 %v1327, 16
      %v1617 = vrot.slane %v1615, 5
      %v1618 = vor.u32 %v1614, %v1617
      %v1619 = vrot.slane %v1618, 4
      %v1621 = vshll.u32 %v1328, 16
      %v1623 = vrot.slane %v1621, 5
      %v1624 = vsel %vm305, %v1619, %v1623
      %v1625 = vshrl.u32 %v1328, 16
      %v1627 = vrot.slane %v1625, 4
      %v1628 = vor.u32 %v1627, %v1623
      %v1629 = vrot.slane %v1628, 4
      %v1631 = vshll.u32 %v1329, 16
      %v1633 = vrot.slane %v1631, 5
      %v1634 = vsel %vm305, %v1629, %v1633
      %v1635 = vshrl.u32 %v1329, 16
      %v1637 = vrot.slane %v1635, 4
      %v1638 = vor.u32 %v1637, %v1633
      %v1639 = vrot.slane %v1638, 4
      %v1641 = vshll.u32 %v1330, 16
      %v1643 = vrot.slane %v1641, 5
      %v1644 = vsel %vm305, %v1639, %v1643
      %v1645 = vshrl.u32 %v1330, 16
      %v1647 = vrot.slane %v1645, 4
      %v1648 = vor.u32 %v1647, %v1643
      %v1649 = vrot.slane %v1648, 4
      %v1651 = vshll.u32 %v1331, 16
      %v1653 = vrot.slane %v1651, 5
      %v1654 = vsel %vm305, %v1649, %v1653
      %v1656 = vshrl.u32 %v1332, 16
      %v1658 = vrot.slane %v1656, 4
      %v1659 = vshll.u32 %v1332, 16
      %v1661 = vrot.slane %v1659, 5
      %v1662 = vor.u32 %v1658, %v1661
      %v1663 = vrot.slane %v1662, 4
      %v1665 = vshll.u32 %v1333, 16
      %v1667 = vrot.slane %v1665, 5
      %v1668 = vsel %vm305, %v1663, %v1667
      %v1669 = vshrl.u32 %v1333, 16
      %v1671 = vrot.slane %v1669, 4
      %v1672 = vor.u32 %v1671, %v1667
      %v1673 = vrot.slane %v1672, 4
      %v1675 = vshll.u32 %v1334, 16
      %v1677 = vrot.slane %v1675, 5
      %v1678 = vsel %vm305, %v1673, %v1677
      %v1679 = vshrl.u32 %v1334, 16
      %v1681 = vrot.slane %v1679, 4
      %v1682 = vor.u32 %v1681, %v1677
      %v1683 = vrot.slane %v1682, 4
      %v1685 = vshll.u32 %v1335, 16
      %v1687 = vrot.slane %v1685, 5
      %v1688 = vsel %vm305, %v1683, %v1687
      %v1689 = vshrl.u32 %v1335, 16
      %v1691 = vrot.slane %v1689, 4
      %v1692 = vor.u32 %v1691, %v1687
      %v1693 = vrot.slane %v1692, 4
      %v1695 = vshll.u32 %v1336, 16
      %v1697 = vrot.slane %v1695, 5
      %v1698 = vsel %vm305, %v1693, %v1697
      %v1700 = vshrl.u32 %v1337, 16
      %v1702 = vrot.slane %v1700, 4
      %v1703 = vshll.u32 %v1337, 16
      %v1705 = vrot.slane %v1703, 5
      %v1706 = vor.u32 %v1702, %v1705
      %v1707 = vrot.slane %v1706, 4
      %v1709 = vshll.u32 %v1338, 16
      %v1711 = vrot.slane %v1709, 5
      %v1712 = vsel %vm305, %v1707, %v1711
      %v1713 = vshrl.u32 %v1338, 16
      %v1715 = vrot.slane %v1713, 4
      %v1716 = vor.u32 %v1715, %v1711
      %v1717 = vrot.slane %v1716, 4
      %v1719 = vshll.u32 %v1339, 16
      %v1721 = vrot.slane %v1719, 5
      %v1722 = vsel %vm305, %v1717, %v1721
      %v1723 = vshrl.u32 %v1339, 16
      %v1725 = vrot.slane %v1723, 4
      %v1726 = vor.u32 %v1725, %v1721
      %v1727 = vrot.slane %v1726, 4
      %v1729 = vshll.u32 %v1340, 16
      %v1731 = vrot.slane %v1729, 5
      %v1732 = vsel %vm305, %v1727, %v1731
      %v1733 = vshrl.u32 %v1340, 16
      %v1735 = vrot.slane %v1733, 4
      %v1736 = vor.u32 %v1735, %v1731
      %v1737 = vrot.slane %v1736, 4
      %v1739 = vshll.u32 %v1341, 16
      %v1741 = vrot.slane %v1739, 5
      %v1742 = vsel %vm305, %v1737, %v1741
      %v1744 = vshrl.u32 %v1342, 16
      %v1746 = vrot.slane %v1744, 4
      %v1747 = vshll.u32 %v1342, 16
      %v1749 = vrot.slane %v1747, 5
      %v1750 = vor.u32 %v1746, %v1749
      %v1751 = vrot.slane %v1750, 4
      %v1753 = vshll.u32 %v1343, 16
      %v1755 = vrot.slane %v1753, 5
      %v1756 = vsel %vm305, %v1751, %v1755
      %v1757 = vshrl.u32 %v1343, 16
      %v1759 = vrot.slane %v1757, 4
      %v1760 = vor.u32 %v1759, %v1755
      %v1761 = vrot.slane %v1760, 4
      %v1763 = vshll.u32 %v1344, 16
      %v1765 = vrot.slane %v1763, 5
      %v1766 = vsel %vm305, %v1761, %v1765
      %v1767 = vshrl.u32 %v1344, 16
      %v1769 = vrot.slane %v1767, 4
      %v1770 = vor.u32 %v1769, %v1765
      %v1771 = vrot.slane %v1770, 4
      %v1773 = vshll.u32 %v1345, 16
      %v1775 = vrot.slane %v1773, 5
      %v1776 = vsel %vm305, %v1771, %v1775
      %v1777 = vshrl.u32 %v1345, 16
      %v1779 = vrot.slane %v1777, 4
      %v1780 = vor.u32 %v1779, %v1775
      %v1781 = vrot.slane %v1780, 4
      %v1783 = vshll.u32 %v1346, 16
      %v1785 = vrot.slane %v1783, 5
      %v1786 = vsel %vm305, %v1781, %v1785
      %v1837 = vrot.slane %v1297, 5
      %v1838 = vrot.slane %v1837, 4
      %v1839 = vrot.slane %v1298, 5
      %v1840 = vsel %vm798, %v1838, %v1839
      %v1841 = vrot.slane %v1839, 4
      %v1842 = vrot.slane %v1299, 5
      %v1843 = vsel %vm798, %v1841, %v1842
      %v1844 = vrot.slane %v1842, 4
      %v1845 = vrot.slane %v1300, 5
      %v1846 = vsel %vm798, %v1844, %v1845
      %v1847 = vrot.slane %v1845, 4
      %v1848 = vrot.slane %v1301, 5
      %v1849 = vsel %vm798, %v1847, %v1848
      %v1850 = vrot.slane %v1302, 5
      %v1851 = vrot.slane %v1850, 4
      %v1852 = vrot.slane %v1303, 5
      %v1853 = vsel %vm798, %v1851, %v1852
      %v1854 = vrot.slane %v1852, 4
      %v1855 = vrot.slane %v1304, 5
      %v1856 = vsel %vm798, %v1854, %v1855
      %v1857 = vrot.slane %v1855, 4
      %v1858 = vrot.slane %v1305, 5
      %v1859 = vsel %vm798, %v1857, %v1858
      %v1860 = vrot.slane %v1858, 4
      %v1861 = vrot.slane %v1306, 5
      %v1862 = vsel %vm798, %v1860, %v1861
      %v1863 = vrot.slane %v1307, 5
      %v1864 = vrot.slane %v1863, 4
      %v1865 = vrot.slane %v1308, 5
      %v1866 = vsel %vm798, %v1864, %v1865
      %v1867 = vrot.slane %v1865, 4
      %v1868 = vrot.slane %v1309, 5
      %v1869 = vsel %vm798, %v1867, %v1868
      %v1870 = vrot.slane %v1868, 4
      %v1871 = vrot.slane %v1310, 5
      %v1872 = vsel %vm798, %v1870, %v1871
      %v1873 = vrot.slane %v1871, 4
      %v1874 = vrot.slane %v1311, 5
      %v1875 = vsel %vm798, %v1873, %v1874
      %v1876 = vrot.slane %v1312, 5
      %v1877 = vrot.slane %v1876, 4
      %v1878 = vrot.slane %v1313, 5
      %v1879 = vsel %vm798, %v1877, %v1878
      %v1880 = vrot.slane %v1878, 4
      %v1881 = vrot.slane %v1314, 5
      %v1882 = vsel %vm798, %v1880, %v1881
      %v1883 = vrot.slane %v1881, 4
      %v1884 = vrot.slane %v1315, 5
      %v1885 = vsel %vm798, %v1883, %v1884
      %v1886 = vrot.slane %v1884, 4
      %v1887 = vrot.slane %v1316, 5
      %v1888 = vsel %vm798, %v1886, %v1887
      %v1889 = vrot.slane %v1317, 5
      %v1890 = vrot.slane %v1889, 4
      %v1891 = vrot.slane %v1318, 5
      %v1892 = vsel %vm798, %v1890, %v1891
      %v1893 = vrot.slane %v1891, 4
      %v1894 = vrot.slane %v1319, 5
      %v1895 = vsel %vm798, %v1893, %v1894
      %v1896 = vrot.slane %v1894, 4
      %v1897 = vrot.slane %v1320, 5
      %v1898 = vsel %vm798, %v1896, %v1897
      %v1899 = vrot.slane %v1897, 4
      %v1900 = vrot.slane %v1321, 5
      %v1901 = vsel %vm798, %v1899, %v1900
      %v1902 = vrot.slane %v1322, 5
      %v1903 = vrot.slane %v1902, 4
      %v1904 = vrot.slane %v1323, 5
      %v1905 = vsel %vm798, %v1903, %v1904
      %v1906 = vrot.slane %v1904, 4
      %v1907 = vrot.slane %v1324, 5
      %v1908 = vsel %vm798, %v1906, %v1907
      %v1909 = vrot.slane %v1907, 4
      %v1910 = vrot.slane %v1325, 5
      %v1911 = vsel %vm798, %v1909, %v1910
      %v1912 = vrot.slane %v1910, 4
      %v1913 = vrot.slane %v1326, 5
      %v1914 = vsel %vm798, %v1912, %v1913
      %v1915 = vrot.slane %v1327, 5
      %v1916 = vrot.slane %v1915, 4
      %v1917 = vrot.slane %v1328, 5
      %v1918 = vsel %vm798, %v1916, %v1917
      %v1919 = vrot.slane %v1917, 4
      %v1920 = vrot.slane %v1329, 5
      %v1921 = vsel %vm798, %v1919, %v1920
      %v1922 = vrot.slane %v1920, 4
      %v1923 = vrot.slane %v1330, 5
      %v1924 = vsel %vm798, %v1922, %v1923
      %v1925 = vrot.slane %v1923, 4
      %v1926 = vrot.slane %v1331, 5
      %v1927 = vsel %vm798, %v1925, %v1926
      %v1928 = vrot.slane %v1332, 5
      %v1929 = vrot.slane %v1928, 4
      %v1930 = vrot.slane %v1333, 5
      %v1931 = vsel %vm798, %v1929, %v1930
      %v1932 = vrot.slane %v1930, 4
      %v1933 = vrot.slane %v1334, 5
      %v1934 = vsel %vm798, %v1932, %v1933
      %v1935 = vrot.slane %v1933, 4
      %v1936 = vrot.slane %v1335, 5
      %v1937 = vsel %vm798, %v1935, %v1936
      %v1938 = vrot.slane %v1936, 4
      %v1939 = vrot.slane %v1336, 5
      %v1940 = vsel %vm798, %v1938, %v1939
      %v1941 = vrot.slane %v1337, 5
      %v1942 = vrot.slane %v1941, 4
      %v1943 = vrot.slane %v1338, 5
      %v1944 = vsel %vm798, %v1942, %v1943
      %v1945 = vrot.slane %v1943, 4
      %v1946 = vrot.slane %v1339, 5
      %v1947 = vsel %vm798, %v1945, %v1946
      %v1948 = vrot.slane %v1946, 4
      %v1949 = vrot.slane %v1340, 5
      %v1950 = vsel %vm798, %v1948, %v1949
      %v1951 = vrot.slane %v1949, 4
      %v1952 = vrot.slane %v1341, 5
      %v1953 = vsel %vm798, %v1951, %v1952
      %v1954 = vrot.slane %v1342, 5
      %v1955 = vrot.slane %v1954, 4
      %v1956 = vrot.slane %v1343, 5
      %v1957 = vsel %vm798, %v1955, %v1956
      %v1958 = vrot.slane %v1956, 4
      %v1959 = vrot.slane %v1344, 5
      %v1960 = vsel %vm798, %v1958, %v1959
      %v1961 = vrot.slane %v1959, 4
      %v1962 = vrot.slane %v1345, 5
      %v1963 = vsel %vm798, %v1961, %v1962
      %v1964 = vrot.slane %v1962, 4
      %v1965 = vrot.slane %v1346, 5
      %v1966 = vsel %vm798, %v1964, %v1965
      %v1967 = vunpack.c.l.b16 %v1297
      %v1968 = vunpack.c.l.b16 %v1298
      %v1969 = vunpack.c.l.b16 %v1299
      %v1970 = vunpack.c.l.b16 %v1300
      %v1971 = vunpack.c.l.b16 %v1302
      %v1972 = vunpack.c.l.b16 %v1303
      %v1973 = vunpack.c.l.b16 %v1304
      %v1974 = vunpack.c.l.b16 %v1305
      %v1975 = vunpack.c.l.b16 %v1307
      %v1976 = vunpack.c.l.b16 %v1308
      %v1977 = vunpack.c.l.b16 %v1309
      %v1978 = vunpack.c.l.b16 %v1310
      %v1979 = vunpack.c.l.b16 %v1312
      %v1980 = vunpack.c.l.b16 %v1313
      %v1981 = vunpack.c.l.b16 %v1314
      %v1982 = vunpack.c.l.b16 %v1315
      %v1983 = vunpack.c.l.b16 %v1317
      %v1984 = vunpack.c.l.b16 %v1318
      %v1985 = vunpack.c.l.b16 %v1319
      %v1986 = vunpack.c.l.b16 %v1320
      %v1987 = vunpack.c.l.b16 %v1322
      %v1988 = vunpack.c.l.b16 %v1323
      %v1989 = vunpack.c.l.b16 %v1324
      %v1990 = vunpack.c.l.b16 %v1325
      %v1991 = vunpack.c.l.b16 %v1327
      %v1992 = vunpack.c.l.b16 %v1328
      %v1993 = vunpack.c.l.b16 %v1329
      %v1994 = vunpack.c.l.b16 %v1330
      %v1995 = vunpack.c.l.b16 %v1332
      %v1996 = vunpack.c.l.b16 %v1333
      %v1997 = vunpack.c.l.b16 %v1334
      %v1998 = vunpack.c.l.b16 %v1335
      %v1999 = vunpack.c.l.b16 %v1337
      %v2000 = vunpack.c.l.b16 %v1338
      %v2001 = vunpack.c.l.b16 %v1339
      %v2002 = vunpack.c.l.b16 %v1340
      %v2003 = vunpack.c.l.b16 %v1342
      %v2004 = vunpack.c.l.b16 %v1343
      %v2005 = vunpack.c.l.b16 %v1344
      %v2006 = vunpack.c.l.b16 %v1345
      %v2007 = vpack.c.b16 %v1968, %v1967
      %v2008 = vpack.c.b16 %v1970, %v1969
      %v2009 = vpack.c.b16 %v1972, %v1971
      %v2010 = vpack.c.b16 %v1974, %v1973
      %v2011 = vpack.c.b16 %v1976, %v1975
      %v2012 = vpack.c.b16 %v1978, %v1977
      %v2013 = vpack.c.b16 %v1980, %v1979
      %v2014 = vpack.c.b16 %v1982, %v1981
      %v2015 = vpack.c.b16 %v1984, %v1983
      %v2016 = vpack.c.b16 %v1986, %v1985
      %v2017 = vpack.c.b16 %v1988, %v1987
      %v2018 = vpack.c.b16 %v1990, %v1989
      %v2019 = vpack.c.b16 %v1992, %v1991
      %v2020 = vpack.c.b16 %v1994, %v1993
      %v2021 = vpack.c.b16 %v1996, %v1995
      %v2022 = vpack.c.b16 %v1998, %v1997
      %v2023 = vpack.c.b16 %v2000, %v1999
      %v2024 = vpack.c.b16 %v2002, %v2001
      %v2025 = vpack.c.b16 %v2004, %v2003
      %v2026 = vpack.c.b16 %v2006, %v2005
      %v2027 = vunpack.c.l.b16 %v1360
      %v2028 = vunpack.c.l.b16 %v1370
      %v2029 = vunpack.c.l.b16 %v1380
      %v2030 = vunpack.c.l.b16 %v1390
      %v2031 = vunpack.c.l.b16 %v1404
      %v2032 = vunpack.c.l.b16 %v1414
      %v2033 = vunpack.c.l.b16 %v1424
      %v2034 = vunpack.c.l.b16 %v1434
      %v2035 = vunpack.c.l.b16 %v1448
      %v2036 = vunpack.c.l.b16 %v1458
      %v2037 = vunpack.c.l.b16 %v1468
      %v2038 = vunpack.c.l.b16 %v1478
      %v2039 = vunpack.c.l.b16 %v1492
      %v2040 = vunpack.c.l.b16 %v1502
      %v2041 = vunpack.c.l.b16 %v1512
      %v2042 = vunpack.c.l.b16 %v1522
      %v2043 = vunpack.c.l.b16 %v1536
      %v2044 = vunpack.c.l.b16 %v1546
      %v2045 = vunpack.c.l.b16 %v1556
      %v2046 = vunpack.c.l.b16 %v1566
      %v2047 = vunpack.c.l.b16 %v1580
      %v2048 = vunpack.c.l.b16 %v1590
      %v2049 = vunpack.c.l.b16 %v1600
      %v2050 = vunpack.c.l.b16 %v1610
      %v2051 = vunpack.c.l.b16 %v1624
      %v2052 = vunpack.c.l.b16 %v1634
      %v2053 = vunpack.c.l.b16 %v1644
      %v2054 = vunpack.c.l.b16 %v1654
      %v2055 = vunpack.c.l.b16 %v1668
      %v2056 = vunpack.c.l.b16 %v1678
      %v2057 = vunpack.c.l.b16 %v1688
      %v2058 = vunpack.c.l.b16 %v1698
      %v2059 = vunpack.c.l.b16 %v1712
      %v2060 = vunpack.c.l.b16 %v1722
      %v2061 = vunpack.c.l.b16 %v1732
      %v2062 = vunpack.c.l.b16 %v1742
      %v2063 = vunpack.c.l.b16 %v1756
      %v2064 = vunpack.c.l.b16 %v1766
      %v2065 = vunpack.c.l.b16 %v1776
      %v2066 = vunpack.c.l.b16 %v1786
      %v2067 = vpack.c.b16 %v2028, %v2027
      %v2068 = vpack.c.b16 %v2030, %v2029
      %v2069 = vpack.c.b16 %v2032, %v2031
      %v2070 = vpack.c.b16 %v2034, %v2033
      %v2071 = vpack.c.b16 %v2036, %v2035
      %v2072 = vpack.c.b16 %v2038, %v2037
      %v2073 = vpack.c.b16 %v2040, %v2039
      %v2074 = vpack.c.b16 %v2042, %v2041
      %v2075 = vpack.c.b16 %v2044, %v2043
      %v2076 = vpack.c.b16 %v2046, %v2045
      %v2077 = vpack.c.b16 %v2048, %v2047
      %v2078 = vpack.c.b16 %v2050, %v2049
      %v2079 = vpack.c.b16 %v2052, %v2051
      %v2080 = vpack.c.b16 %v2054, %v2053
      %v2081 = vpack.c.b16 %v2056, %v2055
      %v2082 = vpack.c.b16 %v2058, %v2057
      %v2083 = vpack.c.b16 %v2060, %v2059
      %v2084 = vpack.c.b16 %v2062, %v2061
      %v2085 = vpack.c.b16 %v2064, %v2063
      %v2086 = vpack.c.b16 %v2066, %v2065
      %2087 = vrot.lane.b32.xlu0 %v2067, 4
      %v2088 = vpop.permute.xlu0 %2087
      %2089 = vrot.lane.b32.xlu0 %v2068, 4
      %v2090 = vpop.permute.xlu0 %2089
      %2091 = vrot.lane.b32.xlu0 %v2069, 4
      %v2092 = vpop.permute.xlu0 %2091
      %2093 = vrot.lane.b32.xlu0 %v2070, 4
      %v2094 = vpop.permute.xlu0 %2093
      %2095 = vrot.lane.b32.xlu0 %v2071, 4
      %v2096 = vpop.permute.xlu0 %2095
      %2097 = vrot.lane.b32.xlu0 %v2072, 4
      %v2098 = vpop.permute.xlu0 %2097
      %2099 = vrot.lane.b32.xlu0 %v2073, 4
      %v2100 = vpop.permute.xlu0 %2099
      %2101 = vrot.lane.b32.xlu0 %v2074, 4
      %v2102 = vpop.permute.xlu0 %2101
      %2103 = vrot.lane.b32.xlu0 %v2075, 4
      %v2104 = vpop.permute.xlu0 %2103
      %2105 = vrot.lane.b32.xlu0 %v2076, 4
      %v2106 = vpop.permute.xlu0 %2105
      %2107 = vrot.lane.b32.xlu0 %v2077, 4
      %v2108 = vpop.permute.xlu0 %2107
      %2109 = vrot.lane.b32.xlu0 %v2078, 4
      %v2110 = vpop.permute.xlu0 %2109
      %2111 = vrot.lane.b32.xlu0 %v2079, 4
      %v2112 = vpop.permute.xlu0 %2111
      %2113 = vrot.lane.b32.xlu0 %v2080, 4
      %v2114 = vpop.permute.xlu0 %2113
      %2115 = vrot.lane.b32.xlu0 %v2081, 4
      %v2116 = vpop.permute.xlu0 %2115
      %2117 = vrot.lane.b32.xlu0 %v2082, 4
      %v2118 = vpop.permute.xlu0 %2117
      %2119 = vrot.lane.b32.xlu0 %v2083, 4
      %v2120 = vpop.permute.xlu0 %2119
      %2121 = vrot.lane.b32.xlu0 %v2084, 4
      %v2122 = vpop.permute.xlu0 %2121
      %2123 = vrot.lane.b32.xlu0 %v2085, 4
      %v2124 = vpop.permute.xlu0 %2123
      %2125 = vrot.lane.b32.xlu0 %v2086, 4
      %v2126 = vpop.permute.xlu0 %2125
      %v2127 = vunpack.c.l.b16 %v1840
      %v2128 = vunpack.c.l.b16 %v1843
      %v2129 = vunpack.c.l.b16 %v1846
      %v2130 = vunpack.c.l.b16 %v1849
      %v2131 = vunpack.c.l.b16 %v1853
      %v2132 = vunpack.c.l.b16 %v1856
      %v2133 = vunpack.c.l.b16 %v1859
      %v2134 = vunpack.c.l.b16 %v1862
      %v2135 = vunpack.c.l.b16 %v1866
      %v2136 = vunpack.c.l.b16 %v1869
      %v2137 = vunpack.c.l.b16 %v1872
      %v2138 = vunpack.c.l.b16 %v1875
      %v2139 = vunpack.c.l.b16 %v1879
      %v2140 = vunpack.c.l.b16 %v1882
      %v2141 = vunpack.c.l.b16 %v1885
      %v2142 = vunpack.c.l.b16 %v1888
      %v2143 = vunpack.c.l.b16 %v1892
      %v2144 = vunpack.c.l.b16 %v1895
      %v2145 = vunpack.c.l.b16 %v1898
      %v2146 = vunpack.c.l.b16 %v1901
      %v2147 = vunpack.c.l.b16 %v1905
      %v2148 = vunpack.c.l.b16 %v1908
      %v2149 = vunpack.c.l.b16 %v1911
      %v2150 = vunpack.c.l.b16 %v1914
      %v2151 = vunpack.c.l.b16 %v1918
      %v2152 = vunpack.c.l.b16 %v1921
      %v2153 = vunpack.c.l.b16 %v1924
      %v2154 = vunpack.c.l.b16 %v1927
      %v2155 = vunpack.c.l.b16 %v1931
      %v2156 = vunpack.c.l.b16 %v1934
      %v2157 = vunpack.c.l.b16 %v1937
      %v2158 = vunpack.c.l.b16 %v1940
      %v2159 = vunpack.c.l.b16 %v1944
      %v2160 = vunpack.c.l.b16 %v1947
      %v2161 = vunpack.c.l.b16 %v1950
      %v2162 = vunpack.c.l.b16 %v1953
      %v2163 = vunpack.c.l.b16 %v1957
      %v2164 = vunpack.c.l.b16 %v1960
      %v2165 = vunpack.c.l.b16 %v1963
      %v2166 = vunpack.c.l.b16 %v1966
      %v2167 = vpack.c.b16 %v2128, %v2127
      %v2168 = vpack.c.b16 %v2130, %v2129
      %v2169 = vpack.c.b16 %v2132, %v2131
      %v2170 = vpack.c.b16 %v2134, %v2133
      %v2171 = vpack.c.b16 %v2136, %v2135
      %v2172 = vpack.c.b16 %v2138, %v2137
      %v2173 = vpack.c.b16 %v2140, %v2139
      %v2174 = vpack.c.b16 %v2142, %v2141
      %v2175 = vpack.c.b16 %v2144, %v2143
      %v2176 = vpack.c.b16 %v2146, %v2145
      %v2177 = vpack.c.b16 %v2148, %v2147
      %v2178 = vpack.c.b16 %v2150, %v2149
      %v2179 = vpack.c.b16 %v2152, %v2151
      %v2180 = vpack.c.b16 %v2154, %v2153
      %v2181 = vpack.c.b16 %v2156, %v2155
      %v2182 = vpack.c.b16 %v2158, %v2157
      %v2183 = vpack.c.b16 %v2160, %v2159
      %v2184 = vpack.c.b16 %v2162, %v2161
      %v2185 = vpack.c.b16 %v2164, %v2163
      %v2186 = vpack.c.b16 %v2166, %v2165
      %2187 = vrot.lane.b32.xlu0 %v2167, 8
      %v2188 = vpop.permute.xlu0 %2187
      %2189 = vrot.lane.b32.xlu0 %v2168, 8
      %v2190 = vpop.permute.xlu0 %2189
      %2191 = vrot.lane.b32.xlu0 %v2169, 8
      %v2192 = vpop.permute.xlu0 %2191
      %2193 = vrot.lane.b32.xlu0 %v2170, 8
      %v2194 = vpop.permute.xlu0 %2193
      %2195 = vrot.lane.b32.xlu0 %v2171, 8
      %v2196 = vpop.permute.xlu0 %2195
      %2197 = vrot.lane.b32.xlu0 %v2172, 8
      %v2198 = vpop.permute.xlu0 %2197
      %2199 = vrot.lane.b32.xlu0 %v2173, 8
      %v2200 = vpop.permute.xlu0 %2199
      %2201 = vrot.lane.b32.xlu0 %v2174, 8
      %v2202 = vpop.permute.xlu0 %2201
      %2203 = vrot.lane.b32.xlu0 %v2175, 8
      %v2204 = vpop.permute.xlu0 %2203
      %2205 = vrot.lane.b32.xlu0 %v2176, 8
      %v2206 = vpop.permute.xlu0 %2205
      %2207 = vrot.lane.b32.xlu0 %v2177, 8
      %v2208 = vpop.permute.xlu0 %2207
      %2209 = vrot.lane.b32.xlu0 %v2178, 8
      %v2210 = vpop.permute.xlu0 %2209
      %2211 = vrot.lane.b32.xlu0 %v2179, 8
      %v2212 = vpop.permute.xlu0 %2211
      %2213 = vrot.lane.b32.xlu0 %v2180, 8
      %v2214 = vpop.permute.xlu0 %2213
      %2215 = vrot.lane.b32.xlu0 %v2181, 8
      %v2216 = vpop.permute.xlu0 %2215
      %2217 = vrot.lane.b32.xlu0 %v2182, 8
      %v2218 = vpop.permute.xlu0 %2217
      %2219 = vrot.lane.b32.xlu0 %v2183, 8
      %v2220 = vpop.permute.xlu0 %2219
      %2221 = vrot.lane.b32.xlu0 %v2184, 8
      %v2222 = vpop.permute.xlu0 %2221
      %2223 = vrot.lane.b32.xlu0 %v2185, 8
      %v2224 = vpop.permute.xlu0 %2223
      %2225 = vrot.lane.b32.xlu0 %v2186, 8
      %v2226 = vpop.permute.xlu0 %2225
      %v2229 = vsel %vm1189, %v2007, %v2088
      %v2232 = vsel %vm1189, %v2008, %v2090
      %v2235 = vsel %vm1189, %v2009, %v2092
      %v2238 = vsel %vm1189, %v2010, %v2094
      %v2241 = vsel %vm1189, %v2011, %v2096
      %v2244 = vsel %vm1189, %v2012, %v2098
      %v2247 = vsel %vm1189, %v2013, %v2100
      %v2250 = vsel %vm1189, %v2014, %v2102
      %v2253 = vsel %vm1189, %v2015, %v2104
      %v2256 = vsel %vm1189, %v2016, %v2106
      %v2259 = vsel %vm1189, %v2017, %v2108
      %v2262 = vsel %vm1189, %v2018, %v2110
      %v2265 = vsel %vm1189, %v2019, %v2112
      %v2268 = vsel %vm1189, %v2020, %v2114
      %v2271 = vsel %vm1189, %v2021, %v2116
      %v2274 = vsel %vm1189, %v2022, %v2118
      %v2277 = vsel %vm1189, %v2023, %v2120
      %v2280 = vsel %vm1189, %v2024, %v2122
      %v2283 = vsel %vm1189, %v2025, %v2124
      %v2286 = vsel %vm1189, %v2026, %v2126
      %v2288 = vsel %vm1250, %v2229, %v2188
      %v2290 = vsel %vm1250, %v2232, %v2190
      %v2292 = vsel %vm1250, %v2235, %v2192
      %v2294 = vsel %vm1250, %v2238, %v2194
      %v2296 = vsel %vm1250, %v2241, %v2196
      %v2298 = vsel %vm1250, %v2244, %v2198
      %v2300 = vsel %vm1250, %v2247, %v2200
      %v2302 = vsel %vm1250, %v2250, %v2202
      %v2304 = vsel %vm1250, %v2253, %v2204
      %v2306 = vsel %vm1250, %v2256, %v2206
      %v2308 = vsel %vm1250, %v2259, %v2208
      %v2310 = vsel %vm1250, %v2262, %v2210
      %v2312 = vsel %vm1250, %v2265, %v2212
      %v2314 = vsel %vm1250, %v2268, %v2214
      %v2316 = vsel %vm1250, %v2271, %v2216
      %v2318 = vsel %vm1250, %v2274, %v2218
      %v2320 = vsel %vm1250, %v2277, %v2220
      %v2322 = vsel %vm1250, %v2280, %v2222
      %v2324 = vsel %vm1250, %v2283, %v2224
      %v2326 = vsel %vm1250, %v2286, %v2226
      %s2327 = scalar_lea.vmem %s1, 8
      %v2328 = vld [vmem:[%s2327] sm:$0xf]
      %v2329 = vld [vmem:[%s2327 + $0x4] sm:$0x3]
      %v2332 = vunpack.c.l.b16 %v2328
      %v2333 = vunpack.c.l.b16 %v2329
      %v2334 = vpack.c.b16 %v2333, %v2332
      %vm2335 = vcmask 97280
      %v2336 = vsel %vm2335, %v2288, 0
      %v2338 = vsel %vm2335, %v2290, 0
      %v2340 = vsel %vm2335, %v2292, 0
      %v2342 = vsel %vm2335, %v2294, 0
      %v2344 = vsel %vm2335, %v2296, 0
      %v2346 = vsel %vm2335, %v2298, 0
      %v2348 = vsel %vm2335, %v2300, 0
      %v2350 = vsel %vm2335, %v2302, 0
      %v2352 = vsel %vm2335, %v2304, 0
      %v2354 = vsel %vm2335, %v2306, 0
      %v2356 = vsel %vm2335, %v2308, 0
      %v2358 = vsel %vm2335, %v2310, 0
      %v2360 = vsel %vm2335, %v2312, 0
      %v2362 = vsel %vm2335, %v2314, 0
      %v2364 = vsel %vm2335, %v2316, 0
      %v2366 = vsel %vm2335, %v2318, 0
      %v2368 = vsel %vm2335, %v2320, 0
      %v2370 = vsel %vm2335, %v2322, 0
      %v2372 = vsel %vm2335, %v2324, 0
      %v2374 = vsel %vm2335, %v2326, 0
      %vm2376 = vcmask 1045504
      %v2378 = vsel %vm2376, %v2334, 0
      %2380 = vmatprep.subr.bf16.mxu0 0
      %2381 = vmatpush1.bf16.msra.mxu0 %v2378
      %2382 = vmatprep.subr.bf16.mxu0 0
      %2383 = vmatpush1.bf16.msra.mxu0 0
      %2384 = vmatprep.subr.bf16.mxu0 0
      %2385 = vmatpush1.bf16.msra.mxu0 0
      %2386 = vmatprep.subr.bf16.mxu0 0
      %2387 = vmatpush1.bf16.msra.mxu0 0
      %2388 = vmatprep.subr.bf16.mxu0 0
      %2389 = vmatpush1.bf16.msra.mxu0 0
      %2390 = vmatprep.subr.bf16.mxu0 0
      %2391 = vmatpush1.bf16.msra.mxu0 0
      %2392 = vmatprep.subr.bf16.mxu0 0
      %2393 = vmatpush1.bf16.msra.mxu0 0
      %2394 = vmatprep.subr.bf16.mxu0 0
      %2395 = vmatpush1.bf16.msra.mxu0 0
      %2396 = vmatprep.subr.bf16.mxu0 0
      %2397 = vmatpush1.bf16.msra.mxu0 0
      %2398 = vmatprep.subr.bf16.mxu0 0
      %2399 = vmatpush1.bf16.msra.mxu0 0
      %2400 = vmatprep.subr.bf16.mxu0 0
      %2401 = vmatpush1.bf16.msra.mxu0 0
      %2402 = vmatprep.subr.bf16.mxu0 0
      %2403 = vmatpush1.bf16.msra.mxu0 0
      %2404 = vmatprep.subr.bf16.mxu0 0
      %2405 = vmatpush1.bf16.msra.mxu0 0
      %2406 = vmatprep.subr.bf16.mxu0 0
      %2407 = vmatpush1.bf16.msra.mxu0 0
      %2408 = vmatprep.subr.bf16.mxu0 0
      %2409 = vmatpush1.bf16.msra.mxu0 0
      %2410 = vmatprep.subr.bf16.mxu0 0
      %2411 = vmatpush1.bf16.msra.mxu0 0
      %2412 = vmatprep.mubr.bf16.mxu0 0
      %2413 = vmatmul.mubr.bf16.gmra.mrb[0].mxu0 %v2336
      %v2414 = vpop.f32.mrb[0].mxu0
      %v2415 = vadd.f32 0.0, %v2414
      %v2416 = vpop.f32.mrb[0].mxu0
      %v2417 = vpop.f32.mrb[0].mxu0
      %v2418 = vadd.f32 0.0, %v2417
      %v2419 = vpop.f32.mrb[0].mxu0
      %2420 = vmatprep.mubr.bf16.mxu0 0
      %2421 = vmatmul.mubr.bf16.gmra.mrb[0].mxu0 %v2338
      %v2422 = vpop.f32.mrb[0].mxu0
      %v2423 = vadd.f32 0.0, %v2422
      %v2424 = vpop.f32.mrb[0].mxu0
      %v2425 = vpop.f32.mrb[0].mxu0
      %v2426 = vadd.f32 0.0, %v2425
      %v2427 = vpop.f32.mrb[0].mxu0
      %2428 = vmatprep.mubr.bf16.mxu0 0
      %2429 = vmatmul.mubr.bf16.gmra.mrb[0].mxu0 %v2340
      %v2430 = vpop.f32.mrb[0].mxu0
      %v2431 = vadd.f32 0.0, %v2430
      %v2432 = vpop.f32.mrb[0].mxu0
      %v2433 = vpop.f32.mrb[0].mxu0
      %v2434 = vadd.f32 0.0, %v2433
      %v2435 = vpop.f32.mrb[0].mxu0
      %2436 = vmatprep.mubr.bf16.mxu0 0
      %2437 = vmatmul.mubr.bf16.gmra.mrb[0].mxu0 %v2342
      %v2438 = vpop.f32.mrb[0].mxu0
      %v2439 = vadd.f32 0.0, %v2438
      %v2440 = vpop.f32.mrb[0].mxu0
      %v2441 = vpop.f32.mrb[0].mxu0
      %v2442 = vadd.f32 0.0, %v2441
      %v2443 = vpop.f32.mrb[0].mxu0
      %2444 = vmatprep.mubr.bf16.mxu0 0
      %2445 = vmatmul.mubr.bf16.gmra.mrb[0].mxu0 %v2344
      %v2446 = vpop.f32.mrb[0].mxu0
      %v2447 = vadd.f32 0.0, %v2446
      %v2448 = vpop.f32.mrb[0].mxu0
      %v2449 = vpop.f32.mrb[0].mxu0
      %v2450 = vadd.f32 0.0, %v2449
      %v2451 = vpop.f32.mrb[0].mxu0
      %2452 = vmatprep.mubr.bf16.mxu0 0
      %2453 = vmatmul.mubr.bf16.gmra.mrb[0].mxu0 %v2346
      %v2454 = vpop.f32.mrb[0].mxu0
      %v2455 = vadd.f32 0.0, %v2454
      %v2456 = vpop.f32.mrb[0].mxu0
      %v2457 = vpop.f32.mrb[0].mxu0
      %v2458 = vadd.f32 0.0, %v2457
      %v2459 = vpop.f32.mrb[0].mxu0
      %2460 = vmatprep.mubr.bf16.mxu0 0
      %2461 = vmatmul.mubr.bf16.gmra.mrb[0].mxu0 %v2348
      %v2462 = vpop.f32.mrb[0].mxu0
      %v2463 = vadd.f32 0.0, %v2462
      %v2464 = vpop.f32.mrb[0].mxu0
      %v2465 = vpop.f32.mrb[0].mxu0
      %v2466 = vadd.f32 0.0, %v2465
      %v2467 = vpop.f32.mrb[0].mxu0
      %2468 = vmatprep.mubr.bf16.mxu0 0
      %2469 = vmatmul.mubr.bf16.gmra.mrb[0].mxu0 %v2350
      %v2470 = vpop.f32.mrb[0].mxu0
      %v2471 = vadd.f32 0.0, %v2470
      %v2472 = vpop.f32.mrb[0].mxu0
      %v2473 = vpop.f32.mrb[0].mxu0
      %v2474 = vadd.f32 0.0, %v2473
      %v2475 = vpop.f32.mrb[0].mxu0
      %2476 = vmatprep.mubr.bf16.mxu0 0
      %2477 = vmatmul.mubr.bf16.gmra.mrb[0].mxu0 %v2352
      %v2478 = vpop.f32.mrb[0].mxu0
      %v2479 = vadd.f32 0.0, %v2478
      %v2480 = vpop.f32.mrb[0].mxu0
      %v2481 = vpop.f32.mrb[0].mxu0
      %v2482 = vadd.f32 0.0, %v2481
      %v2483 = vpop.f32.mrb[0].mxu0
      %2484 = vmatprep.mubr.bf16.mxu0 0
      %2485 = vmatmul.mubr.bf16.gmra.mrb[0].mxu0 %v2354
      %v2486 = vpop.f32.mrb[0].mxu0
      %v2487 = vadd.f32 0.0, %v2486
      %v2488 = vpop.f32.mrb[0].mxu0
      %v2489 = vpop.f32.mrb[0].mxu0
      %v2490 = vadd.f32 0.0, %v2489
      %v2491 = vpop.f32.mrb[0].mxu0
      %2492 = vmatprep.mubr.bf16.mxu0 0
      %2493 = vmatmul.mubr.bf16.gmra.mrb[0].mxu0 %v2356
      %v2494 = vpop.f32.mrb[0].mxu0
      %v2495 = vadd.f32 0.0, %v2494
      %v2496 = vpop.f32.mrb[0].mxu0
      %v2497 = vpop.f32.mrb[0].mxu0
      %v2498 = vadd.f32 0.0, %v2497
      %v2499 = vpop.f32.mrb[0].mxu0
      %2500 = vmatprep.mubr.bf16.mxu0 0
      %2501 = vmatmul.mubr.bf16.gmra.mrb[0].mxu0 %v2358
      %v2502 = vpop.f32.mrb[0].mxu0
      %v2503 = vadd.f32 0.0, %v2502
      %v2504 = vpop.f32.mrb[0].mxu0
      %v2505 = vpop.f32.mrb[0].mxu0
      %v2506 = vadd.f32 0.0, %v2505
      %v2507 = vpop.f32.mrb[0].mxu0
      %2508 = vmatprep.mubr.bf16.mxu0 0
      %2509 = vmatmul.mubr.bf16.gmra.mrb[0].mxu0 %v2360
      %v2510 = vpop.f32.mrb[0].mxu0
      %v2511 = vadd.f32 0.0, %v2510
      %v2512 = vpop.f32.mrb[0].mxu0
      %v2513 = vpop.f32.mrb[0].mxu0
      %v2514 = vadd.f32 0.0, %v2513
      %v2515 = vpop.f32.mrb[0].mxu0
      %2516 = vmatprep.mubr.bf16.mxu0 0
      %2517 = vmatmul.mubr.bf16.gmra.mrb[0].mxu0 %v2362
      %v2518 = vpop.f32.mrb[0].mxu0
      %v2519 = vadd.f32 0.0, %v2518
      %v2520 = vpop.f32.mrb[0].mxu0
      %v2521 = vpop.f32.mrb[0].mxu0
      %v2522 = vadd.f32 0.0, %v2521
      %v2523 = vpop.f32.mrb[0].mxu0
      %2524 = vmatprep.mubr.bf16.mxu0 0
      %2525 = vmatmul.mubr.bf16.gmra.mrb[0].mxu0 %v2364
      %v2526 = vpop.f32.mrb[0].mxu0
      %v2527 = vadd.f32 0.0, %v2526
      %v2528 = vpop.f32.mrb[0].mxu0
      %v2529 = vpop.f32.mrb[0].mxu0
      %v2530 = vadd.f32 0.0, %v2529
      %v2531 = vpop.f32.mrb[0].mxu0
      %2532 = vmatprep.mubr.bf16.mxu0 0
      %2533 = vmatmul.mubr.bf16.gmra.mrb[0].mxu0 %v2366
      %v2534 = vpop.f32.mrb[0].mxu0
      %v2535 = vadd.f32 0.0, %v2534
      %v2536 = vpop.f32.mrb[0].mxu0
      %v2537 = vpop.f32.mrb[0].mxu0
      %v2538 = vadd.f32 0.0, %v2537
      %v2539 = vpop.f32.mrb[0].mxu0
      %2540 = vmatprep.mubr.bf16.mxu0 0
      %2541 = vmatmul.mubr.bf16.gmra.mrb[0].mxu0 %v2368
      %v2542 = vpop.f32.mrb[0].mxu0
      %v2543 = vadd.f32 0.0, %v2542
      %v2544 = vpop.f32.mrb[0].mxu0
      %v2545 = vpop.f32.mrb[0].mxu0
      %v2546 = vadd.f32 0.0, %v2545
      %v2547 = vpop.f32.mrb[0].mxu0
      %2548 = vmatprep.mubr.bf16.mxu0 0
      %2549 = vmatmul.mubr.bf16.gmra.mrb[0].mxu0 %v2370
      %v2550 = vpop.f32.mrb[0].mxu0
      %v2551 = vadd.f32 0.0, %v2550
      %v2552 = vpop.f32.mrb[0].mxu0
      %v2553 = vpop.f32.mrb[0].mxu0
      %v2554 = vadd.f32 0.0, %v2553
      %v2555 = vpop.f32.mrb[0].mxu0
      %2556 = vmatprep.mubr.bf16.mxu0 0
      %2557 = vmatmul.mubr.bf16.gmra.mrb[0].mxu0 %v2372
      %v2558 = vpop.f32.mrb[0].mxu0
      %v2559 = vadd.f32 0.0, %v2558
      %v2560 = vpop.f32.mrb[0].mxu0
      %v2561 = vpop.f32.mrb[0].mxu0
      %v2562 = vadd.f32 0.0, %v2561
      %v2563 = vpop.f32.mrb[0].mxu0
      %2564 = vmatprep.mubr.bf16.mxu0 0
      %2565 = vmatmul.mubr.bf16.gmra.mrb[0].mxu0 %v2374
      %v2566 = vpop.f32.mrb[0].mxu0
      %v2567 = vadd.f32 0.0, %v2566
      %v2568 = vpop.f32.mrb[0].mxu0
      %v2569 = vpop.f32.mrb[0].mxu0
      %v2570 = vadd.f32 0.0, %v2569
      %v2571 = vpop.f32.mrb[0].mxu0
      %2572 = vdwg.mxu0
      %v2575 = vunpack.c.l.b16 %v1291
      %v2576 = vunpack.c.l.b16 %v1292
      %v2577 = vpack.c.b16 %v2576, %v2575
      %v2578 = vsel %vm2335, %v1252, 0
      %v2580 = vsel %vm2335, %v1254, 0
      %v2582 = vsel %vm2335, %v1256, 0
      %v2584 = vsel %vm2335, %v1258, 0
      %v2586 = vsel %vm2335, %v1260, 0
      %v2588 = vsel %vm2335, %v1262, 0
      %v2590 = vsel %vm2335, %v1264, 0
      %v2592 = vsel %vm2335, %v1266, 0
      %v2594 = vsel %vm2335, %v1268, 0
      %v2596 = vsel %vm2335, %v1270, 0
      %v2598 = vsel %vm2335, %v1272, 0
      %v2600 = vsel %vm2335, %v1274, 0
      %v2602 = vsel %vm2335, %v1276, 0
      %v2604 = vsel %vm2335, %v1278, 0
      %v2606 = vsel %vm2335, %v1280, 0
      %v2608 = vsel %vm2335, %v1282, 0
      %v2610 = vsel %vm2335, %v1284, 0
      %v2612 = vsel %vm2335, %v1286, 0
      %v2614 = vsel %vm2335, %v1288, 0
      %v2616 = vsel %vm2335, %v1290, 0
      %v2619 = vsel %vm2376, %v2577, 0
      %2621 = vmatprep.subr.bf16.mxu0 0
      %2622 = vmatpush1.bf16.msra.mxu0 %v2619
      %2623 = vmatprep.subr.bf16.mxu0 0
      %2624 = vmatpush1.bf16.msra.mxu0 0
      %2625 = vmatprep.subr.bf16.mxu0 0
      %2626 = vmatpush1.bf16.msra.mxu0 0
      %2627 = vmatprep.subr.bf16.mxu0 0
      %2628 = vmatpush1.bf16.msra.mxu0 0
      %2629 = vmatprep.subr.bf16.mxu0 0
      %2630 = vmatpush1.bf16.msra.mxu0 0
      %2631 = vmatprep.subr.bf16.mxu0 0
      %2632 = vmatpush1.bf16.msra.mxu0 0
      %2633 = vmatprep.subr.bf16.mxu0 0
      %2634 = vmatpush1.bf16.msra.mxu0 0
      %2635 = vmatprep.subr.bf16.mxu0 0
      %2636 = vmatpush1.bf16.msra.mxu0 0
      %2637 = vmatprep.subr.bf16.mxu0 0
      %2638 = vmatpush1.bf16.msra.mxu0 0
      %2639 = vmatprep.subr.bf16.mxu0 0
      %2640 = vmatpush1.bf16.msra.mxu0 0
      %2641 = vmatprep.subr.bf16.mxu0 0
      %2642 = vmatpush1.bf16.msra.mxu0 0
      %2643 = vmatprep.subr.bf16.mxu0 0
      %2644 = vmatpush1.bf16.msra.mxu0 0
      %2645 = vmatprep.subr.bf16.mxu0 0
      %2646 = vmatpush1.bf16.msra.mxu0 0
      %2647 = vmatprep.subr.bf16.mxu0 0
      %2648 = vmatpush1.bf16.msra.mxu0 0
      %2649 = vmatprep.subr.bf16.mxu0 0
      %2650 = vmatpush1.bf16.msra.mxu0 0
      %2651 = vmatprep.subr.bf16.mxu0 0
      %2652 = vmatpush1.bf16.msra.mxu0 0
      %2653 = vmatprep.mubr.bf16.mxu0 0
      %2654 = vmatmul.mubr.bf16.gmra.mrb[0].mxu0 %v2578
      %v2655 = vpop.f32.mrb[0].mxu0
      %v2656 = vadd.f32 %v2415, %v2655
      %v2657 = vpop.f32.mrb[0].mxu0
      %v2658 = vpop.f32.mrb[0].mxu0
      %v2659 = vadd.f32 %v2418, %v2658
      %v2660 = vpop.f32.mrb[0].mxu0
      %2661 = vmatprep.mubr.bf16.mxu0 0
      %2662 = vmatmul.mubr.bf16.gmra.mrb[0].mxu0 %v2580
      %v2663 = vpop.f32.mrb[0].mxu0
      %v2664 = vadd.f32 %v2423, %v2663
      %v2665 = vpop.f32.mrb[0].mxu0
      %v2666 = vpop.f32.mrb[0].mxu0
      %v2667 = vadd.f32 %v2426, %v2666
      %v2668 = vpop.f32.mrb[0].mxu0
      %2669 = vmatprep.mubr.bf16.mxu0 0
      %2670 = vmatmul.mubr.bf16.gmra.mrb[0].mxu0 %v2582
      %v2671 = vpop.f32.mrb[0].mxu0
      %v2672 = vadd.f32 %v2431, %v2671
      %v2673 = vpop.f32.mrb[0].mxu0
      %v2674 = vpop.f32.mrb[0].mxu0
      %v2675 = vadd.f32 %v2434, %v2674
      %v2676 = vpop.f32.mrb[0].mxu0
      %2677 = vmatprep.mubr.bf16.mxu0 0
      %2678 = vmatmul.mubr.bf16.gmra.mrb[0].mxu0 %v2584
      %v2679 = vpop.f32.mrb[0].mxu0
      %v2680 = vadd.f32 %v2439, %v2679
      %v2681 = vpop.f32.mrb[0].mxu0
      %v2682 = vpop.f32.mrb[0].mxu0
      %v2683 = vadd.f32 %v2442, %v2682
      %v2684 = vpop.f32.mrb[0].mxu0
      %2685 = vmatprep.mubr.bf16.mxu0 0
      %2686 = vmatmul.mubr.bf16.gmra.mrb[0].mxu0 %v2586
      %v2687 = vpop.f32.mrb[0].mxu0
      %v2688 = vadd.f32 %v2447, %v2687
      %v2689 = vpop.f32.mrb[0].mxu0
      %v2690 = vpop.f32.mrb[0].mxu0
      %v2691 = vadd.f32 %v2450, %v2690
      %v2692 = vpop.f32.mrb[0].mxu0
      %2693 = vmatprep.mubr.bf16.mxu0 0
      %2694 = vmatmul.mubr.bf16.gmra.mrb[0].mxu0 %v2588
      %v2695 = vpop.f32.mrb[0].mxu0
      %v2696 = vadd.f32 %v2455, %v2695
      %v2697 = vpop.f32.mrb[0].mxu0
      %v2698 = vpop.f32.mrb[0].mxu0
      %v2699 = vadd.f32 %v2458, %v2698
      %v2700 = vpop.f32.mrb[0].mxu0
      %2701 = vmatprep.mubr.bf16.mxu0 0
      %2702 = vmatmul.mubr.bf16.gmra.mrb[0].mxu0 %v2590
      %v2703 = vpop.f32.mrb[0].mxu0
      %v2704 = vadd.f32 %v2463, %v2703
      %v2705 = vpop.f32.mrb[0].mxu0
      %v2706 = vpop.f32.mrb[0].mxu0
      %v2707 = vadd.f32 %v2466, %v2706
      %v2708 = vpop.f32.mrb[0].mxu0
      %2709 = vmatprep.mubr.bf16.mxu0 0
      %2710 = vmatmul.mubr.bf16.gmra.mrb[0].mxu0 %v2592
      %v2711 = vpop.f32.mrb[0].mxu0
      %v2712 = vadd.f32 %v2471, %v2711
      %v2713 = vpop.f32.mrb[0].mxu0
      %v2714 = vpop.f32.mrb[0].mxu0
      %v2715 = vadd.f32 %v2474, %v2714
      %v2716 = vpop.f32.mrb[0].mxu0
      %2717 = vmatprep.mubr.bf16.mxu0 0
      %2718 = vmatmul.mubr.bf16.gmra.mrb[0].mxu0 %v2594
      %v2719 = vpop.f32.mrb[0].mxu0
      %v2720 = vadd.f32 %v2479, %v2719
      %v2721 = vpop.f32.mrb[0].mxu0
      %v2722 = vpop.f32.mrb[0].mxu0
      %v2723 = vadd.f32 %v2482, %v2722
      %v2724 = vpop.f32.mrb[0].mxu0
      %2725 = vmatprep.mubr.bf16.mxu0 0
      %2726 = vmatmul.mubr.bf16.gmra.mrb[0].mxu0 %v2596
      %v2727 = vpop.f32.mrb[0].mxu0
      %v2728 = vadd.f32 %v2487, %v2727
      %v2729 = vpop.f32.mrb[0].mxu0
      %v2730 = vpop.f32.mrb[0].mxu0
      %v2731 = vadd.f32 %v2490, %v2730
      %v2732 = vpop.f32.mrb[0].mxu0
      %2733 = vmatprep.mubr.bf16.mxu0 0
      %2734 = vmatmul.mubr.bf16.gmra.mrb[0].mxu0 %v2598
      %v2735 = vpop.f32.mrb[0].mxu0
      %v2736 = vadd.f32 %v2495, %v2735
      %v2737 = vpop.f32.mrb[0].mxu0
      %v2738 = vpop.f32.mrb[0].mxu0
      %v2739 = vadd.f32 %v2498, %v2738
      %v2740 = vpop.f32.mrb[0].mxu0
      %2741 = vmatprep.mubr.bf16.mxu0 0
      %2742 = vmatmul.mubr.bf16.gmra.mrb[0].mxu0 %v2600
      %v2743 = vpop.f32.mrb[0].mxu0
      %v2744 = vadd.f32 %v2503, %v2743
      %v2745 = vpop.f32.mrb[0].mxu0
      %v2746 = vpop.f32.mrb[0].mxu0
      %v2747 = vadd.f32 %v2506, %v2746
      %v2748 = vpop.f32.mrb[0].mxu0
      %2749 = vmatprep.mubr.bf16.mxu0 0
      %2750 = vmatmul.mubr.bf16.gmra.mrb[0].mxu0 %v2602
      %v2751 = vpop.f32.mrb[0].mxu0
      %v2752 = vadd.f32 %v2511, %v2751
      %v2753 = vpop.f32.mrb[0].mxu0
      %v2754 = vpop.f32.mrb[0].mxu0
      %v2755 = vadd.f32 %v2514, %v2754
      %v2756 = vpop.f32.mrb[0].mxu0
      %2757 = vmatprep.mubr.bf16.mxu0 0
      %2758 = vmatmul.mubr.bf16.gmra.mrb[0].mxu0 %v2604
      %v2759 = vpop.f32.mrb[0].mxu0
      %v2760 = vadd.f32 %v2519, %v2759
      %v2761 = vpop.f32.mrb[0].mxu0
      %v2762 = vpop.f32.mrb[0].mxu0
      %v2763 = vadd.f32 %v2522, %v2762
      %v2764 = vpop.f32.mrb[0].mxu0
      %2765 = vmatprep.mubr.bf16.mxu0 0
      %2766 = vmatmul.mubr.bf16.gmra.mrb[0].mxu0 %v2606
      %v2767 = vpop.f32.mrb[0].mxu0
      %v2768 = vadd.f32 %v2527, %v2767
      %v2769 = vpop.f32.mrb[0].mxu0
      %v2770 = vpop.f32.mrb[0].mxu0
      %v2771 = vadd.f32 %v2530, %v2770
      %v2772 = vpop.f32.mrb[0].mxu0
      %2773 = vmatprep.mubr.bf16.mxu0 0
      %2774 = vmatmul.mubr.bf16.gmra.mrb[0].mxu0 %v2608
      %v2775 = vpop.f32.mrb[0].mxu0
      %v2776 = vadd.f32 %v2535, %v2775
      %v2777 = vpop.f32.mrb[0].mxu0
      %v2778 = vpop.f32.mrb[0].mxu0
      %v2779 = vadd.f32 %v2538, %v2778
      %v2780 = vpop.f32.mrb[0].mxu0
      %2781 = vmatprep.mubr.bf16.mxu0 0
      %2782 = vmatmul.mubr.bf16.gmra.mrb[0].mxu0 %v2610
      %v2783 = vpop.f32.mrb[0].mxu0
      %v2784 = vadd.f32 %v2543, %v2783
      %v2785 = vpop.f32.mrb[0].mxu0
      %v2786 = vpop.f32.mrb[0].mxu0
      %v2787 = vadd.f32 %v2546, %v2786
      %v2788 = vpop.f32.mrb[0].mxu0
      %2789 = vmatprep.mubr.bf16.mxu0 0
      %2790 = vmatmul.mubr.bf16.gmra.mrb[0].mxu0 %v2612
      %v2791 = vpop.f32.mrb[0].mxu0
      %v2792 = vadd.f32 %v2551, %v2791
      %v2793 = vpop.f32.mrb[0].mxu0
      %v2794 = vpop.f32.mrb[0].mxu0
      %v2795 = vadd.f32 %v2554, %v2794
      %v2796 = vpop.f32.mrb[0].mxu0
      %2797 = vmatprep.mubr.bf16.mxu0 0
      %2798 = vmatmul.mubr.bf16.gmra.mrb[0].mxu0 %v2614
      %v2799 = vpop.f32.mrb[0].mxu0
      %v2800 = vadd.f32 %v2559, %v2799
      %v2801 = vpop.f32.mrb[0].mxu0
      %v2802 = vpop.f32.mrb[0].mxu0
      %v2803 = vadd.f32 %v2562, %v2802
      %v2804 = vpop.f32.mrb[0].mxu0
      %2805 = vmatprep.mubr.bf16.mxu0 0
      %2806 = vmatmul.mubr.bf16.gmra.mrb[0].mxu0 %v2616
      %v2807 = vpop.f32.mrb[0].mxu0
      %v2808 = vadd.f32 %v2567, %v2807
      %v2809 = vpop.f32.mrb[0].mxu0
      %v2810 = vpop.f32.mrb[0].mxu0
      %v2811 = vadd.f32 %v2570, %v2810
      %v2812 = vpop.f32.mrb[0].mxu0
      %2813 = vdwg.mxu0
      %s2814 = sadd.s32 %s249, 2
      %s2815 = smul.u32 %s2814, 5
      %s2816 = smul.addr %s2815, 4
      %s2817 = scalar_lea.vmem %s237, %s2816
      %v2818 = vld [vmem:[%s2817] sm:$0xf]
      %v2819 = vld [vmem:[%s2817 + $0x4] sm:$0xf]
      %v2820 = vld [vmem:[%s2817 + $0x8] sm:$0xf]
      %v2821 = vld [vmem:[%s2817 + $0xc] sm:$0xf]
      %v2822 = vld [vmem:[%s2817 + $0x10] sm:$0x1]
      %v2823 = vld [vmem:[%s2817 + $0x14] sm:$0xf]
      %v2824 = vld [vmem:[%s2817 + $0x18] sm:$0xf]
      %v2825 = vld [vmem:[%s2817 + $0x1c] sm:$0xf]
      %v2826 = vld [vmem:[%s2817 + $0x20] sm:$0xf]
      %v2827 = vld [vmem:[%s2817 + $0x24] sm:$0x1]
      %v2828 = vld [vmem:[%s2817 + $0x28] sm:$0xf]
      %v2829 = vld [vmem:[%s2817 + $0x2c] sm:$0xf]
      %v2830 = vld [vmem:[%s2817 + $0x30] sm:$0xf]
      %v2831 = vld [vmem:[%s2817 + $0x34] sm:$0xf]
      %v2832 = vld [vmem:[%s2817 + $0x38] sm:$0x1]
      %v2833 = vld [vmem:[%s2817 + $0x3c] sm:$0xf]
      %v2834 = vld [vmem:[%s2817 + $0x40] sm:$0xf]
      %v2835 = vld [vmem:[%s2817 + $0x44] sm:$0xf]
      %v2836 = vld [vmem:[%s2817 + $0x48] sm:$0xf]
      %v2837 = vld [vmem:[%s2817 + $0x4c] sm:$0x1]
      %v2838 = vld [vmem:[%s2817 + $0x50] sm:$0xf]
      %v2839 = vld [vmem:[%s2817 + $0x54] sm:$0xf]
      %v2840 = vld [vmem:[%s2817 + $0x58] sm:$0xf]
      %v2841 = vld [vmem:[%s2817 + $0x5c] sm:$0xf]
      %v2842 = vld [vmem:[%s2817 + $0x60] sm:$0x1]
      %v2843 = vld [vmem:[%s2817 + $0x64] sm:$0xf]
      %v2844 = vld [vmem:[%s2817 + $0x68] sm:$0xf]
      %v2845 = vld [vmem:[%s2817 + $0x6c] sm:$0xf]
      %v2846 = vld [vmem:[%s2817 + $0x70] sm:$0xf]
      %v2847 = vld [vmem:[%s2817 + $0x74] sm:$0x1]
      %v2848 = vld [vmem:[%s2817 + $0x78] sm:$0xf]
      %v2849 = vld [vmem:[%s2817 + $0x7c] sm:$0xf]
      %v2850 = vld [vmem:[%s2817 + $0x80] sm:$0xf]
      %v2851 = vld [vmem:[%s2817 + $0x84] sm:$0xf]
      %v2852 = vld [vmem:[%s2817 + $0x88] sm:$0x1]
      %v2853 = vld [vmem:[%s2817 + $0x8c] sm:$0xf]
      %v2854 = vld [vmem:[%s2817 + $0x90] sm:$0xf]
      %v2855 = vld [vmem:[%s2817 + $0x94] sm:$0xf]
      %v2856 = vld [vmem:[%s2817 + $0x98] sm:$0xf]
      %v2857 = vld [vmem:[%s2817 + $0x9c] sm:$0x1]
      %v2858 = vld [vmem:[%s2817 + $0xa0] sm:$0xf]
      %v2859 = vld [vmem:[%s2817 + $0xa4] sm:$0xf]
      %v2860 = vld [vmem:[%s2817 + $0xa8] sm:$0xf]
      %v2861 = vld [vmem:[%s2817 + $0xac] sm:$0xf]
      %v2862 = vld [vmem:[%s2817 + $0xb0] sm:$0x1]
      %v2863 = vld [vmem:[%s2817 + $0xb4] sm:$0xf]
      %v2864 = vld [vmem:[%s2817 + $0xb8] sm:$0xf]
      %v2865 = vld [vmem:[%s2817 + $0xbc] sm:$0xf]
      %v2866 = vld [vmem:[%s2817 + $0xc0] sm:$0xf]
      %v2867 = vld [vmem:[%s2817 + $0xc4] sm:$0x1]
      %v2869 = vshrl.u32 %v2818, 16
      %v2871 = vrot.slane %v2869, 4
      %v2872 = vshll.u32 %v2818, 16
      %v2874 = vrot.slane %v2872, 5
      %v2875 = vor.u32 %v2871, %v2874
      %v2876 = vrot.slane %v2875, 4
      %v2878 = vshll.u32 %v2819, 16
      %v2880 = vrot.slane %v2878, 5
      %v2881 = vsel %vm305, %v2876, %v2880
      %v2882 = vshrl.u32 %v2819, 16
      %v2884 = vrot.slane %v2882, 4
      %v2885 = vor.u32 %v2884, %v2880
      %v2886 = vrot.slane %v2885, 4
      %v2888 = vshll.u32 %v2820, 16
      %v2890 = vrot.slane %v2888, 5
      %v2891 = vsel %vm305, %v2886, %v2890
      %v2892 = vshrl.u32 %v2820, 16
      %v2894 = vrot.slane %v2892, 4
      %v2895 = vor.u32 %v2894, %v2890
      %v2896 = vrot.slane %v2895, 4
      %v2898 = vshll.u32 %v2821, 16
      %v2900 = vrot.slane %v2898, 5
      %v2901 = vsel %vm305, %v2896, %v2900
      %v2902 = vshrl.u32 %v2821, 16
      %v2904 = vrot.slane %v2902, 4
      %v2905 = vor.u32 %v2904, %v2900
      %v2906 = vrot.slane %v2905, 4
      %v2908 = vshll.u32 %v2822, 16
      %v2910 = vrot.slane %v2908, 5
      %v2911 = vsel %vm305, %v2906, %v2910
      %v2913 = vshrl.u32 %v2823, 16
      %v2915 = vrot.slane %v2913, 4
      %v2916 = vshll.u32 %v2823, 16
      %v2918 = vrot.slane %v2916, 5
      %v2919 = vor.u32 %v2915, %v2918
      %v2920 = vrot.slane %v2919, 4
      %v2922 = vshll.u32 %v2824, 16
      %v2924 = vrot.slane %v2922, 5
      %v2925 = vsel %vm305, %v2920, %v2924
      %v2926 = vshrl.u32 %v2824, 16
      %v2928 = vrot.slane %v2926, 4
      %v2929 = vor.u32 %v2928, %v2924
      %v2930 = vrot.slane %v2929, 4
      %v2932 = vshll.u32 %v2825, 16
      %v2934 = vrot.slane %v2932, 5
      %v2935 = vsel %vm305, %v2930, %v2934
      %v2936 = vshrl.u32 %v2825, 16
      %v2938 = vrot.slane %v2936, 4
      %v2939 = vor.u32 %v2938, %v2934
      %v2940 = vrot.slane %v2939, 4
      %v2942 = vshll.u32 %v2826, 16
      %v2944 = vrot.slane %v2942, 5
      %v2945 = vsel %vm305, %v2940, %v2944
      %v2946 = vshrl.u32 %v2826, 16
      %v2948 = vrot.slane %v2946, 4
      %v2949 = vor.u32 %v2948, %v2944
      %v2950 = vrot.slane %v2949, 4
      %v2952 = vshll.u32 %v2827, 16
      %v2954 = vrot.slane %v2952, 5
      %v2955 = vsel %vm305, %v2950, %v2954
      %v2957 = vshrl.u32 %v2828, 16
      %v2959 = vrot.slane %v2957, 4
      %v2960 = vshll.u32 %v2828, 16
      %v2962 = vrot.slane %v2960, 5
      %v2963 = vor.u32 %v2959, %v2962
      %v2964 = vrot.slane %v2963, 4
      %v2966 = vshll.u32 %v2829, 16
      %v2968 = vrot.slane %v2966, 5
      %v2969 = vsel %vm305, %v2964, %v2968
      %v2970 = vshrl.u32 %v2829, 16
      %v2972 = vrot.slane %v2970, 4
      %v2973 = vor.u32 %v2972, %v2968
      %v2974 = vrot.slane %v2973, 4
      %v2976 = vshll.u32 %v2830, 16
      %v2978 = vrot.slane %v2976, 5
      %v2979 = vsel %vm305, %v2974, %v2978
      %v2980 = vshrl.u32 %v2830, 16
      %v2982 = vrot.slane %v2980, 4
      %v2983 = vor.u32 %v2982, %v2978
      %v2984 = vrot.slane %v2983, 4
      %v2986 = vshll.u32 %v2831, 16
      %v2988 = vrot.slane %v2986, 5
      %v2989 = vsel %vm305, %v2984, %v2988
      %v2990 = vshrl.u32 %v2831, 16
      %v2992 = vrot.slane %v2990, 4
      %v2993 = vor.u32 %v2992, %v2988
      %v2994 = vrot.slane %v2993, 4
      %v2996 = vshll.u32 %v2832, 16
      %v2998 = vrot.slane %v2996, 5
      %v2999 = vsel %vm305, %v2994, %v2998
      %v3001 = vshrl.u32 %v2833, 16
      %v3003 = vrot.slane %v3001, 4
      %v3004 = vshll.u32 %v2833, 16
      %v3006 = vrot.slane %v3004, 5
      %v3007 = vor.u32 %v3003, %v3006
      %v3008 = vrot.slane %v3007, 4
      %v3010 = vshll.u32 %v2834, 16
      %v3012 = vrot.slane %v3010, 5
      %v3013 = vsel %vm305, %v3008, %v3012
      %v3014 = vshrl.u32 %v2834, 16
      %v3016 = vrot.slane %v3014, 4
      %v3017 = vor.u32 %v3016, %v3012
      %v3018 = vrot.slane %v3017, 4
      %v3020 = vshll.u32 %v2835, 16
      %v3022 = vrot.slane %v3020, 5
      %v3023 = vsel %vm305, %v3018, %v3022
      %v3024 = vshrl.u32 %v2835, 16
      %v3026 = vrot.slane %v3024, 4
      %v3027 = vor.u32 %v3026, %v3022
      %v3028 = vrot.slane %v3027, 4
      %v3030 = vshll.u32 %v2836, 16
      %v3032 = vrot.slane %v3030, 5
      %v3033 = vsel %vm305, %v3028, %v3032
      %v3034 = vshrl.u32 %v2836, 16
      %v3036 = vrot.slane %v3034, 4
      %v3037 = vor.u32 %v3036, %v3032
      %v3038 = vrot.slane %v3037, 4
      %v3040 = vshll.u32 %v2837, 16
      %v3042 = vrot.slane %v3040, 5
      %v3043 = vsel %vm305, %v3038, %v3042
      %v3045 = vshrl.u32 %v2838, 16
      %v3047 = vrot.slane %v3045, 4
      %v3048 = vshll.u32 %v2838, 16
      %v3050 = vrot.slane %v3048, 5
      %v3051 = vor.u32 %v3047, %v3050
      %v3052 = vrot.slane %v3051, 4
      %v3054 = vshll.u32 %v2839, 16
      %v3056 = vrot.slane %v3054, 5
      %v3057 = vsel %vm305, %v3052, %v3056
      %v3058 = vshrl.u32 %v2839, 16
      %v3060 = vrot.slane %v3058, 4
      %v3061 = vor.u32 %v3060, %v3056
      %v3062 = vrot.slane %v3061, 4
      %v3064 = vshll.u32 %v2840, 16
      %v3066 = vrot.slane %v3064, 5
      %v3067 = vsel %vm305, %v3062, %v3066
      %v3068 = vshrl.u32 %v2840, 16
      %v3070 = vrot.slane %v3068, 4
      %v3071 = vor.u32 %v3070, %v3066
      %v3072 = vrot.slane %v3071, 4
      %v3074 = vshll.u32 %v2841, 16
      %v3076 = vrot.slane %v3074, 5
      %v3077 = vsel %vm305, %v3072, %v3076
      %v3078 = vshrl.u32 %v2841, 16
      %v3080 = vrot.slane %v3078, 4
      %v3081 = vor.u32 %v3080, %v3076
      %v3082 = vrot.slane %v3081, 4
      %v3084 = vshll.u32 %v2842, 16
      %v3086 = vrot.slane %v3084, 5
      %v3087 = vsel %vm305, %v3082, %v3086
      %v3089 = vshrl.u32 %v2843, 16
      %v3091 = vrot.slane %v3089, 4
      %v3092 = vshll.u32 %v2843, 16
      %v3094 = vrot.slane %v3092, 5
      %v3095 = vor.u32 %v3091, %v3094
      %v3096 = vrot.slane %v3095, 4
      %v3098 = vshll.u32 %v2844, 16
      %v3100 = vrot.slane %v3098, 5
      %v3101 = vsel %vm305, %v3096, %v3100
      %v3102 = vshrl.u32 %v2844, 16
      %v3104 = vrot.slane %v3102, 4
      %v3105 = vor.u32 %v3104, %v3100
      %v3106 = vrot.slane %v3105, 4
      %v3108 = vshll.u32 %v2845, 16
      %v3110 = vrot.slane %v3108, 5
      %v3111 = vsel %vm305, %v3106, %v3110
      %v3112 = vshrl.u32 %v2845, 16
      %v3114 = vrot.slane %v3112, 4
      %v3115 = vor.u32 %v3114, %v3110
      %v3116 = vrot.slane %v3115, 4
      %v3118 = vshll.u32 %v2846, 16
      %v3120 = vrot.slane %v3118, 5
      %v3121 = vsel %vm305, %v3116, %v3120
      %v3122 = vshrl.u32 %v2846, 16
      %v3124 = vrot.slane %v3122, 4
      %v3125 = vor.u32 %v3124, %v3120
      %v3126 = vrot.slane %v3125, 4
      %v3128 = vshll.u32 %v2847, 16
      %v3130 = vrot.slane %v3128, 5
      %v3131 = vsel %vm305, %v3126, %v3130
      %v3133 = vshrl.u32 %v2848, 16
      %v3135 = vrot.slane %v3133, 4
      %v3136 = vshll.u32 %v2848, 16
      %v3138 = vrot.slane %v3136, 5
      %v3139 = vor.u32 %v3135, %v3138
      %v3140 = vrot.slane %v3139, 4
      %v3142 = vshll.u32 %v2849, 16
      %v3144 = vrot.slane %v3142, 5
      %v3145 = vsel %vm305, %v3140, %v3144
      %v3146 = vshrl.u32 %v2849, 16
      %v3148 = vrot.slane %v3146, 4
      %v3149 = vor.u32 %v3148, %v3144
      %v3150 = vrot.slane %v3149, 4
      %v3152 = vshll.u32 %v2850, 16
      %v3154 = vrot.slane %v3152, 5
      %v3155 = vsel %vm305, %v3150, %v3154
      %v3156 = vshrl.u32 %v2850, 16
      %v3158 = vrot.slane %v3156, 4
      %v3159 = vor.u32 %v3158, %v3154
      %v3160 = vrot.slane %v3159, 4
      %v3162 = vshll.u32 %v2851, 16
      %v3164 = vrot.slane %v3162, 5
      %v3165 = vsel %vm305, %v3160, %v3164
      %v3166 = vshrl.u32 %v2851, 16
      %v3168 = vrot.slane %v3166, 4
      %v3169 = vor.u32 %v3168, %v3164
      %v3170 = vrot.slane %v3169, 4
      %v3172 = vshll.u32 %v2852, 16
      %v3174 = vrot.slane %v3172, 5
      %v3175 = vsel %vm305, %v3170, %v3174
      %v3177 = vshrl.u32 %v2853, 16
      %v3179 = vrot.slane %v3177, 4
      %v3180 = vshll.u32 %v2853, 16
      %v3182 = vrot.slane %v3180, 5
      %v3183 = vor.u32 %v3179, %v3182
      %v3184 = vrot.slane %v3183, 4
      %v3186 = vshll.u32 %v2854, 16
      %v3188 = vrot.slane %v3186, 5
      %v3189 = vsel %vm305, %v3184, %v3188
      %v3190 = vshrl.u32 %v2854, 16
      %v3192 = vrot.slane %v3190, 4
      %v3193 = vor.u32 %v3192, %v3188
      %v3194 = vrot.slane %v3193, 4
      %v3196 = vshll.u32 %v2855, 16
      %v3198 = vrot.slane %v3196, 5
      %v3199 = vsel %vm305, %v3194, %v3198
      %v3200 = vshrl.u32 %v2855, 16
      %v3202 = vrot.slane %v3200, 4
      %v3203 = vor.u32 %v3202, %v3198
      %v3204 = vrot.slane %v3203, 4
      %v3206 = vshll.u32 %v2856, 16
      %v3208 = vrot.slane %v3206, 5
      %v3209 = vsel %vm305, %v3204, %v3208
      %v3210 = vshrl.u32 %v2856, 16
      %v3212 = vrot.slane %v3210, 4
      %v3213 = vor.u32 %v3212, %v3208
      %v3214 = vrot.slane %v3213, 4
      %v3216 = vshll.u32 %v2857, 16
      %v3218 = vrot.slane %v3216, 5
      %v3219 = vsel %vm305, %v3214, %v3218
      %v3221 = vshrl.u32 %v2858, 16
      %v3223 = vrot.slane %v3221, 4
      %v3224 = vshll.u32 %v2858, 16
      %v3226 = vrot.slane %v3224, 5
      %v3227 = vor.u32 %v3223, %v3226
      %v3228 = vrot.slane %v3227, 4
      %v3230 = vshll.u32 %v2859, 16
      %v3232 = vrot.slane %v3230, 5
      %v3233 = vsel %vm305, %v3228, %v3232
      %v3234 = vshrl.u32 %v2859, 16
      %v3236 = vrot.slane %v3234, 4
      %v3237 = vor.u32 %v3236, %v3232
      %v3238 = vrot.slane %v3237, 4
      %v3240 = vshll.u32 %v2860, 16
      %v3242 = vrot.slane %v3240, 5
      %v3243 = vsel %vm305, %v3238, %v3242
      %v3244 = vshrl.u32 %v2860, 16
      %v3246 = vrot.slane %v3244, 4
      %v3247 = vor.u32 %v3246, %v3242
      %v3248 = vrot.slane %v3247, 4
      %v3250 = vshll.u32 %v2861, 16
      %v3252 = vrot.slane %v3250, 5
      %v3253 = vsel %vm305, %v3248, %v3252
      %v3254 = vshrl.u32 %v2861, 16
      %v3256 = vrot.slane %v3254, 4
      %v3257 = vor.u32 %v3256, %v3252
      %v3258 = vrot.slane %v3257, 4
      %v3260 = vshll.u32 %v2862, 16
      %v3262 = vrot.slane %v3260, 5
      %v3263 = vsel %vm305, %v3258, %v3262
      %v3265 = vshrl.u32 %v2863, 16
      %v3267 = vrot.slane %v3265, 4
      %v3268 = vshll.u32 %v2863, 16
      %v3270 = vrot.slane %v3268, 5
      %v3271 = vor.u32 %v3267, %v3270
      %v3272 = vrot.slane %v3271, 4
      %v3274 = vshll.u32 %v2864, 16
      %v3276 = vrot.slane %v3274, 5
      %v3277 = vsel %vm305, %v3272, %v3276
      %v3278 = vshrl.u32 %v2864, 16
      %v3280 = vrot.slane %v3278, 4
      %v3281 = vor.u32 %v3280, %v3276
      %v3282 = vrot.slane %v3281, 4
      %v3284 = vshll.u32 %v2865, 16
      %v3286 = vrot.slane %v3284, 5
      %v3287 = vsel %vm305, %v3282, %v3286
      %v3288 = vshrl.u32 %v2865, 16
      %v3290 = vrot.slane %v3288, 4
      %v3291 = vor.u32 %v3290, %v3286
      %v3292 = vrot.slane %v3291, 4
      %v3294 = vshll.u32 %v2866, 16
      %v3296 = vrot.slane %v3294, 5
      %v3297 = vsel %vm305, %v3292, %v3296
      %v3298 = vshrl.u32 %v2866, 16
      %v3300 = vrot.slane %v3298, 4
      %v3301 = vor.u32 %v3300, %v3296
      %v3302 = vrot.slane %v3301, 4
      %v3304 = vshll.u32 %v2867, 16
      %v3306 = vrot.slane %v3304, 5
      %v3307 = vsel %vm305, %v3302, %v3306
      %v3358 = vrot.slane %v2818, 5
      %v3359 = vrot.slane %v3358, 4
      %v3360 = vrot.slane %v2819, 5
      %v3361 = vsel %vm798, %v3359, %v3360
      %v3362 = vrot.slane %v3360, 4
      %v3363 = vrot.slane %v2820, 5
      %v3364 = vsel %vm798, %v3362, %v3363
      %v3365 = vrot.slane %v3363, 4
      %v3366 = vrot.slane %v2821, 5
      %v3367 = vsel %vm798, %v3365, %v3366
      %v3368 = vrot.slane %v3366, 4
      %v3369 = vrot.slane %v2822, 5
      %v3370 = vsel %vm798, %v3368, %v3369
      %v3371 = vrot.slane %v2823, 5
      %v3372 = vrot.slane %v3371, 4
      %v3373 = vrot.slane %v2824, 5
      %v3374 = vsel %vm798, %v3372, %v3373
      %v3375 = vrot.slane %v3373, 4
      %v3376 = vrot.slane %v2825, 5
      %v3377 = vsel %vm798, %v3375, %v3376
      %v3378 = vrot.slane %v3376, 4
      %v3379 = vrot.slane %v2826, 5
      %v3380 = vsel %vm798, %v3378, %v3379
      %v3381 = vrot.slane %v3379, 4
      %v3382 = vrot.slane %v2827, 5
      %v3383 = vsel %vm798, %v3381, %v3382
      %v3384 = vrot.slane %v2828, 5
      %v3385 = vrot.slane %v3384, 4
      %v3386 = vrot.slane %v2829, 5
      %v3387 = vsel %vm798, %v3385, %v3386
      %v3388 = vrot.slane %v3386, 4
      %v3389 = vrot.slane %v2830, 5
      %v3390 = vsel %vm798, %v3388, %v3389
      %v3391 = vrot.slane %v3389, 4
      %v3392 = vrot.slane %v2831, 5
      %v3393 = vsel %vm798, %v3391, %v3392
      %v3394 = vrot.slane %v3392, 4
      %v3395 = vrot.slane %v2832, 5
      %v3396 = vsel %vm798, %v3394, %v3395
      %v3397 = vrot.slane %v2833, 5
      %v3398 = vrot.slane %v3397, 4
      %v3399 = vrot.slane %v2834, 5
      %v3400 = vsel %vm798, %v3398, %v3399
      %v3401 = vrot.slane %v3399, 4
      %v3402 = vrot.slane %v2835, 5
      %v3403 = vsel %vm798, %v3401, %v3402
      %v3404 = vrot.slane %v3402, 4
      %v3405 = vrot.slane %v2836, 5
      %v3406 = vsel %vm798, %v3404, %v3405
      %v3407 = vrot.slane %v3405, 4
      %v3408 = vrot.slane %v2837, 5
      %v3409 = vsel %vm798, %v3407, %v3408
      %v3410 = vrot.slane %v2838, 5
      %v3411 = vrot.slane %v3410, 4
      %v3412 = vrot.slane %v2839, 5
      %v3413 = vsel %vm798, %v3411, %v3412
      %v3414 = vrot.slane %v3412, 4
      %v3415 = vrot.slane %v2840, 5
      %v3416 = vsel %vm798, %v3414, %v3415
      %v3417 = vrot.slane %v3415, 4
      %v3418 = vrot.slane %v2841, 5
      %v3419 = vsel %vm798, %v3417, %v3418
      %v3420 = vrot.slane %v3418, 4
      %v3421 = vrot.slane %v2842, 5
      %v3422 = vsel %vm798, %v3420, %v3421
      %v3423 = vrot.slane %v2843, 5
      %v3424 = vrot.slane %v3423, 4
      %v3425 = vrot.slane %v2844, 5
      %v3426 = vsel %vm798, %v3424, %v3425
      %v3427 = vrot.slane %v3425, 4
      %v3428 = vrot.slane %v2845, 5
      %v3429 = vsel %vm798, %v3427, %v3428
      %v3430 = vrot.slane %v3428, 4
      %v3431 = vrot.slane %v2846, 5
      %v3432 = vsel %vm798, %v3430, %v3431
      %v3433 = vrot.slane %v3431, 4
      %v3434 = vrot.slane %v2847, 5
      %v3435 = vsel %vm798, %v3433, %v3434
      %v3436 = vrot.slane %v2848, 5
      %v3437 = vrot.slane %v3436, 4
      %v3438 = vrot.slane %v2849, 5
      %v3439 = vsel %vm798, %v3437, %v3438
      %v3440 = vrot.slane %v3438, 4
      %v3441 = vrot.slane %v2850, 5
      %v3442 = vsel %vm798, %v3440, %v3441
      %v3443 = vrot.slane %v3441, 4
      %v3444 = vrot.slane %v2851, 5
      %v3445 = vsel %vm798, %v3443, %v3444
      %v3446 = vrot.slane %v3444, 4
      %v3447 = vrot.slane %v2852, 5
      %v3448 = vsel %vm798, %v3446, %v3447
      %v3449 = vrot.slane %v2853, 5
      %v3450 = vrot.slane %v3449, 4
      %v3451 = vrot.slane %v2854, 5
      %v3452 = vsel %vm798, %v3450, %v3451
      %v3453 = vrot.slane %v3451, 4
      %v3454 = vrot.slane %v2855, 5
      %v3455 = vsel %vm798, %v3453, %v3454
      %v3456 = vrot.slane %v3454, 4
      %v3457 = vrot.slane %v2856, 5
      %v3458 = vsel %vm798, %v3456, %v3457
      %v3459 = vrot.slane %v3457, 4
      %v3460 = vrot.slane %v2857, 5
      %v3461 = vsel %vm798, %v3459, %v3460
      %v3462 = vrot.slane %v2858, 5
      %v3463 = vrot.slane %v3462, 4
      %v3464 = vrot.slane %v2859, 5
      %v3465 = vsel %vm798, %v3463, %v3464
      %v3466 = vrot.slane %v3464, 4
      %v3467 = vrot.slane %v2860, 5
      %v3468 = vsel %vm798, %v3466, %v3467
      %v3469 = vrot.slane %v3467, 4
      %v3470 = vrot.slane %v2861, 5
      %v3471 = vsel %vm798, %v3469, %v3470
      %v3472 = vrot.slane %v3470, 4
      %v3473 = vrot.slane %v2862, 5
      %v3474 = vsel %vm798, %v3472, %v3473
      %v3475 = vrot.slane %v2863, 5
      %v3476 = vrot.slane %v3475, 4
      %v3477 = vrot.slane %v2864, 5
      %v3478 = vsel %vm798, %v3476, %v3477
      %v3479 = vrot.slane %v3477, 4
      %v3480 = vrot.slane %v2865, 5
      %v3481 = vsel %vm798, %v3479, %v3480
      %v3482 = vrot.slane %v3480, 4
      %v3483 = vrot.slane %v2866, 5
      %v3484 = vsel %vm798, %v3482, %v3483
      %v3485 = vrot.slane %v3483, 4
      %v3486 = vrot.slane %v2867, 5
      %v3487 = vsel %vm798, %v3485, %v3486
      %v3488 = vunpack.c.l.b16 %v2818
      %v3489 = vunpack.c.l.b16 %v2819
      %v3490 = vunpack.c.l.b16 %v2820
      %v3491 = vunpack.c.l.b16 %v2821
      %v3492 = vunpack.c.l.b16 %v2823
      %v3493 = vunpack.c.l.b16 %v2824
      %v3494 = vunpack.c.l.b16 %v2825
      %v3495 = vunpack.c.l.b16 %v2826
      %v3496 = vunpack.c.l.b16 %v2828
      %v3497 = vunpack.c.l.b16 %v2829
      %v3498 = vunpack.c.l.b16 %v2830
      %v3499 = vunpack.c.l.b16 %v2831
      %v3500 = vunpack.c.l.b16 %v2833
      %v3501 = vunpack.c.l.b16 %v2834
      %v3502 = vunpack.c.l.b16 %v2835
      %v3503 = vunpack.c.l.b16 %v2836
      %v3504 = vunpack.c.l.b16 %v2838
      %v3505 = vunpack.c.l.b16 %v2839
      %v3506 = vunpack.c.l.b16 %v2840
      %v3507 = vunpack.c.l.b16 %v2841
      %v3508 = vunpack.c.l.b16 %v2843
      %v3509 = vunpack.c.l.b16 %v2844
      %v3510 = vunpack.c.l.b16 %v2845
      %v3511 = vunpack.c.l.b16 %v2846
      %v3512 = vunpack.c.l.b16 %v2848
      %v3513 = vunpack.c.l.b16 %v2849
      %v3514 = vunpack.c.l.b16 %v2850
      %v3515 = vunpack.c.l.b16 %v2851
      %v3516 = vunpack.c.l.b16 %v2853
      %v3517 = vunpack.c.l.b16 %v2854
      %v3518 = vunpack.c.l.b16 %v2855
      %v3519 = vunpack.c.l.b16 %v2856
      %v3520 = vunpack.c.l.b16 %v2858
      %v3521 = vunpack.c.l.b16 %v2859
      %v3522 = vunpack.c.l.b16 %v2860
      %v3523 = vunpack.c.l.b16 %v2861
      %v3524 = vunpack.c.l.b16 %v2863
      %v3525 = vunpack.c.l.b16 %v2864
      %v3526 = vunpack.c.l.b16 %v2865
      %v3527 = vunpack.c.l.b16 %v2866
      %v3528 = vpack.c.b16 %v3489, %v3488
      %v3529 = vpack.c.b16 %v3491, %v3490
      %v3530 = vpack.c.b16 %v3493, %v3492
      %v3531 = vpack.c.b16 %v3495, %v3494
      %v3532 = vpack.c.b16 %v3497, %v3496
      %v3533 = vpack.c.b16 %v3499, %v3498
      %v3534 = vpack.c.b16 %v3501, %v3500
      %v3535 = vpack.c.b16 %v3503, %v3502
      %v3536 = vpack.c.b16 %v3505, %v3504
      %v3537 = vpack.c.b16 %v3507, %v3506
      %v3538 = vpack.c.b16 %v3509, %v3508
      %v3539 = vpack.c.b16 %v3511, %v3510
      %v3540 = vpack.c.b16 %v3513, %v3512
      %v3541 = vpack.c.b16 %v3515, %v3514
      %v3542 = vpack.c.b16 %v3517, %v3516
      %v3543 = vpack.c.b16 %v3519, %v3518
      %v3544 = vpack.c.b16 %v3521, %v3520
      %v3545 = vpack.c.b16 %v3523, %v3522
      %v3546 = vpack.c.b16 %v3525, %v3524
      %v3547 = vpack.c.b16 %v3527, %v3526
      %v3548 = vunpack.c.l.b16 %v2881
      %v3549 = vunpack.c.l.b16 %v2891
      %v3550 = vunpack.c.l.b16 %v2901
      %v3551 = vunpack.c.l.b16 %v2911
      %v3552 = vunpack.c.l.b16 %v2925
      %v3553 = vunpack.c.l.b16 %v2935
      %v3554 = vunpack.c.l.b16 %v2945
      %v3555 = vunpack.c.l.b16 %v2955
      %v3556 = vunpack.c.l.b16 %v2969
      %v3557 = vunpack.c.l.b16 %v2979
      %v3558 = vunpack.c.l.b16 %v2989
      %v3559 = vunpack.c.l.b16 %v2999
      %v3560 = vunpack.c.l.b16 %v3013
      %v3561 = vunpack.c.l.b16 %v3023
      %v3562 = vunpack.c.l.b16 %v3033
      %v3563 = vunpack.c.l.b16 %v3043
      %v3564 = vunpack.c.l.b16 %v3057
      %v3565 = vunpack.c.l.b16 %v3067
      %v3566 = vunpack.c.l.b16 %v3077
      %v3567 = vunpack.c.l.b16 %v3087
      %v3568 = vunpack.c.l.b16 %v3101
      %v3569 = vunpack.c.l.b16 %v3111
      %v3570 = vunpack.c.l.b16 %v3121
      %v3571 = vunpack.c.l.b16 %v3131
      %v3572 = vunpack.c.l.b16 %v3145
      %v3573 = vunpack.c.l.b16 %v3155
      %v3574 = vunpack.c.l.b16 %v3165
      %v3575 = vunpack.c.l.b16 %v3175
      %v3576 = vunpack.c.l.b16 %v3189
      %v3577 = vunpack.c.l.b16 %v3199
      %v3578 = vunpack.c.l.b16 %v3209
      %v3579 = vunpack.c.l.b16 %v3219
      %v3580 = vunpack.c.l.b16 %v3233
      %v3581 = vunpack.c.l.b16 %v3243
      %v3582 = vunpack.c.l.b16 %v3253
      %v3583 = vunpack.c.l.b16 %v3263
      %v3584 = vunpack.c.l.b16 %v3277
      %v3585 = vunpack.c.l.b16 %v3287
      %v3586 = vunpack.c.l.b16 %v3297
      %v3587 = vunpack.c.l.b16 %v3307
      %v3588 = vpack.c.b16 %v3549, %v3548
      %v3589 = vpack.c.b16 %v3551, %v3550
      %v3590 = vpack.c.b16 %v3553, %v3552
      %v3591 = vpack.c.b16 %v3555, %v3554
      %v3592 = vpack.c.b16 %v3557, %v3556
      %v3593 = vpack.c.b16 %v3559, %v3558
      %v3594 = vpack.c.b16 %v3561, %v3560
      %v3595 = vpack.c.b16 %v3563, %v3562
      %v3596 = vpack.c.b16 %v3565, %v3564
      %v3597 = vpack.c.b16 %v3567, %v3566
      %v3598 = vpack.c.b16 %v3569, %v3568
      %v3599 = vpack.c.b16 %v3571, %v3570
      %v3600 = vpack.c.b16 %v3573, %v3572
      %v3601 = vpack.c.b16 %v3575, %v3574
      %v3602 = vpack.c.b16 %v3577, %v3576
      %v3603 = vpack.c.b16 %v3579, %v3578
      %v3604 = vpack.c.b16 %v3581, %v3580
      %v3605 = vpack.c.b16 %v3583, %v3582
      %v3606 = vpack.c.b16 %v3585, %v3584
      %v3607 = vpack.c.b16 %v3587, %v3586
      %3608 = vrot.lane.b32.xlu0 %v3588, 4
      %v3609 = vpop.permute.xlu0 %3608
      %3610 = vrot.lane.b32.xlu0 %v3589, 4
      %v3611 = vpop.permute.xlu0 %3610
      %3612 = vrot.lane.b32.xlu0 %v3590, 4
      %v3613 = vpop.permute.xlu0 %3612
      %3614 = vrot.lane.b32.xlu0 %v3591, 4
      %v3615 = vpop.permute.xlu0 %3614
      %3616 = vrot.lane.b32.xlu0 %v3592, 4
      %v3617 = vpop.permute.xlu0 %3616
      %3618 = vrot.lane.b32.xlu0 %v3593, 4
      %v3619 = vpop.permute.xlu0 %3618
      %3620 = vrot.lane.b32.xlu0 %v3594, 4
      %v3621 = vpop.permute.xlu0 %3620
      %3622 = vrot.lane.b32.xlu0 %v3595, 4
      %v3623 = vpop.permute.xlu0 %3622
      %3624 = vrot.lane.b32.xlu0 %v3596, 4
      %v3625 = vpop.permute.xlu0 %3624
      %3626 = vrot.lane.b32.xlu0 %v3597, 4
      %v3627 = vpop.permute.xlu0 %3626
      %3628 = vrot.lane.b32.xlu0 %v3598, 4
      %v3629 = vpop.permute.xlu0 %3628
      %3630 = vrot.lane.b32.xlu0 %v3599, 4
      %v3631 = vpop.permute.xlu0 %3630
      %3632 = vrot.lane.b32.xlu0 %v3600, 4
      %v3633 = vpop.permute.xlu0 %3632
      %3634 = vrot.lane.b32.xlu0 %v3601, 4
      %v3635 = vpop.permute.xlu0 %3634
      %3636 = vrot.lane.b32.xlu0 %v3602, 4
      %v3637 = vpop.permute.xlu0 %3636
      %3638 = vrot.lane.b32.xlu0 %v3603, 4
      %v3639 = vpop.permute.xlu0 %3638
      %3640 = vrot.lane.b32.xlu0 %v3604, 4
      %v3641 = vpop.permute.xlu0 %3640
      %3642 = vrot.lane.b32.xlu0 %v3605, 4
      %v3643 = vpop.permute.xlu0 %3642
      %3644 = vrot.lane.b32.xlu0 %v3606, 4
      %v3645 = vpop.permute.xlu0 %3644
      %3646 = vrot.lane.b32.xlu0 %v3607, 4
      %v3647 = vpop.permute.xlu0 %3646
      %v3648 = vunpack.c.l.b16 %v3361
      %v3649 = vunpack.c.l.b16 %v3364
      %v3650 = vunpack.c.l.b16 %v3367
      %v3651 = vunpack.c.l.b16 %v3370
      %v3652 = vunpack.c.l.b16 %v3374
      %v3653 = vunpack.c.l.b16 %v3377
      %v3654 = vunpack.c.l.b16 %v3380
      %v3655 = vunpack.c.l.b16 %v3383
      %v3656 = vunpack.c.l.b16 %v3387
      %v3657 = vunpack.c.l.b16 %v3390
      %v3658 = vunpack.c.l.b16 %v3393
      %v3659 = vunpack.c.l.b16 %v3396
      %v3660 = vunpack.c.l.b16 %v3400
      %v3661 = vunpack.c.l.b16 %v3403
      %v3662 = vunpack.c.l.b16 %v3406
      %v3663 = vunpack.c.l.b16 %v3409
      %v3664 = vunpack.c.l.b16 %v3413
      %v3665 = vunpack.c.l.b16 %v3416
      %v3666 = vunpack.c.l.b16 %v3419
      %v3667 = vunpack.c.l.b16 %v3422
      %v3668 = vunpack.c.l.b16 %v3426
      %v3669 = vunpack.c.l.b16 %v3429
      %v3670 = vunpack.c.l.b16 %v3432
      %v3671 = vunpack.c.l.b16 %v3435
      %v3672 = vunpack.c.l.b16 %v3439
      %v3673 = vunpack.c.l.b16 %v3442
      %v3674 = vunpack.c.l.b16 %v3445
      %v3675 = vunpack.c.l.b16 %v3448
      %v3676 = vunpack.c.l.b16 %v3452
      %v3677 = vunpack.c.l.b16 %v3455
      %v3678 = vunpack.c.l.b16 %v3458
      %v3679 = vunpack.c.l.b16 %v3461
      %v3680 = vunpack.c.l.b16 %v3465
      %v3681 = vunpack.c.l.b16 %v3468
      %v3682 = vunpack.c.l.b16 %v3471
      %v3683 = vunpack.c.l.b16 %v3474
      %v3684 = vunpack.c.l.b16 %v3478
      %v3685 = vunpack.c.l.b16 %v3481
      %v3686 = vunpack.c.l.b16 %v3484
      %v3687 = vunpack.c.l.b16 %v3487
      %v3688 = vpack.c.b16 %v3649, %v3648
      %v3689 = vpack.c.b16 %v3651, %v3650
      %v3690 = vpack.c.b16 %v3653, %v3652
      %v3691 = vpack.c.b16 %v3655, %v3654
      %v3692 = vpack.c.b16 %v3657, %v3656
      %v3693 = vpack.c.b16 %v3659, %v3658
      %v3694 = vpack.c.b16 %v3661, %v3660
      %v3695 = vpack.c.b16 %v3663, %v3662
      %v3696 = vpack.c.b16 %v3665, %v3664
      %v3697 = vpack.c.b16 %v3667, %v3666
      %v3698 = vpack.c.b16 %v3669, %v3668
      %v3699 = vpack.c.b16 %v3671, %v3670
      %v3700 = vpack.c.b16 %v3673, %v3672
      %v3701 = vpack.c.b16 %v3675, %v3674
      %v3702 = vpack.c.b16 %v3677, %v3676
      %v3703 = vpack.c.b16 %v3679, %v3678
      %v3704 = vpack.c.b16 %v3681, %v3680
      %v3705 = vpack.c.b16 %v3683, %v3682
      %v3706 = vpack.c.b16 %v3685, %v3684
      %v3707 = vpack.c.b16 %v3687, %v3686
      %3708 = vrot.lane.b32.xlu0 %v3688, 8
      %v3709 = vpop.permute.xlu0 %3708
      %3710 = vrot.lane.b32.xlu0 %v3689, 8
      %v3711 = vpop.permute.xlu0 %3710
      %3712 = vrot.lane.b32.xlu0 %v3690, 8
      %v3713 = vpop.permute.xlu0 %3712
      %3714 = vrot.lane.b32.xlu0 %v3691, 8
      %v3715 = vpop.permute.xlu0 %3714
      %3716 = vrot.lane.b32.xlu0 %v3692, 8
      %v3717 = vpop.permute.xlu0 %3716
      %3718 = vrot.lane.b32.xlu0 %v3693, 8
      %v3719 = vpop.permute.xlu0 %3718
      %3720 = vrot.lane.b32.xlu0 %v3694, 8
      %v3721 = vpop.permute.xlu0 %3720
      %3722 = vrot.lane.b32.xlu0 %v3695, 8
      %v3723 = vpop.permute.xlu0 %3722
      %3724 = vrot.lane.b32.xlu0 %v3696, 8
      %v3725 = vpop.permute.xlu0 %3724
      %3726 = vrot.lane.b32.xlu0 %v3697, 8
      %v3727 = vpop.permute.xlu0 %3726
      %3728 = vrot.lane.b32.xlu0 %v3698, 8
      %v3729 = vpop.permute.xlu0 %3728
      %3730 = vrot.lane.b32.xlu0 %v3699, 8
      %v3731 = vpop.permute.xlu0 %3730
      %3732 = vrot.lane.b32.xlu0 %v3700, 8
      %v3733 = vpop.permute.xlu0 %3732
      %3734 = vrot.lane.b32.xlu0 %v3701, 8
      %v3735 = vpop.permute.xlu0 %3734
      %3736 = vrot.lane.b32.xlu0 %v3702, 8
      %v3737 = vpop.permute.xlu0 %3736
      %3738 = vrot.lane.b32.xlu0 %v3703, 8
      %v3739 = vpop.permute.xlu0 %3738
      %3740 = vrot.lane.b32.xlu0 %v3704, 8
      %v3741 = vpop.permute.xlu0 %3740
      %3742 = vrot.lane.b32.xlu0 %v3705, 8
      %v3743 = vpop.permute.xlu0 %3742
      %3744 = vrot.lane.b32.xlu0 %v3706, 8
      %v3745 = vpop.permute.xlu0 %3744
      %3746 = vrot.lane.b32.xlu0 %v3707, 8
      %v3747 = vpop.permute.xlu0 %3746
      %v3750 = vsel %vm1189, %v3528, %v3609
      %v3753 = vsel %vm1189, %v3529, %v3611
      %v3756 = vsel %vm1189, %v3530, %v3613
      %v3759 = vsel %vm1189, %v3531, %v3615
      %v3762 = vsel %vm1189, %v3532, %v3617
      %v3765 = vsel %vm1189, %v3533, %v3619
      %v3768 = vsel %vm1189, %v3534, %v3621
      %v3771 = vsel %vm1189, %v3535, %v3623
      %v3774 = vsel %vm1189, %v3536, %v3625
      %v3777 = vsel %vm1189, %v3537, %v3627
      %v3780 = vsel %vm1189, %v3538, %v3629
      %v3783 = vsel %vm1189, %v3539, %v3631
      %v3786 = vsel %vm1189, %v3540, %v3633
      %v3789 = vsel %vm1189, %v3541, %v3635
      %v3792 = vsel %vm1189, %v3542, %v3637
      %v3795 = vsel %vm1189, %v3543, %v3639
      %v3798 = vsel %vm1189, %v3544, %v3641
      %v3801 = vsel %vm1189, %v3545, %v3643
      %v3804 = vsel %vm1189, %v3546, %v3645
      %v3807 = vsel %vm1189, %v3547, %v3647
      %v3809 = vsel %vm1250, %v3750, %v3709
      %v3811 = vsel %vm1250, %v3753, %v3711
      %v3813 = vsel %vm1250, %v3756, %v3713
      %v3815 = vsel %vm1250, %v3759, %v3715
      %v3817 = vsel %vm1250, %v3762, %v3717
      %v3819 = vsel %vm1250, %v3765, %v3719
      %v3821 = vsel %vm1250, %v3768, %v3721
      %v3823 = vsel %vm1250, %v3771, %v3723
      %v3825 = vsel %vm1250, %v3774, %v3725
      %v3827 = vsel %vm1250, %v3777, %v3727
      %v3829 = vsel %vm1250, %v3780, %v3729
      %v3831 = vsel %vm1250, %v3783, %v3731
      %v3833 = vsel %vm1250, %v3786, %v3733
      %v3835 = vsel %vm1250, %v3789, %v3735
      %v3837 = vsel %vm1250, %v3792, %v3737
      %v3839 = vsel %vm1250, %v3795, %v3739
      %v3841 = vsel %vm1250, %v3798, %v3741
      %v3843 = vsel %vm1250, %v3801, %v3743
      %v3845 = vsel %vm1250, %v3804, %v3745
      %v3847 = vsel %vm1250, %v3807, %v3747
      %s3848 = scalar_lea.vmem %s1, 16
      %v3849 = vld [vmem:[%s3848] sm:$0xf]
      %v3850 = vld [vmem:[%s3848 + $0x4] sm:$0x3]
      %v3853 = vunpack.c.l.b16 %v3849
      %v3854 = vunpack.c.l.b16 %v3850
      %v3855 = vpack.c.b16 %v3854, %v3853
      %v3856 = vsel %vm2335, %v3809, 0
      %v3858 = vsel %vm2335, %v3811, 0
      %v3860 = vsel %vm2335, %v3813, 0
      %v3862 = vsel %vm2335, %v3815, 0
      %v3864 = vsel %vm2335, %v3817, 0
      %v3866 = vsel %vm2335, %v3819, 0
      %v3868 = vsel %vm2335, %v3821, 0
      %v3870 = vsel %vm2335, %v3823, 0
      %v3872 = vsel %vm2335, %v3825, 0
      %v3874 = vsel %vm2335, %v3827, 0
      %v3876 = vsel %vm2335, %v3829, 0
      %v3878 = vsel %vm2335, %v3831, 0
      %v3880 = vsel %vm2335, %v3833, 0
      %v3882 = vsel %vm2335, %v3835, 0
      %v3884 = vsel %vm2335, %v3837, 0
      %v3886 = vsel %vm2335, %v3839, 0
      %v3888 = vsel %vm2335, %v3841, 0
      %v3890 = vsel %vm2335, %v3843, 0
      %v3892 = vsel %vm2335, %v3845, 0
      %v3894 = vsel %vm2335, %v3847, 0
      %v3897 = vsel %vm2376, %v3855, 0
      %3899 = vmatprep.subr.bf16.mxu0 0
      %3900 = vmatpush1.bf16.msra.mxu0 %v3897
      %3901 = vmatprep.subr.bf16.mxu0 0
      %3902 = vmatpush1.bf16.msra.mxu0 0
      %3903 = vmatprep.subr.bf16.mxu0 0
      %3904 = vmatpush1.bf16.msra.mxu0 0
      %3905 = vmatprep.subr.bf16.mxu0 0
      %3906 = vmatpush1.bf16.msra.mxu0 0
      %3907 = vmatprep.subr.bf16.mxu0 0
      %3908 = vmatpush1.bf16.msra.mxu0 0
      %3909 = vmatprep.subr.bf16.mxu0 0
      %3910 = vmatpush1.bf16.msra.mxu0 0
      %3911 = vmatprep.subr.bf16.mxu0 0
      %3912 = vmatpush1.bf16.msra.mxu0 0
      %3913 = vmatprep.subr.bf16.mxu0 0
      %3914 = vmatpush1.bf16.msra.mxu0 0
      %3915 = vmatprep.subr.bf16.mxu0 0
      %3916 = vmatpush1.bf16.msra.mxu0 0
      %3917 = vmatprep.subr.bf16.mxu0 0
      %3918 = vmatpush1.bf16.msra.mxu0 0
      %3919 = vmatprep.subr.bf16.mxu0 0
      %3920 = vmatpush1.bf16.msra.mxu0 0
      %3921 = vmatprep.subr.bf16.mxu0 0
      %3922 = vmatpush1.bf16.msra.mxu0 0
      %3923 = vmatprep.subr.bf16.mxu0 0
      %3924 = vmatpush1.bf16.msra.mxu0 0
      %3925 = vmatprep.subr.bf16.mxu0 0
      %3926 = vmatpush1.bf16.msra.mxu0 0
      %3927 = vmatprep.subr.bf16.mxu0 0
      %3928 = vmatpush1.bf16.msra.mxu0 0
      %3929 = vmatprep.subr.bf16.mxu0 0
      %3930 = vmatpush1.bf16.msra.mxu0 0
      %3931 = vmatprep.mubr.bf16.mxu0 0
      %3932 = vmatmul.mubr.bf16.gmra.mrb[0].mxu0 %v3856
      %v3933 = vpop.f32.mrb[0].mxu0
      %v3934 = vadd.f32 0.0, %v3933
      %v3935 = vpop.f32.mrb[0].mxu0
      %v3936 = vpop.f32.mrb[0].mxu0
      %v3937 = vadd.f32 0.0, %v3936
      %v3938 = vpop.f32.mrb[0].mxu0
      %3939 = vmatprep.mubr.bf16.mxu0 0
      %3940 = vmatmul.mubr.bf16.gmra.mrb[0].mxu0 %v3858
      %v3941 = vpop.f32.mrb[0].mxu0
      %v3942 = vadd.f32 0.0, %v3941
      %v3943 = vpop.f32.mrb[0].mxu0
      %v3944 = vpop.f32.mrb[0].mxu0
      %v3945 = vadd.f32 0.0, %v3944
      %v3946 = vpop.f32.mrb[0].mxu0
      %3947 = vmatprep.mubr.bf16.mxu0 0
      %3948 = vmatmul.mubr.bf16.gmra.mrb[0].mxu0 %v3860
      %v3949 = vpop.f32.mrb[0].mxu0
      %v3950 = vadd.f32 0.0, %v3949
      %v3951 = vpop.f32.mrb[0].mxu0
      %v3952 = vpop.f32.mrb[0].mxu0
      %v3953 = vadd.f32 0.0, %v3952
      %v3954 = vpop.f32.mrb[0].mxu0
      %3955 = vmatprep.mubr.bf16.mxu0 0
      %3956 = vmatmul.mubr.bf16.gmra.mrb[0].mxu0 %v3862
      %v3957 = vpop.f32.mrb[0].mxu0
      %v3958 = vadd.f32 0.0, %v3957
      %v3959 = vpop.f32.mrb[0].mxu0
      %v3960 = vpop.f32.mrb[0].mxu0
      %v3961 = vadd.f32 0.0, %v3960
      %v3962 = vpop.f32.mrb[0].mxu0
      %3963 = vmatprep.mubr.bf16.mxu0 0
      %3964 = vmatmul.mubr.bf16.gmra.mrb[0].mxu0 %v3864
      %v3965 = vpop.f32.mrb[0].mxu0
      %v3966 = vadd.f32 0.0, %v3965
      %v3967 = vpop.f32.mrb[0].mxu0
      %v3968 = vpop.f32.mrb[0].mxu0
      %v3969 = vadd.f32 0.0, %v3968
      %v3970 = vpop.f32.mrb[0].mxu0
      %3971 = vmatprep.mubr.bf16.mxu0 0
      %3972 = vmatmul.mubr.bf16.gmra.mrb[0].mxu0 %v3866
      %v3973 = vpop.f32.mrb[0].mxu0
      %v3974 = vadd.f32 0.0, %v3973
      %v3975 = vpop.f32.mrb[0].mxu0
      %v3976 = vpop.f32.mrb[0].mxu0
      %v3977 = vadd.f32 0.0, %v3976
      %v3978 = vpop.f32.mrb[0].mxu0
      %3979 = vmatprep.mubr.bf16.mxu0 0
      %3980 = vmatmul.mubr.bf16.gmra.mrb[0].mxu0 %v3868
      %v3981 = vpop.f32.mrb[0].mxu0
      %v3982 = vadd.f32 0.0, %v3981
      %v3983 = vpop.f32.mrb[0].mxu0
      %v3984 = vpop.f32.mrb[0].mxu0
      %v3985 = vadd.f32 0.0, %v3984
      %v3986 = vpop.f32.mrb[0].mxu0
      %3987 = vmatprep.mubr.bf16.mxu0 0
      %3988 = vmatmul.mubr.bf16.gmra.mrb[0].mxu0 %v3870
      %v3989 = vpop.f32.mrb[0].mxu0
      %v3990 = vadd.f32 0.0, %v3989
      %v3991 = vpop.f32.mrb[0].mxu0
      %v3992 = vpop.f32.mrb[0].mxu0
      %v3993 = vadd.f32 0.0, %v3992
      %v3994 = vpop.f32.mrb[0].mxu0
      %3995 = vmatprep.mubr.bf16.mxu0 0
      %3996 = vmatmul.mubr.bf16.gmra.mrb[0].mxu0 %v3872
      %v3997 = vpop.f32.mrb[0].mxu0
      %v3998 = vadd.f32 0.0, %v3997
      %v3999 = vpop.f32.mrb[0].mxu0
      %v4000 = vpop.f32.mrb[0].mxu0
      %v4001 = vadd.f32 0.0, %v4000
      %v4002 = vpop.f32.mrb[0].mxu0
      %4003 = vmatprep.mubr.bf16.mxu0 0
      %4004 = vmatmul.mubr.bf16.gmra.mrb[0].mxu0 %v3874
      %v4005 = vpop.f32.mrb[0].mxu0
      %v4006 = vadd.f32 0.0, %v4005
      %v4007 = vpop.f32.mrb[0].mxu0
      %v4008 = vpop.f32.mrb[0].mxu0
      %v4009 = vadd.f32 0.0, %v4008
      %v4010 = vpop.f32.mrb[0].mxu0
      %4011 = vmatprep.mubr.bf16.mxu0 0
      %4012 = vmatmul.mubr.bf16.gmra.mrb[0].mxu0 %v3876
      %v4013 = vpop.f32.mrb[0].mxu0
      %v4014 = vadd.f32 0.0, %v4013
      %v4015 = vpop.f32.mrb[0].mxu0
      %v4016 = vpop.f32.mrb[0].mxu0
      %v4017 = vadd.f32 0.0, %v4016
      %v4018 = vpop.f32.mrb[0].mxu0
      %4019 = vmatprep.mubr.bf16.mxu0 0
      %4020 = vmatmul.mubr.bf16.gmra.mrb[0].mxu0 %v3878
      %v4021 = vpop.f32.mrb[0].mxu0
      %v4022 = vadd.f32 0.0, %v4021
      %v4023 = vpop.f32.mrb[0].mxu0
      %v4024 = vpop.f32.mrb[0].mxu0
      %v4025 = vadd.f32 0.0, %v4024
      %v4026 = vpop.f32.mrb[0].mxu0
      %4027 = vmatprep.mubr.bf16.mxu0 0
      %4028 = vmatmul.mubr.bf16.gmra.mrb[0].mxu0 %v3880
      %v4029 = vpop.f32.mrb[0].mxu0
      %v4030 = vadd.f32 0.0, %v4029
      %v4031 = vpop.f32.mrb[0].mxu0
      %v4032 = vpop.f32.mrb[0].mxu0
      %v4033 = vadd.f32 0.0, %v4032
      %v4034 = vpop.f32.mrb[0].mxu0
      %4035 = vmatprep.mubr.bf16.mxu0 0
      %4036 = vmatmul.mubr.bf16.gmra.mrb[0].mxu0 %v3882
      %v4037 = vpop.f32.mrb[0].mxu0
      %v4038 = vadd.f32 0.0, %v4037
      %v4039 = vpop.f32.mrb[0].mxu0
      %v4040 = vpop.f32.mrb[0].mxu0
      %v4041 = vadd.f32 0.0, %v4040
      %v4042 = vpop.f32.mrb[0].mxu0
      %4043 = vmatprep.mubr.bf16.mxu0 0
      %4044 = vmatmul.mubr.bf16.gmra.mrb[0].mxu0 %v3884
      %v4045 = vpop.f32.mrb[0].mxu0
      %v4046 = vadd.f32 0.0, %v4045
      %v4047 = vpop.f32.mrb[0].mxu0
      %v4048 = vpop.f32.mrb[0].mxu0
      %v4049 = vadd.f32 0.0, %v4048
      %v4050 = vpop.f32.mrb[0].mxu0
      %4051 = vmatprep.mubr.bf16.mxu0 0
      %4052 = vmatmul.mubr.bf16.gmra.mrb[0].mxu0 %v3886
      %v4053 = vpop.f32.mrb[0].mxu0
      %v4054 = vadd.f32 0.0, %v4053
      %v4055 = vpop.f32.mrb[0].mxu0
      %v4056 = vpop.f32.mrb[0].mxu0
      %v4057 = vadd.f32 0.0, %v4056
      %v4058 = vpop.f32.mrb[0].mxu0
      %4059 = vmatprep.mubr.bf16.mxu0 0
      %4060 = vmatmul.mubr.bf16.gmra.mrb[0].mxu0 %v3888
      %v4061 = vpop.f32.mrb[0].mxu0
      %v4062 = vadd.f32 0.0, %v4061
      %v4063 = vpop.f32.mrb[0].mxu0
      %v4064 = vpop.f32.mrb[0].mxu0
      %v4065 = vadd.f32 0.0, %v4064
      %v4066 = vpop.f32.mrb[0].mxu0
      %4067 = vmatprep.mubr.bf16.mxu0 0
      %4068 = vmatmul.mubr.bf16.gmra.mrb[0].mxu0 %v3890
      %v4069 = vpop.f32.mrb[0].mxu0
      %v4070 = vadd.f32 0.0, %v4069
      %v4071 = vpop.f32.mrb[0].mxu0
      %v4072 = vpop.f32.mrb[0].mxu0
      %v4073 = vadd.f32 0.0, %v4072
      %v4074 = vpop.f32.mrb[0].mxu0
      %4075 = vmatprep.mubr.bf16.mxu0 0
      %4076 = vmatmul.mubr.bf16.gmra.mrb[0].mxu0 %v3892
      %v4077 = vpop.f32.mrb[0].mxu0
      %v4078 = vadd.f32 0.0, %v4077
      %v4079 = vpop.f32.mrb[0].mxu0
      %v4080 = vpop.f32.mrb[0].mxu0
      %v4081 = vadd.f32 0.0, %v4080
      %v4082 = vpop.f32.mrb[0].mxu0
      %4083 = vmatprep.mubr.bf16.mxu0 0
      %4084 = vmatmul.mubr.bf16.gmra.mrb[0].mxu0 %v3894
      %v4085 = vpop.f32.mrb[0].mxu0
      %v4086 = vadd.f32 0.0, %v4085
      %v4087 = vpop.f32.mrb[0].mxu0
      %v4088 = vpop.f32.mrb[0].mxu0
      %v4089 = vadd.f32 0.0, %v4088
      %v4090 = vpop.f32.mrb[0].mxu0
      %4091 = vdwg.mxu0
      %v4092 = vadd.f32 %v2656, %v3934
      %v4093 = vadd.f32 %v2659, %v3937
      %v4094 = vadd.f32 %v2664, %v3942
      %v4095 = vadd.f32 %v2667, %v3945
      %v4096 = vadd.f32 %v2672, %v3950
      %v4097 = vadd.f32 %v2675, %v3953
      %v4098 = vadd.f32 %v2680, %v3958
      %v4099 = vadd.f32 %v2683, %v3961
      %v4100 = vadd.f32 %v2688, %v3966
      %v4101 = vadd.f32 %v2691, %v3969
      %v4102 = vadd.f32 %v2696, %v3974
      %v4103 = vadd.f32 %v2699, %v3977
      %v4104 = vadd.f32 %v2704, %v3982
      %v4105 = vadd.f32 %v2707, %v3985
      %v4106 = vadd.f32 %v2712, %v3990
      %v4107 = vadd.f32 %v2715, %v3993
      %v4108 = vadd.f32 %v2720, %v3998
      %v4109 = vadd.f32 %v2723, %v4001
      %v4110 = vadd.f32 %v2728, %v4006
      %v4111 = vadd.f32 %v2731, %v4009
      %v4112 = vadd.f32 %v2736, %v4014
      %v4113 = vadd.f32 %v2739, %v4017
      %v4114 = vadd.f32 %v2744, %v4022
      %v4115 = vadd.f32 %v2747, %v4025
      %v4116 = vadd.f32 %v2752, %v4030
      %v4117 = vadd.f32 %v2755, %v4033
      %v4118 = vadd.f32 %v2760, %v4038
      %v4119 = vadd.f32 %v2763, %v4041
      %v4120 = vadd.f32 %v2768, %v4046
      %v4121 = vadd.f32 %v2771, %v4049
      %v4122 = vadd.f32 %v2776, %v4054
      %v4123 = vadd.f32 %v2779, %v4057
      %v4124 = vadd.f32 %v2784, %v4062
      %v4125 = vadd.f32 %v2787, %v4065
      %v4126 = vadd.f32 %v2792, %v4070
      %v4127 = vadd.f32 %v2795, %v4073
      %v4128 = vadd.f32 %v2800, %v4078
      %v4129 = vadd.f32 %v2803, %v4081
      %v4130 = vadd.f32 %v2808, %v4086
      %v4131 = vadd.f32 %v2811, %v4089
      %v4132 = vld [vmem:[%s3] sm:$0x1]
      %v4133 = vlaneseq
      %v4134 = vshrl.u32 %v4133, 7
      %v4135 = vsub.s32 0, %v4134
      %v4136 = vrot.slane %v4132, %v4135
      %v4137 = vadd.f32 %v4092, %v4136
      %v4138 = vadd.f32 %v4093, %v4136
      %v4139 = vadd.f32 %v4094, %v4136
      %v4140 = vadd.f32 %v4095, %v4136
      %v4141 = vadd.f32 %v4096, %v4136
      %v4142 = vadd.f32 %v4097, %v4136
      %v4143 = vadd.f32 %v4098, %v4136
      %v4144 = vadd.f32 %v4099, %v4136
      %v4145 = vadd.f32 %v4100, %v4136
      %v4146 = vadd.f32 %v4101, %v4136
      %v4147 = vadd.f32 %v4102, %v4136
      %v4148 = vadd.f32 %v4103, %v4136
      %v4149 = vadd.f32 %v4104, %v4136
      %v4150 = vadd.f32 %v4105, %v4136
      %v4151 = vadd.f32 %v4106, %v4136
      %v4152 = vadd.f32 %v4107, %v4136
      %v4153 = vadd.f32 %v4108, %v4136
      %v4154 = vadd.f32 %v4109, %v4136
      %v4155 = vadd.f32 %v4110, %v4136
      %v4156 = vadd.f32 %v4111, %v4136
      %v4157 = vadd.f32 %v4112, %v4136
      %v4158 = vadd.f32 %v4113, %v4136
      %v4159 = vadd.f32 %v4114, %v4136
      %v4160 = vadd.f32 %v4115, %v4136
      %v4161 = vadd.f32 %v4116, %v4136
      %v4162 = vadd.f32 %v4117, %v4136
      %v4163 = vadd.f32 %v4118, %v4136
      %v4164 = vadd.f32 %v4119, %v4136
      %v4165 = vadd.f32 %v4120, %v4136
      %v4166 = vadd.f32 %v4121, %v4136
      %v4167 = vadd.f32 %v4122, %v4136
      %v4168 = vadd.f32 %v4123, %v4136
      %v4169 = vadd.f32 %v4124, %v4136
      %v4170 = vadd.f32 %v4125, %v4136
      %v4171 = vadd.f32 %v4126, %v4136
      %v4172 = vadd.f32 %v4127, %v4136
      %v4173 = vadd.f32 %v4128, %v4136
      %v4174 = vadd.f32 %v4129, %v4136
      %v4175 = vadd.f32 %v4130, %v4136
      %v4176 = vadd.f32 %v4131, %v4136
      %v4177 = vmax.f32 %v4137, 0.0
      %v4178 = vmax.f32 %v4138, 0.0
      %v4179 = vmax.f32 %v4139, 0.0
      %v4180 = vmax.f32 %v4140, 0.0
      %v4181 = vmax.f32 %v4141, 0.0
      %v4182 = vmax.f32 %v4142, 0.0
      %v4183 = vmax.f32 %v4143, 0.0
      %v4184 = vmax.f32 %v4144, 0.0
      %v4185 = vmax.f32 %v4145, 0.0
      %v4186 = vmax.f32 %v4146, 0.0
      %v4187 = vmax.f32 %v4147, 0.0
      %v4188 = vmax.f32 %v4148, 0.0
      %v4189 = vmax.f32 %v4149, 0.0
      %v4190 = vmax.f32 %v4150, 0.0
      %v4191 = vmax.f32 %v4151, 0.0
      %v4192 = vmax.f32 %v4152, 0.0
      %v4193 = vmax.f32 %v4153, 0.0
      %v4194 = vmax.f32 %v4154, 0.0
      %v4195 = vmax.f32 %v4155, 0.0
      %v4196 = vmax.f32 %v4156, 0.0
      %v4197 = vmax.f32 %v4157, 0.0
      %v4198 = vmax.f32 %v4158, 0.0
      %v4199 = vmax.f32 %v4159, 0.0
      %v4200 = vmax.f32 %v4160, 0.0
      %v4201 = vmax.f32 %v4161, 0.0
      %v4202 = vmax.f32 %v4162, 0.0
      %v4203 = vmax.f32 %v4163, 0.0
      %v4204 = vmax.f32 %v4164, 0.0
      %v4205 = vmax.f32 %v4165, 0.0
      %v4206 = vmax.f32 %v4166, 0.0
      %v4207 = vmax.f32 %v4167, 0.0
      %v4208 = vmax.f32 %v4168, 0.0
      %v4209 = vmax.f32 %v4169, 0.0
      %v4210 = vmax.f32 %v4170, 0.0
      %v4211 = vmax.f32 %v4171, 0.0
      %v4212 = vmax.f32 %v4172, 0.0
      %v4213 = vmax.f32 %v4173, 0.0
      %v4214 = vmax.f32 %v4174, 0.0
      %v4215 = vmax.f32 %v4175, 0.0
      %v4216 = vmax.f32 %v4176, 0.0
      %v4217 = vld [vmem:[%s3 + $0x1] sm:$0x1]
      %v4218 = vlaneseq
      %v4219 = vshrl.u32 %v4218, 7
      %v4220 = vsub.s32 0, %v4219
      %v4221 = vrot.slane %v4217, %v4220
      %v4222 = vmul.f32 %v4177, %v4221
      %v4223 = vmul.f32 %v4178, %v4221
      %v4224 = vmul.f32 %v4179, %v4221
      %v4225 = vmul.f32 %v4180, %v4221
      %v4226 = vmul.f32 %v4181, %v4221
      %v4227 = vmul.f32 %v4182, %v4221
      %v4228 = vmul.f32 %v4183, %v4221
      %v4229 = vmul.f32 %v4184, %v4221
      %v4230 = vmul.f32 %v4185, %v4221
      %v4231 = vmul.f32 %v4186, %v4221
      %v4232 = vmul.f32 %v4187, %v4221
      %v4233 = vmul.f32 %v4188, %v4221
      %v4234 = vmul.f32 %v4189, %v4221
      %v4235 = vmul.f32 %v4190, %v4221
      %v4236 = vmul.f32 %v4191, %v4221
      %v4237 = vmul.f32 %v4192, %v4221
      %v4238 = vmul.f32 %v4193, %v4221
      %v4239 = vmul.f32 %v4194, %v4221
      %v4240 = vmul.f32 %v4195, %v4221
      %v4241 = vmul.f32 %v4196, %v4221
      %v4242 = vmul.f32 %v4197, %v4221
      %v4243 = vmul.f32 %v4198, %v4221
      %v4244 = vmul.f32 %v4199, %v4221
      %v4245 = vmul.f32 %v4200, %v4221
      %v4246 = vmul.f32 %v4201, %v4221
      %v4247 = vmul.f32 %v4202, %v4221
      %v4248 = vmul.f32 %v4203, %v4221
      %v4249 = vmul.f32 %v4204, %v4221
      %v4250 = vmul.f32 %v4205, %v4221
      %v4251 = vmul.f32 %v4206, %v4221
      %v4252 = vmul.f32 %v4207, %v4221
      %v4253 = vmul.f32 %v4208, %v4221
      %v4254 = vmul.f32 %v4209, %v4221
      %v4255 = vmul.f32 %v4210, %v4221
      %v4256 = vmul.f32 %v4211, %v4221
      %v4257 = vmul.f32 %v4212, %v4221
      %v4258 = vmul.f32 %v4213, %v4221
      %v4259 = vmul.f32 %v4214, %v4221
      %v4260 = vmul.f32 %v4215, %v4221
      %v4261 = vmul.f32 %v4216, %v4221
      %v4262 = vld [vmem:[%s3 + $0x2] sm:$0x1]
      %v4263 = vlaneseq
      %v4264 = vshrl.u32 %v4263, 7
      %v4265 = vsub.s32 0, %v4264
      %v4266 = vrot.slane %v4262, %v4265
      %v4267 = vadd.f32 %v4222, %v4266
      %v4268 = vadd.f32 %v4223, %v4266
      %v4269 = vadd.f32 %v4224, %v4266
      %v4270 = vadd.f32 %v4225, %v4266
      %v4271 = vadd.f32 %v4226, %v4266
      %v4272 = vadd.f32 %v4227, %v4266
      %v4273 = vadd.f32 %v4228, %v4266
      %v4274 = vadd.f32 %v4229, %v4266
      %v4275 = vadd.f32 %v4230, %v4266
      %v4276 = vadd.f32 %v4231, %v4266
      %v4277 = vadd.f32 %v4232, %v4266
      %v4278 = vadd.f32 %v4233, %v4266
      %v4279 = vadd.f32 %v4234, %v4266
      %v4280 = vadd.f32 %v4235, %v4266
      %v4281 = vadd.f32 %v4236, %v4266
      %v4282 = vadd.f32 %v4237, %v4266
      %v4283 = vadd.f32 %v4238, %v4266
      %v4284 = vadd.f32 %v4239, %v4266
      %v4285 = vadd.f32 %v4240, %v4266
      %v4286 = vadd.f32 %v4241, %v4266
      %v4287 = vadd.f32 %v4242, %v4266
      %v4288 = vadd.f32 %v4243, %v4266
      %v4289 = vadd.f32 %v4244, %v4266
      %v4290 = vadd.f32 %v4245, %v4266
      %v4291 = vadd.f32 %v4246, %v4266
      %v4292 = vadd.f32 %v4247, %v4266
      %v4293 = vadd.f32 %v4248, %v4266
      %v4294 = vadd.f32 %v4249, %v4266
      %v4295 = vadd.f32 %v4250, %v4266
      %v4296 = vadd.f32 %v4251, %v4266
      %v4297 = vadd.f32 %v4252, %v4266
      %v4298 = vadd.f32 %v4253, %v4266
      %v4299 = vadd.f32 %v4254, %v4266
      %v4300 = vadd.f32 %v4255, %v4266
      %v4301 = vadd.f32 %v4256, %v4266
      %v4302 = vadd.f32 %v4257, %v4266
      %v4303 = vadd.f32 %v4258, %v4266
      %v4304 = vadd.f32 %v4259, %v4266
      %v4305 = vadd.f32 %v4260, %v4266
      %v4306 = vadd.f32 %v4261, %v4266
      %v4307 = vpack.c.bf16 %v4268, %v4267
      %v4308 = vpack.c.bf16 %v4270, %v4269
      %v4309 = vpack.c.bf16 %v4272, %v4271
      %v4310 = vpack.c.bf16 %v4274, %v4273
      %v4311 = vpack.c.bf16 %v4276, %v4275
      %v4312 = vpack.c.bf16 %v4278, %v4277
      %v4313 = vpack.c.bf16 %v4280, %v4279
      %v4314 = vpack.c.bf16 %v4282, %v4281
      %v4315 = vpack.c.bf16 %v4284, %v4283
      %v4316 = vpack.c.bf16 %v4286, %v4285
      %v4317 = vpack.c.bf16 %v4288, %v4287
      %v4318 = vpack.c.bf16 %v4290, %v4289
      %v4319 = vpack.c.bf16 %v4292, %v4291
      %v4320 = vpack.c.bf16 %v4294, %v4293
      %v4321 = vpack.c.bf16 %v4296, %v4295
      %v4322 = vpack.c.bf16 %v4298, %v4297
      %v4323 = vpack.c.bf16 %v4300, %v4299
      %v4324 = vpack.c.bf16 %v4302, %v4301
      %v4325 = vpack.c.bf16 %v4304, %v4303
      %v4326 = vpack.c.bf16 %v4306, %v4305
      %4327 = vst.msk [vmem:[#allocation2] sm:$0xff] %vm1250, %v4307
      %4328 = vst.msk [vmem:[#allocation2 + $0x8] sm:$0xff] %vm1250, %v4308
      %4329 = vst.msk [vmem:[#allocation2 + $0x10] sm:$0xff] %vm1250, %v4309
      %4330 = vst.msk [vmem:[#allocation2 + $0x18] sm:$0xff] %vm1250, %v4310
      %4331 = vst.msk [vmem:[#allocation2 + $0x20] sm:$0xff] %vm1250, %v4311
      %4332 = vst.msk [vmem:[#allocation2 + $0x28] sm:$0xff] %vm1250, %v4312
      %4333 = vst.msk [vmem:[#allocation2 + $0x30] sm:$0xff] %vm1250, %v4313
      %4334 = vst.msk [vmem:[#allocation2 + $0x38] sm:$0xff] %vm1250, %v4314
      %4335 = vst.msk [vmem:[#allocation2 + $0x40] sm:$0xff] %vm1250, %v4315
      %4336 = vst.msk [vmem:[#allocation2 + $0x48] sm:$0xff] %vm1250, %v4316
      %4337 = vst.msk [vmem:[#allocation2 + $0x50] sm:$0xff] %vm1250, %v4317
      %4338 = vst.msk [vmem:[#allocation2 + $0x58] sm:$0xff] %vm1250, %v4318
      %4339 = vst.msk [vmem:[#allocation2 + $0x60] sm:$0xff] %vm1250, %v4319
      %4340 = vst.msk [vmem:[#allocation2 + $0x68] sm:$0xff] %vm1250, %v4320
      %4341 = vst.msk [vmem:[#allocation2 + $0x70] sm:$0xff] %vm1250, %v4321
      %4342 = vst.msk [vmem:[#allocation2 + $0x78] sm:$0xff] %vm1250, %v4322
      %4343 = vst.msk [vmem:[#allocation2 + $0x80] sm:$0xff] %vm1250, %v4323
      %4344 = vst.msk [vmem:[#allocation2 + $0x88] sm:$0xff] %vm1250, %v4324
      %4345 = vst.msk [vmem:[#allocation2 + $0x90] sm:$0xff] %vm1250, %v4325
      %4346 = vst.msk [vmem:[#allocation2 + $0x98] sm:$0xff] %vm1250, %v4326
      %vm4347 = vcmask 57344
      %vm4348 = vsmask.f32 256
      %vm4349 = vmand %vm4347, %vm4348
      %v4350 = vld [vmem:[#allocation2] sm:$0x1]
      %v4351 = vsel %vm4349, 0, %v4350
      %4352 = vst [vmem:[#allocation2] sm:$0x1] %v4351
      %v4353 = vld [vmem:[#allocation2 + $0x10] sm:$0x1]
      %v4354 = vsel %vm4349, 0, %v4353
      %4355 = vst [vmem:[#allocation2 + $0x10] sm:$0x1] %v4354
      %v4356 = vld [vmem:[#allocation2 + $0x20] sm:$0x1]
      %v4357 = vsel %vm4349, 0, %v4356
      %4358 = vst [vmem:[#allocation2 + $0x20] sm:$0x1] %v4357
      %v4359 = vld [vmem:[#allocation2 + $0x30] sm:$0x1]
      %v4360 = vsel %vm4349, 0, %v4359
      %4361 = vst [vmem:[#allocation2 + $0x30] sm:$0x1] %v4360
      %v4362 = vld [vmem:[#allocation2 + $0x40] sm:$0x1]
      %v4363 = vsel %vm4349, 0, %v4362
      %4364 = vst [vmem:[#allocation2 + $0x40] sm:$0x1] %v4363
      %v4365 = vld [vmem:[#allocation2 + $0x50] sm:$0x1]
      %v4366 = vsel %vm4349, 0, %v4365
      %4367 = vst [vmem:[#allocation2 + $0x50] sm:$0x1] %v4366
      %v4368 = vld [vmem:[#allocation2 + $0x60] sm:$0x1]
      %v4369 = vsel %vm4349, 0, %v4368
      %4370 = vst [vmem:[#allocation2 + $0x60] sm:$0x1] %v4369
      %v4371 = vld [vmem:[#allocation2 + $0x70] sm:$0x1]
      %v4372 = vsel %vm4349, 0, %v4371
      %4373 = vst [vmem:[#allocation2 + $0x70] sm:$0x1] %v4372
      %v4374 = vld [vmem:[#allocation2 + $0x80] sm:$0x1]
      %v4375 = vsel %vm4349, 0, %v4374
      %4376 = vst [vmem:[#allocation2 + $0x80] sm:$0x1] %v4375
      %v4377 = vld [vmem:[#allocation2 + $0x90] sm:$0x1]
      %v4378 = vsel %vm4349, 0, %v4377
      %4379 = vst [vmem:[#allocation2 + $0x90] sm:$0x1] %v4378
      %vm4380 = vcmask 64512
      %vm4381 = vsmask.f32 7938
      %vm4382 = vmand %vm4380, %vm4381
      %v4383 = vld [vmem:[#allocation2 + $0x8] sm:$0xff]
      %v4384 = vsel %vm4382, 0, %v4383
      %4385 = vst [vmem:[#allocation2 + $0x8] sm:$0xff] %v4384
      %v4386 = vld [vmem:[#allocation2 + $0x18] sm:$0xff]
      %v4387 = vsel %vm4382, 0, %v4386
      %4388 = vst [vmem:[#allocation2 + $0x18] sm:$0xff] %v4387
      %v4389 = vld [vmem:[#allocation2 + $0x28] sm:$0xff]
      %v4390 = vsel %vm4382, 0, %v4389
      %4391 = vst [vmem:[#allocation2 + $0x28] sm:$0xff] %v4390
      %v4392 = vld [vmem:[#allocation2 + $0x38] sm:$0xff]
      %v4393 = vsel %vm4382, 0, %v4392
      %4394 = vst [vmem:[#allocation2 + $0x38] sm:$0xff] %v4393
      %v4395 = vld [vmem:[#allocation2 + $0x48] sm:$0xff]
      %v4396 = vsel %vm4382, 0, %v4395
      %4397 = vst [vmem:[#allocation2 + $0x48] sm:$0xff] %v4396
      %v4398 = vld [vmem:[#allocation2 + $0x58] sm:$0xff]
      %v4399 = vsel %vm4382, 0, %v4398
      %4400 = vst [vmem:[#allocation2 + $0x58] sm:$0xff] %v4399
      %v4401 = vld [vmem:[#allocation2 + $0x68] sm:$0xff]
      %v4402 = vsel %vm4382, 0, %v4401
      %4403 = vst [vmem:[#allocation2 + $0x68] sm:$0xff] %v4402
      %v4404 = vld [vmem:[#allocation2 + $0x78] sm:$0xff]
      %v4405 = vsel %vm4382, 0, %v4404
      %4406 = vst [vmem:[#allocation2 + $0x78] sm:$0xff] %v4405
      %v4407 = vld [vmem:[#allocation2 + $0x88] sm:$0xff]
      %v4408 = vsel %vm4382, 0, %v4407
      %4409 = vst [vmem:[#allocation2 + $0x88] sm:$0xff] %v4408
      %v4410 = vld [vmem:[#allocation2 + $0x98] sm:$0xff]
      %v4411 = vsel %vm4382, 0, %v4410
      %4412 = vst [vmem:[#allocation2 + $0x98] sm:$0xff] %v4411
      %p4413 = scmp.eq.s32.totalorder %s21, 0
      // Predicated region
      $region41: #{tpu_custom_call.1} parent=39 // pred_check
        %p4414 = pneg %p4413
      $region42: #{tpu_custom_call.1} parent=39 // pred_check_branch
        %4416 = sbr.rel (%p4414) target = $region44
      $region43: #{tpu_custom_call.1} parent=39 // pred_region
        %4417 = vst.msk [vmem:[#allocation2] sm:$0xff] %vm1250, 0
        %4418 = vst.msk [vmem:[#allocation2 + $0x8] sm:$0xff] %vm1250, 0
      $region44: #{tpu_custom_call.1} parent=39 // pred_fallthru
        _
      %p4419 = scmp.eq.s32.totalorder %s21, 1
      // Predicated region
      $region45: #{tpu_custom_call.1} parent=39 // pred_check
        %p4420 = pneg %p4419
      $region46: #{tpu_custom_call.1} parent=39 // pred_check_branch
        %4422 = sbr.rel (%p4420) target = $region48
      $region47: #{tpu_custom_call.1} parent=39 // pred_region
        %s4423 = scalar_lea.vmem [#allocation2], 144
        %4424 = vst.msk [vmem:[%s4423] sm:$0xff] %vm1250, 0
        %4425 = vst.msk [vmem:[%s4423 + $0x8] sm:$0xff] %vm1250, 0
      $region48: #{tpu_custom_call.1} parent=39 // pred_fallthru
        _
      %v4426 = vld [vmem:[#allocation2] sm:$0xff]
      %v4427 = vld [vmem:[#allocation2 + $0x8] sm:$0xff]
      %v4428 = vld [vmem:[#allocation2 + $0x10] sm:$0xff]
      %v4429 = vld [vmem:[#allocation2 + $0x18] sm:$0xff]
      %v4430 = vld [vmem:[#allocation2 + $0x20] sm:$0xff]
      %v4431 = vld [vmem:[#allocation2 + $0x28] sm:$0xff]
      %v4432 = vld [vmem:[#allocation2 + $0x30] sm:$0xff]
      %v4433 = vld [vmem:[#allocation2 + $0x38] sm:$0xff]
      %v4434 = vld [vmem:[#allocation2 + $0x40] sm:$0xff]
      %v4435 = vld [vmem:[#allocation2 + $0x48] sm:$0xff]
      %v4436 = vld [vmem:[#allocation2 + $0x50] sm:$0xff]
      %v4437 = vld [vmem:[#allocation2 + $0x58] sm:$0xff]
      %v4438 = vld [vmem:[#allocation2 + $0x60] sm:$0xff]
      %v4439 = vld [vmem:[#allocation2 + $0x68] sm:$0xff]
      %v4440 = vld [vmem:[#allocation2 + $0x70] sm:$0xff]
      %v4441 = vld [vmem:[#allocation2 + $0x78] sm:$0xff]
      %vm4442 = vsmask.f32 7424
      %v4444 = vshrl.u32 %v4426, 16
      %v4446 = vshll.u32 %v4426, 16
      %v4448 = vrot.slane %v4446, 1
      %v4449 = vor.u32 %v4444, %v4448
      %v4451 = vshll.u32 %v4427, 16
      %v4453 = vrot.slane %v4451, 1
      %v4454 = vsel %vm4442, %v4449, %v4453
      %v4456 = vshrl.u32 %v4428, 16
      %v4458 = vshll.u32 %v4428, 16
      %v4460 = vrot.slane %v4458, 1
      %v4461 = vor.u32 %v4456, %v4460
      %v4463 = vshll.u32 %v4429, 16
      %v4465 = vrot.slane %v4463, 1
      %v4466 = vsel %vm4442, %v4461, %v4465
      %v4468 = vshrl.u32 %v4430, 16
      %v4470 = vshll.u32 %v4430, 16
      %v4472 = vrot.slane %v4470, 1
      %v4473 = vor.u32 %v4468, %v4472
      %v4475 = vshll.u32 %v4431, 16
      %v4477 = vrot.slane %v4475, 1
      %v4478 = vsel %vm4442, %v4473, %v4477
      %v4480 = vshrl.u32 %v4432, 16
      %v4482 = vshll.u32 %v4432, 16
      %v4484 = vrot.slane %v4482, 1
      %v4485 = vor.u32 %v4480, %v4484
      %v4487 = vshll.u32 %v4433, 16
      %v4489 = vrot.slane %v4487, 1
      %v4490 = vsel %vm4442, %v4485, %v4489
      %v4492 = vshrl.u32 %v4434, 16
      %v4494 = vshll.u32 %v4434, 16
      %v4496 = vrot.slane %v4494, 1
      %v4497 = vor.u32 %v4492, %v4496
      %v4499 = vshll.u32 %v4435, 16
      %v4501 = vrot.slane %v4499, 1
      %v4502 = vsel %vm4442, %v4497, %v4501
      %v4504 = vshrl.u32 %v4436, 16
      %v4506 = vshll.u32 %v4436, 16
      %v4508 = vrot.slane %v4506, 1
      %v4509 = vor.u32 %v4504, %v4508
      %v4511 = vshll.u32 %v4437, 16
      %v4513 = vrot.slane %v4511, 1
      %v4514 = vsel %vm4442, %v4509, %v4513
      %v4516 = vshrl.u32 %v4438, 16
      %v4518 = vshll.u32 %v4438, 16
      %v4520 = vrot.slane %v4518, 1
      %v4521 = vor.u32 %v4516, %v4520
      %v4523 = vshll.u32 %v4439, 16
      %v4525 = vrot.slane %v4523, 1
      %v4526 = vsel %vm4442, %v4521, %v4525
      %v4528 = vshrl.u32 %v4440, 16
      %v4530 = vshll.u32 %v4440, 16
      %v4532 = vrot.slane %v4530, 1
      %v4533 = vor.u32 %v4528, %v4532
      %v4535 = vshll.u32 %v4441, 16
      %v4537 = vrot.slane %v4535, 1
      %v4538 = vsel %vm4442, %v4533, %v4537
      %vm4555 = vcmask 1046528
      %v4556 = vrot.slane %v4426, 1
      %v4557 = vrot.slane %v4427, 1
      %v4558 = vsel %vm4555, %v4556, %v4557
      %v4559 = vrot.slane %v4428, 1
      %v4560 = vrot.slane %v4429, 1
      %v4561 = vsel %vm4555, %v4559, %v4560
      %v4562 = vrot.slane %v4430, 1
      %v4563 = vrot.slane %v4431, 1
      %v4564 = vsel %vm4555, %v4562, %v4563
      %v4565 = vrot.slane %v4432, 1
      %v4566 = vrot.slane %v4433, 1
      %v4567 = vsel %vm4555, %v4565, %v4566
      %v4568 = vrot.slane %v4434, 1
      %v4569 = vrot.slane %v4435, 1
      %v4570 = vsel %vm4555, %v4568, %v4569
      %v4571 = vrot.slane %v4436, 1
      %v4572 = vrot.slane %v4437, 1
      %v4573 = vsel %vm4555, %v4571, %v4572
      %v4574 = vrot.slane %v4438, 1
      %v4575 = vrot.slane %v4439, 1
      %v4576 = vsel %vm4555, %v4574, %v4575
      %v4577 = vrot.slane %v4440, 1
      %v4578 = vrot.slane %v4441, 1
      %v4579 = vsel %vm4555, %v4577, %v4578
      %4580 = vrot.lane.b32.xlu0 %v4454, 8
      %v4581 = vpop.permute.xlu0 %4580
      %4582 = vrot.lane.b32.xlu0 %v4466, 8
      %v4583 = vpop.permute.xlu0 %4582
      %4584 = vrot.lane.b32.xlu0 %v4478, 8
      %v4585 = vpop.permute.xlu0 %4584
      %4586 = vrot.lane.b32.xlu0 %v4490, 8
      %v4587 = vpop.permute.xlu0 %4586
      %4588 = vrot.lane.b32.xlu0 %v4502, 8
      %v4589 = vpop.permute.xlu0 %4588
      %4590 = vrot.lane.b32.xlu0 %v4514, 8
      %v4591 = vpop.permute.xlu0 %4590
      %4592 = vrot.lane.b32.xlu0 %v4526, 8
      %v4593 = vpop.permute.xlu0 %4592
      %4594 = vrot.lane.b32.xlu0 %v4538, 8
      %v4595 = vpop.permute.xlu0 %4594
      %4596 = vrot.lane.b32.xlu0 %v4558, 16
      %v4597 = vpop.permute.xlu0 %4596
      %4598 = vrot.lane.b32.xlu0 %v4561, 16
      %v4599 = vpop.permute.xlu0 %4598
      %4600 = vrot.lane.b32.xlu0 %v4564, 16
      %v4601 = vpop.permute.xlu0 %4600
      %4602 = vrot.lane.b32.xlu0 %v4567, 16
      %v4603 = vpop.permute.xlu0 %4602
      %4604 = vrot.lane.b32.xlu0 %v4570, 16
      %v4605 = vpop.permute.xlu0 %4604
      %4606 = vrot.lane.b32.xlu0 %v4573, 16
      %v4607 = vpop.permute.xlu0 %4606
      %4608 = vrot.lane.b32.xlu0 %v4576, 16
      %v4609 = vpop.permute.xlu0 %4608
      %4610 = vrot.lane.b32.xlu0 %v4579, 16
      %v4611 = vpop.permute.xlu0 %4610
      %v4613 = vsel %vm1250, %v4426, %v4581
      %v4615 = vsel %vm1250, %v4428, %v4583
      %v4617 = vsel %vm1250, %v4430, %v4585
      %v4619 = vsel %vm1250, %v4432, %v4587
      %v4621 = vsel %vm1250, %v4434, %v4589
      %v4623 = vsel %vm1250, %v4436, %v4591
      %v4625 = vsel %vm1250, %v4438, %v4593
      %v4627 = vsel %vm1250, %v4440, %v4595
      %vm4628 = vcmask 130048
      %v4630 = vsel %vm4628, %v4613, %v4597
      %v4632 = vsel %vm4628, %v4615, %v4599
      %v4634 = vsel %vm4628, %v4617, %v4601
      %v4636 = vsel %vm4628, %v4619, %v4603
      %v4638 = vsel %vm4628, %v4621, %v4605
      %v4640 = vsel %vm4628, %v4623, %v4607
      %v4642 = vsel %vm4628, %v4625, %v4609
      %v4644 = vsel %vm4628, %v4627, %v4611
      %v4645 = vld [vmem:[%s2] sm:$0xf]
      %v4646 = vld [vmem:[%s2 + $0x4] sm:$0xf]
      %v4647 = vld [vmem:[%s2 + $0x8] sm:$0xf]
      %s4648 = scalar_lea.vmem [#allocation2], 16
      %v4649 = vld [vmem:[%s4648] sm:$0xff]
      %v4650 = vld [vmem:[%s4648 + $0x8] sm:$0xff]
      %v4651 = vld [vmem:[%s4648 + $0x10] sm:$0xff]
      %v4652 = vld [vmem:[%s4648 + $0x18] sm:$0xff]
      %v4653 = vld [vmem:[%s4648 + $0x20] sm:$0xff]
      %v4654 = vld [vmem:[%s4648 + $0x28] sm:$0xff]
      %v4655 = vld [vmem:[%s4648 + $0x30] sm:$0xff]
      %v4656 = vld [vmem:[%s4648 + $0x38] sm:$0xff]
      %v4657 = vld [vmem:[%s4648 + $0x40] sm:$0xff]
      %v4658 = vld [vmem:[%s4648 + $0x48] sm:$0xff]
      %v4659 = vld [vmem:[%s4648 + $0x50] sm:$0xff]
      %v4660 = vld [vmem:[%s4648 + $0x58] sm:$0xff]
      %v4661 = vld [vmem:[%s4648 + $0x60] sm:$0xff]
      %v4662 = vld [vmem:[%s4648 + $0x68] sm:$0xff]
      %v4663 = vld [vmem:[%s4648 + $0x70] sm:$0xff]
      %v4664 = vld [vmem:[%s4648 + $0x78] sm:$0xff]
      %v4666 = vshrl.u32 %v4649, 16
      %v4668 = vshll.u32 %v4649, 16
      %v4670 = vrot.slane %v4668, 1
      %v4671 = vor.u32 %v4666, %v4670
      %v4673 = vshll.u32 %v4650, 16
      %v4675 = vrot.slane %v4673, 1
      %v4676 = vsel %vm4442, %v4671, %v4675
      %v4678 = vshrl.u32 %v4651, 16
      %v4680 = vshll.u32 %v4651, 16
      %v4682 = vrot.slane %v4680, 1
      %v4683 = vor.u32 %v4678, %v4682
      %v4685 = vshll.u32 %v4652, 16
      %v4687 = vrot.slane %v4685, 1
      %v4688 = vsel %vm4442, %v4683, %v4687
      %v4690 = vshrl.u32 %v4653, 16
      %v4692 = vshll.u32 %v4653, 16
      %v4694 = vrot.slane %v4692, 1
      %v4695 = vor.u32 %v4690, %v4694
      %v4697 = vshll.u32 %v4654, 16
      %v4699 = vrot.slane %v4697, 1
      %v4700 = vsel %vm4442, %v4695, %v4699
      %v4702 = vshrl.u32 %v4655, 16
      %v4704 = vshll.u32 %v4655, 16
      %v4706 = vrot.slane %v4704, 1
      %v4707 = vor.u32 %v4702, %v4706
      %v4709 = vshll.u32 %v4656, 16
      %v4711 = vrot.slane %v4709, 1
      %v4712 = vsel %vm4442, %v4707, %v4711
      %v4714 = vshrl.u32 %v4657, 16
      %v4716 = vshll.u32 %v4657, 16
      %v4718 = vrot.slane %v4716, 1
      %v4719 = vor.u32 %v4714, %v4718
      %v4721 = vshll.u32 %v4658, 16
      %v4723 = vrot.slane %v4721, 1
      %v4724 = vsel %vm4442, %v4719, %v4723
      %v4726 = vshrl.u32 %v4659, 16
      %v4728 = vshll.u32 %v4659, 16
      %v4730 = vrot.slane %v4728, 1
      %v4731 = vor.u32 %v4726, %v4730
      %v4733 = vshll.u32 %v4660, 16
      %v4735 = vrot.slane %v4733, 1
      %v4736 = vsel %vm4442, %v4731, %v4735
      %v4738 = vshrl.u32 %v4661, 16
      %v4740 = vshll.u32 %v4661, 16
      %v4742 = vrot.slane %v4740, 1
      %v4743 = vor.u32 %v4738, %v4742
      %v4745 = vshll.u32 %v4662, 16
      %v4747 = vrot.slane %v4745, 1
      %v4748 = vsel %vm4442, %v4743, %v4747
      %v4750 = vshrl.u32 %v4663, 16
      %v4752 = vshll.u32 %v4663, 16
      %v4754 = vrot.slane %v4752, 1
      %v4755 = vor.u32 %v4750, %v4754
      %v4757 = vshll.u32 %v4664, 16
      %v4759 = vrot.slane %v4757, 1
      %v4760 = vsel %vm4442, %v4755, %v4759
      %v4777 = vrot.slane %v4649, 1
      %v4778 = vrot.slane %v4650, 1
      %v4779 = vsel %vm4555, %v4777, %v4778
      %v4780 = vrot.slane %v4651, 1
      %v4781 = vrot.slane %v4652, 1
      %v4782 = vsel %vm4555, %v4780, %v4781
      %v4783 = vrot.slane %v4653, 1
      %v4784 = vrot.slane %v4654, 1
      %v4785 = vsel %vm4555, %v4783, %v4784
      %v4786 = vrot.slane %v4655, 1
      %v4787 = vrot.slane %v4656, 1
      %v4788 = vsel %vm4555, %v4786, %v4787
      %v4789 = vrot.slane %v4657, 1
      %v4790 = vrot.slane %v4658, 1
      %v4791 = vsel %vm4555, %v4789, %v4790
      %v4792 = vrot.slane %v4659, 1
      %v4793 = vrot.slane %v4660, 1
      %v4794 = vsel %vm4555, %v4792, %v4793
      %v4795 = vrot.slane %v4661, 1
      %v4796 = vrot.slane %v4662, 1
      %v4797 = vsel %vm4555, %v4795, %v4796
      %v4798 = vrot.slane %v4663, 1
      %v4799 = vrot.slane %v4664, 1
      %v4800 = vsel %vm4555, %v4798, %v4799
      %4801 = vrot.lane.b32.xlu0 %v4676, 8
      %v4802 = vpop.permute.xlu0 %4801
      %4803 = vrot.lane.b32.xlu0 %v4688, 8
      %v4804 = vpop.permute.xlu0 %4803
      %4805 = vrot.lane.b32.xlu0 %v4700, 8
      %v4806 = vpop.permute.xlu0 %4805
      %4807 = vrot.lane.b32.xlu0 %v4712, 8
      %v4808 = vpop.permute.xlu0 %4807
      %4809 = vrot.lane.b32.xlu0 %v4724, 8
      %v4810 = vpop.permute.xlu0 %4809
      %4811 = vrot.lane.b32.xlu0 %v4736, 8
      %v4812 = vpop.permute.xlu0 %4811
      %4813 = vrot.lane.b32.xlu0 %v4748, 8
      %v4814 = vpop.permute.xlu0 %4813
      %4815 = vrot.lane.b32.xlu0 %v4760, 8
      %v4816 = vpop.permute.xlu0 %4815
      %4817 = vrot.lane.b32.xlu0 %v4779, 16
      %v4818 = vpop.permute.xlu0 %4817
      %4819 = vrot.lane.b32.xlu0 %v4782, 16
      %v4820 = vpop.permute.xlu0 %4819
      %4821 = vrot.lane.b32.xlu0 %v4785, 16
      %v4822 = vpop.permute.xlu0 %4821
      %4823 = vrot.lane.b32.xlu0 %v4788, 16
      %v4824 = vpop.permute.xlu0 %4823
      %4825 = vrot.lane.b32.xlu0 %v4791, 16
      %v4826 = vpop.permute.xlu0 %4825
      %4827 = vrot.lane.b32.xlu0 %v4794, 16
      %v4828 = vpop.permute.xlu0 %4827
      %4829 = vrot.lane.b32.xlu0 %v4797, 16
      %v4830 = vpop.permute.xlu0 %4829
      %4831 = vrot.lane.b32.xlu0 %v4800, 16
      %v4832 = vpop.permute.xlu0 %4831
      %v4834 = vsel %vm1250, %v4649, %v4802
      %v4836 = vsel %vm1250, %v4651, %v4804
      %v4838 = vsel %vm1250, %v4653, %v4806
      %v4840 = vsel %vm1250, %v4655, %v4808
      %v4842 = vsel %vm1250, %v4657, %v4810
      %v4844 = vsel %vm1250, %v4659, %v4812
      %v4846 = vsel %vm1250, %v4661, %v4814
      %v4848 = vsel %vm1250, %v4663, %v4816
      %v4850 = vsel %vm4628, %v4834, %v4818
      %v4852 = vsel %vm4628, %v4836, %v4820
      %v4854 = vsel %vm4628, %v4838, %v4822
      %v4856 = vsel %vm4628, %v4840, %v4824
      %v4858 = vsel %vm4628, %v4842, %v4826
      %v4860 = vsel %vm4628, %v4844, %v4828
      %v4862 = vsel %vm4628, %v4846, %v4830
      %v4864 = vsel %vm4628, %v4848, %v4832
      %s4865 = scalar_lea.vmem %s2, 12
      %v4866 = vld [vmem:[%s4865] sm:$0xf]
      %v4867 = vld [vmem:[%s4865 + $0x4] sm:$0xf]
      %v4868 = vld [vmem:[%s4865 + $0x8] sm:$0xf]
      %v4872 = vunpack.c.l.b16 %v4866
      %v4873 = vunpack.c.l.b16 %v4867
      %v4874 = vunpack.c.l.b16 %v4868
      %v4875 = vpack.c.b16 %v4873, %v4872
      %v4876 = vpack.c.b16 %v4874, %v4874
      %vm4878 = vcmask 195584
      %v4879 = vsel %vm4878, %v4850, 0
      %v4881 = vsel %vm4878, %v4852, 0
      %v4883 = vsel %vm4878, %v4854, 0
      %v4885 = vsel %vm4878, %v4856, 0
      %v4887 = vsel %vm4878, %v4858, 0
      %v4889 = vsel %vm4878, %v4860, 0
      %v4891 = vsel %vm4878, %v4862, 0
      %v4893 = vsel %vm4878, %v4864, 0
      %vm4895 = vcmask 1043456
      %v4897 = vsel %vm4895, %v4876, 0
      %4899 = vmatprep.subr.bf16.mxu0 0
      %4900 = vmatpush1.bf16.msra.mxu0 %v4875
      %4901 = vmatprep.subr.bf16.mxu0 0
      %4902 = vmatpush1.bf16.msra.mxu0 %v4897
      %4903 = vmatprep.subr.bf16.mxu0 0
      %4904 = vmatpush1.bf16.msra.mxu0 0
      %4905 = vmatprep.subr.bf16.mxu0 0
      %4906 = vmatpush1.bf16.msra.mxu0 0
      %4907 = vmatprep.subr.bf16.mxu0 0
      %4908 = vmatpush1.bf16.msra.mxu0 0
      %4909 = vmatprep.subr.bf16.mxu0 0
      %4910 = vmatpush1.bf16.msra.mxu0 0
      %4911 = vmatprep.subr.bf16.mxu0 0
      %4912 = vmatpush1.bf16.msra.mxu0 0
      %4913 = vmatprep.subr.bf16.mxu0 0
      %4914 = vmatpush1.bf16.msra.mxu0 0
      %4915 = vmatprep.subr.bf16.mxu0 0
      %4916 = vmatpush1.bf16.msra.mxu0 0
      %4917 = vmatprep.subr.bf16.mxu0 0
      %4918 = vmatpush1.bf16.msra.mxu0 0
      %4919 = vmatprep.subr.bf16.mxu0 0
      %4920 = vmatpush1.bf16.msra.mxu0 0
      %4921 = vmatprep.subr.bf16.mxu0 0
      %4922 = vmatpush1.bf16.msra.mxu0 0
      %4923 = vmatprep.subr.bf16.mxu0 0
      %4924 = vmatpush1.bf16.msra.mxu0 0
      %4925 = vmatprep.subr.bf16.mxu0 0
      %4926 = vmatpush1.bf16.msra.mxu0 0
      %4927 = vmatprep.subr.bf16.mxu0 0
      %4928 = vmatpush1.bf16.msra.mxu0 0
      %4929 = vmatprep.subr.bf16.mxu0 0
      %4930 = vmatpush1.bf16.msra.mxu0 0
      %4931 = vmatprep.mubr.bf16.mxu0 0
      %4932 = vmatmul.mubr.bf16.gmra.mrb[0].mxu0 %v4879
      %v4933 = vpop.f32.mrb[0].mxu0
      %v4934 = vadd.f32 0.0, %v4933
      %v4935 = vpop.f32.mrb[0].mxu0
      %v4936 = vpop.f32.mrb[0].mxu0
      %v4937 = vadd.f32 0.0, %v4936
      %v4938 = vpop.f32.mrb[0].mxu0
      %4939 = vmatprep.mubr.bf16.mxu0 0
      %4940 = vmatmul.mubr.bf16.gmra.mrb[0].mxu0 %v4881
      %v4941 = vpop.f32.mrb[0].mxu0
      %v4942 = vadd.f32 0.0, %v4941
      %v4943 = vpop.f32.mrb[0].mxu0
      %v4944 = vpop.f32.mrb[0].mxu0
      %v4945 = vadd.f32 0.0, %v4944
      %v4946 = vpop.f32.mrb[0].mxu0
      %4947 = vmatprep.mubr.bf16.mxu0 0
      %4948 = vmatmul.mubr.bf16.gmra.mrb[0].mxu0 %v4883
      %v4949 = vpop.f32.mrb[0].mxu0
      %v4950 = vadd.f32 0.0, %v4949
      %v4951 = vpop.f32.mrb[0].mxu0
      %v4952 = vpop.f32.mrb[0].mxu0
      %v4953 = vadd.f32 0.0, %v4952
      %v4954 = vpop.f32.mrb[0].mxu0
      %4955 = vmatprep.mubr.bf16.mxu0 0
      %4956 = vmatmul.mubr.bf16.gmra.mrb[0].mxu0 %v4885
      %v4957 = vpop.f32.mrb[0].mxu0
      %v4958 = vadd.f32 0.0, %v4957
      %v4959 = vpop.f32.mrb[0].mxu0
      %v4960 = vpop.f32.mrb[0].mxu0
      %v4961 = vadd.f32 0.0, %v4960
      %v4962 = vpop.f32.mrb[0].mxu0
      %4963 = vmatprep.mubr.bf16.mxu0 0
      %4964 = vmatmul.mubr.bf16.gmra.mrb[0].mxu0 %v4887
      %v4965 = vpop.f32.mrb[0].mxu0
      %v4966 = vadd.f32 0.0, %v4965
      %v4967 = vpop.f32.mrb[0].mxu0
      %v4968 = vpop.f32.mrb[0].mxu0
      %v4969 = vadd.f32 0.0, %v4968
      %v4970 = vpop.f32.mrb[0].mxu0
      %4971 = vmatprep.mubr.bf16.mxu0 0
      %4972 = vmatmul.mubr.bf16.gmra.mrb[0].mxu0 %v4889
      %v4973 = vpop.f32.mrb[0].mxu0
      %v4974 = vadd.f32 0.0, %v4973
      %v4975 = vpop.f32.mrb[0].mxu0
      %v4976 = vpop.f32.mrb[0].mxu0
      %v4977 = vadd.f32 0.0, %v4976
      %v4978 = vpop.f32.mrb[0].mxu0
      %4979 = vmatprep.mubr.bf16.mxu0 0
      %4980 = vmatmul.mubr.bf16.gmra.mrb[0].mxu0 %v4891
      %v4981 = vpop.f32.mrb[0].mxu0
      %v4982 = vadd.f32 0.0, %v4981
      %v4983 = vpop.f32.mrb[0].mxu0
      %v4984 = vpop.f32.mrb[0].mxu0
      %v4985 = vadd.f32 0.0, %v4984
      %v4986 = vpop.f32.mrb[0].mxu0
      %4987 = vmatprep.mubr.bf16.mxu0 0
      %4988 = vmatmul.mubr.bf16.gmra.mrb[0].mxu0 %v4893
      %v4989 = vpop.f32.mrb[0].mxu0
      %v4990 = vadd.f32 0.0, %v4989
      %v4991 = vpop.f32.mrb[0].mxu0
      %v4992 = vpop.f32.mrb[0].mxu0
      %v4993 = vadd.f32 0.0, %v4992
      %v4994 = vpop.f32.mrb[0].mxu0
      %4995 = vdwg.mxu0
      %v4999 = vunpack.c.l.b16 %v4645
      %v5000 = vunpack.c.l.b16 %v4646
      %v5001 = vunpack.c.l.b16 %v4647
      %v5002 = vpack.c.b16 %v5000, %v4999
      %v5003 = vpack.c.b16 %v5001, %v5001
      %v5005 = vsel %vm4878, %v4630, 0
      %v5007 = vsel %vm4878, %v4632, 0
      %v5009 = vsel %vm4878, %v4634, 0
      %v5011 = vsel %vm4878, %v4636, 0
      %v5013 = vsel %vm4878, %v4638, 0
      %v5015 = vsel %vm4878, %v4640, 0
      %v5017 = vsel %vm4878, %v4642, 0
      %v5019 = vsel %vm4878, %v4644, 0
      %v5022 = vsel %vm4895, %v5003, 0
      %5024 = vmatprep.subr.bf16.mxu0 0
      %5025 = vmatpush1.bf16.msra.mxu0 %v5002
      %5026 = vmatprep.subr.bf16.mxu0 0
      %5027 = vmatpush1.bf16.msra.mxu0 %v5022
      %5028 = vmatprep.subr.bf16.mxu0 0
      %5029 = vmatpush1.bf16.msra.mxu0 0
      %5030 = vmatprep.subr.bf16.mxu0 0
      %5031 = vmatpush1.bf16.msra.mxu0 0
      %5032 = vmatprep.subr.bf16.mxu0 0
      %5033 = vmatpush1.bf16.msra.mxu0 0
      %5034 = vmatprep.subr.bf16.mxu0 0
      %5035 = vmatpush1.bf16.msra.mxu0 0
      %5036 = vmatprep.subr.bf16.mxu0 0
      %5037 = vmatpush1.bf16.msra.mxu0 0
      %5038 = vmatprep.subr.bf16.mxu0 0
      %5039 = vmatpush1.bf16.msra.mxu0 0
      %5040 = vmatprep.subr.bf16.mxu0 0
      %5041 = vmatpush1.bf16.msra.mxu0 0
      %5042 = vmatprep.subr.bf16.mxu0 0
      %5043 = vmatpush1.bf16.msra.mxu0 0
      %5044 = vmatprep.subr.bf16.mxu0 0
      %5045 = vmatpush1.bf16.msra.mxu0 0
      %5046 = vmatprep.subr.bf16.mxu0 0
      %5047 = vmatpush1.bf16.msra.mxu0 0
      %5048 = vmatprep.subr.bf16.mxu0 0
      %5049 = vmatpush1.bf16.msra.mxu0 0
      %5050 = vmatprep.subr.bf16.mxu0 0
      %5051 = vmatpush1.bf16.msra.mxu0 0
      %5052 = vmatprep.subr.bf16.mxu0 0
      %5053 = vmatpush1.bf16.msra.mxu0 0
      %5054 = vmatprep.subr.bf16.mxu0 0
      %5055 = vmatpush1.bf16.msra.mxu0 0
      %5056 = vmatprep.mubr.bf16.mxu0 0
      %5057 = vmatmul.mubr.bf16.gmra.mrb[0].mxu0 %v5005
      %v5058 = vpop.f32.mrb[0].mxu0
      %v5059 = vadd.f32 %v4934, %v5058
      %v5060 = vpop.f32.mrb[0].mxu0
      %v5061 = vpop.f32.mrb[0].mxu0
      %v5062 = vadd.f32 %v4937, %v5061
      %v5063 = vpop.f32.mrb[0].mxu0
      %5064 = vmatprep.mubr.bf16.mxu0 0
      %5065 = vmatmul.mubr.bf16.gmra.mrb[0].mxu0 %v5007
      %v5066 = vpop.f32.mrb[0].mxu0
      %v5067 = vadd.f32 %v4942, %v5066
      %v5068 = vpop.f32.mrb[0].mxu0
      %v5069 = vpop.f32.mrb[0].mxu0
      %v5070 = vadd.f32 %v4945, %v5069
      %v5071 = vpop.f32.mrb[0].mxu0
      %5072 = vmatprep.mubr.bf16.mxu0 0
      %5073 = vmatmul.mubr.bf16.gmra.mrb[0].mxu0 %v5009
      %v5074 = vpop.f32.mrb[0].mxu0
      %v5075 = vadd.f32 %v4950, %v5074
      %v5076 = vpop.f32.mrb[0].mxu0
      %v5077 = vpop.f32.mrb[0].mxu0
      %v5078 = vadd.f32 %v4953, %v5077
      %v5079 = vpop.f32.mrb[0].mxu0
      %5080 = vmatprep.mubr.bf16.mxu0 0
      %5081 = vmatmul.mubr.bf16.gmra.mrb[0].mxu0 %v5011
      %v5082 = vpop.f32.mrb[0].mxu0
      %v5083 = vadd.f32 %v4958, %v5082
      %v5084 = vpop.f32.mrb[0].mxu0
      %v5085 = vpop.f32.mrb[0].mxu0
      %v5086 = vadd.f32 %v4961, %v5085
      %v5087 = vpop.f32.mrb[0].mxu0
      %5088 = vmatprep.mubr.bf16.mxu0 0
      %5089 = vmatmul.mubr.bf16.gmra.mrb[0].mxu0 %v5013
      %v5090 = vpop.f32.mrb[0].mxu0
      %v5091 = vadd.f32 %v4966, %v5090
      %v5092 = vpop.f32.mrb[0].mxu0
      %v5093 = vpop.f32.mrb[0].mxu0
      %v5094 = vadd.f32 %v4969, %v5093
      %v5095 = vpop.f32.mrb[0].mxu0
      %5096 = vmatprep.mubr.bf16.mxu0 0
      %5097 = vmatmul.mubr.bf16.gmra.mrb[0].mxu0 %v5015
      %v5098 = vpop.f32.mrb[0].mxu0
      %v5099 = vadd.f32 %v4974, %v5098
      %v5100 = vpop.f32.mrb[0].mxu0
      %v5101 = vpop.f32.mrb[0].mxu0
      %v5102 = vadd.f32 %v4977, %v5101
      %v5103 = vpop.f32.mrb[0].mxu0
      %5104 = vmatprep.mubr.bf16.mxu0 0
      %5105 = vmatmul.mubr.bf16.gmra.mrb[0].mxu0 %v5017
      %v5106 = vpop.f32.mrb[0].mxu0
      %v5107 = vadd.f32 %v4982, %v5106
      %v5108 = vpop.f32.mrb[0].mxu0
      %v5109 = vpop.f32.mrb[0].mxu0
      %v5110 = vadd.f32 %v4985, %v5109
      %v5111 = vpop.f32.mrb[0].mxu0
      %5112 = vmatprep.mubr.bf16.mxu0 0
      %5113 = vmatmul.mubr.bf16.gmra.mrb[0].mxu0 %v5019
      %v5114 = vpop.f32.mrb[0].mxu0
      %v5115 = vadd.f32 %v4990, %v5114
      %v5116 = vpop.f32.mrb[0].mxu0
      %v5117 = vpop.f32.mrb[0].mxu0
      %v5118 = vadd.f32 %v4993, %v5117
      %v5119 = vpop.f32.mrb[0].mxu0
      %5120 = vdwg.mxu0
      %s5121 = scalar_lea.vmem [#allocation2], 32
      %v5122 = vld [vmem:[%s5121] sm:$0xff]
      %v5123 = vld [vmem:[%s5121 + $0x8] sm:$0xff]
      %v5124 = vld [vmem:[%s5121 + $0x10] sm:$0xff]
      %v5125 = vld [vmem:[%s5121 + $0x18] sm:$0xff]
      %v5126 = vld [vmem:[%s5121 + $0x20] sm:$0xff]
      %v5127 = vld [vmem:[%s5121 + $0x28] sm:$0xff]
      %v5128 = vld [vmem:[%s5121 + $0x30] sm:$0xff]
      %v5129 = vld [vmem:[%s5121 + $0x38] sm:$0xff]
      %v5130 = vld [vmem:[%s5121 + $0x40] sm:$0xff]
      %v5131 = vld [vmem:[%s5121 + $0x48] sm:$0xff]
      %v5132 = vld [vmem:[%s5121 + $0x50] sm:$0xff]
      %v5133 = vld [vmem:[%s5121 + $0x58] sm:$0xff]
      %v5134 = vld [vmem:[%s5121 + $0x60] sm:$0xff]
      %v5135 = vld [vmem:[%s5121 + $0x68] sm:$0xff]
      %v5136 = vld [vmem:[%s5121 + $0x70] sm:$0xff]
      %v5137 = vld [vmem:[%s5121 + $0x78] sm:$0xff]
      %v5139 = vshrl.u32 %v5122, 16
      %v5141 = vshll.u32 %v5122, 16
      %v5143 = vrot.slane %v5141, 1
      %v5144 = vor.u32 %v5139, %v5143
      %v5146 = vshll.u32 %v5123, 16
      %v5148 = vrot.slane %v5146, 1
      %v5149 = vsel %vm4442, %v5144, %v5148
      %v5151 = vshrl.u32 %v5124, 16
      %v5153 = vshll.u32 %v5124, 16
      %v5155 = vrot.slane %v5153, 1
      %v5156 = vor.u32 %v5151, %v5155
      %v5158 = vshll.u32 %v5125, 16
      %v5160 = vrot.slane %v5158, 1
      %v5161 = vsel %vm4442, %v5156, %v5160
      %v5163 = vshrl.u32 %v5126, 16
      %v5165 = vshll.u32 %v5126, 16
      %v5167 = vrot.slane %v5165, 1
      %v5168 = vor.u32 %v5163, %v5167
      %v5170 = vshll.u32 %v5127, 16
      %v5172 = vrot.slane %v5170, 1
      %v5173 = vsel %vm4442, %v5168, %v5172
      %v5175 = vshrl.u32 %v5128, 16
      %v5177 = vshll.u32 %v5128, 16
      %v5179 = vrot.slane %v5177, 1
      %v5180 = vor.u32 %v5175, %v5179
      %v5182 = vshll.u32 %v5129, 16
      %v5184 = vrot.slane %v5182, 1
      %v5185 = vsel %vm4442, %v5180, %v5184
      %v5187 = vshrl.u32 %v5130, 16
      %v5189 = vshll.u32 %v5130, 16
      %v5191 = vrot.slane %v5189, 1
      %v5192 = vor.u32 %v5187, %v5191
      %v5194 = vshll.u32 %v5131, 16
      %v5196 = vrot.slane %v5194, 1
      %v5197 = vsel %vm4442, %v5192, %v5196
      %v5199 = vshrl.u32 %v5132, 16
      %v5201 = vshll.u32 %v5132, 16
      %v5203 = vrot.slane %v5201, 1
      %v5204 = vor.u32 %v5199, %v5203
      %v5206 = vshll.u32 %v5133, 16
      %v5208 = vrot.slane %v5206, 1
      %v5209 = vsel %vm4442, %v5204, %v5208
      %v5211 = vshrl.u32 %v5134, 16
      %v5213 = vshll.u32 %v5134, 16
      %v5215 = vrot.slane %v5213, 1
      %v5216 = vor.u32 %v5211, %v5215
      %v5218 = vshll.u32 %v5135, 16
      %v5220 = vrot.slane %v5218, 1
      %v5221 = vsel %vm4442, %v5216, %v5220
      %v5223 = vshrl.u32 %v5136, 16
      %v5225 = vshll.u32 %v5136, 16
      %v5227 = vrot.slane %v5225, 1
      %v5228 = vor.u32 %v5223, %v5227
      %v5230 = vshll.u32 %v5137, 16
      %v5232 = vrot.slane %v5230, 1
      %v5233 = vsel %vm4442, %v5228, %v5232
      %v5250 = vrot.slane %v5122, 1
      %v5251 = vrot.slane %v5123, 1
      %v5252 = vsel %vm4555, %v5250, %v5251
      %v5253 = vrot.slane %v5124, 1
      %v5254 = vrot.slane %v5125, 1
      %v5255 = vsel %vm4555, %v5253, %v5254
      %v5256 = vrot.slane %v5126, 1
      %v5257 = vrot.slane %v5127, 1
      %v5258 = vsel %vm4555, %v5256, %v5257
      %v5259 = vrot.slane %v5128, 1
      %v5260 = vrot.slane %v5129, 1
      %v5261 = vsel %vm4555, %v5259, %v5260
      %v5262 = vrot.slane %v5130, 1
      %v5263 = vrot.slane %v5131, 1
      %v5264 = vsel %vm4555, %v5262, %v5263
      %v5265 = vrot.slane %v5132, 1
      %v5266 = vrot.slane %v5133, 1
      %v5267 = vsel %vm4555, %v5265, %v5266
      %v5268 = vrot.slane %v5134, 1
      %v5269 = vrot.slane %v5135, 1
      %v5270 = vsel %vm4555, %v5268, %v5269
      %v5271 = vrot.slane %v5136, 1
      %v5272 = vrot.slane %v5137, 1
      %v5273 = vsel %vm4555, %v5271, %v5272
      %5274 = vrot.lane.b32.xlu0 %v5149, 8
      %v5275 = vpop.permute.xlu0 %5274
      %5276 = vrot.lane.b32.xlu0 %v5161, 8
      %v5277 = vpop.permute.xlu0 %5276
      %5278 = vrot.lane.b32.xlu0 %v5173, 8
      %v5279 = vpop.permute.xlu0 %5278
      %5280 = vrot.lane.b32.xlu0 %v5185, 8
      %v5281 = vpop.permute.xlu0 %5280
      %5282 = vrot.lane.b32.xlu0 %v5197, 8
      %v5283 = vpop.permute.xlu0 %5282
      %5284 = vrot.lane.b32.xlu0 %v5209, 8
      %v5285 = vpop.permute.xlu0 %5284
      %5286 = vrot.lane.b32.xlu0 %v5221, 8
      %v5287 = vpop.permute.xlu0 %5286
      %5288 = vrot.lane.b32.xlu0 %v5233, 8
      %v5289 = vpop.permute.xlu0 %5288
      %5290 = vrot.lane.b32.xlu0 %v5252, 16
      %v5291 = vpop.permute.xlu0 %5290
      %5292 = vrot.lane.b32.xlu0 %v5255, 16
      %v5293 = vpop.permute.xlu0 %5292
      %5294 = vrot.lane.b32.xlu0 %v5258, 16
      %v5295 = vpop.permute.xlu0 %5294
      %5296 = vrot.lane.b32.xlu0 %v5261, 16
      %v5297 = vpop.permute.xlu0 %5296
      %5298 = vrot.lane.b32.xlu0 %v5264, 16
      %v5299 = vpop.permute.xlu0 %5298
      %5300 = vrot.lane.b32.xlu0 %v5267, 16
      %v5301 = vpop.permute.xlu0 %5300
      %5302 = vrot.lane.b32.xlu0 %v5270, 16
      %v5303 = vpop.permute.xlu0 %5302
      %5304 = vrot.lane.b32.xlu0 %v5273, 16
      %v5305 = vpop.permute.xlu0 %5304
      %v5307 = vsel %vm1250, %v5122, %v5275
      %v5309 = vsel %vm1250, %v5124, %v5277
      %v5311 = vsel %vm1250, %v5126, %v5279
      %v5313 = vsel %vm1250, %v5128, %v5281
      %v5315 = vsel %vm1250, %v5130, %v5283
      %v5317 = vsel %vm1250, %v5132, %v5285
      %v5319 = vsel %vm1250, %v5134, %v5287
      %v5321 = vsel %vm1250, %v5136, %v5289
      %v5323 = vsel %vm4628, %v5307, %v5291
      %v5325 = vsel %vm4628, %v5309, %v5293
      %v5327 = vsel %vm4628, %v5311, %v5295
      %v5329 = vsel %vm4628, %v5313, %v5297
      %v5331 = vsel %vm4628, %v5315, %v5299
      %v5333 = vsel %vm4628, %v5317, %v5301
      %v5335 = vsel %vm4628, %v5319, %v5303
      %v5337 = vsel %vm4628, %v5321, %v5305
      %s5338 = scalar_lea.vmem %s2, 24
      %v5339 = vld [vmem:[%s5338] sm:$0xf]
      %v5340 = vld [vmem:[%s5338 + $0x4] sm:$0xf]
      %v5341 = vld [vmem:[%s5338 + $0x8] sm:$0xf]
      %v5345 = vunpack.c.l.b16 %v5339
      %v5346 = vunpack.c.l.b16 %v5340
      %v5347 = vunpack.c.l.b16 %v5341
      %v5348 = vpack.c.b16 %v5346, %v5345
      %v5349 = vpack.c.b16 %v5347, %v5347
      %v5351 = vsel %vm4878, %v5323, 0
      %v5353 = vsel %vm4878, %v5325, 0
      %v5355 = vsel %vm4878, %v5327, 0
      %v5357 = vsel %vm4878, %v5329, 0
      %v5359 = vsel %vm4878, %v5331, 0
      %v5361 = vsel %vm4878, %v5333, 0
      %v5363 = vsel %vm4878, %v5335, 0
      %v5365 = vsel %vm4878, %v5337, 0
      %v5368 = vsel %vm4895, %v5349, 0
      %5370 = vmatprep.subr.bf16.mxu0 0
      %5371 = vmatpush1.bf16.msra.mxu0 %v5348
      %5372 = vmatprep.subr.bf16.mxu0 0
      %5373 = vmatpush1.bf16.msra.mxu0 %v5368
      %5374 = vmatprep.subr.bf16.mxu0 0
      %5375 = vmatpush1.bf16.msra.mxu0 0
      %5376 = vmatprep.subr.bf16.mxu0 0
      %5377 = vmatpush1.bf16.msra.mxu0 0
      %5378 = vmatprep.subr.bf16.mxu0 0
      %5379 = vmatpush1.bf16.msra.mxu0 0
      %5380 = vmatprep.subr.bf16.mxu0 0
      %5381 = vmatpush1.bf16.msra.mxu0 0
      %5382 = vmatprep.subr.bf16.mxu0 0
      %5383 = vmatpush1.bf16.msra.mxu0 0
      %5384 = vmatprep.subr.bf16.mxu0 0
      %5385 = vmatpush1.bf16.msra.mxu0 0
      %5386 = vmatprep.subr.bf16.mxu0 0
      %5387 = vmatpush1.bf16.msra.mxu0 0
      %5388 = vmatprep.subr.bf16.mxu0 0
      %5389 = vmatpush1.bf16.msra.mxu0 0
      %5390 = vmatprep.subr.bf16.mxu0 0
      %5391 = vmatpush1.bf16.msra.mxu0 0
      %5392 = vmatprep.subr.bf16.mxu0 0
      %5393 = vmatpush1.bf16.msra.mxu0 0
      %5394 = vmatprep.subr.bf16.mxu0 0
      %5395 = vmatpush1.bf16.msra.mxu0 0
      %5396 = vmatprep.subr.bf16.mxu0 0
      %5397 = vmatpush1.bf16.msra.mxu0 0
      %5398 = vmatprep.subr.bf16.mxu0 0
      %5399 = vmatpush1.bf16.msra.mxu0 0
      %5400 = vmatprep.subr.bf16.mxu0 0
      %5401 = vmatpush1.bf16.msra.mxu0 0
      %5402 = vmatprep.mubr.bf16.mxu0 0
      %5403 = vmatmul.mubr.bf16.gmra.mrb[0].mxu0 %v5351
      %v5404 = vpop.f32.mrb[0].mxu0
      %v5405 = vadd.f32 0.0, %v5404
      %v5406 = vpop.f32.mrb[0].mxu0
      %v5407 = vpop.f32.mrb[0].mxu0
      %v5408 = vadd.f32 0.0, %v5407
      %v5409 = vpop.f32.mrb[0].mxu0
      %5410 = vmatprep.mubr.bf16.mxu0 0
      %5411 = vmatmul.mubr.bf16.gmra.mrb[0].mxu0 %v5353
      %v5412 = vpop.f32.mrb[0].mxu0
      %v5413 = vadd.f32 0.0, %v5412
      %v5414 = vpop.f32.mrb[0].mxu0
      %v5415 = vpop.f32.mrb[0].mxu0
      %v5416 = vadd.f32 0.0, %v5415
      %v5417 = vpop.f32.mrb[0].mxu0
      %5418 = vmatprep.mubr.bf16.mxu0 0
      %5419 = vmatmul.mubr.bf16.gmra.mrb[0].mxu0 %v5355
      %v5420 = vpop.f32.mrb[0].mxu0
      %v5421 = vadd.f32 0.0, %v5420
      %v5422 = vpop.f32.mrb[0].mxu0
      %v5423 = vpop.f32.mrb[0].mxu0
      %v5424 = vadd.f32 0.0, %v5423
      %v5425 = vpop.f32.mrb[0].mxu0
      %5426 = vmatprep.mubr.bf16.mxu0 0
      %5427 = vmatmul.mubr.bf16.gmra.mrb[0].mxu0 %v5357
      %v5428 = vpop.f32.mrb[0].mxu0
      %v5429 = vadd.f32 0.0, %v5428
      %v5430 = vpop.f32.mrb[0].mxu0
      %v5431 = vpop.f32.mrb[0].mxu0
      %v5432 = vadd.f32 0.0, %v5431
      %v5433 = vpop.f32.mrb[0].mxu0
      %5434 = vmatprep.mubr.bf16.mxu0 0
      %5435 = vmatmul.mubr.bf16.gmra.mrb[0].mxu0 %v5359
      %v5436 = vpop.f32.mrb[0].mxu0
      %v5437 = vadd.f32 0.0, %v5436
      %v5438 = vpop.f32.mrb[0].mxu0
      %v5439 = vpop.f32.mrb[0].mxu0
      %v5440 = vadd.f32 0.0, %v5439
      %v5441 = vpop.f32.mrb[0].mxu0
      %5442 = vmatprep.mubr.bf16.mxu0 0
      %5443 = vmatmul.mubr.bf16.gmra.mrb[0].mxu0 %v5361
      %v5444 = vpop.f32.mrb[0].mxu0
      %v5445 = vadd.f32 0.0, %v5444
      %v5446 = vpop.f32.mrb[0].mxu0
      %v5447 = vpop.f32.mrb[0].mxu0
      %v5448 = vadd.f32 0.0, %v5447
      %v5449 = vpop.f32.mrb[0].mxu0
      %5450 = vmatprep.mubr.bf16.mxu0 0
      %5451 = vmatmul.mubr.bf16.gmra.mrb[0].mxu0 %v5363
      %v5452 = vpop.f32.mrb[0].mxu0
      %v5453 = vadd.f32 0.0, %v5452
      %v5454 = vpop.f32.mrb[0].mxu0
      %v5455 = vpop.f32.mrb[0].mxu0
      %v5456 = vadd.f32 0.0, %v5455
      %v5457 = vpop.f32.mrb[0].mxu0
      %5458 = vmatprep.mubr.bf16.mxu0 0
      %5459 = vmatmul.mubr.bf16.gmra.mrb[0].mxu0 %v5365
      %v5460 = vpop.f32.mrb[0].mxu0
      %v5461 = vadd.f32 0.0, %v5460
      %v5462 = vpop.f32.mrb[0].mxu0
      %v5463 = vpop.f32.mrb[0].mxu0
      %v5464 = vadd.f32 0.0, %v5463
      %v5465 = vpop.f32.mrb[0].mxu0
      %5466 = vdwg.mxu0
      %v5467 = vadd.f32 %v5059, %v5405
      %v5468 = vadd.f32 %v5062, %v5408
      %v5469 = vadd.f32 %v5067, %v5413
      %v5470 = vadd.f32 %v5070, %v5416
      %v5471 = vadd.f32 %v5075, %v5421
      %v5472 = vadd.f32 %v5078, %v5424
      %v5473 = vadd.f32 %v5083, %v5429
      %v5474 = vadd.f32 %v5086, %v5432
      %v5475 = vadd.f32 %v5091, %v5437
      %v5476 = vadd.f32 %v5094, %v5440
      %v5477 = vadd.f32 %v5099, %v5445
      %v5478 = vadd.f32 %v5102, %v5448
      %v5479 = vadd.f32 %v5107, %v5453
      %v5480 = vadd.f32 %v5110, %v5456
      %v5481 = vadd.f32 %v5115, %v5461
      %v5482 = vadd.f32 %v5118, %v5464
      %v5483 = vld [vmem:[%s4] sm:$0x1]
      %v5484 = vlaneseq
      %v5485 = vshrl.u32 %v5484, 7
      %v5486 = vsub.s32 0, %v5485
      %v5487 = vrot.slane %v5483, %v5486
      %v5488 = vadd.f32 %v5467, %v5487
      %v5489 = vadd.f32 %v5468, %v5487
      %v5490 = vadd.f32 %v5469, %v5487
      %v5491 = vadd.f32 %v5470, %v5487
      %v5492 = vadd.f32 %v5471, %v5487
      %v5493 = vadd.f32 %v5472, %v5487
      %v5494 = vadd.f32 %v5473, %v5487
      %v5495 = vadd.f32 %v5474, %v5487
      %v5496 = vadd.f32 %v5475, %v5487
      %v5497 = vadd.f32 %v5476, %v5487
      %v5498 = vadd.f32 %v5477, %v5487
      %v5499 = vadd.f32 %v5478, %v5487
      %v5500 = vadd.f32 %v5479, %v5487
      %v5501 = vadd.f32 %v5480, %v5487
      %v5502 = vadd.f32 %v5481, %v5487
      %v5503 = vadd.f32 %v5482, %v5487
      %v5504 = vmax.f32 %v5488, 0.0
      %v5505 = vmax.f32 %v5489, 0.0
      %v5506 = vmax.f32 %v5490, 0.0
      %v5507 = vmax.f32 %v5491, 0.0
      %v5508 = vmax.f32 %v5492, 0.0
      %v5509 = vmax.f32 %v5493, 0.0
      %v5510 = vmax.f32 %v5494, 0.0
      %v5511 = vmax.f32 %v5495, 0.0
      %v5512 = vmax.f32 %v5496, 0.0
      %v5513 = vmax.f32 %v5497, 0.0
      %v5514 = vmax.f32 %v5498, 0.0
      %v5515 = vmax.f32 %v5499, 0.0
      %v5516 = vmax.f32 %v5500, 0.0
      %v5517 = vmax.f32 %v5501, 0.0
      %v5518 = vmax.f32 %v5502, 0.0
      %v5519 = vmax.f32 %v5503, 0.0
      %v5520 = vld [vmem:[%s4 + $0x1] sm:$0x1]
      %v5521 = vlaneseq
      %v5522 = vshrl.u32 %v5521, 7
      %v5523 = vsub.s32 0, %v5522
      %v5524 = vrot.slane %v5520, %v5523
      %v5525 = vmul.f32 %v5504, %v5524
      %v5526 = vmul.f32 %v5505, %v5524
      %v5527 = vmul.f32 %v5506, %v5524
      %v5528 = vmul.f32 %v5507, %v5524
      %v5529 = vmul.f32 %v5508, %v5524
      %v5530 = vmul.f32 %v5509, %v5524
      %v5531 = vmul.f32 %v5510, %v5524
      %v5532 = vmul.f32 %v5511, %v5524
      %v5533 = vmul.f32 %v5512, %v5524
      %v5534 = vmul.f32 %v5513, %v5524
      %v5535 = vmul.f32 %v5514, %v5524
      %v5536 = vmul.f32 %v5515, %v5524
      %v5537 = vmul.f32 %v5516, %v5524
      %v5538 = vmul.f32 %v5517, %v5524
      %v5539 = vmul.f32 %v5518, %v5524
      %v5540 = vmul.f32 %v5519, %v5524
      %v5541 = vld [vmem:[%s4 + $0x2] sm:$0x1]
      %v5542 = vlaneseq
      %v5543 = vshrl.u32 %v5542, 7
      %v5544 = vsub.s32 0, %v5543
      %v5545 = vrot.slane %v5541, %v5544
      %v5546 = vadd.f32 %v5525, %v5545
      %v5547 = vadd.f32 %v5526, %v5545
      %v5548 = vadd.f32 %v5527, %v5545
      %v5549 = vadd.f32 %v5528, %v5545
      %v5550 = vadd.f32 %v5529, %v5545
      %v5551 = vadd.f32 %v5530, %v5545
      %v5552 = vadd.f32 %v5531, %v5545
      %v5553 = vadd.f32 %v5532, %v5545
      %v5554 = vadd.f32 %v5533, %v5545
      %v5555 = vadd.f32 %v5534, %v5545
      %v5556 = vadd.f32 %v5535, %v5545
      %v5557 = vadd.f32 %v5536, %v5545
      %v5558 = vadd.f32 %v5537, %v5545
      %v5559 = vadd.f32 %v5538, %v5545
      %v5560 = vadd.f32 %v5539, %v5545
      %v5561 = vadd.f32 %v5540, %v5545
      %5562 = vst.msk [vmem:[%s246] sm:$0xff] %vm1250, %v5546
      %5563 = vst.msk [vmem:[%s246 + $0x8] sm:$0xff] %vm1250, %v5547
      %5564 = vst.msk [vmem:[%s246 + $0x10] sm:$0xff] %vm1250, %v5548
      %5565 = vst.msk [vmem:[%s246 + $0x18] sm:$0xff] %vm1250, %v5549
      %5566 = vst.msk [vmem:[%s246 + $0x20] sm:$0xff] %vm1250, %v5550
      %5567 = vst.msk [vmem:[%s246 + $0x28] sm:$0xff] %vm1250, %v5551
      %5568 = vst.msk [vmem:[%s246 + $0x30] sm:$0xff] %vm1250, %v5552
      %5569 = vst.msk [vmem:[%s246 + $0x38] sm:$0xff] %vm1250, %v5553
      %5570 = vst.msk [vmem:[%s246 + $0x40] sm:$0xff] %vm1250, %v5554
      %5571 = vst.msk [vmem:[%s246 + $0x48] sm:$0xff] %vm1250, %v5555
      %5572 = vst.msk [vmem:[%s246 + $0x50] sm:$0xff] %vm1250, %v5556
      %5573 = vst.msk [vmem:[%s246 + $0x58] sm:$0xff] %vm1250, %v5557
      %5574 = vst.msk [vmem:[%s246 + $0x60] sm:$0xff] %vm1250, %v5558
      %5575 = vst.msk [vmem:[%s246 + $0x68] sm:$0xff] %vm1250, %v5559
      %5576 = vst.msk [vmem:[%s246 + $0x70] sm:$0xff] %vm1250, %v5560
      %5577 = vst.msk [vmem:[%s246 + $0x78] sm:$0xff] %vm1250, %v5561
      %s5578 = smul.u32 16, %s21
      %p5579 = scmp.lt.s32.totalorder %s20, 1
      %s5580 = scalar_select %p5579, %s20, 1
      %p5581 = scmp.lt.s32.totalorder %s5578, 31
      %s5582 = scalar_select %p5581, %s5578, 31
      %s5583 = smul.addr %s5580, 32
      %s5584 = sadd.s32 %s5582, %s5583
      %s5585 = smul.addr %s5584, 8
      %s5586 = scalar_lea.vmem %s5, %s5585
      // Predicated region
      $region49: #{tpu_custom_call.1} parent=39 // pred_check
        %p5587 = pneg %p158
      $region50: #{tpu_custom_call.1} parent=39 // pred_check_branch
        %5589 = sbr.rel (%p5587) target = $region52
      $region51: #{tpu_custom_call.1} parent=39 // pred_region
        %s5590 = smul.u32 16, %s21
      $region52: #{tpu_custom_call.1} parent=39 // pred_fallthru
        _
    $region40: #{tpu_custom_call.1} parent=5 // pred_fallthru
      _
    %p5591 = scmp.le.s32.totalorder 2, %s11
    // Predicated region
    $region53: #{tpu_custom_call.1} parent=5 // pred_check
      %p5592 = pneg %p5591
    $region54: #{tpu_custom_call.1} parent=5 // pred_check_branch
      %5594 = sbr.rel (%p5592) target = $region56
    $region55: #{tpu_custom_call.1} parent=5 // pred_region
      %s5595 = ssub.s32 %s11, 2
      // Predicated region
      $region57: #{tpu_custom_call.1} parent=55 // pred_check
        %p5596 = pneg %p164
      $region58: #{tpu_custom_call.1} parent=55 // pred_check_branch
        %5598 = sbr.rel (%p5596) target = $region60
      $region59: #{tpu_custom_call.1} parent=55 // pred_region
        %s5599 = smul.u32 16, %s23
        %p5600 = scmp.lt.s32.totalorder %s22, 1
        %s5601 = scalar_select %p5600, %s22, 1
        %p5602 = scmp.lt.s32.totalorder %s5599, 31
        %s5603 = scalar_select %p5602, %s5599, 31
        %s5604 = smul.addr %s5601, 32
        %s5605 = sadd.s32 %s5603, %s5604
        %s5606 = smul.addr %s5605, 8
        %s5607 = scalar_lea.vmem %s5, %s5606
      $region60: #{tpu_custom_call.1} parent=55 // pred_fallthru
        _
    $region56: #{tpu_custom_call.1} parent=5 // pred_fallthru
      _
  $region6: #{tpu_custom_call.1} parent=0 // loop_footer
    %s15 = sadd.s32 1, %s11
  $region7: #{tpu_custom_call.1} parent=0 // loop_footer_branch
    %10 = sbr.rel target = $region3
  $region8: #{tpu_custom_call.1} parent=0 // loop_exit
    _

// kernel: tpu_custom_call.1
$region0: #{tpu_custom_call.1}
  #allocation0 [shape = 'u32[]', space=smem, size = 0x4, offset = 0x4, fixed_abs, tag = 'smem constant byte address 0x4 - core index']
  #allocation1 [shape = 'u32[144,128]{1,0:T(1,128)}', space=vmem, size = 0x12000, scoped, tag = 'internal scratch']
  #allocation2 [shape = 'bf16[10,32,8]{2,1,0:T(16,128)(2,1)}', space=vmem, size = 0x14000, scoped, tag = 'scratch operand']
  %s0 = inlined_call_operand.vmem [shape: bf16[2,20,34,4], index: 0, kind: input, shape index: {}]
  %s1 = inlined_call_operand.vmem [shape: bf16[3,12,8], index: 1, kind: input, shape index: {}]
  %s2 = inlined_call_operand.vmem [shape: bf16[3,24,8], index: 2, kind: input, shape index: {}]
  %s3 = inlined_call_operand.vmem [shape: f32[3,8], index: 3, kind: input, shape index: {}]
  %s4 = inlined_call_operand.vmem [shape: f32[3,8], index: 4, kind: input, shape index: {}]
  %s5 = inlined_call_operand.vmem [shape: f32[2,256,8], index: 5, kind: output, shape index: {}]
  %s6 = sld [smem:[#allocation0]]
  $region61: #{tpu_custom_call.1} parent=0
    _
  %s8 = ssub.s32 1, %s6
  %s9 = scalar_select 0, %s8, %s6
  loop: start=0, step=1, limit=6
  $region2: #{tpu_custom_call.1} parent=0 // loop_pre_header
    _
  $region3: #{tpu_custom_call.1} parent=0 // loop_header
    %s11 = sphi 0, %s15
    %p12 = scmp.ge.s32.totalorder %s11, 6
    %s18 = sphi 0, %s30
    %s19 = sphi 0, %s26
    %s20 = sphi 0, %s18
    %s21 = sphi 0, %s19
    %s22 = sphi 0, %s20
    %s23 = sphi 0, %s21
    %s33 = sphi 0, %s35
    %s36 = sphi 0, %s33
    %s37 = sphi 0, %s36
    %s53 = sphi 0, %s37
    %s57 = sphi 0, %s57
    %s59 = sphi 0, %s57
    %s60 = sphi 0, %s59
    %s74 = sphi 0, %s60
    %s78 = sphi 0, %s78
    %s80 = sphi 0, %s78
    %s81 = sphi 0, %s80
    %s95 = sphi 0, %s81
    %s99 = sphi 0, %s99
    %s101 = sphi 0, %s99
    %s102 = sphi 0, %s101
    %s116 = sphi 0, %s102
    %s120 = sphi 0, %s120
    %s122 = sphi 0, %s120
    %s123 = sphi 0, %s122
    %s137 = sphi 0, %s123
    %s145 = sphi 0, %s147
    %s148 = sphi 0, %s145
    %s149 = sphi 0, %s148
    %s165 = sphi 0, %s149
  $region4: #{tpu_custom_call.1} parent=0 // loop_header_branch
    %14 = sbr.rel (%p12) target = $region8
  $region5: #{tpu_custom_call.1} parent=0 // loop_body
    %s16 = ssub.s32 %s11, 1
    %s17 = ssub.s32 %s11, 2
    %s24 = sadd.s32 1, %s19
    %p25 = scmp.ge.s32.totalorder %s24, 2
    %s26 = scalar_select %p25, 0, %s24
    %s27 = sadd.s32 1, %s18
    %s28 = scalar_select %p25, %s27, %s18
    %p29 = scmp.ge.s32.totalorder %s28, 2
    %s30 = scalar_select %p29, 0, %s28
    %s31 = ssub.s32 %s18, %s30
    %p32 = scmp.eq.s32.totalorder %s31, 0
    %s34 = sadd.s32 %s33, 1
    %s35 = scalar_select %p32, %s33, %s34
    %p38 = pneg %p32
    %p39 = scmp.eq.s32.totalorder %s11, 3
    %p40 = por %p38, %p39
    %p41 = scmp.ne.s32.totalorder %s33, %s36
    %p42 = scmp.eq.s32.totalorder %s11, 0
    %p43 = por %p41, %p42
    %p44 = scmp.ne.s32.totalorder %s33, %s36
    %p45 = scmp.eq.s32.totalorder %s16, 3
    %p46 = por %p44, %p45
    %p47 = scmp.ne.s32.totalorder %s36, %s37
    %p48 = scmp.eq.s32.totalorder %s16, 0
    %p49 = por %p47, %p48
    %p50 = scmp.ne.s32.totalorder %s36, %s37
    %p51 = scmp.eq.s32.totalorder %s17, 3
    %p52 = por %p50, %p51
    %p54 = scmp.ne.s32.totalorder %s37, %s53
    %p55 = scmp.eq.s32.totalorder %s17, 0
    %p56 = por %p54, %p55
    %s58 = sadd.s32 %s57, 1
    %p61 = scmp.eq.s32.totalorder %s11, 3
    %p62 = scmp.ne.s32.totalorder %s57, %s59
    %p63 = scmp.eq.s32.totalorder %s11, 0
    %p64 = por %p62, %p63
    %p65 = scmp.ne.s32.totalorder %s57, %s59
    %p66 = scmp.eq.s32.totalorder %s16, 3
    %p67 = por %p65, %p66
    %p68 = scmp.ne.s32.totalorder %s59, %s60
    %p69 = scmp.eq.s32.totalorder %s16, 0
    %p70 = por %p68, %p69
    %p71 = scmp.ne.s32.totalorder %s59, %s60
    %p72 = scmp.eq.s32.totalorder %s17, 3
    %p73 = por %p71, %p72
    %p75 = scmp.ne.s32.totalorder %s60, %s74
    %p76 = scmp.eq.s32.totalorder %s17, 0
    %p77 = por %p75, %p76
    %s79 = sadd.s32 %s78, 1
    %p82 = scmp.eq.s32.totalorder %s11, 3
    %p83 = scmp.ne.s32.totalorder %s78, %s80
    %p84 = scmp.eq.s32.totalorder %s11, 0
    %p85 = por %p83, %p84
    %p86 = scmp.ne.s32.totalorder %s78, %s80
    %p87 = scmp.eq.s32.totalorder %s16, 3
    %p88 = por %p86, %p87
    %p89 = scmp.ne.s32.totalorder %s80, %s81
    %p90 = scmp.eq.s32.totalorder %s16, 0
    %p91 = por %p89, %p90
    %p92 = scmp.ne.s32.totalorder %s80, %s81
    %p93 = scmp.eq.s32.totalorder %s17, 3
    %p94 = por %p92, %p93
    %p96 = scmp.ne.s32.totalorder %s81, %s95
    %p97 = scmp.eq.s32.totalorder %s17, 0
    %p98 = por %p96, %p97
    %s100 = sadd.s32 %s99, 1
    %p103 = scmp.eq.s32.totalorder %s11, 3
    %p104 = scmp.ne.s32.totalorder %s99, %s101
    %p105 = scmp.eq.s32.totalorder %s11, 0
    %p106 = por %p104, %p105
    %p107 = scmp.ne.s32.totalorder %s99, %s101
    %p108 = scmp.eq.s32.totalorder %s16, 3
    %p109 = por %p107, %p108
    %p110 = scmp.ne.s32.totalorder %s101, %s102
    %p111 = scmp.eq.s32.totalorder %s16, 0
    %p112 = por %p110, %p111
    %p113 = scmp.ne.s32.totalorder %s101, %s102
    %p114 = scmp.eq.s32.totalorder %s17, 3
    %p115 = por %p113, %p114
    %p117 = scmp.ne.s32.totalorder %s102, %s116
    %p118 = scmp.eq.s32.totalorder %s17, 0
    %p119 = por %p117, %p118
    %s121 = sadd.s32 %s120, 1
    %p124 = scmp.eq.s32.totalorder %s11, 3
    %p125 = scmp.ne.s32.totalorder %s120, %s122
    %p126 = scmp.eq.s32.totalorder %s11, 0
    %p127 = por %p125, %p126
    %p128 = scmp.ne.s32.totalorder %s120, %s122
    %p129 = scmp.eq.s32.totalorder %s16, 3
    %p130 = por %p128, %p129
    %p131 = scmp.ne.s32.totalorder %s122, %s123
    %p132 = scmp.eq.s32.totalorder %s16, 0
    %p133 = por %p131, %p132
    %p134 = scmp.ne.s32.totalorder %s122, %s123
    %p135 = scmp.eq.s32.totalorder %s17, 3
    %p136 = por %p134, %p135
    %p138 = scmp.ne.s32.totalorder %s123, %s137
    %p139 = scmp.eq.s32.totalorder %s17, 0
    %p140 = por %p138, %p139
    %s141 = ssub.s32 %s18, %s30
    %s142 = ssub.s32 %s19, %s26
    %s143 = sor.u32 %s141, %s142
    %p144 = scmp.eq.s32.totalorder %s143, 0
    %s146 = sadd.s32 %s145, 1
    %s147 = scalar_select %p144, %s145, %s146
    %p150 = pneg %p144
    %p151 = scmp.eq.s32.totalorder %s11, 3
    %p152 = por %p150, %p151
    %p153 = scmp.ne.s32.totalorder %s145, %s148
    %p154 = scmp.eq.s32.totalorder %s11, 0
    %p155 = por %p153, %p154
    %p156 = scmp.ne.s32.totalorder %s145, %s148
    %p157 = scmp.eq.s32.totalorder %s16, 3
    %p158 = por %p156, %p157
    %p159 = scmp.ne.s32.totalorder %s148, %s149
    %p160 = scmp.eq.s32.totalorder %s16, 0
    %p161 = por %p159, %p160
    %p162 = scmp.ne.s32.totalorder %s148, %s149
    %p163 = scmp.eq.s32.totalorder %s17, 3
    %p164 = por %p162, %p163
    %p166 = scmp.ne.s32.totalorder %s149, %s165
    %p167 = scmp.eq.s32.totalorder %s17, 0
    %p168 = por %p166, %p167
    %p169 = scmp.le.s32.totalorder 1, %s11
    %p170 = scmp.lt.s32.totalorder %s11, 5
    %p171 = pnand %p169, %p170
    %p172 = pneg %p171
    // Predicated region
    $region9: #{tpu_custom_call.1} parent=5 // pred_check
      _
    $region10: #{tpu_custom_call.1} parent=5 // pred_check_branch
      %174 = sbr.rel (%p171) target = $region12
    $region11: #{tpu_custom_call.1} parent=5 // pred_region
      %s175 = ssub.s32 %s11, 1
      // Predicated region
      $region13: #{tpu_custom_call.1} parent=11 // pred_check
        %p176 = pneg %p70
      $region14: #{tpu_custom_call.1} parent=11 // pred_check_branch
        %178 = sbr.rel (%p176) target = $region16
      $region15: #{tpu_custom_call.1} parent=11 // pred_region
        _
      $region16: #{tpu_custom_call.1} parent=11 // pred_fallthru
        _
      // Predicated region
      $region17: #{tpu_custom_call.1} parent=11 // pred_check
        %p179 = pneg %p91
      $region18: #{tpu_custom_call.1} parent=11 // pred_check_branch
        %181 = sbr.rel (%p179) target = $region20
      $region19: #{tpu_custom_call.1} parent=11 // pred_region
        _
      $region20: #{tpu_custom_call.1} parent=11 // pred_fallthru
        _
      // Predicated region
      $region21: #{tpu_custom_call.1} parent=11 // pred_check
        %p182 = pneg %p112
      $region22: #{tpu_custom_call.1} parent=11 // pred_check_branch
        %184 = sbr.rel (%p182) target = $region24
      $region23: #{tpu_custom_call.1} parent=11 // pred_region
        _
      $region24: #{tpu_custom_call.1} parent=11 // pred_fallthru
        _
      // Predicated region
      $region25: #{tpu_custom_call.1} parent=11 // pred_check
        %p185 = pneg %p133
      $region26: #{tpu_custom_call.1} parent=11 // pred_check_branch
        %187 = sbr.rel (%p185) target = $region28
      $region27: #{tpu_custom_call.1} parent=11 // pred_region
        _
      $region28: #{tpu_custom_call.1} parent=11 // pred_fallthru
        _
    $region12: #{tpu_custom_call.1} parent=5 // pred_fallthru
      _
    %p188 = scmp.lt.s32.totalorder %s11, 4
    // Predicated region
    $region29: #{tpu_custom_call.1} parent=5 // pred_check
      %p189 = pneg %p188
    $region30: #{tpu_custom_call.1} parent=5 // pred_check_branch
      %191 = sbr.rel (%p189) target = $region32
    $region31: #{tpu_custom_call.1} parent=5 // pred_region
      // Predicated region
      $region33: #{tpu_custom_call.1} parent=31 // pred_check
        %p192 = pneg %p43
      $region34: #{tpu_custom_call.1} parent=31 // pred_check_branch
        %194 = sbr.rel (%p192) target = $region36
      $region35: #{tpu_custom_call.1} parent=31 // pred_region
        %p195 = scmp.lt.s32.totalorder %s18, 1
        %s196 = scalar_select %p195, %s18, 1
        %s197 = smul.addr %s196, 100
        %s198 = smul.addr %s197, 4
        %s199 = scalar_lea.vmem %s0, %s198
      $region36: #{tpu_custom_call.1} parent=31 // pred_fallthru
        _
    $region32: #{tpu_custom_call.1} parent=5 // pred_fallthru
      _
    %p200 = scmp.le.s32.totalorder 1, %s11
    %p201 = scmp.lt.s32.totalorder %s11, 5
    %p202 = pnand %p200, %p201
    %p203 = pneg %p202
    // Predicated region
    $region37: #{tpu_custom_call.1} parent=5 // pred_check
      _
    $region38: #{tpu_custom_call.1} parent=5 // pred_check_branch
      %205 = sbr.rel (%p202) target = $region40
    $region39: #{tpu_custom_call.1} parent=5 // pred_region
      %s206 = ssub.s32 %s11, 1
      %p207 = scmp.lt.s32.totalorder %s20, 1
      %s208 = scalar_select %p207, %s20, 1
      %s209 = smul.addr %s208, 100
      %s210 = smul.addr %s209, 4
      %s211 = scalar_lea.vmem %s0, %s210
      %p212 = pneg %p49
      %p213 = pneg %p46
      %p214 = pneg %p70
      %p215 = pneg %p67
      %p216 = pneg %p91
      %p217 = pneg %p88
      %p218 = pneg %p112
      %p219 = pneg %p109
      %p220 = pneg %p133
      %p221 = pneg %p130
      %p222 = pneg %p161
      %p223 = pneg %p158
      %s224 = smul.u32 16, %s21
      %p225 = scmp.lt.s32.totalorder %s20, 1
      %s226 = scalar_select %p225, %s20, 1
      %p227 = scmp.lt.s32.totalorder %s224, 31
      %s228 = scalar_select %p227, %s224, 31
      %s229 = smul.addr %s226, 32
      %s230 = sadd.s32 %s228, %s229
      %s231 = smul.addr %s230, 8
      %s232 = scalar_lea.vmem %s5, %s231
      %p233 = scmp.lt.s32.totalorder %s20, 1
      %s234 = scalar_select %p233, %s20, 1
      %s235 = smul.addr %s234, 100
      %s236 = smul.addr %s235, 4
      %s237 = scalar_lea.vmem %s0, %s236
      %s238 = smul.u32 16, %s21
      %p239 = scmp.lt.s32.totalorder %s20, 1
      %s240 = scalar_select %p239, %s20, 1
      %p241 = scmp.lt.s32.totalorder %s238, 31
      %s242 = scalar_select %p241, %s238, 31
      %s243 = smul.addr %s240, 32
      %s244 = sadd.s32 %s242, %s243
      %s245 = smul.addr %s244, 8
      %s246 = scalar_lea.vmem %s5, %s245
      %s247 = smul.u32 16, %s21
      %s249 = smul.u32 %s21, 8
      %s250 = smul.u32 %s249, 5
      %s251 = smul.addr %s250, 4
      %s252 = scalar_lea.vmem %s237, %s251
      %v253 = vld [vmem:[%s252] sm:$0xf]
      %v254 = vld [vmem:[%s252 + $0x4] sm:$0xf]
      %v255 = vld [vmem:[%s252 + $0x8] sm:$0xf]
      %v256 = vld [vmem:[%s252 + $0xc] sm:$0xf]
      %v257 = vld [vmem:[%s252 + $0x10] sm:$0x1]
      %v258 = vld [vmem:[%s252 + $0x14] sm:$0xf]
      %v259 = vld [vmem:[%s252 + $0x18] sm:$0xf]
      %v260 = vld [vmem:[%s252 + $0x1c] sm:$0xf]
      %v261 = vld [vmem:[%s252 + $0x20] sm:$0xf]
      %v262 = vld [vmem:[%s252 + $0x24] sm:$0x1]
      %v263 = vld [vmem:[%s252 + $0x28] sm:$0xf]
      %v264 = vld [vmem:[%s252 + $0x2c] sm:$0xf]
      %v265 = vld [vmem:[%s252 + $0x30] sm:$0xf]
      %v266 = vld [vmem:[%s252 + $0x34] sm:$0xf]
      %v267 = vld [vmem:[%s252 + $0x38] sm:$0x1]
      %v268 = vld [vmem:[%s252 + $0x3c] sm:$0xf]
      %v269 = vld [vmem:[%s252 + $0x40] sm:$0xf]
      %v270 = vld [vmem:[%s252 + $0x44] sm:$0xf]
      %v271 = vld [vmem:[%s252 + $0x48] sm:$0xf]
      %v272 = vld [vmem:[%s252 + $0x4c] sm:$0x1]
      %v273 = vld [vmem:[%s252 + $0x50] sm:$0xf]
      %v274 = vld [vmem:[%s252 + $0x54] sm:$0xf]
      %v275 = vld [vmem:[%s252 + $0x58] sm:$0xf]
      %v276 = vld [vmem:[%s252 + $0x5c] sm:$0xf]
      %v277 = vld [vmem:[%s252 + $0x60] sm:$0x1]
      %v278 = vld [vmem:[%s252 + $0x64] sm:$0xf]
      %v279 = vld [vmem:[%s252 + $0x68] sm:$0xf]
      %v280 = vld [vmem:[%s252 + $0x6c] sm:$0xf]
      %v281 = vld [vmem:[%s252 + $0x70] sm:$0xf]
      %v282 = vld [vmem:[%s252 + $0x74] sm:$0x1]
      %v283 = vld [vmem:[%s252 + $0x78] sm:$0xf]
      %v284 = vld [vmem:[%s252 + $0x7c] sm:$0xf]
      %v285 = vld [vmem:[%s252 + $0x80] sm:$0xf]
      %v286 = vld [vmem:[%s252 + $0x84] sm:$0xf]
      %v287 = vld [vmem:[%s252 + $0x88] sm:$0x1]
      %v288 = vld [vmem:[%s252 + $0x8c] sm:$0xf]
      %v289 = vld [vmem:[%s252 + $0x90] sm:$0xf]
      %v290 = vld [vmem:[%s252 + $0x94] sm:$0xf]
      %v291 = vld [vmem:[%s252 + $0x98] sm:$0xf]
      %v292 = vld [vmem:[%s252 + $0x9c] sm:$0x1]
      %v293 = vld [vmem:[%s252 + $0xa0] sm:$0xf]
      %v294 = vld [vmem:[%s252 + $0xa4] sm:$0xf]
      %v295 = vld [vmem:[%s252 + $0xa8] sm:$0xf]
      %v296 = vld [vmem:[%s252 + $0xac] sm:$0xf]
      %v297 = vld [vmem:[%s252 + $0xb0] sm:$0x1]
      %v298 = vld [vmem:[%s252 + $0xb4] sm:$0xf]
      %v299 = vld [vmem:[%s252 + $0xb8] sm:$0xf]
      %v300 = vld [vmem:[%s252 + $0xbc] sm:$0xf]
      %v301 = vld [vmem:[%s252 + $0xc0] sm:$0xf]
      %v302 = vld [vmem:[%s252 + $0xc4] sm:$0x1]
      %vm303 = vsmask.f32 3328
      %vm304 = vsmask.f32 7440
      %vm305 = vmor %vm303, %vm304
      %v307 = vshrl.u32 %v253, 16
      %v309 = vrot.slane %v307, 4
      %v310 = vshll.u32 %v253, 16
      %v312 = vrot.slane %v310, 5
      %v313 = vor.u32 %v309, %v312
      %v314 = vrot.slane %v313, 4
      %v316 = vshll.u32 %v254, 16
      %v318 = vrot.slane %v316, 5
      %v319 = vsel %vm305, %v314, %v318
      %v320 = vshrl.u32 %v254, 16
      %v322 = vrot.slane %v320, 4
      %v323 = vor.u32 %v322, %v318
      %v324 = vrot.slane %v323, 4
      %v326 = vshll.u32 %v255, 16
      %v328 = vrot.slane %v326, 5
      %v329 = vsel %vm305, %v324, %v328
      %v330 = vshrl.u32 %v255, 16
      %v332 = vrot.slane %v330, 4
      %v333 = vor.u32 %v332, %v328
      %v334 = vrot.slane %v333, 4
      %v336 = vshll.u32 %v256, 16
      %v338 = vrot.slane %v336, 5
      %v339 = vsel %vm305, %v334, %v338
      %v340 = vshrl.u32 %v256, 16
      %v342 = vrot.slane %v340, 4
      %v343 = vor.u32 %v342, %v338
      %v344 = vrot.slane %v343, 4
      %v346 = vshll.u32 %v257, 16
      %v348 = vrot.slane %v346, 5
      %v349 = vsel %vm305, %v344, %v348
      %v351 = vshrl.u32 %v258, 16
      %v353 = vrot.slane %v351, 4
      %v354 = vshll.u32 %v258, 16
      %v356 = vrot.slane %v354, 5
      %v357 = vor.u32 %v353, %v356
      %v358 = vrot.slane %v357, 4
      %v360 = vshll.u32 %v259, 16
      %v362 = vrot.slane %v360, 5
      %v363 = vsel %vm305, %v358, %v362
      %v364 = vshrl.u32 %v259, 16
      %v366 = vrot.slane %v364, 4
      %v367 = vor.u32 %v366, %v362
      %v368 = vrot.slane %v367, 4
      %v370 = vshll.u32 %v260, 16
      %v372 = vrot.slane %v370, 5
      %v373 = vsel %vm305, %v368, %v372
      %v374 = vshrl.u32 %v260, 16
      %v376 = vrot.slane %v374, 4
      %v377 = vor.u32 %v376, %v372
      %v378 = vrot.slane %v377, 4
      %v380 = vshll.u32 %v261, 16
      %v382 = vrot.slane %v380, 5
      %v383 = vsel %vm305, %v378, %v382
      %v384 = vshrl.u32 %v261, 16
      %v386 = vrot.slane %v384, 4
      %v387 = vor.u32 %v386, %v382
      %v388 = vrot.slane %v387, 4
      %v390 = vshll.u32 %v262, 16
      %v392 = vrot.slane %v390, 5
      %v393 = vsel %vm305, %v388, %v392
      %v395 = vshrl.u32 %v263, 16
      %v397 = vrot.slane %v395, 4
      %v398 = vshll.u32 %v263, 16
      %v400 = vrot.slane %v398, 5
      %v401 = vor.u32 %v397, %v400
      %v402 = vrot.slane %v401, 4
      %v404 = vshll.u32 %v264, 16
      %v406 = vrot.slane %v404, 5
      %v407 = vsel %vm305, %v402, %v406
      %v408 = vshrl.u32 %v264, 16
      %v410 = vrot.slane %v408, 4
      %v411 = vor.u32 %v410, %v406
      %v412 = vrot.slane %v411, 4
      %v414 = vshll.u32 %v265, 16
      %v416 = vrot.slane %v414, 5
      %v417 = vsel %vm305, %v412, %v416
      %v418 = vshrl.u32 %v265, 16
      %v420 = vrot.slane %v418, 4
      %v421 = vor.u32 %v420, %v416
      %v422 = vrot.slane %v421, 4
      %v424 = vshll.u32 %v266, 16
      %v426 = vrot.slane %v424, 5
      %v427 = vsel %vm305, %v422, %v426
      %v428 = vshrl.u32 %v266, 16
      %v430 = vrot.slane %v428, 4
      %v431 = vor.u32 %v430, %v426
      %v432 = vrot.slane %v431, 4
      %v434 = vshll.u32 %v267, 16
      %v436 = vrot.slane %v434, 5
      %v437 = vsel %vm305, %v432, %v436
      %v439 = vshrl.u32 %v268, 16
      %v441 = vrot.slane %v439, 4
      %v442 = vshll.u32 %v268, 16
      %v444 = vrot.slane %v442, 5
      %v445 = vor.u32 %v441, %v444
      %v446 = vrot.slane %v445, 4
      %v448 = vshll.u32 %v269, 16
      %v450 = vrot.slane %v448, 5
      %v451 = vsel %vm305, %v446, %v450
      %v452 = vshrl.u32 %v269, 16
      %v454 = vrot.slane %v452, 4
      %v455 = vor.u32 %v454, %v450
      %v456 = vrot.slane %v455, 4
      %v458 = vshll.u32 %v270, 16
      %v460 = vrot.slane %v458, 5
      %v461 = vsel %vm305, %v456, %v460
      %v462 = vshrl.u32 %v270, 16
      %v464 = vrot.slane %v462, 4
      %v465 = vor.u32 %v464, %v460
      %v466 = vrot.slane %v465, 4
      %v468 = vshll.u32 %v271, 16
      %v470 = vrot.slane %v468, 5
      %v471 = vsel %vm305, %v466, %v470
      %v472 = vshrl.u32 %v271, 16
      %v474 = vrot.slane %v472, 4
      %v475 = vor.u32 %v474, %v470
      %v476 = vrot.slane %v475, 4
      %v478 = vshll.u32 %v272, 16
      %v480 = vrot.slane %v478, 5
      %v481 = vsel %vm305, %v476, %v480
      %v483 = vshrl.u32 %v273, 16
      %v485 = vrot.slane %v483, 4
      %v486 = vshll.u32 %v273, 16
      %v488 = vrot.slane %v486, 5
      %v489 = vor.u32 %v485, %v488
      %v490 = vrot.slane %v489, 4
      %v492 = vshll.u32 %v274, 16
      %v494 = vrot.slane %v492, 5
      %v495 = vsel %vm305, %v490, %v494
      %v496 = vshrl.u32 %v274, 16
      %v498 = vrot.slane %v496, 4
      %v499 = vor.u32 %v498, %v494
      %v500 = vrot.slane %v499, 4
      %v502 = vshll.u32 %v275, 16
      %v504 = vrot.slane %v502, 5
      %v505 = vsel %vm305, %v500, %v504
      %v506 = vshrl.u32 %v275, 16
      %v508 = vrot.slane %v506, 4
      %v509 = vor.u32 %v508, %v504
      %v510 = vrot.slane %v509, 4
      %v512 = vshll.u32 %v276, 16
      %v514 = vrot.slane %v512, 5
      %v515 = vsel %vm305, %v510, %v514
      %v516 = vshrl.u32 %v276, 16
      %v518 = vrot.slane %v516, 4
      %v519 = vor.u32 %v518, %v514
      %v520 = vrot.slane %v519, 4
      %v522 = vshll.u32 %v277, 16
      %v524 = vrot.slane %v522, 5
      %v525 = vsel %vm305, %v520, %v524
      %v527 = vshrl.u32 %v278, 16
      %v529 = vrot.slane %v527, 4
      %v530 = vshll.u32 %v278, 16
      %v532 = vrot.slane %v530, 5
      %v533 = vor.u32 %v529, %v532
      %v534 = vrot.slane %v533, 4
      %v536 = vshll.u32 %v279, 16
      %v538 = vrot.slane %v536, 5
      %v539 = vsel %vm305, %v534, %v538
      %v540 = vshrl.u32 %v279, 16
      %v542 = vrot.slane %v540, 4
      %v543 = vor.u32 %v542, %v538
      %v544 = vrot.slane %v543, 4
      %v546 = vshll.u32 %v280, 16
      %v548 = vrot.slane %v546, 5
      %v549 = vsel %vm305, %v544, %v548
      %v550 = vshrl.u32 %v280, 16
      %v552 = vrot.slane %v550, 4
      %v553 = vor.u32 %v552, %v548
      %v554 = vrot.slane %v553, 4
      %v556 = vshll.u32 %v281, 16
      %v558 = vrot.slane %v556, 5
      %v559 = vsel %vm305, %v554, %v558
      %v560 = vshrl.u32 %v281, 16
      %v562 = vrot.slane %v560, 4
      %v563 = vor.u32 %v562, %v558
      %v564 = vrot.slane %v563, 4
      %v566 = vshll.u32 %v282, 16
      %v568 = vrot.slane %v566, 5
      %v569 = vsel %vm305, %v564, %v568
      %v571 = vshrl.u32 %v283, 16
      %v573 = vrot.slane %v571, 4
      %v574 = vshll.u32 %v283, 16
      %v576 = vrot.slane %v574, 5
      %v577 = vor.u32 %v573, %v576
      %v578 = vrot.slane %v577, 4
      %v580 = vshll.u32 %v284, 16
      %v582 = vrot.slane %v580, 5
      %v583 = vsel %vm305, %v578, %v582
      %v584 = vshrl.u32 %v284, 16
      %v586 = vrot.slane %v584, 4
      %v587 = vor.u32 %v586, %v582
      %v588 = vrot.slane %v587, 4
      %v590 = vshll.u32 %v285, 16
      %v592 = vrot.slane %v590, 5
      %v593 = vsel %vm305, %v588, %v592
      %v594 = vshrl.u32 %v285, 16
      %v596 = vrot.slane %v594, 4
      %v597 = vor.u32 %v596, %v592
      %v598 = vrot.slane %v597, 4
      %v600 = vshll.u32 %v286, 16
      %v602 = vrot.slane %v600, 5
      %v603 = vsel %vm305, %v598, %v602
      %v604 = vshrl.u32 %v286, 16
      %v606 = vrot.slane %v604, 4
      %v607 = vor.u32 %v606, %v602
      %v608 = vrot.slane %v607, 4
      %v610 = vshll.u32 %v287, 16
      %v612 = vrot.slane %v610, 5
      %v613 = vsel %vm305, %v608, %v612
      %v615 = vshrl.u32 %v288, 16
      %v617 = vrot.slane %v615, 4
      %v618 = vshll.u32 %v288, 16
      %v620 = vrot.slane %v618, 5
      %v621 = vor.u32 %v617, %v620
      %v622 = vrot.slane %v621, 4
      %v624 = vshll.u32 %v289, 16
      %v626 = vrot.slane %v624, 5
      %v627 = vsel %vm305, %v622, %v626
      %v628 = vshrl.u32 %v289, 16
      %v630 = vrot.slane %v628, 4
      %v631 = vor.u32 %v630, %v626
      %v632 = vrot.slane %v631, 4
      %v634 = vshll.u32 %v290, 16
      %v636 = vrot.slane %v634, 5
      %v637 = vsel %vm305, %v632, %v636
      %v638 = vshrl.u32 %v290, 16
      %v640 = vrot.slane %v638, 4
      %v641 = vor.u32 %v640, %v636
      %v642 = vrot.slane %v641, 4
      %v644 = vshll.u32 %v291, 16
      %v646 = vrot.slane %v644, 5
      %v647 = vsel %vm305, %v642, %v646
      %v648 = vshrl.u32 %v291, 16
      %v650 = vrot.slane %v648, 4
      %v651 = vor.u32 %v650, %v646
      %v652 = vrot.slane %v651, 4
      %v654 = vshll.u32 %v292, 16
      %v656 = vrot.slane %v654, 5
      %v657 = vsel %vm305, %v652, %v656
      %v659 = vshrl.u32 %v293, 16
      %v661 = vrot.slane %v659, 4
      %v662 = vshll.u32 %v293, 16
      %v664 = vrot.slane %v662, 5
      %v665 = vor.u32 %v661, %v664
      %v666 = vrot.slane %v665, 4
      %v668 = vshll.u32 %v294, 16
      %v670 = vrot.slane %v668, 5
      %v671 = vsel %vm305, %v666, %v670
      %v672 = vshrl.u32 %v294, 16
      %v674 = vrot.slane %v672, 4
      %v675 = vor.u32 %v674, %v670
      %v676 = vrot.slane %v675, 4
      %v678 = vshll.u32 %v295, 16
      %v680 = vrot.slane %v678, 5
      %v681 = vsel %vm305, %v676, %v680
      %v682 = vshrl.u32 %v295, 16
      %v684 = vrot.slane %v682, 4
      %v685 = vor.u32 %v684, %v680
      %v686 = vrot.slane %v685, 4
      %v688 = vshll.u32 %v296, 16
      %v690 = vrot.slane %v688, 5
      %v691 = vsel %vm305, %v686, %v690
      %v692 = vshrl.u32 %v296, 16
      %v694 = vrot.slane %v692, 4
      %v695 = vor.u32 %v694, %v690
      %v696 = vrot.slane %v695, 4
      %v698 = vshll.u32 %v297, 16
      %v700 = vrot.slane %v698, 5
      %v701 = vsel %vm305, %v696, %v700
      %v703 = vshrl.u32 %v298, 16
      %v705 = vrot.slane %v703, 4
      %v706 = vshll.u32 %v298, 16
      %v708 = vrot.slane %v706, 5
      %v709 = vor.u32 %v705, %v708
      %v710 = vrot.slane %v709, 4
      %v712 = vshll.u32 %v299, 16
      %v714 = vrot.slane %v712, 5
      %v715 = vsel %vm305, %v710, %v714
      %v716 = vshrl.u32 %v299, 16
      %v718 = vrot.slane %v716, 4
      %v719 = vor.u32 %v718, %v714
      %v720 = vrot.slane %v719, 4
      %v722 = vshll.u32 %v300, 16
      %v724 = vrot.slane %v722, 5
      %v725 = vsel %vm305, %v720, %v724
      %v726 = vshrl.u32 %v300, 16
      %v728 = vrot.slane %v726, 4
      %v729 = vor.u32 %v728, %v724
      %v730 = vrot.slane %v729, 4
      %v732 = vshll.u32 %v301, 16
      %v734 = vrot.slane %v732, 5
      %v735 = vsel %vm305, %v730, %v734
      %v736 = vshrl.u32 %v301, 16
      %v738 = vrot.slane %v736, 4
      %v739 = vor.u32 %v738, %v734
      %v740 = vrot.slane %v739, 4
      %v742 = vshll.u32 %v302, 16
      %v744 = vrot.slane %v742, 5
      %v745 = vsel %vm305, %v740, %v744
      %vm796 = vcmask 1042432
      %vm797 = vcmask 1046532
      %vm798 = vmor %vm796, %vm797
      %v799 = vrot.slane %v253, 5
      %v800 = vrot.slane %v799, 4
      %v801 = vrot.slane %v254, 5
      %v802 = vsel %vm798, %v800, %v801
      %v803 = vrot.slane %v801, 4
      %v804 = vrot.slane %v255, 5
      %v805 = vsel %vm798, %v803, %v804
      %v806 = vrot.slane %v804, 4
      %v807 = vrot.slane %v256, 5
      %v808 = vsel %vm798, %v806, %v807
      %v809 = vrot.slane %v807, 4
      %v810 = vrot.slane %v257, 5
      %v811 = vsel %vm798, %v809, %v810
      %v812 = vrot.slane %v258, 5
      %v813 = vrot.slane %v812, 4
      %v814 = vrot.slane %v259, 5
      %v815 = vsel %vm798, %v813, %v814
      %v816 = vrot.slane %v814, 4
      %v817 = vrot.slane %v260, 5
      %v818 = vsel %vm798, %v816, %v817
      %v819 = vrot.slane %v817, 4
      %v820 = vrot.slane %v261, 5
      %v821 = vsel %vm798, %v819, %v820
      %v822 = vrot.slane %v820, 4
      %v823 = vrot.slane %v262, 5
      %v824 = vsel %vm798, %v822, %v823
      %v825 = vrot.slane %v263, 5
      %v826 = vrot.slane %v825, 4
      %v827 = vrot.slane %v264, 5
      %v828 = vsel %vm798, %v826, %v827
      %v829 = vrot.slane %v827, 4
      %v830 = vrot.slane %v265, 5
      %v831 = vsel %vm798, %v829, %v830
      %v832 = vrot.slane %v830, 4
      %v833 = vrot.slane %v266, 5
      %v834 = vsel %vm798, %v832, %v833
      %v835 = vrot.slane %v833, 4
      %v836 = vrot.slane %v267, 5
      %v837 = vsel %vm798, %v835, %v836
      %v838 = vrot.slane %v268, 5
      %v839 = vrot.slane %v838, 4
      %v840 = vrot.slane %v269, 5
      %v841 = vsel %vm798, %v839, %v840
      %v842 = vrot.slane %v840, 4
      %v843 = vrot.slane %v270, 5
      %v844 = vsel %vm798, %v842, %v843
      %v845 = vrot.slane %v843, 4
      %v846 = vrot.slane %v271, 5
      %v847 = vsel %vm798, %v845, %v846
      %v848 = vrot.slane %v846, 4
      %v849 = vrot.slane %v272, 5
      %v850 = vsel %vm798, %v848, %v849
      %v851 = vrot.slane %v273, 5
      %v852 = vrot.slane %v851, 4
      %v853 = vrot.slane %v274, 5
      %v854 = vsel %vm798, %v852, %v853
      %v855 = vrot.slane %v853, 4
      %v856 = vrot.slane %v275, 5
      %v857 = vsel %vm798, %v855, %v856
      %v858 = vrot.slane %v856, 4
      %v859 = vrot.slane %v276, 5
      %v860 = vsel %vm798, %v858, %v859
      %v861 = vrot.slane %v859, 4
      %v862 = vrot.slane %v277, 5
      %v863 = vsel %vm798, %v861, %v862
      %v864 = vrot.slane %v278, 5
      %v865 = vrot.slane %v864, 4
      %v866 = vrot.slane %v279, 5
      %v867 = vsel %vm798, %v865, %v866
      %v868 = vrot.slane %v866, 4
      %v869 = vrot.slane %v280, 5
      %v870 = vsel %vm798, %v868, %v869
      %v871 = vrot.slane %v869, 4
      %v872 = vrot.slane %v281, 5
      %v873 = vsel %vm798, %v871, %v872
      %v874 = vrot.slane %v872, 4
      %v875 = vrot.slane %v282, 5
      %v876 = vsel %vm798, %v874, %v875
      %v877 = vrot.slane %v283, 5
      %v878 = vrot.slane %v877, 4
      %v879 = vrot.slane %v284, 5
      %v880 = vsel %vm798, %v878, %v879
      %v881 = vrot.slane %v879, 4
      %v882 = vrot.slane %v285, 5
      %v883 = vsel %vm798, %v881, %v882
      %v884 = vrot.slane %v882, 4
      %v885 = vrot.slane %v286, 5
      %v886 = vsel %vm798, %v884, %v885
      %v887 = vrot.slane %v885, 4
      %v888 = vrot.slane %v287, 5
      %v889 = vsel %vm798, %v887, %v888
      %v890 = vrot.slane %v288, 5
      %v891 = vrot.slane %v890, 4
      %v892 = vrot.slane %v289, 5
      %v893 = vsel %vm798, %v891, %v892
      %v894 = vrot.slane %v892, 4
      %v895 = vrot.slane %v290, 5
      %v896 = vsel %vm798, %v894, %v895
      %v897 = vrot.slane %v895, 4
      %v898 = vrot.slane %v291, 5
      %v899 = vsel %vm798, %v897, %v898
      %v900 = vrot.slane %v898, 4
      %v901 = vrot.slane %v292, 5
      %v902 = vsel %vm798, %v900, %v901
      %v903 = vrot.slane %v293, 5
      %v904 = vrot.slane %v903, 4
      %v905 = vrot.slane %v294, 5
      %v906 = vsel %vm798, %v904, %v905
      %v907 = vrot.slane %v905, 4
      %v908 = vrot.slane %v295, 5
      %v909 = vsel %vm798, %v907, %v908
      %v910 = vrot.slane %v908, 4
      %v911 = vrot.slane %v296, 5
      %v912 = vsel %vm798, %v910, %v911
      %v913 = vrot.slane %v911, 4
      %v914 = vrot.slane %v297, 5
      %v915 = vsel %vm798, %v913, %v914
      %v916 = vrot.slane %v298, 5
      %v917 = vrot.slane %v916, 4
      %v918 = vrot.slane %v299, 5
      %v919 = vsel %vm798, %v917, %v918
      %v920 = vrot.slane %v918, 4
      %v921 = vrot.slane %v300, 5
      %v922 = vsel %vm798, %v920, %v921
      %v923 = vrot.slane %v921, 4
      %v924 = vrot.slane %v301, 5
      %v925 = vsel %vm798, %v923, %v924
      %v926 = vrot.slane %v924, 4
      %v927 = vrot.slane %v302, 5
      %v928 = vsel %vm798, %v926, %v927
      %v929 = vunpack.c.l.b16 %v253
      %v930 = vunpack.c.l.b16 %v254
      %v931 = vunpack.c.l.b16 %v255
      %v932 = vunpack.c.l.b16 %v256
      %v933 = vunpack.c.l.b16 %v258
      %v934 = vunpack.c.l.b16 %v259
      %v935 = vunpack.c.l.b16 %v260
      %v936 = vunpack.c.l.b16 %v261
      %v937 = vunpack.c.l.b16 %v263
      %v938 = vunpack.c.l.b16 %v264
      %v939 = vunpack.c.l.b16 %v265
      %v940 = vunpack.c.l.b16 %v266
      %v941 = vunpack.c.l.b16 %v268
      %v942 = vunpack.c.l.b16 %v269
      %v943 = vunpack.c.l.b16 %v270
      %v944 = vunpack.c.l.b16 %v271
      %v945 = vunpack.c.l.b16 %v273
      %v946 = vunpack.c.l.b16 %v274
      %v947 = vunpack.c.l.b16 %v275
      %v948 = vunpack.c.l.b16 %v276
      %v949 = vunpack.c.l.b16 %v278
      %v950 = vunpack.c.l.b16 %v279
      %v951 = vunpack.c.l.b16 %v280
      %v952 = vunpack.c.l.b16 %v281
      %v953 = vunpack.c.l.b16 %v283
      %v954 = vunpack.c.l.b16 %v284
      %v955 = vunpack.c.l.b16 %v285
      %v956 = vunpack.c.l.b16 %v286
      %v957 = vunpack.c.l.b16 %v288
      %v958 = vunpack.c.l.b16 %v289
      %v959 = vunpack.c.l.b16 %v290
      %v960 = vunpack.c.l.b16 %v291
      %v961 = vunpack.c.l.b16 %v293
      %v962 = vunpack.c.l.b16 %v294
      %v963 = vunpack.c.l.b16 %v295
      %v964 = vunpack.c.l.b16 %v296
      %v965 = vunpack.c.l.b16 %v298
      %v966 = vunpack.c.l.b16 %v299
      %v967 = vunpack.c.l.b16 %v300
      %v968 = vunpack.c.l.b16 %v301
      %v969 = vpack.c.b16 %v930, %v929
      %v970 = vpack.c.b16 %v932, %v931
      %v971 = vpack.c.b16 %v934, %v933
      %v972 = vpack.c.b16 %v936, %v935
      %v973 = vpack.c.b16 %v938, %v937
      %v974 = vpack.c.b16 %v940, %v939
      %v975 = vpack.c.b16 %v942, %v941
      %v976 = vpack.c.b16 %v944, %v943
      %v977 = vpack.c.b16 %v946, %v945
      %v978 = vpack.c.b16 %v948, %v947
      %v979 = vpack.c.b16 %v950, %v949
      %v980 = vpack.c.b16 %v952, %v951
      %v981 = vpack.c.b16 %v954, %v953
      %v982 = vpack.c.b16 %v956, %v955
      %v983 = vpack.c.b16 %v958, %v957
      %v984 = vpack.c.b16 %v960, %v959
      %v985 = vpack.c.b16 %v962, %v961
      %v986 = vpack.c.b16 %v964, %v963
      %v987 = vpack.c.b16 %v966, %v965
      %v988 = vpack.c.b16 %v968, %v967
      %v989 = vunpack.c.l.b16 %v319
      %v990 = vunpack.c.l.b16 %v329
      %v991 = vunpack.c.l.b16 %v339
      %v992 = vunpack.c.l.b16 %v349
      %v993 = vunpack.c.l.b16 %v363
      %v994 = vunpack.c.l.b16 %v373
      %v995 = vunpack.c.l.b16 %v383
      %v996 = vunpack.c.l.b16 %v393
      %v997 = vunpack.c.l.b16 %v407
      %v998 = vunpack.c.l.b16 %v417
      %v999 = vunpack.c.l.b16 %v427
      %v1000 = vunpack.c.l.b16 %v437
      %v1001 = vunpack.c.l.b16 %v451
      %v1002 = vunpack.c.l.b16 %v461
      %v1003 = vunpack.c.l.b16 %v471
      %v1004 = vunpack.c.l.b16 %v481
      %v1005 = vunpack.c.l.b16 %v495
      %v1006 = vunpack.c.l.b16 %v505
      %v1007 = vunpack.c.l.b16 %v515
      %v1008 = vunpack.c.l.b16 %v525
      %v1009 = vunpack.c.l.b16 %v539
      %v1010 = vunpack.c.l.b16 %v549
      %v1011 = vunpack.c.l.b16 %v559
      %v1012 = vunpack.c.l.b16 %v569
      %v1013 = vunpack.c.l.b16 %v583
      %v1014 = vunpack.c.l.b16 %v593
      %v1015 = vunpack.c.l.b16 %v603
      %v1016 = vunpack.c.l.b16 %v613
      %v1017 = vunpack.c.l.b16 %v627
      %v1018 = vunpack.c.l.b16 %v637
      %v1019 = vunpack.c.l.b16 %v647
      %v1020 = vunpack.c.l.b16 %v657
      %v1021 = vunpack.c.l.b16 %v671
      %v1022 = vunpack.c.l.b16 %v681
      %v1023 = vunpack.c.l.b16 %v691
      %v1024 = vunpack.c.l.b16 %v701
      %v1025 = vunpack.c.l.b16 %v715
      %v1026 = vunpack.c.l.b16 %v725
      %v1027 = vunpack.c.l.b16 %v735
      %v1028 = vunpack.c.l.b16 %v745
      %v1029 = vpack.c.b16 %v990, %v989
      %v1030 = vpack.c.b16 %v992, %v991
      %v1031 = vpack.c.b16 %v994, %v993
      %v1032 = vpack.c.b16 %v996, %v995
      %v1033 = vpack.c.b16 %v998, %v997
      %v1034 = vpack.c.b16 %v1000, %v999
      %v1035 = vpack.c.b16 %v1002, %v1001
      %v1036 = vpack.c.b16 %v1004, %v1003
      %v1037 = vpack.c.b16 %v1006, %v1005
      %v1038 = vpack.c.b16 %v1008, %v1007
      %v1039 = vpack.c.b16 %v1010, %v1009
      %v1040 = vpack.c.b16 %v1012, %v1011
      %v1041 = vpack.c.b16 %v1014, %v1013
      %v1042 = vpack.c.b16 %v1016, %v1015
      %v1043 = vpack.c.b16 %v1018, %v1017
      %v1044 = vpack.c.b16 %v1020, %v1019
      %v1045 = vpack.c.b16 %v1022, %v1021
      %v1046 = vpack.c.b16 %v1024, %v1023
      %v1047 = vpack.c.b16 %v1026, %v1025
      %v1048 = vpack.c.b16 %v1028, %v1027
      %1049 = vrot.lane.b32.xlu0 %v1029, 4
      %v1050 = vpop.permute.xlu0 %1049
      %1051 = vrot.lane.b32.xlu0 %v1030, 4
      %v1052 = vpop.permute.xlu0 %1051
      %1053 = vrot.lane.b32.xlu0 %v1031, 4
      %v1054 = vpop.permute.xlu0 %1053
      %1055 = vrot.lane.b32.xlu0 %v1032, 4
      %v1056 = vpop.permute.xlu0 %1055
      %1057 = vrot.lane.b32.xlu0 %v1033, 4
      %v1058 = vpop.permute.xlu0 %1057
      %1059 = vrot.lane.b32.xlu0 %v1034, 4
      %v1060 = vpop.permute.xlu0 %1059
      %1061 = vrot.lane.b32.xlu0 %v1035, 4
      %v1062 = vpop.permute.xlu0 %1061
      %1063 = vrot.lane.b32.xlu0 %v1036, 4
      %v1064 = vpop.permute.xlu0 %1063
      %1065 = vrot.lane.b32.xlu0 %v1037, 4
      %v1066 = vpop.permute.xlu0 %1065
      %1067 = vrot.lane.b32.xlu0 %v1038, 4
      %v1068 = vpop.permute.xlu0 %1067
      %1069 = vrot.lane.b32.xlu0 %v1039, 4
      %v1070 = vpop.permute.xlu0 %1069
      %1071 = vrot.lane.b32.xlu0 %v1040, 4
      %v1072 = vpop.permute.xlu0 %1071
      %1073 = vrot.lane.b32.xlu0 %v1041, 4
      %v1074 = vpop.permute.xlu0 %1073
      %1075 = vrot.lane.b32.xlu0 %v1042, 4
      %v1076 = vpop.permute.xlu0 %1075
      %1077 = vrot.lane.b32.xlu0 %v1043, 4
      %v1078 = vpop.permute.xlu0 %1077
      %1079 = vrot.lane.b32.xlu0 %v1044, 4
      %v1080 = vpop.permute.xlu0 %1079
      %1081 = vrot.lane.b32.xlu0 %v1045, 4
      %v1082 = vpop.permute.xlu0 %1081
      %1083 = vrot.lane.b32.xlu0 %v1046, 4
      %v1084 = vpop.permute.xlu0 %1083
      %1085 = vrot.lane.b32.xlu0 %v1047, 4
      %v1086 = vpop.permute.xlu0 %1085
      %1087 = vrot.lane.b32.xlu0 %v1048, 4
      %v1088 = vpop.permute.xlu0 %1087
      %v1089 = vunpack.c.l.b16 %v802
      %v1090 = vunpack.c.l.b16 %v805
      %v1091 = vunpack.c.l.b16 %v808
      %v1092 = vunpack.c.l.b16 %v811
      %v1093 = vunpack.c.l.b16 %v815
      %v1094 = vunpack.c.l.b16 %v818
      %v1095 = vunpack.c.l.b16 %v821
      %v1096 = vunpack.c.l.b16 %v824
      %v1097 = vunpack.c.l.b16 %v828
      %v1098 = vunpack.c.l.b16 %v831
      %v1099 = vunpack.c.l.b16 %v834
      %v1100 = vunpack.c.l.b16 %v837
      %v1101 = vunpack.c.l.b16 %v841
      %v1102 = vunpack.c.l.b16 %v844
      %v1103 = vunpack.c.l.b16 %v847
      %v1104 = vunpack.c.l.b16 %v850
      %v1105 = vunpack.c.l.b16 %v854
      %v1106 = vunpack.c.l.b16 %v857
      %v1107 = vunpack.c.l.b16 %v860
      %v1108 = vunpack.c.l.b16 %v863
      %v1109 = vunpack.c.l.b16 %v867
      %v1110 = vunpack.c.l.b16 %v870
      %v1111 = vunpack.c.l.b16 %v873
      %v1112 = vunpack.c.l.b16 %v876
      %v1113 = vunpack.c.l.b16 %v880
      %v1114 = vunpack.c.l.b16 %v883
      %v1115 = vunpack.c.l.b16 %v886
      %v1116 = vunpack.c.l.b16 %v889
      %v1117 = vunpack.c.l.b16 %v893
      %v1118 = vunpack.c.l.b16 %v896
      %v1119 = vunpack.c.l.b16 %v899
      %v1120 = vunpack.c.l.b16 %v902
      %v1121 = vunpack.c.l.b16 %v906
      %v1122 = vunpack.c.l.b16 %v909
      %v1123 = vunpack.c.l.b16 %v912
      %v1124 = vunpack.c.l.b16 %v915
      %v1125 = vunpack.c.l.b16 %v919
      %v1126 = vunpack.c.l.b16 %v922
      %v1127 = vunpack.c.l.b16 %v925
      %v1128 = vunpack.c.l.b16 %v928
      %v1129 = vpack.c.b16 %v1090, %v1089
      %v1130 = vpack.c.b16 %v1092, %v1091
      %v1131 = vpack.c.b16 %v1094, %v1093
      %v1132 = vpack.c.b16 %v1096, %v1095
      %v1133 = vpack.c.b16 %v1098, %v1097
      %v1134 = vpack.c.b16 %v1100, %v1099
      %v1135 = vpack.c.b16 %v1102, %v1101
      %v1136 = vpack.c.b16 %v1104, %v1103
      %v1137 = vpack.c.b16 %v1106, %v1105
      %v1138 = vpack.c.b16 %v1108, %v1107
      %v1139 = vpack.c.b16 %v1110, %v1109
      %v1140 = vpack.c.b16 %v1112, %v1111
      %v1141 = vpack.c.b16 %v1114, %v1113
      %v1142 = vpack.c.b16 %v1116, %v1115
      %v1143 = vpack.c.b16 %v1118, %v1117
      %v1144 = vpack.c.b16 %v1120, %v1119
      %v1145 = vpack.c.b16 %v1122, %v1121
      %v1146 = vpack.c.b16 %v1124, %v1123
      %v1147 = vpack.c.b16 %v1126, %v1125
      %v1148 = vpack.c.b16 %v1128, %v1127
      %1149 = vrot.lane.b32.xlu0 %v1129, 8
      %v1150 = vpop.permute.xlu0 %1149
      %1151 = vrot.lane.b32.xlu0 %v1130, 8
      %v1152 = vpop.permute.xlu0 %1151
      %1153 = vrot.lane.b32.xlu0 %v1131, 8
      %v1154 = vpop.permute.xlu0 %1153
      %1155 = vrot.lane.b32.xlu0 %v1132, 8
      %v1156 = vpop.permute.xlu0 %1155
      %1157 = vrot.lane.b32.xlu0 %v1133, 8
      %v1158 = vpop.permute.xlu0 %1157
      %1159 = vrot.lane.b32.xlu0 %v1134, 8
      %v1160 = vpop.permute.xlu0 %1159
      %1161 = vrot.lane.b32.xlu0 %v1135, 8
      %v1162 = vpop.permute.xlu0 %1161
      %1163 = vrot.lane.b32.xlu0 %v1136, 8
      %v1164 = vpop.permute.xlu0 %1163
      %1165 = vrot.lane.b32.xlu0 %v1137, 8
      %v1166 = vpop.permute.xlu0 %1165
      %1167 = vrot.lane.b32.xlu0 %v1138, 8
      %v1168 = vpop.permute.xlu0 %1167
      %1169 = vrot.lane.b32.xlu0 %v1139, 8
      %v1170 = vpop.permute.xlu0 %1169
      %1171 = vrot.lane.b32.xlu0 %v1140, 8
      %v1172 = vpop.permute.xlu0 %1171
      %1173 = vrot.lane.b32.xlu0 %v1141, 8
      %v1174 = vpop.permute.xlu0 %1173
      %1175 = vrot.lane.b32.xlu0 %v1142, 8
      %v1176 = vpop.permute.xlu0 %1175
      %1177 = vrot.lane.b32.xlu0 %v1143, 8
      %v1178 = vpop.permute.xlu0 %1177
      %1179 = vrot.lane.b32.xlu0 %v1144, 8
      %v1180 = vpop.permute.xlu0 %1179
      %1181 = vrot.lane.b32.xlu0 %v1145, 8
      %v1182 = vpop.permute.xlu0 %1181
      %1183 = vrot.lane.b32.xlu0 %v1146, 8
      %v1184 = vpop.permute.xlu0 %1183
      %1185 = vrot.lane.b32.xlu0 %v1147, 8
      %v1186 = vpop.permute.xlu0 %1185
      %1187 = vrot.lane.b32.xlu0 %v1148, 8
      %v1188 = vpop.permute.xlu0 %1187
      %vm1189 = vcmask 31744
      %v1192 = vsel %vm1189, %v969, %v1050
      %v1195 = vsel %vm1189, %v970, %v1052
      %v1198 = vsel %vm1189, %v971, %v1054
      %v1201 = vsel %vm1189, %v972, %v1056
      %v1204 = vsel %vm1189, %v973, %v1058
      %v1207 = vsel %vm1189, %v974, %v1060
      %v1210 = vsel %vm1189, %v975, %v1062
      %v1213 = vsel %vm1189, %v976, %v1064
      %v1216 = vsel %vm1189, %v977, %v1066
      %v1219 = vsel %vm1189, %v978, %v1068
      %v1222 = vsel %vm1189, %v979, %v1070
      %v1225 = vsel %vm1189, %v980, %v1072
      %v1228 = vsel %vm1189, %v981, %v1074
      %v1231 = vsel %vm1189, %v982, %v1076
      %v1234 = vsel %vm1189, %v983, %v1078
      %v1237 = vsel %vm1189, %v984, %v1080
      %v1240 = vsel %vm1189, %v985, %v1082
      %v1243 = vsel %vm1189, %v986, %v1084
      %v1246 = vsel %vm1189, %v987, %v1086
      %v1249 = vsel %vm1189, %v988, %v1088
      %vm1250 = vcmask 64512
      %v1252 = vsel %vm1250, %v1192, %v1150
      %v1254 = vsel %vm1250, %v1195, %v1152
      %v1256 = vsel %vm1250, %v1198, %v1154
      %v1258 = vsel %vm1250, %v1201, %v1156
      %v1260 = vsel %vm1250, %v1204, %v1158
      %v1262 = vsel %vm1250, %v1207, %v1160
      %v1264 = vsel %vm1250, %v1210, %v1162
      %v1266 = vsel %vm1250, %v1213, %v1164
      %v1268 = vsel %vm1250, %v1216, %v1166
      %v1270 = vsel %vm1250, %v1219, %v1168
      %v1272 = vsel %vm1250, %v1222, %v1170
      %v1274 = vsel %vm1250, %v1225, %v1172
      %v1276 = vsel %vm1250, %v1228, %v1174
      %v1278 = vsel %vm1250, %v1231, %v1176
      %v1280 = vsel %vm1250, %v1234, %v1178
      %v1282 = vsel %vm1250, %v1237, %v1180
      %v1284 = vsel %vm1250, %v1240, %v1182
      %v1286 = vsel %vm1250, %v1243, %v1184
      %v1288 = vsel %vm1250, %v1246, %v1186
      %v1290 = vsel %vm1250, %v1249, %v1188
      %v1291 = vld [vmem:[%s1] sm:$0xf]
      %v1292 = vld [vmem:[%s1 + $0x4] sm:$0x3]
      %s1293 = sadd.s32 %s249, 1
      %s1294 = smul.u32 %s1293, 5
      %s1295 = smul.addr %s1294, 4
      %s1296 = scalar_lea.vmem %s237, %s1295
      %v1297 = vld [vmem:[%s1296] sm:$0xf]
      %v1298 = vld [vmem:[%s1296 + $0x4] sm:$0xf]
      %v1299 = vld [vmem:[%s1296 + $0x8] sm:$0xf]
      %v1300 = vld [vmem:[%s1296 + $0xc] sm:$0xf]
      %v1301 = vld [vmem:[%s1296 + $0x10] sm:$0x1]
      %v1302 = vld [vmem:[%s1296 + $0x14] sm:$0xf]
      %v1303 = vld [vmem:[%s1296 + $0x18] sm:$0xf]
      %v1304 = vld [vmem:[%s1296 + $0x1c] sm:$0xf]
      %v1305 = vld [vmem:[%s1296 + $0x20] sm:$0xf]
      %v1306 = vld [vmem:[%s1296 + $0x24] sm:$0x1]
      %v1307 = vld [vmem:[%s1296 + $0x28] sm:$0xf]
      %v1308 = vld [vmem:[%s1296 + $0x2c] sm:$0xf]
      %v1309 = vld [vmem:[%s1296 + $0x30] sm:$0xf]
      %v1310 = vld [vmem:[%s1296 + $0x34] sm:$0xf]
      %v1311 = vld [vmem:[%s1296 + $0x38] sm:$0x1]
      %v1312 = vld [vmem:[%s1296 + $0x3c] sm:$0xf]
      %v1313 = vld [vmem:[%s1296 + $0x40] sm:$0xf]
      %v1314 = vld [vmem:[%s1296 + $0x44] sm:$0xf]
      %v1315 = vld [vmem:[%s1296 + $0x48] sm:$0xf]
      %v1316 = vld [vmem:[%s1296 + $0x4c] sm:$0x1]
      %v1317 = vld [vmem:[%s1296 + $0x50] sm:$0xf]
      %v1318 = vld [vmem:[%s1296 + $0x54] sm:$0xf]
      %v1319 = vld [vmem:[%s1296 + $0x58] sm:$0xf]
      %v1320 = vld [vmem:[%s1296 + $0x5c] sm:$0xf]
      %v1321 = vld [vmem:[%s1296 + $0x60] sm:$0x1]
      %v1322 = vld [vmem:[%s1296 + $0x64] sm:$0xf]
      %v1323 = vld [vmem:[%s1296 + $0x68] sm:$0xf]
      %v1324 = vld [vmem:[%s1296 + $0x6c] sm:$0xf]
      %v1325 = vld [vmem:[%s1296 + $0x70] sm:$0xf]
      %v1326 = vld [vmem:[%s1296 + $0x74] sm:$0x1]
      %v1327 = vld [vmem:[%s1296 + $0x78] sm:$0xf]
      %v1328 = vld [vmem:[%s1296 + $0x7c] sm:$0xf]
      %v1329 = vld [vmem:[%s1296 + $0x80] sm:$0xf]
      %v1330 = vld [vmem:[%s1296 + $0x84] sm:$0xf]
      %v1331 = vld [vmem:[%s1296 + $0x88] sm:$0x1]
      %v1332 = vld [vmem:[%s1296 + $0x8c] sm:$0xf]
      %v1333 = vld [vmem:[%s1296 + $0x90] sm:$0xf]
      %v1334 = vld [vmem:[%s1296 + $0x94] sm:$0xf]
      %v1335 = vld [vmem:[%s1296 + $0x98] sm:$0xf]
      %v1336 = vld [vmem:[%s1296 + $0x9c] sm:$0x1]
      %v1337 = vld [vmem:[%s1296 + $0xa0] sm:$0xf]
      %v1338 = vld [vmem:[%s1296 + $0xa4] sm:$0xf]
      %v1339 = vld [vmem:[%s1296 + $0xa8] sm:$0xf]
      %v1340 = vld [vmem:[%s1296 + $0xac] sm:$0xf]
      %v1341 = vld [vmem:[%s1296 + $0xb0] sm:$0x1]
      %v1342 = vld [vmem:[%s1296 + $0xb4] sm:$0xf]
      %v1343 = vld [vmem:[%s1296 + $0xb8] sm:$0xf]
      %v1344 = vld [vmem:[%s1296 + $0xbc] sm:$0xf]
      %v1345 = vld [vmem:[%s1296 + $0xc0] sm:$0xf]
      %v1346 = vld [vmem:[%s1296 + $0xc4] sm:$0x1]
      %v1348 = vshrl.u32 %v1297, 16
      %v1350 = vrot.slane %v1348, 4
      %v1351 = vshll.u32 %v1297, 16
      %v1353 = vrot.slane %v1351, 5
      %v1354 = vor.u32 %v1350, %v1353
      %v1355 = vrot.slane %v1354, 4
      %v1357 = vshll.u32 %v1298, 16
      %v1359 = vrot.slane %v1357, 5
      %v1360 = vsel %vm305, %v1355, %v1359
      %v1361 = vshrl.u32 %v1298, 16
      %v1363 = vrot.slane %v1361, 4
      %v1364 = vor.u32 %v1363, %v1359
      %v1365 = vrot.slane %v1364, 4
      %v1367 = vshll.u32 %v1299, 16
      %v1369 = vrot.slane %v1367, 5
      %v1370 = vsel %vm305, %v1365, %v1369
      %v1371 = vshrl.u32 %v1299, 16
      %v1373 = vrot.slane %v1371, 4
      %v1374 = vor.u32 %v1373, %v1369
      %v1375 = vrot.slane %v1374, 4
      %v1377 = vshll.u32 %v1300, 16
      %v1379 = vrot.slane %v1377, 5
      %v1380 = vsel %vm305, %v1375, %v1379
      %v1381 = vshrl.u32 %v1300, 16
      %v1383 = vrot.slane %v1381, 4
      %v1384 = vor.u32 %v1383, %v1379
      %v1385 = vrot.slane %v1384, 4
      %v1387 = vshll.u32 %v1301, 16
      %v1389 = vrot.slane %v1387, 5
      %v1390 = vsel %vm305, %v1385, %v1389
      %v1392 = vshrl.u32 %v1302, 16
      %v1394 = vrot.slane %v1392, 4
      %v1395 = vshll.u32 %v1302, 16
      %v1397 = vrot.slane %v1395, 5
      %v1398 = vor.u32 %v1394, %v1397
      %v1399 = vrot.slane %v1398, 4
      %v1401 = vshll.u32 %v1303, 16
      %v1403 = vrot.slane %v1401, 5
      %v1404 = vsel %vm305, %v1399, %v1403
      %v1405 = vshrl.u32 %v1303, 16
      %v1407 = vrot.slane %v1405, 4
      %v1408 = vor.u32 %v1407, %v1403
      %v1409 = vrot.slane %v1408, 4
      %v1411 = vshll.u32 %v1304, 16
      %v1413 = vrot.slane %v1411, 5
      %v1414 = vsel %vm305, %v1409, %v1413
      %v1415 = vshrl.u32 %v1304, 16
      %v1417 = vrot.slane %v1415, 4
      %v1418 = vor.u32 %v1417, %v1413
      %v1419 = vrot.slane %v1418, 4
      %v1421 = vshll.u32 %v1305, 16
      %v1423 = vrot.slane %v1421, 5
      %v1424 = vsel %vm305, %v1419, %v1423
      %v1425 = vshrl.u32 %v1305, 16
      %v1427 = vrot.slane %v1425, 4
      %v1428 = vor.u32 %v1427, %v1423
      %v1429 = vrot.slane %v1428, 4
      %v1431 = vshll.u32 %v1306, 16
      %v1433 = vrot.slane %v1431, 5
      %v1434 = vsel %vm305, %v1429, %v1433
      %v1436 = vshrl.u32 %v1307, 16
      %v1438 = vrot.slane %v1436, 4
      %v1439 = vshll.u32 %v1307, 16
      %v1441 = vrot.slane %v1439, 5
      %v1442 = vor.u32 %v1438, %v1441
      %v1443 = vrot.slane %v1442, 4
      %v1445 = vshll.u32 %v1308, 16
      %v1447 = vrot.slane %v1445, 5
      %v1448 = vsel %vm305, %v1443, %v1447
      %v1449 = vshrl.u32 %v1308, 16
      %v1451 = vrot.slane %v1449, 4
      %v1452 = vor.u32 %v1451, %v1447
      %v1453 = vrot.slane %v1452, 4
      %v1455 = vshll.u32 %v1309, 16
      %v1457 = vrot.slane %v1455, 5
      %v1458 = vsel %vm305, %v1453, %v1457
      %v1459 = vshrl.u32 %v1309, 16
      %v1461 = vrot.slane %v1459, 4
      %v1462 = vor.u32 %v1461, %v1457
      %v1463 = vrot.slane %v1462, 4
      %v1465 = vshll.u32 %v1310, 16
      %v1467 = vrot.slane %v1465, 5
      %v1468 = vsel %vm305, %v1463, %v1467
      %v1469 = vshrl.u32 %v1310, 16
      %v1471 = vrot.slane %v1469, 4
      %v1472 = vor.u32 %v1471, %v1467
      %v1473 = vrot.slane %v1472, 4
      %v1475 = vshll.u32 %v1311, 16
      %v1477 = vrot.slane %v1475, 5
      %v1478 = vsel %vm305, %v1473, %v1477
      %v1480 = vshrl.u32 %v1312, 16
      %v1482 = vrot.slane %v1480, 4
      %v1483 = vshll.u32 %v1312, 16
      %v1485 = vrot.slane %v1483, 5
      %v1486 = vor.u32 %v1482, %v1485
      %v1487 = vrot.slane %v1486, 4
      %v1489 = vshll.u32 %v1313, 16
      %v1491 = vrot.slane %v1489, 5
      %v1492 = vsel %vm305, %v1487, %v1491
      %v1493 = vshrl.u32 %v1313, 16
      %v1495 = vrot.slane %v1493, 4
      %v1496 = vor.u32 %v1495, %v1491
      %v1497 = vrot.slane %v1496, 4
      %v1499 = vshll.u32 %v1314, 16
      %v1501 = vrot.slane %v1499, 5
      %v1502 = vsel %vm305, %v1497, %v1501
      %v1503 = vshrl.u32 %v1314, 16
      %v1505 = vrot.slane %v1503, 4
      %v1506 = vor.u32 %v1505, %v1501
      %v1507 = vrot.slane %v1506, 4
      %v1509 = vshll.u32 %v1315, 16
      %v1511 = vrot.slane %v1509, 5
      %v1512 = vsel %vm305, %v1507, %v1511
      %v1513 = vshrl.u32 %v1315, 16
      %v1515 = vrot.slane %v1513, 4
      %v1516 = vor.u32 %v1515, %v1511
      %v1517 = vrot.slane %v1516, 4
      %v1519 = vshll.u32 %v1316, 16
      %v1521 = vrot.slane %v1519, 5
      %v1522 = vsel %vm305, %v1517, %v1521
      %v1524 = vshrl.u32 %v1317, 16
      %v1526 = vrot.slane %v1524, 4
      %v1527 = vshll.u32 %v1317, 16
      %v1529 = vrot.slane %v1527, 5
      %v1530 = vor.u32 %v1526, %v1529
      %v1531 = vrot.slane %v1530, 4
      %v1533 = vshll.u32 %v1318, 16
      %v1535 = vrot.slane %v1533, 5
      %v1536 = vsel %vm305, %v1531, %v1535
      %v1537 = vshrl.u32 %v1318, 16
      %v1539 = vrot.slane %v1537, 4
      %v1540 = vor.u32 %v1539, %v1535
      %v1541 = vrot.slane %v1540, 4
      %v1543 = vshll.u32 %v1319, 16
      %v1545 = vrot.slane %v1543, 5
      %v1546 = vsel %vm305, %v1541, %v1545
      %v1547 = vshrl.u32 %v1319, 16
      %v1549 = vrot.slane %v1547, 4
      %v1550 = vor.u32 %v1549, %v1545
      %v1551 = vrot.slane %v1550, 4
      %v1553 = vshll.u32 %v1320, 16
      %v1555 = vrot.slane %v1553, 5
      %v1556 = vsel %vm305, %v1551, %v1555
      %v1557 = vshrl.u32 %v1320, 16
      %v1559 = vrot.slane %v1557, 4
      %v1560 = vor.u32 %v1559, %v1555
      %v1561 = vrot.slane %v1560, 4
      %v1563 = vshll.u32 %v1321, 16
      %v1565 = vrot.slane %v1563, 5
      %v1566 = vsel %vm305, %v1561, %v1565
      %v1568 = vshrl.u32 %v1322, 16
      %v1570 = vrot.slane %v1568, 4
      %v1571 = vshll.u32 %v1322, 16
      %v1573 = vrot.slane %v1571, 5
      %v1574 = vor.u32 %v1570, %v1573
      %v1575 = vrot.slane %v1574, 4
      %v1577 = vshll.u32 %v1323, 16
      %v1579 = vrot.slane %v1577, 5
      %v1580 = vsel %vm305, %v1575, %v1579
      %v1581 = vshrl.u32 %v1323, 16
      %v1583 = vrot.slane %v1581, 4
      %v1584 = vor.u32 %v1583, %v1579
      %v1585 = vrot.slane %v1584, 4
      %v1587 = vshll.u32 %v1324, 16
      %v1589 = vrot.slane %v1587, 5
      %v1590 = vsel %vm305, %v1585, %v1589
      %v1591 = vshrl.u32 %v1324, 16
      %v1593 = vrot.slane %v1591, 4
      %v1594 = vor.u32 %v1593, %v1589
      %v1595 = vrot.slane %v1594, 4
      %v1597 = vshll.u32 %v1325, 16
      %v1599 = vrot.slane %v1597, 5
      %v1600 = vsel %vm305, %v1595, %v1599
      %v1601 = vshrl.u32 %v1325, 16
      %v1603 = vrot.slane %v1601, 4
      %v1604 = vor.u32 %v1603, %v1599
      %v1605 = vrot.slane %v1604, 4
      %v1607 = vshll.u32 %v1326, 16
      %v1609 = vrot.slane %v1607, 5
      %v1610 = vsel %vm305, %v1605, %v1609
      %v1612 = vshrl.u32 %v1327, 16
      %v1614 = vrot.slane %v1612, 4
      %v1615 = vshll.u32 %v1327, 16
      %v1617 = vrot.slane %v1615, 5
      %v1618 = vor.u32 %v1614, %v1617
      %v1619 = vrot.slane %v1618, 4
      %v1621 = vshll.u32 %v1328, 16
      %v1623 = vrot.slane %v1621, 5
      %v1624 = vsel %vm305, %v1619, %v1623
      %v1625 = vshrl.u32 %v1328, 16
      %v1627 = vrot.slane %v1625, 4
      %v1628 = vor.u32 %v1627, %v1623
      %v1629 = vrot.slane %v1628, 4
      %v1631 = vshll.u32 %v1329, 16
      %v1633 = vrot.slane %v1631, 5
      %v1634 = vsel %vm305, %v1629, %v1633
      %v1635 = vshrl.u32 %v1329, 16
      %v1637 = vrot.slane %v1635, 4
      %v1638 = vor.u32 %v1637, %v1633
      %v1639 = vrot.slane %v1638, 4
      %v1641 = vshll.u32 %v1330, 16
      %v1643 = vrot.slane %v1641, 5
      %v1644 = vsel %vm305, %v1639, %v1643
      %v1645 = vshrl.u32 %v1330, 16
      %v1647 = vrot.slane %v1645, 4
      %v1648 = vor.u32 %v1647, %v1643
      %v1649 = vrot.slane %v1648, 4
      %v1651 = vshll.u32 %v1331, 16
      %v1653 = vrot.slane %v1651, 5
      %v1654 = vsel %vm305, %v1649, %v1653
      %v1656 = vshrl.u32 %v1332, 16
      %v1658 = vrot.slane %v1656, 4
      %v1659 = vshll.u32 %v1332, 16
      %v1661 = vrot.slane %v1659, 5
      %v1662 = vor.u32 %v1658, %v1661
      %v1663 = vrot.slane %v1662, 4
      %v1665 = vshll.u32 %v1333, 16
      %v1667 = vrot.slane %v1665, 5
      %v1668 = vsel %vm305, %v1663, %v1667
      %v1669 = vshrl.u32 %v1333, 16
      %v1671 = vrot.slane %v1669, 4
      %v1672 = vor.u32 %v1671, %v1667
      %v1673 = vrot.slane %v1672, 4
      %v1675 = vshll.u32 %v1334, 16
      %v1677 = vrot.slane %v1675, 5
      %v1678 = vsel %vm305, %v1673, %v1677
      %v1679 = vshrl.u32 %v1334, 16
      %v1681 = vrot.slane %v1679, 4
      %v1682 = vor.u32 %v1681, %v1677
      %v1683 = vrot.slane %v1682, 4
      %v1685 = vshll.u32 %v1335, 16
      %v1687 = vrot.slane %v1685, 5
      %v1688 = vsel %vm305, %v1683, %v1687
      %v1689 = vshrl.u32 %v1335, 16
      %v1691 = vrot.slane %v1689, 4
      %v1692 = vor.u32 %v1691, %v1687
      %v1693 = vrot.slane %v1692, 4
      %v1695 = vshll.u32 %v1336, 16
      %v1697 = vrot.slane %v1695, 5
      %v1698 = vsel %vm305, %v1693, %v1697
      %v1700 = vshrl.u32 %v1337, 16
      %v1702 = vrot.slane %v1700, 4
      %v1703 = vshll.u32 %v1337, 16
      %v1705 = vrot.slane %v1703, 5
      %v1706 = vor.u32 %v1702, %v1705
      %v1707 = vrot.slane %v1706, 4
      %v1709 = vshll.u32 %v1338, 16
      %v1711 = vrot.slane %v1709, 5
      %v1712 = vsel %vm305, %v1707, %v1711
      %v1713 = vshrl.u32 %v1338, 16
      %v1715 = vrot.slane %v1713, 4
      %v1716 = vor.u32 %v1715, %v1711
      %v1717 = vrot.slane %v1716, 4
      %v1719 = vshll.u32 %v1339, 16
      %v1721 = vrot.slane %v1719, 5
      %v1722 = vsel %vm305, %v1717, %v1721
      %v1723 = vshrl.u32 %v1339, 16
      %v1725 = vrot.slane %v1723, 4
      %v1726 = vor.u32 %v1725, %v1721
      %v1727 = vrot.slane %v1726, 4
      %v1729 = vshll.u32 %v1340, 16
      %v1731 = vrot.slane %v1729, 5
      %v1732 = vsel %vm305, %v1727, %v1731
      %v1733 = vshrl.u32 %v1340, 16
      %v1735 = vrot.slane %v1733, 4
      %v1736 = vor.u32 %v1735, %v1731
      %v1737 = vrot.slane %v1736, 4
      %v1739 = vshll.u32 %v1341, 16
      %v1741 = vrot.slane %v1739, 5
      %v1742 = vsel %vm305, %v1737, %v1741
      %v1744 = vshrl.u32 %v1342, 16
      %v1746 = vrot.slane %v1744, 4
      %v1747 = vshll.u32 %v1342, 16
      %v1749 = vrot.slane %v1747, 5
      %v1750 = vor.u32 %v1746, %v1749
      %v1751 = vrot.slane %v1750, 4
      %v1753 = vshll.u32 %v1343, 16
      %v1755 = vrot.slane %v1753, 5
      %v1756 = vsel %vm305, %v1751, %v1755
      %v1757 = vshrl.u32 %v1343, 16
      %v1759 = vrot.slane %v1757, 4
      %v1760 = vor.u32 %v1759, %v1755
      %v1761 = vrot.slane %v1760, 4
      %v1763 = vshll.u32 %v1344, 16
      %v1765 = vrot.slane %v1763, 5
      %v1766 = vsel %vm305, %v1761, %v1765
      %v1767 = vshrl.u32 %v1344, 16
      %v1769 = vrot.slane %v1767, 4
      %v1770 = vor.u32 %v1769, %v1765
      %v1771 = vrot.slane %v1770, 4
      %v1773 = vshll.u32 %v1345, 16
      %v1775 = vrot.slane %v1773, 5
      %v1776 = vsel %vm305, %v1771, %v1775
      %v1777 = vshrl.u32 %v1345, 16
      %v1779 = vrot.slane %v1777, 4
      %v1780 = vor.u32 %v1779, %v1775
      %v1781 = vrot.slane %v1780, 4
      %v1783 = vshll.u32 %v1346, 16
      %v1785 = vrot.slane %v1783, 5
      %v1786 = vsel %vm305, %v1781, %v1785
      %v1837 = vrot.slane %v1297, 5
      %v1838 = vrot.slane %v1837, 4
      %v1839 = vrot.slane %v1298, 5
      %v1840 = vsel %vm798, %v1838, %v1839
      %v1841 = vrot.slane %v1839, 4
      %v1842 = vrot.slane %v1299, 5
      %v1843 = vsel %vm798, %v1841, %v1842
      %v1844 = vrot.slane %v1842, 4
      %v1845 = vrot.slane %v1300, 5
      %v1846 = vsel %vm798, %v1844, %v1845
      %v1847 = vrot.slane %v1845, 4
      %v1848 = vrot.slane %v1301, 5
      %v1849 = vsel %vm798, %v1847, %v1848
      %v1850 = vrot.slane %v1302, 5
      %v1851 = vrot.slane %v1850, 4
      %v1852 = vrot.slane %v1303, 5
      %v1853 = vsel %vm798, %v1851, %v1852
      %v1854 = vrot.slane %v1852, 4
      %v1855 = vrot.slane %v1304, 5
      %v1856 = vsel %vm798, %v1854, %v1855
      %v1857 = vrot.slane %v1855, 4
      %v1858 = vrot.slane %v1305, 5
      %v1859 = vsel %vm798, %v1857, %v1858
      %v1860 = vrot.slane %v1858, 4
      %v1861 = vrot.slane %v1306, 5
      %v1862 = vsel %vm798, %v1860, %v1861
      %v1863 = vrot.slane %v1307, 5
      %v1864 = vrot.slane %v1863, 4
      %v1865 = vrot.slane %v1308, 5
      %v1866 = vsel %vm798, %v1864, %v1865
      %v1867 = vrot.slane %v1865, 4
      %v1868 = vrot.slane %v1309, 5
      %v1869 = vsel %vm798, %v1867, %v1868
      %v1870 = vrot.slane %v1868, 4
      %v1871 = vrot.slane %v1310, 5
      %v1872 = vsel %vm798, %v1870, %v1871
      %v1873 = vrot.slane %v1871, 4
      %v1874 = vrot.slane %v1311, 5
      %v1875 = vsel %vm798, %v1873, %v1874
      %v1876 = vrot.slane %v1312, 5
      %v1877 = vrot.slane %v1876, 4
      %v1878 = vrot.slane %v1313, 5
      %v1879 = vsel %vm798, %v1877, %v1878
      %v1880 = vrot.slane %v1878, 4
      %v1881 = vrot.slane %v1314, 5
      %v1882 = vsel %vm798, %v1880, %v1881
      %v1883 = vrot.slane %v1881, 4
      %v1884 = vrot.slane %v1315, 5
      %v1885 = vsel %vm798, %v1883, %v1884
      %v1886 = vrot.slane %v1884, 4
      %v1887 = vrot.slane %v1316, 5
      %v1888 = vsel %vm798, %v1886, %v1887
      %v1889 = vrot.slane %v1317, 5
      %v1890 = vrot.slane %v1889, 4
      %v1891 = vrot.slane %v1318, 5
      %v1892 = vsel %vm798, %v1890, %v1891
      %v1893 = vrot.slane %v1891, 4
      %v1894 = vrot.slane %v1319, 5
      %v1895 = vsel %vm798, %v1893, %v1894
      %v1896 = vrot.slane %v1894, 4
      %v1897 = vrot.slane %v1320, 5
      %v1898 = vsel %vm798, %v1896, %v1897
      %v1899 = vrot.slane %v1897, 4
      %v1900 = vrot.slane %v1321, 5
      %v1901 = vsel %vm798, %v1899, %v1900
      %v1902 = vrot.slane %v1322, 5
      %v1903 = vrot.slane %v1902, 4
      %v1904 = vrot.slane %v1323, 5
      %v1905 = vsel %vm798, %v1903, %v1904
      %v1906 = vrot.slane %v1904, 4
      %v1907 = vrot.slane %v1324, 5
      %v1908 = vsel %vm798, %v1906, %v1907
      %v1909 = vrot.slane %v1907, 4
      %v1910 = vrot.slane %v1325, 5
      %v1911 = vsel %vm798, %v1909, %v1910
      %v1912 = vrot.slane %v1910, 4
      %v1913 = vrot.slane %v1326, 5
      %v1914 = vsel %vm798, %v1912, %v1913
      %v1915 = vrot.slane %v1327, 5
      %v1916 = vrot.slane %v1915, 4
      %v1917 = vrot.slane %v1328, 5
      %v1918 = vsel %vm798, %v1916, %v1917
      %v1919 = vrot.slane %v1917, 4
      %v1920 = vrot.slane %v1329, 5
      %v1921 = vsel %vm798, %v1919, %v1920
      %v1922 = vrot.slane %v1920, 4
      %v1923 = vrot.slane %v1330, 5
      %v1924 = vsel %vm798, %v1922, %v1923
      %v1925 = vrot.slane %v1923, 4
      %v1926 = vrot.slane %v1331, 5
      %v1927 = vsel %vm798, %v1925, %v1926
      %v1928 = vrot.slane %v1332, 5
      %v1929 = vrot.slane %v1928, 4
      %v1930 = vrot.slane %v1333, 5
      %v1931 = vsel %vm798, %v1929, %v1930
      %v1932 = vrot.slane %v1930, 4
      %v1933 = vrot.slane %v1334, 5
      %v1934 = vsel %vm798, %v1932, %v1933
      %v1935 = vrot.slane %v1933, 4
      %v1936 = vrot.slane %v1335, 5
      %v1937 = vsel %vm798, %v1935, %v1936
      %v1938 = vrot.slane %v1936, 4
      %v1939 = vrot.slane %v1336, 5
      %v1940 = vsel %vm798, %v1938, %v1939
      %v1941 = vrot.slane %v1337, 5
      %v1942 = vrot.slane %v1941, 4
      %v1943 = vrot.slane %v1338, 5
      %v1944 = vsel %vm798, %v1942, %v1943
      %v1945 = vrot.slane %v1943, 4
      %v1946 = vrot.slane %v1339, 5
      %v1947 = vsel %vm798, %v1945, %v1946
      %v1948 = vrot.slane %v1946, 4
      %v1949 = vrot.slane %v1340, 5
      %v1950 = vsel %vm798, %v1948, %v1949
      %v1951 = vrot.slane %v1949, 4
      %v1952 = vrot.slane %v1341, 5
      %v1953 = vsel %vm798, %v1951, %v1952
      %v1954 = vrot.slane %v1342, 5
      %v1955 = vrot.slane %v1954, 4
      %v1956 = vrot.slane %v1343, 5
      %v1957 = vsel %vm798, %v1955, %v1956
      %v1958 = vrot.slane %v1956, 4
      %v1959 = vrot.slane %v1344, 5
      %v1960 = vsel %vm798, %v1958, %v1959
      %v1961 = vrot.slane %v1959, 4
      %v1962 = vrot.slane %v1345, 5
      %v1963 = vsel %vm798, %v1961, %v1962
      %v1964 = vrot.slane %v1962, 4
      %v1965 = vrot.slane %v1346, 5
      %v1966 = vsel %vm798, %v1964, %v1965
      %v1967 = vunpack.c.l.b16 %v1297
      %v1968 = vunpack.c.l.b16 %v1298
      %v1969 = vunpack.c.l.b16 %v1299
      %v1970 = vunpack.c.l.b16 %v1300
      %v1971 = vunpack.c.l.b16 %v1302
      %v1972 = vunpack.c.l.b16 %v1303
      %v1973 = vunpack.c.l.b16 %v1304
      %v1974 = vunpack.c.l.b16 %v1305
      %v1975 = vunpack.c.l.b16 %v1307
      %v1976 = vunpack.c.l.b16 %v1308
      %v1977 = vunpack.c.l.b16 %v1309
      %v1978 = vunpack.c.l.b16 %v1310
      %v1979 = vunpack.c.l.b16 %v1312
      %v1980 = vunpack.c.l.b16 %v1313
      %v1981 = vunpack.c.l.b16 %v1314
      %v1982 = vunpack.c.l.b16 %v1315
      %v1983 = vunpack.c.l.b16 %v1317
      %v1984 = vunpack.c.l.b16 %v1318
      %v1985 = vunpack.c.l.b16 %v1319
      %v1986 = vunpack.c.l.b16 %v1320
      %v1987 = vunpack.c.l.b16 %v1322
      %v1988 = vunpack.c.l.b16 %v1323
      %v1989 = vunpack.c.l.b16 %v1324
      %v1990 = vunpack.c.l.b16 %v1325
      %v1991 = vunpack.c.l.b16 %v1327
      %v1992 = vunpack.c.l.b16 %v1328
      %v1993 = vunpack.c.l.b16 %v1329
      %v1994 = vunpack.c.l.b16 %v1330
      %v1995 = vunpack.c.l.b16 %v1332
      %v1996 = vunpack.c.l.b16 %v1333
      %v1997 = vunpack.c.l.b16 %v1334
      %v1998 = vunpack.c.l.b16 %v1335
      %v1999 = vunpack.c.l.b16 %v1337
      %v2000 = vunpack.c.l.b16 %v1338
      %v2001 = vunpack.c.l.b16 %v1339
      %v2002 = vunpack.c.l.b16 %v1340
      %v2003 = vunpack.c.l.b16 %v1342
      %v2004 = vunpack.c.l.b16 %v1343
      %v2005 = vunpack.c.l.b16 %v1344
      %v2006 = vunpack.c.l.b16 %v1345
      %v2007 = vpack.c.b16 %v1968, %v1967
      %v2008 = vpack.c.b16 %v1970, %v1969
      %v2009 = vpack.c.b16 %v1972, %v1971
      %v2010 = vpack.c.b16 %v1974, %v1973
      %v2011 = vpack.c.b16 %v1976, %v1975
      %v2012 = vpack.c.b16 %v1978, %v1977
      %v2013 = vpack.c.b16 %v1980, %v1979
      %v2014 = vpack.c.b16 %v1982, %v1981
      %v2015 = vpack.c.b16 %v1984, %v1983
      %v2016 = vpack.c.b16 %v1986, %v1985
      %v2017 = vpack.c.b16 %v1988, %v1987
      %v2018 = vpack.c.b16 %v1990, %v1989
      %v2019 = vpack.c.b16 %v1992, %v1991
      %v2020 = vpack.c.b16 %v1994, %v1993
      %v2021 = vpack.c.b16 %v1996, %v1995
      %v2022 = vpack.c.b16 %v1998, %v1997
      %v2023 = vpack.c.b16 %v2000, %v1999
      %v2024 = vpack.c.b16 %v2002, %v2001
      %v2025 = vpack.c.b16 %v2004, %v2003
      %v2026 = vpack.c.b16 %v2006, %v2005
      %v2027 = vunpack.c.l.b16 %v1360
      %v2028 = vunpack.c.l.b16 %v1370
      %v2029 = vunpack.c.l.b16 %v1380
      %v2030 = vunpack.c.l.b16 %v1390
      %v2031 = vunpack.c.l.b16 %v1404
      %v2032 = vunpack.c.l.b16 %v1414
      %v2033 = vunpack.c.l.b16 %v1424
      %v2034 = vunpack.c.l.b16 %v1434
      %v2035 = vunpack.c.l.b16 %v1448
      %v2036 = vunpack.c.l.b16 %v1458
      %v2037 = vunpack.c.l.b16 %v1468
      %v2038 = vunpack.c.l.b16 %v1478
      %v2039 = vunpack.c.l.b16 %v1492
      %v2040 = vunpack.c.l.b16 %v1502
      %v2041 = vunpack.c.l.b16 %v1512
      %v2042 = vunpack.c.l.b16 %v1522
      %v2043 = vunpack.c.l.b16 %v1536
      %v2044 = vunpack.c.l.b16 %v1546
      %v2045 = vunpack.c.l.b16 %v1556
      %v2046 = vunpack.c.l.b16 %v1566
      %v2047 = vunpack.c.l.b16 %v1580
      %v2048 = vunpack.c.l.b16 %v1590
      %v2049 = vunpack.c.l.b16 %v1600
      %v2050 = vunpack.c.l.b16 %v1610
      %v2051 = vunpack.c.l.b16 %v1624
      %v2052 = vunpack.c.l.b16 %v1634
      %v2053 = vunpack.c.l.b16 %v1644
      %v2054 = vunpack.c.l.b16 %v1654
      %v2055 = vunpack.c.l.b16 %v1668
      %v2056 = vunpack.c.l.b16 %v1678
      %v2057 = vunpack.c.l.b16 %v1688
      %v2058 = vunpack.c.l.b16 %v1698
      %v2059 = vunpack.c.l.b16 %v1712
      %v2060 = vunpack.c.l.b16 %v1722
      %v2061 = vunpack.c.l.b16 %v1732
      %v2062 = vunpack.c.l.b16 %v1742
      %v2063 = vunpack.c.l.b16 %v1756
      %v2064 = vunpack.c.l.b16 %v1766
      %v2065 = vunpack.c.l.b16 %v1776
      %v2066 = vunpack.c.l.b16 %v1786
      %v2067 = vpack.c.b16 %v2028, %v2027
      %v2068 = vpack.c.b16 %v2030, %v2029
      %v2069 = vpack.c.b16 %v2032, %v2031
      %v2070 = vpack.c.b16 %v2034, %v2033
      %v2071 = vpack.c.b16 %v2036, %v2035
      %v2072 = vpack.c.b16 %v2038, %v2037
      %v2073 = vpack.c.b16 %v2040, %v2039
      %v2074 = vpack.c.b16 %v2042, %v2041
      %v2075 = vpack.c.b16 %v2044, %v2043
      %v2076 = vpack.c.b16 %v2046, %v2045
      %v2077 = vpack.c.b16 %v2048, %v2047
      %v2078 = vpack.c.b16 %v2050, %v2049
      %v2079 = vpack.c.b16 %v2052, %v2051
      %v2080 = vpack.c.b16 %v2054, %v2053
      %v2081 = vpack.c.b16 %v2056, %v2055
      %v2082 = vpack.c.b16 %v2058, %v2057
      %v2083 = vpack.c.b16 %v2060, %v2059
      %v2084 = vpack.c.b16 %v2062, %v2061
      %v2085 = vpack.c.b16 %v2064, %v2063
      %v2086 = vpack.c.b16 %v2066, %v2065
      %2087 = vrot.lane.b32.xlu0 %v2067, 4
      %v2088 = vpop.permute.xlu0 %2087
      %2089 = vrot.lane.b32.xlu0 %v2068, 4
      %v2090 = vpop.permute.xlu0 %2089
      %2091 = vrot.lane.b32.xlu0 %v2069, 4
      %v2092 = vpop.permute.xlu0 %2091
      %2093 = vrot.lane.b32.xlu0 %v2070, 4
      %v2094 = vpop.permute.xlu0 %2093
      %2095 = vrot.lane.b32.xlu0 %v2071, 4
      %v2096 = vpop.permute.xlu0 %2095
      %2097 = vrot.lane.b32.xlu0 %v2072, 4
      %v2098 = vpop.permute.xlu0 %2097
      %2099 = vrot.lane.b32.xlu0 %v2073, 4
      %v2100 = vpop.permute.xlu0 %2099
      %2101 = vrot.lane.b32.xlu0 %v2074, 4
      %v2102 = vpop.permute.xlu0 %2101
      %2103 = vrot.lane.b32.xlu0 %v2075, 4
      %v2104 = vpop.permute.xlu0 %2103
      %2105 = vrot.lane.b32.xlu0 %v2076, 4
      %v2106 = vpop.permute.xlu0 %2105
      %2107 = vrot.lane.b32.xlu0 %v2077, 4
      %v2108 = vpop.permute.xlu0 %2107
      %2109 = vrot.lane.b32.xlu0 %v2078, 4
      %v2110 = vpop.permute.xlu0 %2109
      %2111 = vrot.lane.b32.xlu0 %v2079, 4
      %v2112 = vpop.permute.xlu0 %2111
      %2113 = vrot.lane.b32.xlu0 %v2080, 4
      %v2114 = vpop.permute.xlu0 %2113
      %2115 = vrot.lane.b32.xlu0 %v2081, 4
      %v2116 = vpop.permute.xlu0 %2115
      %2117 = vrot.lane.b32.xlu0 %v2082, 4
      %v2118 = vpop.permute.xlu0 %2117
      %2119 = vrot.lane.b32.xlu0 %v2083, 4
      %v2120 = vpop.permute.xlu0 %2119
      %2121 = vrot.lane.b32.xlu0 %v2084, 4
      %v2122 = vpop.permute.xlu0 %2121
      %2123 = vrot.lane.b32.xlu0 %v2085, 4
      %v2124 = vpop.permute.xlu0 %2123
      %2125 = vrot.lane.b32.xlu0 %v2086, 4
      %v2126 = vpop.permute.xlu0 %2125
      %v2127 = vunpack.c.l.b16 %v1840
      %v2128 = vunpack.c.l.b16 %v1843
      %v2129 = vunpack.c.l.b16 %v1846
      %v2130 = vunpack.c.l.b16 %v1849
      %v2131 = vunpack.c.l.b16 %v1853
      %v2132 = vunpack.c.l.b16 %v1856
      %v2133 = vunpack.c.l.b16 %v1859
      %v2134 = vunpack.c.l.b16 %v1862
      %v2135 = vunpack.c.l.b16 %v1866
      %v2136 = vunpack.c.l.b16 %v1869
      %v2137 = vunpack.c.l.b16 %v1872
      %v2138 = vunpack.c.l.b16 %v1875
      %v2139 = vunpack.c.l.b16 %v1879
      %v2140 = vunpack.c.l.b16 %v1882
      %v2141 = vunpack.c.l.b16 %v1885
      %v2142 = vunpack.c.l.b16 %v1888
      %v2143 = vunpack.c.l.b16 %v1892
      %v2144 = vunpack.c.l.b16 %v1895
      %v2145 = vunpack.c.l.b16 %v1898
      %v2146 = vunpack.c.l.b16 %v1901
      %v2147 = vunpack.c.l.b16 %v1905
      %v2148 = vunpack.c.l.b16 %v1908
      %v2149 = vunpack.c.l.b16 %v1911
      %v2150 = vunpack.c.l.b16 %v1914
      %v2151 = vunpack.c.l.b16 %v1918
      %v2152 = vunpack.c.l.b16 %v1921
      %v2153 = vunpack.c.l.b16 %v1924
      %v2154 = vunpack.c.l.b16 %v1927
      %v2155 = vunpack.c.l.b16 %v1931
      %v2156 = vunpack.c.l.b16 %v1934
      %v2157 = vunpack.c.l.b16 %v1937
      %v2158 = vunpack.c.l.b16 %v1940
      %v2159 = vunpack.c.l.b16 %v1944
      %v2160 = vunpack.c.l.b16 %v1947
      %v2161 = vunpack.c.l.b16 %v1950
      %v2162 = vunpack.c.l.b16 %v1953
      %v2163 = vunpack.c.l.b16 %v1957
      %v2164 = vunpack.c.l.b16 %v1960
      %v2165 = vunpack.c.l.b16 %v1963
      %v2166 = vunpack.c.l.b16 %v1966
      %v2167 = vpack.c.b16 %v2128, %v2127
      %v2168 = vpack.c.b16 %v2130, %v2129
      %v2169 = vpack.c.b16 %v2132, %v2131
      %v2170 = vpack.c.b16 %v2134, %v2133
      %v2171 = vpack.c.b16 %v2136, %v2135
      %v2172 = vpack.c.b16 %v2138, %v2137
      %v2173 = vpack.c.b16 %v2140, %v2139
      %v2174 = vpack.c.b16 %v2142, %v2141
      %v2175 = vpack.c.b16 %v2144, %v2143
      %v2176 = vpack.c.b16 %v2146, %v2145
      %v2177 = vpack.c.b16 %v2148, %v2147
      %v2178 = vpack.c.b16 %v2150, %v2149
      %v2179 = vpack.c.b16 %v2152, %v2151
      %v2180 = vpack.c.b16 %v2154, %v2153
      %v2181 = vpack.c.b16 %v2156, %v2155
      %v2182 = vpack.c.b16 %v2158, %v2157
      %v2183 = vpack.c.b16 %v2160, %v2159
      %v2184 = vpack.c.b16 %v2162, %v2161
      %v2185 = vpack.c.b16 %v2164, %v2163
      %v2186 = vpack.c.b16 %v2166, %v2165
      %2187 = vrot.lane.b32.xlu0 %v2167, 8
      %v2188 = vpop.permute.xlu0 %2187
      %2189 = vrot.lane.b32.xlu0 %v2168, 8
      %v2190 = vpop.permute.xlu0 %2189
      %2191 = vrot.lane.b32.xlu0 %v2169, 8
      %v2192 = vpop.permute.xlu0 %2191
      %2193 = vrot.lane.b32.xlu0 %v2170, 8
      %v2194 = vpop.permute.xlu0 %2193
      %2195 = vrot.lane.b32.xlu0 %v2171, 8
      %v2196 = vpop.permute.xlu0 %2195
      %2197 = vrot.lane.b32.xlu0 %v2172, 8
      %v2198 = vpop.permute.xlu0 %2197
      %2199 = vrot.lane.b32.xlu0 %v2173, 8
      %v2200 = vpop.permute.xlu0 %2199
      %2201 = vrot.lane.b32.xlu0 %v2174, 8
      %v2202 = vpop.permute.xlu0 %2201
      %2203 = vrot.lane.b32.xlu0 %v2175, 8
      %v2204 = vpop.permute.xlu0 %2203
      %2205 = vrot.lane.b32.xlu0 %v2176, 8
      %v2206 = vpop.permute.xlu0 %2205
      %2207 = vrot.lane.b32.xlu0 %v2177, 8
      %v2208 = vpop.permute.xlu0 %2207
      %2209 = vrot.lane.b32.xlu0 %v2178, 8
      %v2210 = vpop.permute.xlu0 %2209
      %2211 = vrot.lane.b32.xlu0 %v2179, 8
      %v2212 = vpop.permute.xlu0 %2211
      %2213 = vrot.lane.b32.xlu0 %v2180, 8
      %v2214 = vpop.permute.xlu0 %2213
      %2215 = vrot.lane.b32.xlu0 %v2181, 8
      %v2216 = vpop.permute.xlu0 %2215
      %2217 = vrot.lane.b32.xlu0 %v2182, 8
      %v2218 = vpop.permute.xlu0 %2217
      %2219 = vrot.lane.b32.xlu0 %v2183, 8
      %v2220 = vpop.permute.xlu0 %2219
      %2221 = vrot.lane.b32.xlu0 %v2184, 8
      %v2222 = vpop.permute.xlu0 %2221
      %2223 = vrot.lane.b32.xlu0 %v2185, 8
      %v2224 = vpop.permute.xlu0 %2223
      %2225 = vrot.lane.b32.xlu0 %v2186, 8
      %v2226 = vpop.permute.xlu0 %2225
      %v2229 = vsel %vm1189, %v2007, %v2088
      %v2232 = vsel %vm1189, %v2008, %v2090
      %v2235 = vsel %vm1189, %v2009, %v2092
      %v2238 = vsel %vm1189, %v2010, %v2094
      %v2241 = vsel %vm1189, %v2011, %v2096
      %v2244 = vsel %vm1189, %v2012, %v2098
      %v2247 = vsel %vm1189, %v2013, %v2100
      %v2250 = vsel %vm1189, %v2014, %v2102
      %v2253 = vsel %vm1189, %v2015, %v2104
      %v2256 = vsel %vm1189, %v2016, %v2106
      %v2259 = vsel %vm1189, %v2017, %v2108
      %v2262 = vsel %vm1189, %v2018, %v2110
      %v2265 = vsel %vm1189, %v2019, %v2112
      %v2268 = vsel %vm1189, %v2020, %v2114
      %v2271 = vsel %vm1189, %v2021, %v2116
      %v2274 = vsel %vm1189, %v2022, %v2118
      %v2277 = vsel %vm1189, %v2023, %v2120
      %v2280 = vsel %vm1189, %v2024, %v2122
      %v2283 = vsel %vm1189, %v2025, %v2124
      %v2286 = vsel %vm1189, %v2026, %v2126
      %v2288 = vsel %vm1250, %v2229, %v2188
      %v2290 = vsel %vm1250, %v2232, %v2190
      %v2292 = vsel %vm1250, %v2235, %v2192
      %v2294 = vsel %vm1250, %v2238, %v2194
      %v2296 = vsel %vm1250, %v2241, %v2196
      %v2298 = vsel %vm1250, %v2244, %v2198
      %v2300 = vsel %vm1250, %v2247, %v2200
      %v2302 = vsel %vm1250, %v2250, %v2202
      %v2304 = vsel %vm1250, %v2253, %v2204
      %v2306 = vsel %vm1250, %v2256, %v2206
      %v2308 = vsel %vm1250, %v2259, %v2208
      %v2310 = vsel %vm1250, %v2262, %v2210
      %v2312 = vsel %vm1250, %v2265, %v2212
      %v2314 = vsel %vm1250, %v2268, %v2214
      %v2316 = vsel %vm1250, %v2271, %v2216
      %v2318 = vsel %vm1250, %v2274, %v2218
      %v2320 = vsel %vm1250, %v2277, %v2220
      %v2322 = vsel %vm1250, %v2280, %v2222
      %v2324 = vsel %vm1250, %v2283, %v2224
      %v2326 = vsel %vm1250, %v2286, %v2226
      %s2327 = scalar_lea.vmem %s1, 8
      %v2328 = vld [vmem:[%s2327] sm:$0xf]
      %v2329 = vld [vmem:[%s2327 + $0x4] sm:$0x3]
      %v2332 = vunpack.c.l.b16 %v2328
      %v2333 = vunpack.c.l.b16 %v2329
      %v2334 = vpack.c.b16 %v2333, %v2332
      %vm2335 = vcmask 97280
      %v2336 = vsel %vm2335, %v2288, 0
      %v2338 = vsel %vm2335, %v2290, 0
      %v2340 = vsel %vm2335, %v2292, 0
      %v2342 = vsel %vm2335, %v2294, 0
      %v2344 = vsel %vm2335, %v2296, 0
      %v2346 = vsel %vm2335, %v2298, 0
      %v2348 = vsel %vm2335, %v2300, 0
      %v2350 = vsel %vm2335, %v2302, 0
      %v2352 = vsel %vm2335, %v2304, 0
      %v2354 = vsel %vm2335, %v2306, 0
      %v2356 = vsel %vm2335, %v2308, 0
      %v2358 = vsel %vm2335, %v2310, 0
      %v2360 = vsel %vm2335, %v2312, 0
      %v2362 = vsel %vm2335, %v2314, 0
      %v2364 = vsel %vm2335, %v2316, 0
      %v2366 = vsel %vm2335, %v2318, 0
      %v2368 = vsel %vm2335, %v2320, 0
      %v2370 = vsel %vm2335, %v2322, 0
      %v2372 = vsel %vm2335, %v2324, 0
      %v2374 = vsel %vm2335, %v2326, 0
      %vm2376 = vcmask 1045504
      %v2378 = vsel %vm2376, %v2334, 0
      %2380 = vmatprep.subr.bf16.mxu0 0
      %2381 = vmatpush1.bf16.msra.mxu0 %v2378
      %2382 = vmatprep.subr.bf16.mxu0 0
      %2383 = vmatpush1.bf16.msra.mxu0 0
      %2384 = vmatprep.subr.bf16.mxu0 0
      %2385 = vmatpush1.bf16.msra.mxu0 0
      %2386 = vmatprep.subr.bf16.mxu0 0
      %2387 = vmatpush1.bf16.msra.mxu0 0
      %2388 = vmatprep.subr.bf16.mxu0 0
      %2389 = vmatpush1.bf16.msra.mxu0 0
      %2390 = vmatprep.subr.bf16.mxu0 0
      %2391 = vmatpush1.bf16.msra.mxu0 0
      %2392 = vmatprep.subr.bf16.mxu0 0
      %2393 = vmatpush1.bf16.msra.mxu0 0
      %2394 = vmatprep.subr.bf16.mxu0 0
      %2395 = vmatpush1.bf16.msra.mxu0 0
      %2396 = vmatprep.subr.bf16.mxu0 0
      %2397 = vmatpush1.bf16.msra.mxu0 0
      %2398 = vmatprep.subr.bf16.mxu0 0
      %2399 = vmatpush1.bf16.msra.mxu0 0
      %2400 = vmatprep.subr.bf16.mxu0 0
      %2401 = vmatpush1.bf16.msra.mxu0 0
      %2402 = vmatprep.subr.bf16.mxu0 0
      %2403 = vmatpush1.bf16.msra.mxu0 0
      %2404 = vmatprep.subr.bf16.mxu0 0
      %2405 = vmatpush1.bf16.msra.mxu0 0
      %2406 = vmatprep.subr.bf16.mxu0 0
      %2407 = vmatpush1.bf16.msra.mxu0 0
      %2408 = vmatprep.subr.bf16.mxu0 0
      %2409 = vmatpush1.bf16.msra.mxu0 0
      %2410 = vmatprep.subr.bf16.mxu0 0
      %2411 = vmatpush1.bf16.msra.mxu0 0
      %2412 = vmatprep.mubr.bf16.mxu0 0
      %2413 = vmatmul.mubr.bf16.gmra.mrb[0].mxu0 %v2336
      %v2414 = vpop.f32.mrb[0].mxu0
      %v2415 = vadd.f32 0.0, %v2414
      %v2416 = vpop.f32.mrb[0].mxu0
      %v2417 = vpop.f32.mrb[0].mxu0
      %v2418 = vadd.f32 0.0, %v2417
      %v2419 = vpop.f32.mrb[0].mxu0
      %2420 = vmatprep.mubr.bf16.mxu0 0
      %2421 = vmatmul.mubr.bf16.gmra.mrb[0].mxu0 %v2338
      %v2422 = vpop.f32.mrb[0].mxu0
      %v2423 = vadd.f32 0.0, %v2422
      %v2424 = vpop.f32.mrb[0].mxu0
      %v2425 = vpop.f32.mrb[0].mxu0
      %v2426 = vadd.f32 0.0, %v2425
      %v2427 = vpop.f32.mrb[0].mxu0
      %2428 = vmatprep.mubr.bf16.mxu0 0
      %2429 = vmatmul.mubr.bf16.gmra.mrb[0].mxu0 %v2340
      %v2430 = vpop.f32.mrb[0].mxu0
      %v2431 = vadd.f32 0.0, %v2430
      %v2432 = vpop.f32.mrb[0].mxu0
      %v2433 = vpop.f32.mrb[0].mxu0
      %v2434 = vadd.f32 0.0, %v2433
      %v2435 = vpop.f32.mrb[0].mxu0
      %2436 = vmatprep.mubr.bf16.mxu0 0
      %2437 = vmatmul.mubr.bf16.gmra.mrb[0].mxu0 %v2342
      %v2438 = vpop.f32.mrb[0].mxu0
      %v2439 = vadd.f32 0.0, %v2438
      %v2440 = vpop.f32.mrb[0].mxu0
      %v2441 = vpop.f32.mrb[0].mxu0
      %v2442 = vadd.f32 0.0, %v2441
      %v2443 = vpop.f32.mrb[0].mxu0
      %2444 = vmatprep.mubr.bf16.mxu0 0
      %2445 = vmatmul.mubr.bf16.gmra.mrb[0].mxu0 %v2344
      %v2446 = vpop.f32.mrb[0].mxu0
      %v2447 = vadd.f32 0.0, %v2446
      %v2448 = vpop.f32.mrb[0].mxu0
      %v2449 = vpop.f32.mrb[0].mxu0
      %v2450 = vadd.f32 0.0, %v2449
      %v2451 = vpop.f32.mrb[0].mxu0
      %2452 = vmatprep.mubr.bf16.mxu0 0
      %2453 = vmatmul.mubr.bf16.gmra.mrb[0].mxu0 %v2346
      %v2454 = vpop.f32.mrb[0].mxu0
      %v2455 = vadd.f32 0.0, %v2454
      %v2456 = vpop.f32.mrb[0].mxu0
      %v2457 = vpop.f32.mrb[0].mxu0
      %v2458 = vadd.f32 0.0, %v2457
      %v2459 = vpop.f32.mrb[0].mxu0
      %2460 = vmatprep.mubr.bf16.mxu0 0
      %2461 = vmatmul.mubr.bf16.gmra.mrb[0].mxu0 %v2348
      %v2462 = vpop.f32.mrb[0].mxu0
      %v2463 = vadd.f32 0.0, %v2462
      %v2464 = vpop.f32.mrb[0].mxu0
      %v2465 = vpop.f32.mrb[0].mxu0
      %v2466 = vadd.f32 0.0, %v2465
      %v2467 = vpop.f32.mrb[0].mxu0
      %2468 = vmatprep.mubr.bf16.mxu0 0
      %2469 = vmatmul.mubr.bf16.gmra.mrb[0].mxu0 %v2350
      %v2470 = vpop.f32.mrb[0].mxu0
      %v2471 = vadd.f32 0.0, %v2470
      %v2472 = vpop.f32.mrb[0].mxu0
      %v2473 = vpop.f32.mrb[0].mxu0
      %v2474 = vadd.f32 0.0, %v2473
      %v2475 = vpop.f32.mrb[0].mxu0
      %2476 = vmatprep.mubr.bf16.mxu0 0
      %2477 = vmatmul.mubr.bf16.gmra.mrb[0].mxu0 %v2352
      %v2478 = vpop.f32.mrb[0].mxu0
      %v2479 = vadd.f32 0.0, %v2478
      %v2480 = vpop.f32.mrb[0].mxu0
      %v2481 = vpop.f32.mrb[0].mxu0
      %v2482 = vadd.f32 0.0, %v2481
      %v2483 = vpop.f32.mrb[0].mxu0
      %2484 = vmatprep.mubr.bf16.mxu0 0
      %2485 = vmatmul.mubr.bf16.gmra.mrb[0].mxu0 %v2354
      %v2486 = vpop.f32.mrb[0].mxu0
      %v2487 = vadd.f32 0.0, %v2486
      %v2488 = vpop.f32.mrb[0].mxu0
      %v2489 = vpop.f32.mrb[0].mxu0
      %v2490 = vadd.f32 0.0, %v2489
      %v2491 = vpop.f32.mrb[0].mxu0
      %2492 = vmatprep.mubr.bf16.mxu0 0
      %2493 = vmatmul.mubr.bf16.gmra.mrb[0].mxu0 %v2356
      %v2494 = vpop.f32.mrb[0].mxu0
      %v2495 = vadd.f32 0.0, %v2494
      %v2496 = vpop.f32.mrb[0].mxu0
      %v2497 = vpop.f32.mrb[0].mxu0
      %v2498 = vadd.f32 0.0, %v2497
      %v2499 = vpop.f32.mrb[0].mxu0
      %2500 = vmatprep.mubr.bf16.mxu0 0
      %2501 = vmatmul.mubr.bf16.gmra.mrb[0].mxu0 %v2358
      %v2502 = vpop.f32.mrb[0].mxu0
      %v2503 = vadd.f32 0.0, %v2502
      %v2504 = vpop.f32.mrb[0].mxu0
      %v2505 = vpop.f32.mrb[0].mxu0
      %v2506 = vadd.f32 0.0, %v2505
      %v2507 = vpop.f32.mrb[0].mxu0
      %2508 = vmatprep.mubr.bf16.mxu0 0
      %2509 = vmatmul.mubr.bf16.gmra.mrb[0].mxu0 %v2360
      %v2510 = vpop.f32.mrb[0].mxu0
      %v2511 = vadd.f32 0.0, %v2510
      %v2512 = vpop.f32.mrb[0].mxu0
      %v2513 = vpop.f32.mrb[0].mxu0
      %v2514 = vadd.f32 0.0, %v2513
      %v2515 = vpop.f32.mrb[0].mxu0
      %2516 = vmatprep.mubr.bf16.mxu0 0
      %2517 = vmatmul.mubr.bf16.gmra.mrb[0].mxu0 %v2362
      %v2518 = vpop.f32.mrb[0].mxu0
      %v2519 = vadd.f32 0.0, %v2518
      %v2520 = vpop.f32.mrb[0].mxu0
      %v2521 = vpop.f32.mrb[0].mxu0
      %v2522 = vadd.f32 0.0, %v2521
      %v2523 = vpop.f32.mrb[0].mxu0
      %2524 = vmatprep.mubr.bf16.mxu0 0
      %2525 = vmatmul.mubr.bf16.gmra.mrb[0].mxu0 %v2364
      %v2526 = vpop.f32.mrb[0].mxu0
      %v2527 = vadd.f32 0.0, %v2526
      %v2528 = vpop.f32.mrb[0].mxu0
      %v2529 = vpop.f32.mrb[0].mxu0
      %v2530 = vadd.f32 0.0, %v2529
      %v2531 = vpop.f32.mrb[0].mxu0
      %2532 = vmatprep.mubr.bf16.mxu0 0
      %2533 = vmatmul.mubr.bf16.gmra.mrb[0].mxu0 %v2366
      %v2534 = vpop.f32.mrb[0].mxu0
      %v2535 = vadd.f32 0.0, %v2534
      %v2536 = vpop.f32.mrb[0].mxu0
      %v2537 = vpop.f32.mrb[0].mxu0
      %v2538 = vadd.f32 0.0, %v2537
      %v2539 = vpop.f32.mrb[0].mxu0
      %2540 = vmatprep.mubr.bf16.mxu0 0
      %2541 = vmatmul.mubr.bf16.gmra.mrb[0].mxu0 %v2368
      %v2542 = vpop.f32.mrb[0].mxu0
      %v2543 = vadd.f32 0.0, %v2542
      %v2544 = vpop.f32.mrb[0].mxu0
      %v2545 = vpop.f32.mrb[0].mxu0
      %v2546 = vadd.f32 0.0, %v2545
      %v2547 = vpop.f32.mrb[0].mxu0
      %2548 = vmatprep.mubr.bf16.mxu0 0
      %2549 = vmatmul.mubr.bf16.gmra.mrb[0].mxu0 %v2370
      %v2550 = vpop.f32.mrb[0].mxu0
      %v2551 = vadd.f32 0.0, %v2550
      %v2552 = vpop.f32.mrb[0].mxu0
      %v2553 = vpop.f32.mrb[0].mxu0
      %v2554 = vadd.f32 0.0, %v2553
      %v2555 = vpop.f32.mrb[0].mxu0
      %2556 = vmatprep.mubr.bf16.mxu0 0
      %2557 = vmatmul.mubr.bf16.gmra.mrb[0].mxu0 %v2372
      %v2558 = vpop.f32.mrb[0].mxu0
      %v2559 = vadd.f32 0.0, %v2558
      %v2560 = vpop.f32.mrb[0].mxu0
      %v2561 = vpop.f32.mrb[0].mxu0
      %v2562 = vadd.f32 0.0, %v2561
      %v2563 = vpop.f32.mrb[0].mxu0
      %2564 = vmatprep.mubr.bf16.mxu0 0
      %2565 = vmatmul.mubr.bf16.gmra.mrb[0].mxu0 %v2374
      %v2566 = vpop.f32.mrb[0].mxu0
      %v2567 = vadd.f32 0.0, %v2566
      %v2568 = vpop.f32.mrb[0].mxu0
      %v2569 = vpop.f32.mrb[0].mxu0
      %v2570 = vadd.f32 0.0, %v2569
      %v2571 = vpop.f32.mrb[0].mxu0
      %2572 = vdwg.mxu0
      %v2575 = vunpack.c.l.b16 %v1291
      %v2576 = vunpack.c.l.b16 %v1292
      %v2577 = vpack.c.b16 %v2576, %v2575
      %v2578 = vsel %vm2335, %v1252, 0
      %v2580 = vsel %vm2335, %v1254, 0
      %v2582 = vsel %vm2335, %v1256, 0
      %v2584 = vsel %vm2335, %v1258, 0
      %v2586 = vsel %vm2335, %v1260, 0
      %v2588 = vsel %vm2335, %v1262, 0
      %v2590 = vsel %vm2335, %v1264, 0
      %v2592 = vsel %vm2335, %v1266, 0
      %v2594 = vsel %vm2335, %v1268, 0
      %v2596 = vsel %vm2335, %v1270, 0
      %v2598 = vsel %vm2335, %v1272, 0
      %v2600 = vsel %vm2335, %v1274, 0
      %v2602 = vsel %vm2335, %v1276, 0
      %v2604 = vsel %vm2335, %v1278, 0
      %v2606 = vsel %vm2335, %v1280, 0
      %v2608 = vsel %vm2335, %v1282, 0
      %v2610 = vsel %vm2335, %v1284, 0
      %v2612 = vsel %vm2335, %v1286, 0
      %v2614 = vsel %vm2335, %v1288, 0
      %v2616 = vsel %vm2335, %v1290, 0
      %v2619 = vsel %vm2376, %v2577, 0
      %2621 = vmatprep.subr.bf16.mxu0 0
      %2622 = vmatpush1.bf16.msra.mxu0 %v2619
      %2623 = vmatprep.subr.bf16.mxu0 0
      %2624 = vmatpush1.bf16.msra.mxu0 0
      %2625 = vmatprep.subr.bf16.mxu0 0
      %2626 = vmatpush1.bf16.msra.mxu0 0
      %2627 = vmatprep.subr.bf16.mxu0 0
      %2628 = vmatpush1.bf16.msra.mxu0 0
      %2629 = vmatprep.subr.bf16.mxu0 0
      %2630 = vmatpush1.bf16.msra.mxu0 0
      %2631 = vmatprep.subr.bf16.mxu0 0
      %2632 = vmatpush1.bf16.msra.mxu0 0
      %2633 = vmatprep.subr.bf16.mxu0 0
      %2634 = vmatpush1.bf16.msra.mxu0 0
      %2635 = vmatprep.subr.bf16.mxu0 0
      %2636 = vmatpush1.bf16.msra.mxu0 0
      %2637 = vmatprep.subr.bf16.mxu0 0
      %2638 = vmatpush1.bf16.msra.mxu0 0
      %2639 = vmatprep.subr.bf16.mxu0 0
      %2640 = vmatpush1.bf16.msra.mxu0 0
      %2641 = vmatprep.subr.bf16.mxu0 0
      %2642 = vmatpush1.bf16.msra.mxu0 0
      %2643 = vmatprep.subr.bf16.mxu0 0
      %2644 = vmatpush1.bf16.msra.mxu0 0
      %2645 = vmatprep.subr.bf16.mxu0 0
      %2646 = vmatpush1.bf16.msra.mxu0 0
      %2647 = vmatprep.subr.bf16.mxu0 0
      %2648 = vmatpush1.bf16.msra.mxu0 0
      %2649 = vmatprep.subr.bf16.mxu0 0
      %2650 = vmatpush1.bf16.msra.mxu0 0
      %2651 = vmatprep.subr.bf16.mxu0 0
      %2652 = vmatpush1.bf16.msra.mxu0 0
      %2653 = vmatprep.mubr.bf16.mxu0 0
      %2654 = vmatmul.mubr.bf16.gmra.mrb[0].mxu0 %v2578
      %v2655 = vpop.f32.mrb[0].mxu0
      %v2656 = vadd.f32 %v2415, %v2655
      %v2657 = vpop.f32.mrb[0].mxu0
      %v2658 = vpop.f32.mrb[0].mxu0
      %v2659 = vadd.f32 %v2418, %v2658
      %v2660 = vpop.f32.mrb[0].mxu0
      %2661 = vmatprep.mubr.bf16.mxu0 0
      %2662 = vmatmul.mubr.bf16.gmra.mrb[0].mxu0 %v2580
      %v2663 = vpop.f32.mrb[0].mxu0
      %v2664 = vadd.f32 %v2423, %v2663
      %v2665 = vpop.f32.mrb[0].mxu0
      %v2666 = vpop.f32.mrb[0].mxu0
      %v2667 = vadd.f32 %v2426, %v2666
      %v2668 = vpop.f32.mrb[0].mxu0
      %2669 = vmatprep.mubr.bf16.mxu0 0
      %2670 = vmatmul.mubr.bf16.gmra.mrb[0].mxu0 %v2582
      %v2671 = vpop.f32.mrb[0].mxu0
      %v2672 = vadd.f32 %v2431, %v2671
      %v2673 = vpop.f32.mrb[0].mxu0
      %v2674 = vpop.f32.mrb[0].mxu0
      %v2675 = vadd.f32 %v2434, %v2674
      %v2676 = vpop.f32.mrb[0].mxu0
      %2677 = vmatprep.mubr.bf16.mxu0 0
      %2678 = vmatmul.mubr.bf16.gmra.mrb[0].mxu0 %v2584
      %v2679 = vpop.f32.mrb[0].mxu0
      %v2680 = vadd.f32 %v2439, %v2679
      %v2681 = vpop.f32.mrb[0].mxu0
      %v2682 = vpop.f32.mrb[0].mxu0
      %v2683 = vadd.f32 %v2442, %v2682
      %v2684 = vpop.f32.mrb[0].mxu0
      %2685 = vmatprep.mubr.bf16.mxu0 0
      %2686 = vmatmul.mubr.bf16.gmra.mrb[0].mxu0 %v2586
      %v2687 = vpop.f32.mrb[0].mxu0
      %v2688 = vadd.f32 %v2447, %v2687
      %v2689 = vpop.f32.mrb[0].mxu0
      %v2690 = vpop.f32.mrb[0].mxu0
      %v2691 = vadd.f32 %v2450, %v2690
      %v2692 = vpop.f32.mrb[0].mxu0
      %2693 = vmatprep.mubr.bf16.mxu0 0
      %2694 = vmatmul.mubr.bf16.gmra.mrb[0].mxu0 %v2588
      %v2695 = vpop.f32.mrb[0].mxu0
      %v2696 = vadd.f32 %v2455, %v2695
      %v2697 = vpop.f32.mrb[0].mxu0
      %v2698 = vpop.f32.mrb[0].mxu0
      %v2699 = vadd.f32 %v2458, %v2698
      %v2700 = vpop.f32.mrb[0].mxu0
      %2701 = vmatprep.mubr.bf16.mxu0 0
      %2702 = vmatmul.mubr.bf16.gmra.mrb[0].mxu0 %v2590
      %v2703 = vpop.f32.mrb[0].mxu0
      %v2704 = vadd.f32 %v2463, %v2703
      %v2705 = vpop.f32.mrb[0].mxu0
      %v2706 = vpop.f32.mrb[0].mxu0
      %v2707 = vadd.f32 %v2466, %v2706
      %v2708 = vpop.f32.mrb[0].mxu0
      %2709 = vmatprep.mubr.bf16.mxu0 0
      %2710 = vmatmul.mubr.bf16.gmra.mrb[0].mxu0 %v2592
      %v2711 = vpop.f32.mrb[0].mxu0
      %v2712 = vadd.f32 %v2471, %v2711
      %v2713 = vpop.f32.mrb[0].mxu0
      %v2714 = vpop.f32.mrb[0].mxu0
      %v2715 = vadd.f32 %v2474, %v2714
      %v2716 = vpop.f32.mrb[0].mxu0
      %2717 = vmatprep.mubr.bf16.mxu0 0
      %2718 = vmatmul.mubr.bf16.gmra.mrb[0].mxu0 %v2594
      %v2719 = vpop.f32.mrb[0].mxu0
      %v2720 = vadd.f32 %v2479, %v2719
      %v2721 = vpop.f32.mrb[0].mxu0
      %v2722 = vpop.f32.mrb[0].mxu0
      %v2723 = vadd.f32 %v2482, %v2722
      %v2724 = vpop.f32.mrb[0].mxu0
      %2725 = vmatprep.mubr.bf16.mxu0 0
      %2726 = vmatmul.mubr.bf16.gmra.mrb[0].mxu0 %v2596
      %v2727 = vpop.f32.mrb[0].mxu0
      %v2728 = vadd.f32 %v2487, %v2727
      %v2729 = vpop.f32.mrb[0].mxu0
      %v2730 = vpop.f32.mrb[0].mxu0
      %v2731 = vadd.f32 %v2490, %v2730
      %v2732 = vpop.f32.mrb[0].mxu0
      %2733 = vmatprep.mubr.bf16.mxu0 0
      %2734 = vmatmul.mubr.bf16.gmra.mrb[0].mxu0 %v2598
      %v2735 = vpop.f32.mrb[0].mxu0
      %v2736 = vadd.f32 %v2495, %v2735
      %v2737 = vpop.f32.mrb[0].mxu0
      %v2738 = vpop.f32.mrb[0].mxu0
      %v2739 = vadd.f32 %v2498, %v2738
      %v2740 = vpop.f32.mrb[0].mxu0
      %2741 = vmatprep.mubr.bf16.mxu0 0
      %2742 = vmatmul.mubr.bf16.gmra.mrb[0].mxu0 %v2600
      %v2743 = vpop.f32.mrb[0].mxu0
      %v2744 = vadd.f32 %v2503, %v2743
      %v2745 = vpop.f32.mrb[0].mxu0
      %v2746 = vpop.f32.mrb[0].mxu0
      %v2747 = vadd.f32 %v2506, %v2746
      %v2748 = vpop.f32.mrb[0].mxu0
      %2749 = vmatprep.mubr.bf16.mxu0 0
      %2750 = vmatmul.mubr.bf16.gmra.mrb[0].mxu0 %v2602
      %v2751 = vpop.f32.mrb[0].mxu0
      %v2752 = vadd.f32 %v2511, %v2751
      %v2753 = vpop.f32.mrb[0].mxu0
      %v2754 = vpop.f32.mrb[0].mxu0
      %v2755 = vadd.f32 %v2514, %v2754
      %v2756 = vpop.f32.mrb[0].mxu0
      %2757 = vmatprep.mubr.bf16.mxu0 0
      %2758 = vmatmul.mubr.bf16.gmra.mrb[0].mxu0 %v2604
      %v2759 = vpop.f32.mrb[0].mxu0
      %v2760 = vadd.f32 %v2519, %v2759
      %v2761 = vpop.f32.mrb[0].mxu0
      %v2762 = vpop.f32.mrb[0].mxu0
      %v2763 = vadd.f32 %v2522, %v2762
      %v2764 = vpop.f32.mrb[0].mxu0
      %2765 = vmatprep.mubr.bf16.mxu0 0
      %2766 = vmatmul.mubr.bf16.gmra.mrb[0].mxu0 %v2606
      %v2767 = vpop.f32.mrb[0].mxu0
      %v2768 = vadd.f32 %v2527, %v2767
      %v2769 = vpop.f32.mrb[0].mxu0
      %v2770 = vpop.f32.mrb[0].mxu0
      %v2771 = vadd.f32 %v2530, %v2770
      %v2772 = vpop.f32.mrb[0].mxu0
      %2773 = vmatprep.mubr.bf16.mxu0 0
      %2774 = vmatmul.mubr.bf16.gmra.mrb[0].mxu0 %v2608
      %v2775 = vpop.f32.mrb[0].mxu0
      %v2776 = vadd.f32 %v2535, %v2775
      %v2777 = vpop.f32.mrb[0].mxu0
      %v2778 = vpop.f32.mrb[0].mxu0
      %v2779 = vadd.f32 %v2538, %v2778
      %v2780 = vpop.f32.mrb[0].mxu0
      %2781 = vmatprep.mubr.bf16.mxu0 0
      %2782 = vmatmul.mubr.bf16.gmra.mrb[0].mxu0 %v2610
      %v2783 = vpop.f32.mrb[0].mxu0
      %v2784 = vadd.f32 %v2543, %v2783
      %v2785 = vpop.f32.mrb[0].mxu0
      %v2786 = vpop.f32.mrb[0].mxu0
      %v2787 = vadd.f32 %v2546, %v2786
      %v2788 = vpop.f32.mrb[0].mxu0
      %2789 = vmatprep.mubr.bf16.mxu0 0
      %2790 = vmatmul.mubr.bf16.gmra.mrb[0].mxu0 %v2612
      %v2791 = vpop.f32.mrb[0].mxu0
      %v2792 = vadd.f32 %v2551, %v2791
      %v2793 = vpop.f32.mrb[0].mxu0
      %v2794 = vpop.f32.mrb[0].mxu0
      %v2795 = vadd.f32 %v2554, %v2794
      %v2796 = vpop.f32.mrb[0].mxu0
      %2797 = vmatprep.mubr.bf16.mxu0 0
      %2798 = vmatmul.mubr.bf16.gmra.mrb[0].mxu0 %v2614
      %v2799 = vpop.f32.mrb[0].mxu0
      %v2800 = vadd.f32 %v2559, %v2799
      %v2801 = vpop.f32.mrb[0].mxu0
      %v2802 = vpop.f32.mrb[0].mxu0
      %v2803 = vadd.f32 %v2562, %v2802
      %v2804 = vpop.f32.mrb[0].mxu0
      %2805 = vmatprep.mubr.bf16.mxu0 0
      %2806 = vmatmul.mubr.bf16.gmra.mrb[0].mxu0 %v2616
      %v2807 = vpop.f32.mrb[0].mxu0
      %v2808 = vadd.f32 %v2567, %v2807
      %v2809 = vpop.f32.mrb[0].mxu0
      %v2810 = vpop.f32.mrb[0].mxu0
      %v2811 = vadd.f32 %v2570, %v2810
      %v2812 = vpop.f32.mrb[0].mxu0
      %2813 = vdwg.mxu0
      %s2814 = sadd.s32 %s249, 2
      %s2815 = smul.u32 %s2814, 5
      %s2816 = smul.addr %s2815, 4
      %s2817 = scalar_lea.vmem %s237, %s2816
      %v2818 = vld [vmem:[%s2817] sm:$0xf]
      %v2819 = vld [vmem:[%s2817 + $0x4] sm:$0xf]
      %v2820 = vld [vmem:[%s2817 + $0x8] sm:$0xf]
      %v2821 = vld [vmem:[%s2817 + $0xc] sm:$0xf]
      %v2822 = vld [vmem:[%s2817 + $0x10] sm:$0x1]
      %v2823 = vld [vmem:[%s2817 + $0x14] sm:$0xf]
      %v2824 = vld [vmem:[%s2817 + $0x18] sm:$0xf]
      %v2825 = vld [vmem:[%s2817 + $0x1c] sm:$0xf]
      %v2826 = vld [vmem:[%s2817 + $0x20] sm:$0xf]
      %v2827 = vld [vmem:[%s2817 + $0x24] sm:$0x1]
      %v2828 = vld [vmem:[%s2817 + $0x28] sm:$0xf]
      %v2829 = vld [vmem:[%s2817 + $0x2c] sm:$0xf]
      %v2830 = vld [vmem:[%s2817 + $0x30] sm:$0xf]
      %v2831 = vld [vmem:[%s2817 + $0x34] sm:$0xf]
      %v2832 = vld [vmem:[%s2817 + $0x38] sm:$0x1]
      %v2833 = vld [vmem:[%s2817 + $0x3c] sm:$0xf]
      %v2834 = vld [vmem:[%s2817 + $0x40] sm:$0xf]
      %v2835 = vld [vmem:[%s2817 + $0x44] sm:$0xf]
      %v2836 = vld [vmem:[%s2817 + $0x48] sm:$0xf]
      %v2837 = vld [vmem:[%s2817 + $0x4c] sm:$0x1]
      %v2838 = vld [vmem:[%s2817 + $0x50] sm:$0xf]
      %v2839 = vld [vmem:[%s2817 + $0x54] sm:$0xf]
      %v2840 = vld [vmem:[%s2817 + $0x58] sm:$0xf]
      %v2841 = vld [vmem:[%s2817 + $0x5c] sm:$0xf]
      %v2842 = vld [vmem:[%s2817 + $0x60] sm:$0x1]
      %v2843 = vld [vmem:[%s2817 + $0x64] sm:$0xf]
      %v2844 = vld [vmem:[%s2817 + $0x68] sm:$0xf]
      %v2845 = vld [vmem:[%s2817 + $0x6c] sm:$0xf]
      %v2846 = vld [vmem:[%s2817 + $0x70] sm:$0xf]
      %v2847 = vld [vmem:[%s2817 + $0x74] sm:$0x1]
      %v2848 = vld [vmem:[%s2817 + $0x78] sm:$0xf]
      %v2849 = vld [vmem:[%s2817 + $0x7c] sm:$0xf]
      %v2850 = vld [vmem:[%s2817 + $0x80] sm:$0xf]
      %v2851 = vld [vmem:[%s2817 + $0x84] sm:$0xf]
      %v2852 = vld [vmem:[%s2817 + $0x88] sm:$0x1]
      %v2853 = vld [vmem:[%s2817 + $0x8c] sm:$0xf]
      %v2854 = vld [vmem:[%s2817 + $0x90] sm:$0xf]
      %v2855 = vld [vmem:[%s2817 + $0x94] sm:$0xf]
      %v2856 = vld [vmem:[%s2817 + $0x98] sm:$0xf]
      %v2857 = vld [vmem:[%s2817 + $0x9c] sm:$0x1]
      %v2858 = vld [vmem:[%s2817 + $0xa0] sm:$0xf]
      %v2859 = vld [vmem:[%s2817 + $0xa4] sm:$0xf]
      %v2860 = vld [vmem:[%s2817 + $0xa8] sm:$0xf]
      %v2861 = vld [vmem:[%s2817 + $0xac] sm:$0xf]
      %v2862 = vld [vmem:[%s2817 + $0xb0] sm:$0x1]
      %v2863 = vld [vmem:[%s2817 + $0xb4] sm:$0xf]
      %v2864 = vld [vmem:[%s2817 + $0xb8] sm:$0xf]
      %v2865 = vld [vmem:[%s2817 + $0xbc] sm:$0xf]
      %v2866 = vld [vmem:[%s2817 + $0xc0] sm:$0xf]
      %v2867 = vld [vmem:[%s2817 + $0xc4] sm:$0x1]
      %v2869 = vshrl.u32 %v2818, 16
      %v2871 = vrot.slane %v2869, 4
      %v2872 = vshll.u32 %v2818, 16
      %v2874 = vrot.slane %v2872, 5
      %v2875 = vor.u32 %v2871, %v2874
      %v2876 = vrot.slane %v2875, 4
      %v2878 = vshll.u32 %v2819, 16
      %v2880 = vrot.slane %v2878, 5
      %v2881 = vsel %vm305, %v2876, %v2880
      %v2882 = vshrl.u32 %v2819, 16
      %v2884 = vrot.slane %v2882, 4
      %v2885 = vor.u32 %v2884, %v2880
      %v2886 = vrot.slane %v2885, 4
      %v2888 = vshll.u32 %v2820, 16
      %v2890 = vrot.slane %v2888, 5
      %v2891 = vsel %vm305, %v2886, %v2890
      %v2892 = vshrl.u32 %v2820, 16
      %v2894 = vrot.slane %v2892, 4
      %v2895 = vor.u32 %v2894, %v2890
      %v2896 = vrot.slane %v2895, 4
      %v2898 = vshll.u32 %v2821, 16
      %v2900 = vrot.slane %v2898, 5
      %v2901 = vsel %vm305, %v2896, %v2900
      %v2902 = vshrl.u32 %v2821, 16
      %v2904 = vrot.slane %v2902, 4
      %v2905 = vor.u32 %v2904, %v2900
      %v2906 = vrot.slane %v2905, 4
      %v2908 = vshll.u32 %v2822, 16
      %v2910 = vrot.slane %v2908, 5
      %v2911 = vsel %vm305, %v2906, %v2910
      %v2913 = vshrl.u32 %v2823, 16
      %v2915 = vrot.slane %v2913, 4
      %v2916 = vshll.u32 %v2823, 16
      %v2918 = vrot.slane %v2916, 5
      %v2919 = vor.u32 %v2915, %v2918
      %v2920 = vrot.slane %v2919, 4
      %v2922 = vshll.u32 %v2824, 16
      %v2924 = vrot.slane %v2922, 5
      %v2925 = vsel %vm305, %v2920, %v2924
      %v2926 = vshrl.u32 %v2824, 16
      %v2928 = vrot.slane %v2926, 4
      %v2929 = vor.u32 %v2928, %v2924
      %v2930 = vrot.slane %v2929, 4
      %v2932 = vshll.u32 %v2825, 16
      %v2934 = vrot.slane %v2932, 5
      %v2935 = vsel %vm305, %v2930, %v2934
      %v2936 = vshrl.u32 %v2825, 16
      %v2938 = vrot.slane %v2936, 4
      %v2939 = vor.u32 %v2938, %v2934
      %v2940 = vrot.slane %v2939, 4
      %v2942 = vshll.u32 %v2826, 16
      %v2944 = vrot.slane %v2942, 5
      %v2945 = vsel %vm305, %v2940, %v2944
      %v2946 = vshrl.u32 %v2826, 16
      %v2948 = vrot.slane %v2946, 4
      %v2949 = vor.u32 %v2948, %v2944
      %v2950 = vrot.slane %v2949, 4
      %v2952 = vshll.u32 %v2827, 16
      %v2954 = vrot.slane %v2952, 5
      %v2955 = vsel %vm305, %v2950, %v2954
      %v2957 = vshrl.u32 %v2828, 16
      %v2959 = vrot.slane %v2957, 4
      %v2960 = vshll.u32 %v2828, 16
      %v2962 = vrot.slane %v2960, 5
      %v2963 = vor.u32 %v2959, %v2962
      %v2964 = vrot.slane %v2963, 4
      %v2966 = vshll.u32 %v2829, 16
      %v2968 = vrot.slane %v2966, 5
      %v2969 = vsel %vm305, %v2964, %v2968
      %v2970 = vshrl.u32 %v2829, 16
      %v2972 = vrot.slane %v2970, 4
      %v2973 = vor.u32 %v2972, %v2968
      %v2974 = vrot.slane %v2973, 4
      %v2976 = vshll.u32 %v2830, 16
      %v2978 = vrot.slane %v2976, 5
      %v2979 = vsel %vm305, %v2974, %v2978
      %v2980 = vshrl.u32 %v2830, 16
      %v2982 = vrot.slane %v2980, 4
      %v2983 = vor.u32 %v2982, %v2978
      %v2984 = vrot.slane %v2983, 4
      %v2986 = vshll.u32 %v2831, 16
      %v2988 = vrot.slane %v2986, 5
      %v2989 = vsel %vm305, %v2984, %v2988
      %v2990 = vshrl.u32 %v2831, 16
      %v2992 = vrot.slane %v2990, 4
      %v2993 = vor.u32 %v2992, %v2988
      %v2994 = vrot.slane %v2993, 4
      %v2996 = vshll.u32 %v2832, 16
      %v2998 = vrot.slane %v2996, 5
      %v2999 = vsel %vm305, %v2994, %v2998
      %v3001 = vshrl.u32 %v2833, 16
      %v3003 = vrot.slane %v3001, 4
      %v3004 = vshll.u32 %v2833, 16
      %v3006 = vrot.slane %v3004, 5
      %v3007 = vor.u32 %v3003, %v3006
      %v3008 = vrot.slane %v3007, 4
      %v3010 = vshll.u32 %v2834, 16
      %v3012 = vrot.slane %v3010, 5
      %v3013 = vsel %vm305, %v3008, %v3012
      %v3014 = vshrl.u32 %v2834, 16
      %v3016 = vrot.slane %v3014, 4
      %v3017 = vor.u32 %v3016, %v3012
      %v3018 = vrot.slane %v3017, 4
      %v3020 = vshll.u32 %v2835, 16
      %v3022 = vrot.slane %v3020, 5
      %v3023 = vsel %vm305, %v3018, %v3022
      %v3024 = vshrl.u32 %v2835, 16
      %v3026 = vrot.slane %v3024, 4
      %v3027 = vor.u32 %v3026, %v3022
      %v3028 = vrot.slane %v3027, 4
      %v3030 = vshll.u32 %v2836, 16
      %v3032 = vrot.slane %v3030, 5
      %v3033 = vsel %vm305, %v3028, %v3032
      %v3034 = vshrl.u32 %v2836, 16
      %v3036 = vrot.slane %v3034, 4
      %v3037 = vor.u32 %v3036, %v3032
      %v3038 = vrot.slane %v3037, 4
      %v3040 = vshll.u32 %v2837, 16
      %v3042 = vrot.slane %v3040, 5
      %v3043 = vsel %vm305, %v3038, %v3042
      %v3045 = vshrl.u32 %v2838, 16
      %v3047 = vrot.slane %v3045, 4
      %v3048 = vshll.u32 %v2838, 16
      %v3050 = vrot.slane %v3048, 5
      %v3051 = vor.u32 %v3047, %v3050
      %v3052 = vrot.slane %v3051, 4
      %v3054 = vshll.u32 %v2839, 16
      %v3056 = vrot.slane %v3054, 5
      %v3057 = vsel %vm305, %v3052, %v3056
      %v3058 = vshrl.u32 %v2839, 16
      %v3060 = vrot.slane %v3058, 4
      %v3061 = vor.u32 %v3060, %v3056
      %v3062 = vrot.slane %v3061, 4
      %v3064 = vshll.u32 %v2840, 16
      %v3066 = vrot.slane %v3064, 5
      %v3067 = vsel %vm305, %v3062, %v3066
      %v3068 = vshrl.u32 %v2840, 16
      %v3070 = vrot.slane %v3068, 4
      %v3071 = vor.u32 %v3070, %v3066
      %v3072 = vrot.slane %v3071, 4
      %v3074 = vshll.u32 %v2841, 16
      %v3076 = vrot.slane %v3074, 5
      %v3077 = vsel %vm305, %v3072, %v3076
      %v3078 = vshrl.u32 %v2841, 16
      %v3080 = vrot.slane %v3078, 4
      %v3081 = vor.u32 %v3080, %v3076
      %v3082 = vrot.slane %v3081, 4
      %v3084 = vshll.u32 %v2842, 16
      %v3086 = vrot.slane %v3084, 5
      %v3087 = vsel %vm305, %v3082, %v3086
      %v3089 = vshrl.u32 %v2843, 16
      %v3091 = vrot.slane %v3089, 4
      %v3092 = vshll.u32 %v2843, 16
      %v3094 = vrot.slane %v3092, 5
      %v3095 = vor.u32 %v3091, %v3094
      %v3096 = vrot.slane %v3095, 4
      %v3098 = vshll.u32 %v2844, 16
      %v3100 = vrot.slane %v3098, 5
      %v3101 = vsel %vm305, %v3096, %v3100
      %v3102 = vshrl.u32 %v2844, 16
      %v3104 = vrot.slane %v3102, 4
      %v3105 = vor.u32 %v3104, %v3100
      %v3106 = vrot.slane %v3105, 4
      %v3108 = vshll.u32 %v2845, 16
      %v3110 = vrot.slane %v3108, 5
      %v3111 = vsel %vm305, %v3106, %v3110
      %v3112 = vshrl.u32 %v2845, 16
      %v3114 = vrot.slane %v3112, 4
      %v3115 = vor.u32 %v3114, %v3110
      %v3116 = vrot.slane %v3115, 4
      %v3118 = vshll.u32 %v2846, 16
      %v3120 = vrot.slane %v3118, 5
      %v3121 = vsel %vm305, %v3116, %v3120
      %v3122 = vshrl.u32 %v2846, 16
      %v3124 = vrot.slane %v3122, 4
      %v3125 = vor.u32 %v3124, %v3120
      %v3126 = vrot.slane %v3125, 4
      %v3128 = vshll.u32 %v2847, 16
      %v3130 = vrot.slane %v3128, 5
      %v3131 = vsel %vm305, %v3126, %v3130
      %v3133 = vshrl.u32 %v2848, 16
      %v3135 = vrot.slane %v3133, 4
      %v3136 = vshll.u32 %v2848, 16
      %v3138 = vrot.slane %v3136, 5
      %v3139 = vor.u32 %v3135, %v3138
      %v3140 = vrot.slane %v3139, 4
      %v3142 = vshll.u32 %v2849, 16
      %v3144 = vrot.slane %v3142, 5
      %v3145 = vsel %vm305, %v3140, %v3144
      %v3146 = vshrl.u32 %v2849, 16
      %v3148 = vrot.slane %v3146, 4
      %v3149 = vor.u32 %v3148, %v3144
      %v3150 = vrot.slane %v3149, 4
      %v3152 = vshll.u32 %v2850, 16
      %v3154 = vrot.slane %v3152, 5
      %v3155 = vsel %vm305, %v3150, %v3154
      %v3156 = vshrl.u32 %v2850, 16
      %v3158 = vrot.slane %v3156, 4
      %v3159 = vor.u32 %v3158, %v3154
      %v3160 = vrot.slane %v3159, 4
      %v3162 = vshll.u32 %v2851, 16
      %v3164 = vrot.slane %v3162, 5
      %v3165 = vsel %vm305, %v3160, %v3164
      %v3166 = vshrl.u32 %v2851, 16
      %v3168 = vrot.slane %v3166, 4
      %v3169 = vor.u32 %v3168, %v3164
      %v3170 = vrot.slane %v3169, 4
      %v3172 = vshll.u32 %v2852, 16
      %v3174 = vrot.slane %v3172, 5
      %v3175 = vsel %vm305, %v3170, %v3174
      %v3177 = vshrl.u32 %v2853, 16
      %v3179 = vrot.slane %v3177, 4
      %v3180 = vshll.u32 %v2853, 16
      %v3182 = vrot.slane %v3180, 5
      %v3183 = vor.u32 %v3179, %v3182
      %v3184 = vrot.slane %v3183, 4
      %v3186 = vshll.u32 %v2854, 16
      %v3188 = vrot.slane %v3186, 5
      %v3189 = vsel %vm305, %v3184, %v3188
      %v3190 = vshrl.u32 %v2854, 16
      %v3192 = vrot.slane %v3190, 4
      %v3193 = vor.u32 %v3192, %v3188
      %v3194 = vrot.slane %v3193, 4
      %v3196 = vshll.u32 %v2855, 16
      %v3198 = vrot.slane %v3196, 5
      %v3199 = vsel %vm305, %v3194, %v3198
      %v3200 = vshrl.u32 %v2855, 16
      %v3202 = vrot.slane %v3200, 4
      %v3203 = vor.u32 %v3202, %v3198
      %v3204 = vrot.slane %v3203, 4
      %v3206 = vshll.u32 %v2856, 16
      %v3208 = vrot.slane %v3206, 5
      %v3209 = vsel %vm305, %v3204, %v3208
      %v3210 = vshrl.u32 %v2856, 16
      %v3212 = vrot.slane %v3210, 4
      %v3213 = vor.u32 %v3212, %v3208
      %v3214 = vrot.slane %v3213, 4
      %v3216 = vshll.u32 %v2857, 16
      %v3218 = vrot.slane %v3216, 5
      %v3219 = vsel %vm305, %v3214, %v3218
      %v3221 = vshrl.u32 %v2858, 16
      %v3223 = vrot.slane %v3221, 4
      %v3224 = vshll.u32 %v2858, 16
      %v3226 = vrot.slane %v3224, 5
      %v3227 = vor.u32 %v3223, %v3226
      %v3228 = vrot.slane %v3227, 4
      %v3230 = vshll.u32 %v2859, 16
      %v3232 = vrot.slane %v3230, 5
      %v3233 = vsel %vm305, %v3228, %v3232
      %v3234 = vshrl.u32 %v2859, 16
      %v3236 = vrot.slane %v3234, 4
      %v3237 = vor.u32 %v3236, %v3232
      %v3238 = vrot.slane %v3237, 4
      %v3240 = vshll.u32 %v2860, 16
      %v3242 = vrot.slane %v3240, 5
      %v3243 = vsel %vm305, %v3238, %v3242
      %v3244 = vshrl.u32 %v2860, 16
      %v3246 = vrot.slane %v3244, 4
      %v3247 = vor.u32 %v3246, %v3242
      %v3248 = vrot.slane %v3247, 4
      %v3250 = vshll.u32 %v2861, 16
      %v3252 = vrot.slane %v3250, 5
      %v3253 = vsel %vm305, %v3248, %v3252
      %v3254 = vshrl.u32 %v2861, 16
      %v3256 = vrot.slane %v3254, 4
      %v3257 = vor.u32 %v3256, %v3252
      %v3258 = vrot.slane %v3257, 4
      %v3260 = vshll.u32 %v2862, 16
      %v3262 = vrot.slane %v3260, 5
      %v3263 = vsel %vm305, %v3258, %v3262
      %v3265 = vshrl.u32 %v2863, 16
      %v3267 = vrot.slane %v3265, 4
      %v3268 = vshll.u32 %v2863, 16
      %v3270 = vrot.slane %v3268, 5
      %v3271 = vor.u32 %v3267, %v3270
      %v3272 = vrot.slane %v3271, 4
      %v3274 = vshll.u32 %v2864, 16
      %v3276 = vrot.slane %v3274, 5
      %v3277 = vsel %vm305, %v3272, %v3276
      %v3278 = vshrl.u32 %v2864, 16
      %v3280 = vrot.slane %v3278, 4
      %v3281 = vor.u32 %v3280, %v3276
      %v3282 = vrot.slane %v3281, 4
      %v3284 = vshll.u32 %v2865, 16
      %v3286 = vrot.slane %v3284, 5
      %v3287 = vsel %vm305, %v3282, %v3286
      %v3288 = vshrl.u32 %v2865, 16
      %v3290 = vrot.slane %v3288, 4
      %v3291 = vor.u32 %v3290, %v3286
      %v3292 = vrot.slane %v3291, 4
      %v3294 = vshll.u32 %v2866, 16
      %v3296 = vrot.slane %v3294, 5
      %v3297 = vsel %vm305, %v3292, %v3296
      %v3298 = vshrl.u32 %v2866, 16
      %v3300 = vrot.slane %v3298, 4
      %v3301 = vor.u32 %v3300, %v3296
      %v3302 = vrot.slane %v3301, 4
      %v3304 = vshll.u32 %v2867, 16
      %v3306 = vrot.slane %v3304, 5
      %v3307 = vsel %vm305, %v3302, %v3306
      %v3358 = vrot.slane %v2818, 5
      %v3359 = vrot.slane %v3358, 4
      %v3360 = vrot.slane %v2819, 5
      %v3361 = vsel %vm798, %v3359, %v3360
      %v3362 = vrot.slane %v3360, 4
      %v3363 = vrot.slane %v2820, 5
      %v3364 = vsel %vm798, %v3362, %v3363
      %v3365 = vrot.slane %v3363, 4
      %v3366 = vrot.slane %v2821, 5
      %v3367 = vsel %vm798, %v3365, %v3366
      %v3368 = vrot.slane %v3366, 4
      %v3369 = vrot.slane %v2822, 5
      %v3370 = vsel %vm798, %v3368, %v3369
      %v3371 = vrot.slane %v2823, 5
      %v3372 = vrot.slane %v3371, 4
      %v3373 = vrot.slane %v2824, 5
      %v3374 = vsel %vm798, %v3372, %v3373
      %v3375 = vrot.slane %v3373, 4
      %v3376 = vrot.slane %v2825, 5
      %v3377 = vsel %vm798, %v3375, %v3376
      %v3378 = vrot.slane %v3376, 4
      %v3379 = vrot.slane %v2826, 5
      %v3380 = vsel %vm798, %v3378, %v3379
      %v3381 = vrot.slane %v3379, 4
      %v3382 = vrot.slane %v2827, 5
      %v3383 = vsel %vm798, %v3381, %v3382
      %v3384 = vrot.slane %v2828, 5
      %v3385 = vrot.slane %v3384, 4
      %v3386 = vrot.slane %v2829, 5
      %v3387 = vsel %vm798, %v3385, %v3386
      %v3388 = vrot.slane %v3386, 4
      %v3389 = vrot.slane %v2830, 5
      %v3390 = vsel %vm798, %v3388, %v3389
      %v3391 = vrot.slane %v3389, 4
      %v3392 = vrot.slane %v2831, 5
      %v3393 = vsel %vm798, %v3391, %v3392
      %v3394 = vrot.slane %v3392, 4
      %v3395 = vrot.slane %v2832, 5
      %v3396 = vsel %vm798, %v3394, %v3395
      %v3397 = vrot.slane %v2833, 5
      %v3398 = vrot.slane %v3397, 4
      %v3399 = vrot.slane %v2834, 5
      %v3400 = vsel %vm798, %v3398, %v3399
      %v3401 = vrot.slane %v3399, 4
      %v3402 = vrot.slane %v2835, 5
      %v3403 = vsel %vm798, %v3401, %v3402
      %v3404 = vrot.slane %v3402, 4
      %v3405 = vrot.slane %v2836, 5
      %v3406 = vsel %vm798, %v3404, %v3405
      %v3407 = vrot.slane %v3405, 4
      %v3408 = vrot.slane %v2837, 5
      %v3409 = vsel %vm798, %v3407, %v3408
      %v3410 = vrot.slane %v2838, 5
      %v3411 = vrot.slane %v3410, 4
      %v3412 = vrot.slane %v2839, 5
      %v3413 = vsel %vm798, %v3411, %v3412
      %v3414 = vrot.slane %v3412, 4
      %v3415 = vrot.slane %v2840, 5
      %v3416 = vsel %vm798, %v3414, %v3415
      %v3417 = vrot.slane %v3415, 4
      %v3418 = vrot.slane %v2841, 5
      %v3419 = vsel %vm798, %v3417, %v3418
      %v3420 = vrot.slane %v3418, 4
      %v3421 = vrot.slane %v2842, 5
      %v3422 = vsel %vm798, %v3420, %v3421
      %v3423 = vrot.slane %v2843, 5
      %v3424 = vrot.slane %v3423, 4
      %v3425 = vrot.slane %v2844, 5
      %v3426 = vsel %vm798, %v3424, %v3425
      %v3427 = vrot.slane %v3425, 4
      %v3428 = vrot.slane %v2845, 5
      %v3429 = vsel %vm798, %v3427, %v3428
      %v3430 = vrot.slane %v3428, 4
      %v3431 = vrot.slane %v2846, 5
      %v3432 = vsel %vm798, %v3430, %v3431
      %v3433 = vrot.slane %v3431, 4
      %v3434 = vrot.slane %v2847, 5
      %v3435 = vsel %vm798, %v3433, %v3434
      %v3436 = vrot.slane %v2848, 5
      %v3437 = vrot.slane %v3436, 4
      %v3438 = vrot.slane %v2849, 5
      %v3439 = vsel %vm798, %v3437, %v3438
      %v3440 = vrot.slane %v3438, 4
      %v3441 = vrot.slane %v2850, 5
      %v3442 = vsel %vm798, %v3440, %v3441
      %v3443 = vrot.slane %v3441, 4
      %v3444 = vrot.slane %v2851, 5
      %v3445 = vsel %vm798, %v3443, %v3444
      %v3446 = vrot.slane %v3444, 4
      %v3447 = vrot.slane %v2852, 5
      %v3448 = vsel %vm798, %v3446, %v3447
      %v3449 = vrot.slane %v2853, 5
      %v3450 = vrot.slane %v3449, 4
      %v3451 = vrot.slane %v2854, 5
      %v3452 = vsel %vm798, %v3450, %v3451
      %v3453 = vrot.slane %v3451, 4
      %v3454 = vrot.slane %v2855, 5
      %v3455 = vsel %vm798, %v3453, %v3454
      %v3456 = vrot.slane %v3454, 4
      %v3457 = vrot.slane %v2856, 5
      %v3458 = vsel %vm798, %v3456, %v3457
      %v3459 = vrot.slane %v3457, 4
      %v3460 = vrot.slane %v2857, 5
      %v3461 = vsel %vm798, %v3459, %v3460
      %v3462 = vrot.slane %v2858, 5
      %v3463 = vrot.slane %v3462, 4
      %v3464 = vrot.slane %v2859, 5
      %v3465 = vsel %vm798, %v3463, %v3464
      %v3466 = vrot.slane %v3464, 4
      %v3467 = vrot.slane %v2860, 5
      %v3468 = vsel %vm798, %v3466, %v3467
      %v3469 = vrot.slane %v3467, 4
      %v3470 = vrot.slane %v2861, 5
      %v3471 = vsel %vm798, %v3469, %v3470
      %v3472 = vrot.slane %v3470, 4
      %v3473 = vrot.slane %v2862, 5
      %v3474 = vsel %vm798, %v3472, %v3473
      %v3475 = vrot.slane %v2863, 5
      %v3476 = vrot.slane %v3475, 4
      %v3477 = vrot.slane %v2864, 5
      %v3478 = vsel %vm798, %v3476, %v3477
      %v3479 = vrot.slane %v3477, 4
      %v3480 = vrot.slane %v2865, 5
      %v3481 = vsel %vm798, %v3479, %v3480
      %v3482 = vrot.slane %v3480, 4
      %v3483 = vrot.slane %v2866, 5
      %v3484 = vsel %vm798, %v3482, %v3483
      %v3485 = vrot.slane %v3483, 4
      %v3486 = vrot.slane %v2867, 5
      %v3487 = vsel %vm798, %v3485, %v3486
      %v3488 = vunpack.c.l.b16 %v2818
      %v3489 = vunpack.c.l.b16 %v2819
      %v3490 = vunpack.c.l.b16 %v2820
      %v3491 = vunpack.c.l.b16 %v2821
      %v3492 = vunpack.c.l.b16 %v2823
      %v3493 = vunpack.c.l.b16 %v2824
      %v3494 = vunpack.c.l.b16 %v2825
      %v3495 = vunpack.c.l.b16 %v2826
      %v3496 = vunpack.c.l.b16 %v2828
      %v3497 = vunpack.c.l.b16 %v2829
      %v3498 = vunpack.c.l.b16 %v2830
      %v3499 = vunpack.c.l.b16 %v2831
      %v3500 = vunpack.c.l.b16 %v2833
      %v3501 = vunpack.c.l.b16 %v2834
      %v3502 = vunpack.c.l.b16 %v2835
      %v3503 = vunpack.c.l.b16 %v2836
      %v3504 = vunpack.c.l.b16 %v2838
      %v3505 = vunpack.c.l.b16 %v2839
      %v3506 = vunpack.c.l.b16 %v2840
      %v3507 = vunpack.c.l.b16 %v2841
      %v3508 = vunpack.c.l.b16 %v2843
      %v3509 = vunpack.c.l.b16 %v2844
      %v3510 = vunpack.c.l.b16 %v2845
      %v3511 = vunpack.c.l.b16 %v2846
      %v3512 = vunpack.c.l.b16 %v2848
      %v3513 = vunpack.c.l.b16 %v2849
      %v3514 = vunpack.c.l.b16 %v2850
      %v3515 = vunpack.c.l.b16 %v2851
      %v3516 = vunpack.c.l.b16 %v2853
      %v3517 = vunpack.c.l.b16 %v2854
      %v3518 = vunpack.c.l.b16 %v2855
      %v3519 = vunpack.c.l.b16 %v2856
      %v3520 = vunpack.c.l.b16 %v2858
      %v3521 = vunpack.c.l.b16 %v2859
      %v3522 = vunpack.c.l.b16 %v2860
      %v3523 = vunpack.c.l.b16 %v2861
      %v3524 = vunpack.c.l.b16 %v2863
      %v3525 = vunpack.c.l.b16 %v2864
      %v3526 = vunpack.c.l.b16 %v2865
      %v3527 = vunpack.c.l.b16 %v2866
      %v3528 = vpack.c.b16 %v3489, %v3488
      %v3529 = vpack.c.b16 %v3491, %v3490
      %v3530 = vpack.c.b16 %v3493, %v3492
      %v3531 = vpack.c.b16 %v3495, %v3494
      %v3532 = vpack.c.b16 %v3497, %v3496
      %v3533 = vpack.c.b16 %v3499, %v3498
      %v3534 = vpack.c.b16 %v3501, %v3500
      %v3535 = vpack.c.b16 %v3503, %v3502
      %v3536 = vpack.c.b16 %v3505, %v3504
      %v3537 = vpack.c.b16 %v3507, %v3506
      %v3538 = vpack.c.b16 %v3509, %v3508
      %v3539 = vpack.c.b16 %v3511, %v3510
      %v3540 = vpack.c.b16 %v3513, %v3512
      %v3541 = vpack.c.b16 %v3515, %v3514
      %v3542 = vpack.c.b16 %v3517, %v3516
      %v3543 = vpack.c.b16 %v3519, %v3518
      %v3544 = vpack.c.b16 %v3521, %v3520
      %v3545 = vpack.c.b16 %v3523, %v3522
      %v3546 = vpack.c.b16 %v3525, %v3524
      %v3547 = vpack.c.b16 %v3527, %v3526
      %v3548 = vunpack.c.l.b16 %v2881
      %v3549 = vunpack.c.l.b16 %v2891
      %v3550 = vunpack.c.l.b16 %v2901
      %v3551 = vunpack.c.l.b16 %v2911
      %v3552 = vunpack.c.l.b16 %v2925
      %v3553 = vunpack.c.l.b16 %v2935
      %v3554 = vunpack.c.l.b16 %v2945
      %v3555 = vunpack.c.l.b16 %v2955
      %v3556 = vunpack.c.l.b16 %v2969
      %v3557 = vunpack.c.l.b16 %v2979
      %v3558 = vunpack.c.l.b16 %v2989
      %v3559 = vunpack.c.l.b16 %v2999
      %v3560 = vunpack.c.l.b16 %v3013
      %v3561 = vunpack.c.l.b16 %v3023
      %v3562 = vunpack.c.l.b16 %v3033
      %v3563 = vunpack.c.l.b16 %v3043
      %v3564 = vunpack.c.l.b16 %v3057
      %v3565 = vunpack.c.l.b16 %v3067
      %v3566 = vunpack.c.l.b16 %v3077
      %v3567 = vunpack.c.l.b16 %v3087
      %v3568 = vunpack.c.l.b16 %v3101
      %v3569 = vunpack.c.l.b16 %v3111
      %v3570 = vunpack.c.l.b16 %v3121
      %v3571 = vunpack.c.l.b16 %v3131
      %v3572 = vunpack.c.l.b16 %v3145
      %v3573 = vunpack.c.l.b16 %v3155
      %v3574 = vunpack.c.l.b16 %v3165
      %v3575 = vunpack.c.l.b16 %v3175
      %v3576 = vunpack.c.l.b16 %v3189
      %v3577 = vunpack.c.l.b16 %v3199
      %v3578 = vunpack.c.l.b16 %v3209
      %v3579 = vunpack.c.l.b16 %v3219
      %v3580 = vunpack.c.l.b16 %v3233
      %v3581 = vunpack.c.l.b16 %v3243
      %v3582 = vunpack.c.l.b16 %v3253
      %v3583 = vunpack.c.l.b16 %v3263
      %v3584 = vunpack.c.l.b16 %v3277
      %v3585 = vunpack.c.l.b16 %v3287
      %v3586 = vunpack.c.l.b16 %v3297
      %v3587 = vunpack.c.l.b16 %v3307
      %v3588 = vpack.c.b16 %v3549, %v3548
      %v3589 = vpack.c.b16 %v3551, %v3550
      %v3590 = vpack.c.b16 %v3553, %v3552
      %v3591 = vpack.c.b16 %v3555, %v3554
      %v3592 = vpack.c.b16 %v3557, %v3556
      %v3593 = vpack.c.b16 %v3559, %v3558
      %v3594 = vpack.c.b16 %v3561, %v3560
      %v3595 = vpack.c.b16 %v3563, %v3562
      %v3596 = vpack.c.b16 %v3565, %v3564
      %v3597 = vpack.c.b16 %v3567, %v3566
      %v3598 = vpack.c.b16 %v3569, %v3568
      %v3599 = vpack.c.b16 %v3571, %v3570
      %v3600 = vpack.c.b16 %v3573, %v3572
      %v3601 = vpack.c.b16 %v3575, %v3574
      %v3602 = vpack.c.b16 %v3577, %v3576
      %v3603 = vpack.c.b16 %v3579, %v3578
      %v3604 = vpack.c.b16 %v3581, %v3580
      %v3605 = vpack.c.b16 %v3583, %v3582
      %v3606 = vpack.c.b16 %v3585, %v3584
      %v3607 = vpack.c.b16 %v3587, %v3586
      %3608 = vrot.lane.b32.xlu0 %v3588, 4
      %v3609 = vpop.permute.xlu0 %3608
      %3610 = vrot.lane.b32.xlu0 %v3589, 4
      %v3611 = vpop.permute.xlu0 %3610
      %3612 = vrot.lane.b32.xlu0 %v3590, 4
      %v3613 = vpop.permute.xlu0 %3612
      %3614 = vrot.lane.b32.xlu0 %v3591, 4
      %v3615 = vpop.permute.xlu0 %3614
      %3616 = vrot.lane.b32.xlu0 %v3592, 4
      %v3617 = vpop.permute.xlu0 %3616
      %3618 = vrot.lane.b32.xlu0 %v3593, 4
      %v3619 = vpop.permute.xlu0 %3618
      %3620 = vrot.lane.b32.xlu0 %v3594, 4
      %v3621 = vpop.permute.xlu0 %3620
      %3622 = vrot.lane.b32.xlu0 %v3595, 4
      %v3623 = vpop.permute.xlu0 %3622
      %3624 = vrot.lane.b32.xlu0 %v3596, 4
      %v3625 = vpop.permute.xlu0 %3624
      %3626 = vrot.lane.b32.xlu0 %v3597, 4
      %v3627 = vpop.permute.xlu0 %3626
      %3628 = vrot.lane.b32.xlu0 %v3598, 4
      %v3629 = vpop.permute.xlu0 %3628
      %3630 = vrot.lane.b32.xlu0 %v3599, 4
      %v3631 = vpop.permute.xlu0 %3630
      %3632 = vrot.lane.b32.xlu0 %v3600, 4
      %v3633 = vpop.permute.xlu0 %3632
      %3634 = vrot.lane.b32.xlu0 %v3601, 4
      %v3635 = vpop.permute.xlu0 %3634
      %3636 = vrot.lane.b32.xlu0 %v3602, 4
      %v3637 = vpop.permute.xlu0 %3636
      %3638 = vrot.lane.b32.xlu0 %v3603, 4
      %v3639 = vpop.permute.xlu0 %3638
      %3640 = vrot.lane.b32.xlu0 %v3604, 4
      %v3641 = vpop.permute.xlu0 %3640
      %3642 = vrot.lane.b32.xlu0 %v3605, 4
      %v3643 = vpop.permute.xlu0 %3642
      %3644 = vrot.lane.b32.xlu0 %v3606, 4
      %v3645 = vpop.permute.xlu0 %3644
      %3646 = vrot.lane.b32.xlu0 %v3607, 4
      %v3647 = vpop.permute.xlu0 %3646
      %v3648 = vunpack.c.l.b16 %v3361
      %v3649 = vunpack.c.l.b16 %v3364
      %v3650 = vunpack.c.l.b16 %v3367
      %v3651 = vunpack.c.l.b16 %v3370
      %v3652 = vunpack.c.l.b16 %v3374
      %v3653 = vunpack.c.l.b16 %v3377
      %v3654 = vunpack.c.l.b16 %v3380
      %v3655 = vunpack.c.l.b16 %v3383
      %v3656 = vunpack.c.l.b16 %v3387
      %v3657 = vunpack.c.l.b16 %v3390
      %v3658 = vunpack.c.l.b16 %v3393
      %v3659 = vunpack.c.l.b16 %v3396
      %v3660 = vunpack.c.l.b16 %v3400
      %v3661 = vunpack.c.l.b16 %v3403
      %v3662 = vunpack.c.l.b16 %v3406
      %v3663 = vunpack.c.l.b16 %v3409
      %v3664 = vunpack.c.l.b16 %v3413
      %v3665 = vunpack.c.l.b16 %v3416
      %v3666 = vunpack.c.l.b16 %v3419
      %v3667 = vunpack.c.l.b16 %v3422
      %v3668 = vunpack.c.l.b16 %v3426
      %v3669 = vunpack.c.l.b16 %v3429
      %v3670 = vunpack.c.l.b16 %v3432
      %v3671 = vunpack.c.l.b16 %v3435
      %v3672 = vunpack.c.l.b16 %v3439
      %v3673 = vunpack.c.l.b16 %v3442
      %v3674 = vunpack.c.l.b16 %v3445
      %v3675 = vunpack.c.l.b16 %v3448
      %v3676 = vunpack.c.l.b16 %v3452
      %v3677 = vunpack.c.l.b16 %v3455
      %v3678 = vunpack.c.l.b16 %v3458
      %v3679 = vunpack.c.l.b16 %v3461
      %v3680 = vunpack.c.l.b16 %v3465
      %v3681 = vunpack.c.l.b16 %v3468
      %v3682 = vunpack.c.l.b16 %v3471
      %v3683 = vunpack.c.l.b16 %v3474
      %v3684 = vunpack.c.l.b16 %v3478
      %v3685 = vunpack.c.l.b16 %v3481
      %v3686 = vunpack.c.l.b16 %v3484
      %v3687 = vunpack.c.l.b16 %v3487
      %v3688 = vpack.c.b16 %v3649, %v3648
      %v3689 = vpack.c.b16 %v3651, %v3650
      %v3690 = vpack.c.b16 %v3653, %v3652
      %v3691 = vpack.c.b16 %v3655, %v3654
      %v3692 = vpack.c.b16 %v3657, %v3656
      %v3693 = vpack.c.b16 %v3659, %v3658
      %v3694 = vpack.c.b16 %v3661, %v3660
      %v3695 = vpack.c.b16 %v3663, %v3662
      %v3696 = vpack.c.b16 %v3665, %v3664
      %v3697 = vpack.c.b16 %v3667, %v3666
      %v3698 = vpack.c.b16 %v3669, %v3668
      %v3699 = vpack.c.b16 %v3671, %v3670
      %v3700 = vpack.c.b16 %v3673, %v3672
      %v3701 = vpack.c.b16 %v3675, %v3674
      %v3702 = vpack.c.b16 %v3677, %v3676
      %v3703 = vpack.c.b16 %v3679, %v3678
      %v3704 = vpack.c.b16 %v3681, %v3680
      %v3705 = vpack.c.b16 %v3683, %v3682
      %v3706 = vpack.c.b16 %v3685, %v3684
      %v3707 = vpack.c.b16 %v3687, %v3686
      %3708 = vrot.lane.b32.xlu0 %v3688, 8
      %v3709 = vpop.permute.xlu0 %3708
      %3710 = vrot.lane.b32.xlu0 %v3689, 8
      %v3711 = vpop.permute.xlu0 %3710
      %3712 = vrot.lane.b32.xlu0 %v3690, 8
      %v3713 = vpop.permute.xlu0 %3712
      %3714 = vrot.lane.b32.xlu0 %v3691, 8
      %v3715 = vpop.permute.xlu0 %3714
      %3716 = vrot.lane.b32.xlu0 %v3692, 8
      %v3717 = vpop.permute.xlu0 %3716
      %3718 = vrot.lane.b32.xlu0 %v3693, 8
      %v3719 = vpop.permute.xlu0 %3718
      %3720 = vrot.lane.b32.xlu0 %v3694, 8
      %v3721 = vpop.permute.xlu0 %3720
      %3722 = vrot.lane.b32.xlu0 %v3695, 8
      %v3723 = vpop.permute.xlu0 %3722
      %3724 = vrot.lane.b32.xlu0 %v3696, 8
      %v3725 = vpop.permute.xlu0 %3724
      %3726 = vrot.lane.b32.xlu0 %v3697, 8
      %v3727 = vpop.permute.xlu0 %3726
      %3728 = vrot.lane.b32.xlu0 %v3698, 8
      %v3729 = vpop.permute.xlu0 %3728
      %3730 = vrot.lane.b32.xlu0 %v3699, 8
      %v3731 = vpop.permute.xlu0 %3730
      %3732 = vrot.lane.b32.xlu0 %v3700, 8
      %v3733 = vpop.permute.xlu0 %3732
      %3734 = vrot.lane.b32.xlu0 %v3701, 8
      %v3735 = vpop.permute.xlu0 %3734
      %3736 = vrot.lane.b32.xlu0 %v3702, 8
      %v3737 = vpop.permute.xlu0 %3736
      %3738 = vrot.lane.b32.xlu0 %v3703, 8
      %v3739 = vpop.permute.xlu0 %3738
      %3740 = vrot.lane.b32.xlu0 %v3704, 8
      %v3741 = vpop.permute.xlu0 %3740
      %3742 = vrot.lane.b32.xlu0 %v3705, 8
      %v3743 = vpop.permute.xlu0 %3742
      %3744 = vrot.lane.b32.xlu0 %v3706, 8
      %v3745 = vpop.permute.xlu0 %3744
      %3746 = vrot.lane.b32.xlu0 %v3707, 8
      %v3747 = vpop.permute.xlu0 %3746
      %v3750 = vsel %vm1189, %v3528, %v3609
      %v3753 = vsel %vm1189, %v3529, %v3611
      %v3756 = vsel %vm1189, %v3530, %v3613
      %v3759 = vsel %vm1189, %v3531, %v3615
      %v3762 = vsel %vm1189, %v3532, %v3617
      %v3765 = vsel %vm1189, %v3533, %v3619
      %v3768 = vsel %vm1189, %v3534, %v3621
      %v3771 = vsel %vm1189, %v3535, %v3623
      %v3774 = vsel %vm1189, %v3536, %v3625
      %v3777 = vsel %vm1189, %v3537, %v3627
      %v3780 = vsel %vm1189, %v3538, %v3629
      %v3783 = vsel %vm1189, %v3539, %v3631
      %v3786 = vsel %vm1189, %v3540, %v3633
      %v3789 = vsel %vm1189, %v3541, %v3635
      %v3792 = vsel %vm1189, %v3542, %v3637
      %v3795 = vsel %vm1189, %v3543, %v3639
      %v3798 = vsel %vm1189, %v3544, %v3641
      %v3801 = vsel %vm1189, %v3545, %v3643
      %v3804 = vsel %vm1189, %v3546, %v3645
      %v3807 = vsel %vm1189, %v3547, %v3647
      %v3809 = vsel %vm1250, %v3750, %v3709
      %v3811 = vsel %vm1250, %v3753, %v3711
      %v3813 = vsel %vm1250, %v3756, %v3713
      %v3815 = vsel %vm1250, %v3759, %v3715
      %v3817 = vsel %vm1250, %v3762, %v3717
      %v3819 = vsel %vm1250, %v3765, %v3719
      %v3821 = vsel %vm1250, %v3768, %v3721
      %v3823 = vsel %vm1250, %v3771, %v3723
      %v3825 = vsel %vm1250, %v3774, %v3725
      %v3827 = vsel %vm1250, %v3777, %v3727
      %v3829 = vsel %vm1250, %v3780, %v3729
      %v3831 = vsel %vm1250, %v3783, %v3731
      %v3833 = vsel %vm1250, %v3786, %v3733
      %v3835 = vsel %vm1250, %v3789, %v3735
      %v3837 = vsel %vm1250, %v3792, %v3737
      %v3839 = vsel %vm1250, %v3795, %v3739
      %v3841 = vsel %vm1250, %v3798, %v3741
      %v3843 = vsel %vm1250, %v3801, %v3743
      %v3845 = vsel %vm1250, %v3804, %v3745
      %v3847 = vsel %vm1250, %v3807, %v3747
      %s3848 = scalar_lea.vmem %s1, 16
      %v3849 = vld [vmem:[%s3848] sm:$0xf]
      %v3850 = vld [vmem:[%s3848 + $0x4] sm:$0x3]
      %v3853 = vunpack.c.l.b16 %v3849
      %v3854 = vunpack.c.l.b16 %v3850
      %v3855 = vpack.c.b16 %v3854, %v3853
      %v3856 = vsel %vm2335, %v3809, 0
      %v3858 = vsel %vm2335, %v3811, 0
      %v3860 = vsel %vm2335, %v3813, 0
      %v3862 = vsel %vm2335, %v3815, 0
      %v3864 = vsel %vm2335, %v3817, 0
      %v3866 = vsel %vm2335, %v3819, 0
      %v3868 = vsel %vm2335, %v3821, 0
      %v3870 = vsel %vm2335, %v3823, 0
      %v3872 = vsel %vm2335, %v3825, 0
      %v3874 = vsel %vm2335, %v3827, 0
      %v3876 = vsel %vm2335, %v3829, 0
      %v3878 = vsel %vm2335, %v3831, 0
      %v3880 = vsel %vm2335, %v3833, 0
      %v3882 = vsel %vm2335, %v3835, 0
      %v3884 = vsel %vm2335, %v3837, 0
      %v3886 = vsel %vm2335, %v3839, 0
      %v3888 = vsel %vm2335, %v3841, 0
      %v3890 = vsel %vm2335, %v3843, 0
      %v3892 = vsel %vm2335, %v3845, 0
      %v3894 = vsel %vm2335, %v3847, 0
      %v3897 = vsel %vm2376, %v3855, 0
      %3899 = vmatprep.subr.bf16.mxu0 0
      %3900 = vmatpush1.bf16.msra.mxu0 %v3897
      %3901 = vmatprep.subr.bf16.mxu0 0
      %3902 = vmatpush1.bf16.msra.mxu0 0
      %3903 = vmatprep.subr.bf16.mxu0 0
      %3904 = vmatpush1.bf16.msra.mxu0 0
      %3905 = vmatprep.subr.bf16.mxu0 0
      %3906 = vmatpush1.bf16.msra.mxu0 0
      %3907 = vmatprep.subr.bf16.mxu0 0
      %3908 = vmatpush1.bf16.msra.mxu0 0
      %3909 = vmatprep.subr.bf16.mxu0 0
      %3910 = vmatpush1.bf16.msra.mxu0 0
      %3911 = vmatprep.subr.bf16.mxu0 0
      %3912 = vmatpush1.bf16.msra.mxu0 0
      %3913 = vmatprep.subr.bf16.mxu0 0
      %3914 = vmatpush1.bf16.msra.mxu0 0
      %3915 = vmatprep.subr.bf16.mxu0 0
      %3916 = vmatpush1.bf16.msra.mxu0 0
      %3917 = vmatprep.subr.bf16.mxu0 0
      %3918 = vmatpush1.bf16.msra.mxu0 0
      %3919 = vmatprep.subr.bf16.mxu0 0
      %3920 = vmatpush1.bf16.msra.mxu0 0
      %3921 = vmatprep.subr.bf16.mxu0 0
      %3922 = vmatpush1.bf16.msra.mxu0 0
      %3923 = vmatprep.subr.bf16.mxu0 0
      %3924 = vmatpush1.bf16.msra.mxu0 0
      %3925 = vmatprep.subr.bf16.mxu0 0
      %3926 = vmatpush1.bf16.msra.mxu0 0
      %3927 = vmatprep.subr.bf16.mxu0 0
      %3928 = vmatpush1.bf16.msra.mxu0 0
      %3929 = vmatprep.subr.bf16.mxu0 0
      %3930 = vmatpush1.bf16.msra.mxu0 0
      %3931 = vmatprep.mubr.bf16.mxu0 0
      %3932 = vmatmul.mubr.bf16.gmra.mrb[0].mxu0 %v3856
      %v3933 = vpop.f32.mrb[0].mxu0
      %v3934 = vadd.f32 0.0, %v3933
      %v3935 = vpop.f32.mrb[0].mxu0
      %v3936 = vpop.f32.mrb[0].mxu0
      %v3937 = vadd.f32 0.0, %v3936
      %v3938 = vpop.f32.mrb[0].mxu0
      %3939 = vmatprep.mubr.bf16.mxu0 0
      %3940 = vmatmul.mubr.bf16.gmra.mrb[0].mxu0 %v3858
      %v3941 = vpop.f32.mrb[0].mxu0
      %v3942 = vadd.f32 0.0, %v3941
      %v3943 = vpop.f32.mrb[0].mxu0
      %v3944 = vpop.f32.mrb[0].mxu0
      %v3945 = vadd.f32 0.0, %v3944
      %v3946 = vpop.f32.mrb[0].mxu0
      %3947 = vmatprep.mubr.bf16.mxu0 0
      %3948 = vmatmul.mubr.bf16.gmra.mrb[0].mxu0 %v3860
      %v3949 = vpop.f32.mrb[0].mxu0
      %v3950 = vadd.f32 0.0, %v3949
      %v3951 = vpop.f32.mrb[0].mxu0
      %v3952 = vpop.f32.mrb[0].mxu0
      %v3953 = vadd.f32 0.0, %v3952
      %v3954 = vpop.f32.mrb[0].mxu0
      %3955 = vmatprep.mubr.bf16.mxu0 0
      %3956 = vmatmul.mubr.bf16.gmra.mrb[0].mxu0 %v3862
      %v3957 = vpop.f32.mrb[0].mxu0
      %v3958 = vadd.f32 0.0, %v3957
      %v3959 = vpop.f32.mrb[0].mxu0
      %v3960 = vpop.f32.mrb[0].mxu0
      %v3961 = vadd.f32 0.0, %v3960
      %v3962 = vpop.f32.mrb[0].mxu0
      %3963 = vmatprep.mubr.bf16.mxu0 0
      %3964 = vmatmul.mubr.bf16.gmra.mrb[0].mxu0 %v3864
      %v3965 = vpop.f32.mrb[0].mxu0
      %v3966 = vadd.f32 0.0, %v3965
      %v3967 = vpop.f32.mrb[0].mxu0
      %v3968 = vpop.f32.mrb[0].mxu0
      %v3969 = vadd.f32 0.0, %v3968
      %v3970 = vpop.f32.mrb[0].mxu0
      %3971 = vmatprep.mubr.bf16.mxu0 0
      %3972 = vmatmul.mubr.bf16.gmra.mrb[0].mxu0 %v3866
      %v3973 = vpop.f32.mrb[0].mxu0
      %v3974 = vadd.f32 0.0, %v3973
      %v3975 = vpop.f32.mrb[0].mxu0
      %v3976 = vpop.f32.mrb[0].mxu0
      %v3977 = vadd.f32 0.0, %v3976
      %v3978 = vpop.f32.mrb[0].mxu0
      %3979 = vmatprep.mubr.bf16.mxu0 0
      %3980 = vmatmul.mubr.bf16.gmra.mrb[0].mxu0 %v3868
      %v3981 = vpop.f32.mrb[0].mxu0
      %v3982 = vadd.f32 0.0, %v3981
      %v3983 = vpop.f32.mrb[0].mxu0
      %v3984 = vpop.f32.mrb[0].mxu0
      %v3985 = vadd.f32 0.0, %v3984
      %v3986 = vpop.f32.mrb[0].mxu0
      %3987 = vmatprep.mubr.bf16.mxu0 0
      %3988 = vmatmul.mubr.bf16.gmra.mrb[0].mxu0 %v3870
      %v3989 = vpop.f32.mrb[0].mxu0
      %v3990 = vadd.f32 0.0, %v3989
      %v3991 = vpop.f32.mrb[0].mxu0
      %v3992 = vpop.f32.mrb[0].mxu0
      %v3993 = vadd.f32 0.0, %v3992
      %v3994 = vpop.f32.mrb[0].mxu0
      %3995 = vmatprep.mubr.bf16.mxu0 0
      %3996 = vmatmul.mubr.bf16.gmra.mrb[0].mxu0 %v3872
      %v3997 = vpop.f32.mrb[0].mxu0
      %v3998 = vadd.f32 0.0, %v3997
      %v3999 = vpop.f32.mrb[0].mxu0
      %v4000 = vpop.f32.mrb[0].mxu0
      %v4001 = vadd.f32 0.0, %v4000
      %v4002 = vpop.f32.mrb[0].mxu0
      %4003 = vmatprep.mubr.bf16.mxu0 0
      %4004 = vmatmul.mubr.bf16.gmra.mrb[0].mxu0 %v3874
      %v4005 = vpop.f32.mrb[0].mxu0
      %v4006 = vadd.f32 0.0, %v4005
      %v4007 = vpop.f32.mrb[0].mxu0
      %v4008 = vpop.f32.mrb[0].mxu0
      %v4009 = vadd.f32 0.0, %v4008
      %v4010 = vpop.f32.mrb[0].mxu0
      %4011 = vmatprep.mubr.bf16.mxu0 0
      %4012 = vmatmul.mubr.bf16.gmra.mrb[0].mxu0 %v3876
      %v4013 = vpop.f32.mrb[0].mxu0
      %v4014 = vadd.f32 0.0, %v4013
      %v4015 = vpop.f32.mrb[0].mxu0
      %v4016 = vpop.f32.mrb[0].mxu0
      %v4017 = vadd.f32 0.0, %v4016
      %v4018 = vpop.f32.mrb[0].mxu0
      %4019 = vmatprep.mubr.bf16.mxu0 0
      %4020 = vmatmul.mubr.bf16.gmra.mrb[0].mxu0 %v3878
      %v4021 = vpop.f32.mrb[0].mxu0
      %v4022 = vadd.f32 0.0, %v4021
      %v4023 = vpop.f32.mrb[0].mxu0
      %v4024 = vpop.f32.mrb[0].mxu0
      %v4025 = vadd.f32 0.0, %v4024
      %v4026 = vpop.f32.mrb[0].mxu0
      %4027 = vmatprep.mubr.bf16.mxu0 0
      %4028 = vmatmul.mubr.bf16.gmra.mrb[0].mxu0 %v3880
      %v4029 = vpop.f32.mrb[0].mxu0
      %v4030 = vadd.f32 0.0, %v4029
      %v4031 = vpop.f32.mrb[0].mxu0
      %v4032 = vpop.f32.mrb[0].mxu0
      %v4033 = vadd.f32 0.0, %v4032
      %v4034 = vpop.f32.mrb[0].mxu0
      %4035 = vmatprep.mubr.bf16.mxu0 0
      %4036 = vmatmul.mubr.bf16.gmra.mrb[0].mxu0 %v3882
      %v4037 = vpop.f32.mrb[0].mxu0
      %v4038 = vadd.f32 0.0, %v4037
      %v4039 = vpop.f32.mrb[0].mxu0
      %v4040 = vpop.f32.mrb[0].mxu0
      %v4041 = vadd.f32 0.0, %v4040
      %v4042 = vpop.f32.mrb[0].mxu0
      %4043 = vmatprep.mubr.bf16.mxu0 0
      %4044 = vmatmul.mubr.bf16.gmra.mrb[0].mxu0 %v3884
      %v4045 = vpop.f32.mrb[0].mxu0
      %v4046 = vadd.f32 0.0, %v4045
      %v4047 = vpop.f32.mrb[0].mxu0
      %v4048 = vpop.f32.mrb[0].mxu0
      %v4049 = vadd.f32 0.0, %v4048
      %v4050 = vpop.f32.mrb[0].mxu0
      %4051 = vmatprep.mubr.bf16.mxu0 0
      %4052 = vmatmul.mubr.bf16.gmra.mrb[0].mxu0 %v3886
      %v4053 = vpop.f32.mrb[0].mxu0
      %v4054 = vadd.f32 0.0, %v4053
      %v4055 = vpop.f32.mrb[0].mxu0
      %v4056 = vpop.f32.mrb[0].mxu0
      %v4057 = vadd.f32 0.0, %v4056
      %v4058 = vpop.f32.mrb[0].mxu0
      %4059 = vmatprep.mubr.bf16.mxu0 0
      %4060 = vmatmul.mubr.bf16.gmra.mrb[0].mxu0 %v3888
      %v4061 = vpop.f32.mrb[0].mxu0
      %v4062 = vadd.f32 0.0, %v4061
      %v4063 = vpop.f32.mrb[0].mxu0
      %v4064 = vpop.f32.mrb[0].mxu0
      %v4065 = vadd.f32 0.0, %v4064
      %v4066 = vpop.f32.mrb[0].mxu0
      %4067 = vmatprep.mubr.bf16.mxu0 0
      %4068 = vmatmul.mubr.bf16.gmra.mrb[0].mxu0 %v3890
      %v4069 = vpop.f32.mrb[0].mxu0
      %v4070 = vadd.f32 0.0, %v4069
      %v4071 = vpop.f32.mrb[0].mxu0
      %v4072 = vpop.f32.mrb[0].mxu0
      %v4073 = vadd.f32 0.0, %v4072
      %v4074 = vpop.f32.mrb[0].mxu0
      %4075 = vmatprep.mubr.bf16.mxu0 0
      %4076 = vmatmul.mubr.bf16.gmra.mrb[0].mxu0 %v3892
      %v4077 = vpop.f32.mrb[0].mxu0
      %v4078 = vadd.f32 0.0, %v4077
      %v4079 = vpop.f32.mrb[0].mxu0
      %v4080 = vpop.f32.mrb[0].mxu0
      %v4081 = vadd.f32 0.0, %v4080
      %v4082 = vpop.f32.mrb[0].mxu0
      %4083 = vmatprep.mubr.bf16.mxu0 0
      %4084 = vmatmul.mubr.bf16.gmra.mrb[0].mxu0 %v3894
      %v4085 = vpop.f32.mrb[0].mxu0
      %v4086 = vadd.f32 0.0, %v4085
      %v4087 = vpop.f32.mrb[0].mxu0
      %v4088 = vpop.f32.mrb[0].mxu0
      %v4089 = vadd.f32 0.0, %v4088
      %v4090 = vpop.f32.mrb[0].mxu0
      %4091 = vdwg.mxu0
      %v4092 = vadd.f32 %v2656, %v3934
      %v4093 = vadd.f32 %v2659, %v3937
      %v4094 = vadd.f32 %v2664, %v3942
      %v4095 = vadd.f32 %v2667, %v3945
      %v4096 = vadd.f32 %v2672, %v3950
      %v4097 = vadd.f32 %v2675, %v3953
      %v4098 = vadd.f32 %v2680, %v3958
      %v4099 = vadd.f32 %v2683, %v3961
      %v4100 = vadd.f32 %v2688, %v3966
      %v4101 = vadd.f32 %v2691, %v3969
      %v4102 = vadd.f32 %v2696, %v3974
      %v4103 = vadd.f32 %v2699, %v3977
      %v4104 = vadd.f32 %v2704, %v3982
      %v4105 = vadd.f32 %v2707, %v3985
      %v4106 = vadd.f32 %v2712, %v3990
      %v4107 = vadd.f32 %v2715, %v3993
      %v4108 = vadd.f32 %v2720, %v3998
      %v4109 = vadd.f32 %v2723, %v4001
      %v4110 = vadd.f32 %v2728, %v4006
      %v4111 = vadd.f32 %v2731, %v4009
      %v4112 = vadd.f32 %v2736, %v4014
      %v4113 = vadd.f32 %v2739, %v4017
      %v4114 = vadd.f32 %v2744, %v4022
      %v4115 = vadd.f32 %v2747, %v4025
      %v4116 = vadd.f32 %v2752, %v4030
      %v4117 = vadd.f32 %v2755, %v4033
      %v4118 = vadd.f32 %v2760, %v4038
      %v4119 = vadd.f32 %v2763, %v4041
      %v4120 = vadd.f32 %v2768, %v4046
      %v4121 = vadd.f32 %v2771, %v4049
      %v4122 = vadd.f32 %v2776, %v4054
      %v4123 = vadd.f32 %v2779, %v4057
      %v4124 = vadd.f32 %v2784, %v4062
      %v4125 = vadd.f32 %v2787, %v4065
      %v4126 = vadd.f32 %v2792, %v4070
      %v4127 = vadd.f32 %v2795, %v4073
      %v4128 = vadd.f32 %v2800, %v4078
      %v4129 = vadd.f32 %v2803, %v4081
      %v4130 = vadd.f32 %v2808, %v4086
      %v4131 = vadd.f32 %v2811, %v4089
      %v4132 = vld [vmem:[%s3] sm:$0x1]
      %v4133 = vlaneseq
      %v4134 = vshrl.u32 %v4133, 7
      %v4135 = vsub.s32 0, %v4134
      %v4136 = vrot.slane %v4132, %v4135
      %v4137 = vadd.f32 %v4092, %v4136
      %v4138 = vadd.f32 %v4093, %v4136
      %v4139 = vadd.f32 %v4094, %v4136
      %v4140 = vadd.f32 %v4095, %v4136
      %v4141 = vadd.f32 %v4096, %v4136
      %v4142 = vadd.f32 %v4097, %v4136
      %v4143 = vadd.f32 %v4098, %v4136
      %v4144 = vadd.f32 %v4099, %v4136
      %v4145 = vadd.f32 %v4100, %v4136
      %v4146 = vadd.f32 %v4101, %v4136
      %v4147 = vadd.f32 %v4102, %v4136
      %v4148 = vadd.f32 %v4103, %v4136
      %v4149 = vadd.f32 %v4104, %v4136
      %v4150 = vadd.f32 %v4105, %v4136
      %v4151 = vadd.f32 %v4106, %v4136
      %v4152 = vadd.f32 %v4107, %v4136
      %v4153 = vadd.f32 %v4108, %v4136
      %v4154 = vadd.f32 %v4109, %v4136
      %v4155 = vadd.f32 %v4110, %v4136
      %v4156 = vadd.f32 %v4111, %v4136
      %v4157 = vadd.f32 %v4112, %v4136
      %v4158 = vadd.f32 %v4113, %v4136
      %v4159 = vadd.f32 %v4114, %v4136
      %v4160 = vadd.f32 %v4115, %v4136
      %v4161 = vadd.f32 %v4116, %v4136
      %v4162 = vadd.f32 %v4117, %v4136
      %v4163 = vadd.f32 %v4118, %v4136
      %v4164 = vadd.f32 %v4119, %v4136
      %v4165 = vadd.f32 %v4120, %v4136
      %v4166 = vadd.f32 %v4121, %v4136
      %v4167 = vadd.f32 %v4122, %v4136
      %v4168 = vadd.f32 %v4123, %v4136
      %v4169 = vadd.f32 %v4124, %v4136
      %v4170 = vadd.f32 %v4125, %v4136
      %v4171 = vadd.f32 %v4126, %v4136
      %v4172 = vadd.f32 %v4127, %v4136
      %v4173 = vadd.f32 %v4128, %v4136
      %v4174 = vadd.f32 %v4129, %v4136
      %v4175 = vadd.f32 %v4130, %v4136
      %v4176 = vadd.f32 %v4131, %v4136
      %v4177 = vmax.f32 %v4137, 0.0
      %v4178 = vmax.f32 %v4138, 0.0
      %v4179 = vmax.f32 %v4139, 0.0
      %v4180 = vmax.f32 %v4140, 0.0
      %v4181 = vmax.f32 %v4141, 0.0
      %v4182 = vmax.f32 %v4142, 0.0
      %v4183 = vmax.f32 %v4143, 0.0
      %v4184 = vmax.f32 %v4144, 0.0
      %v4185 = vmax.f32 %v4145, 0.0
      %v4186 = vmax.f32 %v4146, 0.0
      %v4187 = vmax.f32 %v4147, 0.0
      %v4188 = vmax.f32 %v4148, 0.0
      %v4189 = vmax.f32 %v4149, 0.0
      %v4190 = vmax.f32 %v4150, 0.0
      %v4191 = vmax.f32 %v4151, 0.0
      %v4192 = vmax.f32 %v4152, 0.0
      %v4193 = vmax.f32 %v4153, 0.0
      %v4194 = vmax.f32 %v4154, 0.0
      %v4195 = vmax.f32 %v4155, 0.0
      %v4196 = vmax.f32 %v4156, 0.0
      %v4197 = vmax.f32 %v4157, 0.0
      %v4198 = vmax.f32 %v4158, 0.0
      %v4199 = vmax.f32 %v4159, 0.0
      %v4200 = vmax.f32 %v4160, 0.0
      %v4201 = vmax.f32 %v4161, 0.0
      %v4202 = vmax.f32 %v4162, 0.0
      %v4203 = vmax.f32 %v4163, 0.0
      %v4204 = vmax.f32 %v4164, 0.0
      %v4205 = vmax.f32 %v4165, 0.0
      %v4206 = vmax.f32 %v4166, 0.0
      %v4207 = vmax.f32 %v4167, 0.0
      %v4208 = vmax.f32 %v4168, 0.0
      %v4209 = vmax.f32 %v4169, 0.0
      %v4210 = vmax.f32 %v4170, 0.0
      %v4211 = vmax.f32 %v4171, 0.0
      %v4212 = vmax.f32 %v4172, 0.0
      %v4213 = vmax.f32 %v4173, 0.0
      %v4214 = vmax.f32 %v4174, 0.0
      %v4215 = vmax.f32 %v4175, 0.0
      %v4216 = vmax.f32 %v4176, 0.0
      %v4217 = vld [vmem:[%s3 + $0x1] sm:$0x1]
      %v4218 = vlaneseq
      %v4219 = vshrl.u32 %v4218, 7
      %v4220 = vsub.s32 0, %v4219
      %v4221 = vrot.slane %v4217, %v4220
      %v4222 = vmul.f32 %v4177, %v4221
      %v4223 = vmul.f32 %v4178, %v4221
      %v4224 = vmul.f32 %v4179, %v4221
      %v4225 = vmul.f32 %v4180, %v4221
      %v4226 = vmul.f32 %v4181, %v4221
      %v4227 = vmul.f32 %v4182, %v4221
      %v4228 = vmul.f32 %v4183, %v4221
      %v4229 = vmul.f32 %v4184, %v4221
      %v4230 = vmul.f32 %v4185, %v4221
      %v4231 = vmul.f32 %v4186, %v4221
      %v4232 = vmul.f32 %v4187, %v4221
      %v4233 = vmul.f32 %v4188, %v4221
      %v4234 = vmul.f32 %v4189, %v4221
      %v4235 = vmul.f32 %v4190, %v4221
      %v4236 = vmul.f32 %v4191, %v4221
      %v4237 = vmul.f32 %v4192, %v4221
      %v4238 = vmul.f32 %v4193, %v4221
      %v4239 = vmul.f32 %v4194, %v4221
      %v4240 = vmul.f32 %v4195, %v4221
      %v4241 = vmul.f32 %v4196, %v4221
      %v4242 = vmul.f32 %v4197, %v4221
      %v4243 = vmul.f32 %v4198, %v4221
      %v4244 = vmul.f32 %v4199, %v4221
      %v4245 = vmul.f32 %v4200, %v4221
      %v4246 = vmul.f32 %v4201, %v4221
      %v4247 = vmul.f32 %v4202, %v4221
      %v4248 = vmul.f32 %v4203, %v4221
      %v4249 = vmul.f32 %v4204, %v4221
      %v4250 = vmul.f32 %v4205, %v4221
      %v4251 = vmul.f32 %v4206, %v4221
      %v4252 = vmul.f32 %v4207, %v4221
      %v4253 = vmul.f32 %v4208, %v4221
      %v4254 = vmul.f32 %v4209, %v4221
      %v4255 = vmul.f32 %v4210, %v4221
      %v4256 = vmul.f32 %v4211, %v4221
      %v4257 = vmul.f32 %v4212, %v4221
      %v4258 = vmul.f32 %v4213, %v4221
      %v4259 = vmul.f32 %v4214, %v4221
      %v4260 = vmul.f32 %v4215, %v4221
      %v4261 = vmul.f32 %v4216, %v4221
      %v4262 = vld [vmem:[%s3 + $0x2] sm:$0x1]
      %v4263 = vlaneseq
      %v4264 = vshrl.u32 %v4263, 7
      %v4265 = vsub.s32 0, %v4264
      %v4266 = vrot.slane %v4262, %v4265
      %v4267 = vadd.f32 %v4222, %v4266
      %v4268 = vadd.f32 %v4223, %v4266
      %v4269 = vadd.f32 %v4224, %v4266
      %v4270 = vadd.f32 %v4225, %v4266
      %v4271 = vadd.f32 %v4226, %v4266
      %v4272 = vadd.f32 %v4227, %v4266
      %v4273 = vadd.f32 %v4228, %v4266
      %v4274 = vadd.f32 %v4229, %v4266
      %v4275 = vadd.f32 %v4230, %v4266
      %v4276 = vadd.f32 %v4231, %v4266
      %v4277 = vadd.f32 %v4232, %v4266
      %v4278 = vadd.f32 %v4233, %v4266
      %v4279 = vadd.f32 %v4234, %v4266
      %v4280 = vadd.f32 %v4235, %v4266
      %v4281 = vadd.f32 %v4236, %v4266
      %v4282 = vadd.f32 %v4237, %v4266
      %v4283 = vadd.f32 %v4238, %v4266
      %v4284 = vadd.f32 %v4239, %v4266
      %v4285 = vadd.f32 %v4240, %v4266
      %v4286 = vadd.f32 %v4241, %v4266
      %v4287 = vadd.f32 %v4242, %v4266
      %v4288 = vadd.f32 %v4243, %v4266
      %v4289 = vadd.f32 %v4244, %v4266
      %v4290 = vadd.f32 %v4245, %v4266
      %v4291 = vadd.f32 %v4246, %v4266
      %v4292 = vadd.f32 %v4247, %v4266
      %v4293 = vadd.f32 %v4248, %v4266
      %v4294 = vadd.f32 %v4249, %v4266
      %v4295 = vadd.f32 %v4250, %v4266
      %v4296 = vadd.f32 %v4251, %v4266
      %v4297 = vadd.f32 %v4252, %v4266
      %v4298 = vadd.f32 %v4253, %v4266
      %v4299 = vadd.f32 %v4254, %v4266
      %v4300 = vadd.f32 %v4255, %v4266
      %v4301 = vadd.f32 %v4256, %v4266
      %v4302 = vadd.f32 %v4257, %v4266
      %v4303 = vadd.f32 %v4258, %v4266
      %v4304 = vadd.f32 %v4259, %v4266
      %v4305 = vadd.f32 %v4260, %v4266
      %v4306 = vadd.f32 %v4261, %v4266
      %v4307 = vpack.c.bf16 %v4268, %v4267
      %v4308 = vpack.c.bf16 %v4270, %v4269
      %v4309 = vpack.c.bf16 %v4272, %v4271
      %v4310 = vpack.c.bf16 %v4274, %v4273
      %v4311 = vpack.c.bf16 %v4276, %v4275
      %v4312 = vpack.c.bf16 %v4278, %v4277
      %v4313 = vpack.c.bf16 %v4280, %v4279
      %v4314 = vpack.c.bf16 %v4282, %v4281
      %v4315 = vpack.c.bf16 %v4284, %v4283
      %v4316 = vpack.c.bf16 %v4286, %v4285
      %v4317 = vpack.c.bf16 %v4288, %v4287
      %v4318 = vpack.c.bf16 %v4290, %v4289
      %v4319 = vpack.c.bf16 %v4292, %v4291
      %v4320 = vpack.c.bf16 %v4294, %v4293
      %v4321 = vpack.c.bf16 %v4296, %v4295
      %v4322 = vpack.c.bf16 %v4298, %v4297
      %v4323 = vpack.c.bf16 %v4300, %v4299
      %v4324 = vpack.c.bf16 %v4302, %v4301
      %v4325 = vpack.c.bf16 %v4304, %v4303
      %v4326 = vpack.c.bf16 %v4306, %v4305
      %4327 = vst.msk [vmem:[#allocation2] sm:$0xff] %vm1250, %v4307
      %4328 = vst.msk [vmem:[#allocation2 + $0x8] sm:$0xff] %vm1250, %v4308
      %4329 = vst.msk [vmem:[#allocation2 + $0x10] sm:$0xff] %vm1250, %v4309
      %4330 = vst.msk [vmem:[#allocation2 + $0x18] sm:$0xff] %vm1250, %v4310
      %4331 = vst.msk [vmem:[#allocation2 + $0x20] sm:$0xff] %vm1250, %v4311
      %4332 = vst.msk [vmem:[#allocation2 + $0x28] sm:$0xff] %vm1250, %v4312
      %4333 = vst.msk [vmem:[#allocation2 + $0x30] sm:$0xff] %vm1250, %v4313
      %4334 = vst.msk [vmem:[#allocation2 + $0x38] sm:$0xff] %vm1250, %v4314
      %4335 = vst.msk [vmem:[#allocation2 + $0x40] sm:$0xff] %vm1250, %v4315
      %4336 = vst.msk [vmem:[#allocation2 + $0x48] sm:$0xff] %vm1250, %v4316
      %4337 = vst.msk [vmem:[#allocation2 + $0x50] sm:$0xff] %vm1250, %v4317
      %4338 = vst.msk [vmem:[#allocation2 + $0x58] sm:$0xff] %vm1250, %v4318
      %4339 = vst.msk [vmem:[#allocation2 + $0x60] sm:$0xff] %vm1250, %v4319
      %4340 = vst.msk [vmem:[#allocation2 + $0x68] sm:$0xff] %vm1250, %v4320
      %4341 = vst.msk [vmem:[#allocation2 + $0x70] sm:$0xff] %vm1250, %v4321
      %4342 = vst.msk [vmem:[#allocation2 + $0x78] sm:$0xff] %vm1250, %v4322
      %4343 = vst.msk [vmem:[#allocation2 + $0x80] sm:$0xff] %vm1250, %v4323
      %4344 = vst.msk [vmem:[#allocation2 + $0x88] sm:$0xff] %vm1250, %v4324
      %4345 = vst.msk [vmem:[#allocation2 + $0x90] sm:$0xff] %vm1250, %v4325
      %4346 = vst.msk [vmem:[#allocation2 + $0x98] sm:$0xff] %vm1250, %v4326
      %vm4347 = vcmask 57344
      %vm4348 = vsmask.f32 256
      %vm4349 = vmand %vm4347, %vm4348
      %v4350 = vld [vmem:[#allocation2] sm:$0x1]
      %v4351 = vsel %vm4349, 0, %v4350
      %4352 = vst [vmem:[#allocation2] sm:$0x1] %v4351
      %v4353 = vld [vmem:[#allocation2 + $0x10] sm:$0x1]
      %v4354 = vsel %vm4349, 0, %v4353
      %4355 = vst [vmem:[#allocation2 + $0x10] sm:$0x1] %v4354
      %v4356 = vld [vmem:[#allocation2 + $0x20] sm:$0x1]
      %v4357 = vsel %vm4349, 0, %v4356
      %4358 = vst [vmem:[#allocation2 + $0x20] sm:$0x1] %v4357
      %v4359 = vld [vmem:[#allocation2 + $0x30] sm:$0x1]
      %v4360 = vsel %vm4349, 0, %v4359
      %4361 = vst [vmem:[#allocation2 + $0x30] sm:$0x1] %v4360
      %v4362 = vld [vmem:[#allocation2 + $0x40] sm:$0x1]
      %v4363 = vsel %vm4349, 0, %v4362
      %4364 = vst [vmem:[#allocation2 + $0x40] sm:$0x1] %v4363
      %v4365 = vld [vmem:[#allocation2 + $0x50] sm:$0x1]
      %v4366 = vsel %vm4349, 0, %v4365
      %4367 = vst [vmem:[#allocation2 + $0x50] sm:$0x1] %v4366
      %v4368 = vld [vmem:[#allocation2 + $0x60] sm:$0x1]
      %v4369 = vsel %vm4349, 0, %v4368
      %4370 = vst [vmem:[#allocation2 + $0x60] sm:$0x1] %v4369
      %v4371 = vld [vmem:[#allocation2 + $0x70] sm:$0x1]
      %v4372 = vsel %vm4349, 0, %v4371
      %4373 = vst [vmem:[#allocation2 + $0x70] sm:$0x1] %v4372
      %v4374 = vld [vmem:[#allocation2 + $0x80] sm:$0x1]
      %v4375 = vsel %vm4349, 0, %v4374
      %4376 = vst [vmem:[#allocation2 + $0x80] sm:$0x1] %v4375
      %v4377 = vld [vmem:[#allocation2 + $0x90] sm:$0x1]
      %v4378 = vsel %vm4349, 0, %v4377
      %4379 = vst [vmem:[#allocation2 + $0x90] sm:$0x1] %v4378
      %vm4380 = vcmask 64512
      %vm4381 = vsmask.f32 7938
      %vm4382 = vmand %vm4380, %vm4381
      %v4383 = vld [vmem:[#allocation2 + $0x8] sm:$0xff]
      %v4384 = vsel %vm4382, 0, %v4383
      %4385 = vst [vmem:[#allocation2 + $0x8] sm:$0xff] %v4384
      %v4386 = vld [vmem:[#allocation2 + $0x18] sm:$0xff]
      %v4387 = vsel %vm4382, 0, %v4386
      %4388 = vst [vmem:[#allocation2 + $0x18] sm:$0xff] %v4387
      %v4389 = vld [vmem:[#allocation2 + $0x28] sm:$0xff]
      %v4390 = vsel %vm4382, 0, %v4389
      %4391 = vst [vmem:[#allocation2 + $0x28] sm:$0xff] %v4390
      %v4392 = vld [vmem:[#allocation2 + $0x38] sm:$0xff]
      %v4393 = vsel %vm4382, 0, %v4392
      %4394 = vst [vmem:[#allocation2 + $0x38] sm:$0xff] %v4393
      %v4395 = vld [vmem:[#allocation2 + $0x48] sm:$0xff]
      %v4396 = vsel %vm4382, 0, %v4395
      %4397 = vst [vmem:[#allocation2 + $0x48] sm:$0xff] %v4396
      %v4398 = vld [vmem:[#allocation2 + $0x58] sm:$0xff]
      %v4399 = vsel %vm4382, 0, %v4398
      %4400 = vst [vmem:[#allocation2 + $0x58] sm:$0xff] %v4399
      %v4401 = vld [vmem:[#allocation2 + $0x68] sm:$0xff]
      %v4402 = vsel %vm4382, 0, %v4401
      %4403 = vst [vmem:[#allocation2 + $0x68] sm:$0xff] %v4402
      %v4404 = vld [vmem:[#allocation2 + $0x78] sm:$0xff]
      %v4405 = vsel %vm4382, 0, %v4404
      %4406 = vst [vmem:[#allocation2 + $0x78] sm:$0xff] %v4405
      %v4407 = vld [vmem:[#allocation2 + $0x88] sm:$0xff]
      %v4408 = vsel %vm4382, 0, %v4407
      %4409 = vst [vmem:[#allocation2 + $0x88] sm:$0xff] %v4408
      %v4410 = vld [vmem:[#allocation2 + $0x98] sm:$0xff]
      %v4411 = vsel %vm4382, 0, %v4410
      %4412 = vst [vmem:[#allocation2 + $0x98] sm:$0xff] %v4411
      %p4413 = scmp.eq.s32.totalorder %s21, 0
      // Predicated region
      $region41: #{tpu_custom_call.1} parent=39 // pred_check
        %p4414 = pneg %p4413
      $region42: #{tpu_custom_call.1} parent=39 // pred_check_branch
        %4416 = sbr.rel (%p4414) target = $region44
      $region43: #{tpu_custom_call.1} parent=39 // pred_region
        %4417 = vst.msk [vmem:[#allocation2] sm:$0xff] %vm1250, 0
        %4418 = vst.msk [vmem:[#allocation2 + $0x8] sm:$0xff] %vm1250, 0
      $region44: #{tpu_custom_call.1} parent=39 // pred_fallthru
        _
      %p4419 = scmp.eq.s32.totalorder %s21, 1
      // Predicated region
      $region45: #{tpu_custom_call.1} parent=39 // pred_check
        %p4420 = pneg %p4419
      $region46: #{tpu_custom_call.1} parent=39 // pred_check_branch
        %4422 = sbr.rel (%p4420) target = $region48
      $region47: #{tpu_custom_call.1} parent=39 // pred_region
        %s4423 = scalar_lea.vmem [#allocation2], 144
        %4424 = vst.msk [vmem:[%s4423] sm:$0xff] %vm1250, 0
        %4425 = vst.msk [vmem:[%s4423 + $0x8] sm:$0xff] %vm1250, 0
      $region48: #{tpu_custom_call.1} parent=39 // pred_fallthru
        _
      %v4426 = vld [vmem:[#allocation2] sm:$0xff]
      %v4427 = vld [vmem:[#allocation2 + $0x8] sm:$0xff]
      %v4428 = vld [vmem:[#allocation2 + $0x10] sm:$0xff]
      %v4429 = vld [vmem:[#allocation2 + $0x18] sm:$0xff]
      %v4430 = vld [vmem:[#allocation2 + $0x20] sm:$0xff]
      %v4431 = vld [vmem:[#allocation2 + $0x28] sm:$0xff]
      %v4432 = vld [vmem:[#allocation2 + $0x30] sm:$0xff]
      %v4433 = vld [vmem:[#allocation2 + $0x38] sm:$0xff]
      %v4434 = vld [vmem:[#allocation2 + $0x40] sm:$0xff]
      %v4435 = vld [vmem:[#allocation2 + $0x48] sm:$0xff]
      %v4436 = vld [vmem:[#allocation2 + $0x50] sm:$0xff]
      %v4437 = vld [vmem:[#allocation2 + $0x58] sm:$0xff]
      %v4438 = vld [vmem:[#allocation2 + $0x60] sm:$0xff]
      %v4439 = vld [vmem:[#allocation2 + $0x68] sm:$0xff]
      %v4440 = vld [vmem:[#allocation2 + $0x70] sm:$0xff]
      %v4441 = vld [vmem:[#allocation2 + $0x78] sm:$0xff]
      %vm4442 = vsmask.f32 7424
      %v4444 = vshrl.u32 %v4426, 16
      %v4446 = vshll.u32 %v4426, 16
      %v4448 = vrot.slane %v4446, 1
      %v4449 = vor.u32 %v4444, %v4448
      %v4451 = vshll.u32 %v4427, 16
      %v4453 = vrot.slane %v4451, 1
      %v4454 = vsel %vm4442, %v4449, %v4453
      %v4456 = vshrl.u32 %v4428, 16
      %v4458 = vshll.u32 %v4428, 16
      %v4460 = vrot.slane %v4458, 1
      %v4461 = vor.u32 %v4456, %v4460
      %v4463 = vshll.u32 %v4429, 16
      %v4465 = vrot.slane %v4463, 1
      %v4466 = vsel %vm4442, %v4461, %v4465
      %v4468 = vshrl.u32 %v4430, 16
      %v4470 = vshll.u32 %v4430, 16
      %v4472 = vrot.slane %v4470, 1
      %v4473 = vor.u32 %v4468, %v4472
      %v4475 = vshll.u32 %v4431, 16
      %v4477 = vrot.slane %v4475, 1
      %v4478 = vsel %vm4442, %v4473, %v4477
      %v4480 = vshrl.u32 %v4432, 16
      %v4482 = vshll.u32 %v4432, 16
      %v4484 = vrot.slane %v4482, 1
      %v4485 = vor.u32 %v4480, %v4484
      %v4487 = vshll.u32 %v4433, 16
      %v4489 = vrot.slane %v4487, 1
      %v4490 = vsel %vm4442, %v4485, %v4489
      %v4492 = vshrl.u32 %v4434, 16
      %v4494 = vshll.u32 %v4434, 16
      %v4496 = vrot.slane %v4494, 1
      %v4497 = vor.u32 %v4492, %v4496
      %v4499 = vshll.u32 %v4435, 16
      %v4501 = vrot.slane %v4499, 1
      %v4502 = vsel %vm4442, %v4497, %v4501
      %v4504 = vshrl.u32 %v4436, 16
      %v4506 = vshll.u32 %v4436, 16
      %v4508 = vrot.slane %v4506, 1
      %v4509 = vor.u32 %v4504, %v4508
      %v4511 = vshll.u32 %v4437, 16
      %v4513 = vrot.slane %v4511, 1
      %v4514 = vsel %vm4442, %v4509, %v4513
      %v4516 = vshrl.u32 %v4438, 16
      %v4518 = vshll.u32 %v4438, 16
      %v4520 = vrot.slane %v4518, 1
      %v4521 = vor.u32 %v4516, %v4520
      %v4523 = vshll.u32 %v4439, 16
      %v4525 = vrot.slane %v4523, 1
      %v4526 = vsel %vm4442, %v4521, %v4525
      %v4528 = vshrl.u32 %v4440, 16
      %v4530 = vshll.u32 %v4440, 16
      %v4532 = vrot.slane %v4530, 1
      %v4533 = vor.u32 %v4528, %v4532
      %v4535 = vshll.u32 %v4441, 16
      %v4537 = vrot.slane %v4535, 1
      %v4538 = vsel %vm4442, %v4533, %v4537
      %vm4555 = vcmask 1046528
      %v4556 = vrot.slane %v4426, 1
      %v4557 = vrot.slane %v4427, 1
      %v4558 = vsel %vm4555, %v4556, %v4557
      %v4559 = vrot.slane %v4428, 1
      %v4560 = vrot.slane %v4429, 1
      %v4561 = vsel %vm4555, %v4559, %v4560
      %v4562 = vrot.slane %v4430, 1
      %v4563 = vrot.slane %v4431, 1
      %v4564 = vsel %vm4555, %v4562, %v4563
      %v4565 = vrot.slane %v4432, 1
      %v4566 = vrot.slane %v4433, 1
      %v4567 = vsel %vm4555, %v4565, %v4566
      %v4568 = vrot.slane %v4434, 1
      %v4569 = vrot.slane %v4435, 1
      %v4570 = vsel %vm4555, %v4568, %v4569
      %v4571 = vrot.slane %v4436, 1
      %v4572 = vrot.slane %v4437, 1
      %v4573 = vsel %vm4555, %v4571, %v4572
      %v4574 = vrot.slane %v4438, 1
      %v4575 = vrot.slane %v4439, 1
      %v4576 = vsel %vm4555, %v4574, %v4575
      %v4577 = vrot.slane %v4440, 1
      %v4578 = vrot.slane %v4441, 1
      %v4579 = vsel %vm4555, %v4577, %v4578
      %4580 = vrot.lane.b32.xlu0 %v4454, 8
      %v4581 = vpop.permute.xlu0 %4580
      %4582 = vrot.lane.b32.xlu0 %v4466, 8
      %v4583 = vpop.permute.xlu0 %4582
      %4584 = vrot.lane.b32.xlu0 %v4478, 8
      %v4585 = vpop.permute.xlu0 %4584
      %4586 = vrot.lane.b32.xlu0 %v4490, 8
      %v4587 = vpop.permute.xlu0 %4586
      %4588 = vrot.lane.b32.xlu0 %v4502, 8
      %v4589 = vpop.permute.xlu0 %4588
      %4590 = vrot.lane.b32.xlu0 %v4514, 8
      %v4591 = vpop.permute.xlu0 %4590
      %4592 = vrot.lane.b32.xlu0 %v4526, 8
      %v4593 = vpop.permute.xlu0 %4592
      %4594 = vrot.lane.b32.xlu0 %v4538, 8
      %v4595 = vpop.permute.xlu0 %4594
      %4596 = vrot.lane.b32.xlu0 %v4558, 16
      %v4597 = vpop.permute.xlu0 %4596
      %4598 = vrot.lane.b32.xlu0 %v4561, 16
      %v4599 = vpop.permute.xlu0 %4598
      %4600 = vrot.lane.b32.xlu0 %v4564, 16
      %v4601 = vpop.permute.xlu0 %4600
      %4602 = vrot.lane.b32.xlu0 %v4567, 16
      %v4603 = vpop.permute.xlu0 %4602
      %4604 = vrot.lane.b32.xlu0 %v4570, 16
      %v4605 = vpop.permute.xlu0 %4604
      %4606 = vrot.lane.b32.xlu0 %v4573, 16
      %v4607 = vpop.permute.xlu0 %4606
      %4608 = vrot.lane.b32.xlu0 %v4576, 16
      %v4609 = vpop.permute.xlu0 %4608
      %4610 = vrot.lane.b32.xlu0 %v4579, 16
      %v4611 = vpop.permute.xlu0 %4610
      %v4613 = vsel %vm1250, %v4426, %v4581
      %v4615 = vsel %vm1250, %v4428, %v4583
      %v4617 = vsel %vm1250, %v4430, %v4585
      %v4619 = vsel %vm1250, %v4432, %v4587
      %v4621 = vsel %vm1250, %v4434, %v4589
      %v4623 = vsel %vm1250, %v4436, %v4591
      %v4625 = vsel %vm1250, %v4438, %v4593
      %v4627 = vsel %vm1250, %v4440, %v4595
      %vm4628 = vcmask 130048
      %v4630 = vsel %vm4628, %v4613, %v4597
      %v4632 = vsel %vm4628, %v4615, %v4599
      %v4634 = vsel %vm4628, %v4617, %v4601
      %v4636 = vsel %vm4628, %v4619, %v4603
      %v4638 = vsel %vm4628, %v4621, %v4605
      %v4640 = vsel %vm4628, %v4623, %v4607
      %v4642 = vsel %vm4628, %v4625, %v4609
      %v4644 = vsel %vm4628, %v4627, %v4611
      %v4645 = vld [vmem:[%s2] sm:$0xf]
      %v4646 = vld [vmem:[%s2 + $0x4] sm:$0xf]
      %v4647 = vld [vmem:[%s2 + $0x8] sm:$0xf]
      %s4648 = scalar_lea.vmem [#allocation2], 16
      %v4649 = vld [vmem:[%s4648] sm:$0xff]
      %v4650 = vld [vmem:[%s4648 + $0x8] sm:$0xff]
      %v4651 = vld [vmem:[%s4648 + $0x10] sm:$0xff]
      %v4652 = vld [vmem:[%s4648 + $0x18] sm:$0xff]
      %v4653 = vld [vmem:[%s4648 + $0x20] sm:$0xff]
      %v4654 = vld [vmem:[%s4648 + $0x28] sm:$0xff]
      %v4655 = vld [vmem:[%s4648 + $0x30] sm:$0xff]
      %v4656 = vld [vmem:[%s4648 + $0x38] sm:$0xff]
      %v4657 = vld [vmem:[%s4648 + $0x40] sm:$0xff]
      %v4658 = vld [vmem:[%s4648 + $0x48] sm:$0xff]
      %v4659 = vld [vmem:[%s4648 + $0x50] sm:$0xff]
      %v4660 = vld [vmem:[%s4648 + $0x58] sm:$0xff]
      %v4661 = vld [vmem:[%s4648 + $0x60] sm:$0xff]
      %v4662 = vld [vmem:[%s4648 + $0x68] sm:$0xff]
      %v4663 = vld [vmem:[%s4648 + $0x70] sm:$0xff]
      %v4664 = vld [vmem:[%s4648 + $0x78] sm:$0xff]
      %v4666 = vshrl.u32 %v4649, 16
      %v4668 = vshll.u32 %v4649, 16
      %v4670 = vrot.slane %v4668, 1
      %v4671 = vor.u32 %v4666, %v4670
      %v4673 = vshll.u32 %v4650, 16
      %v4675 = vrot.slane %v4673, 1
      %v4676 = vsel %vm4442, %v4671, %v4675
      %v4678 = vshrl.u32 %v4651, 16
      %v4680 = vshll.u32 %v4651, 16
      %v4682 = vrot.slane %v4680, 1
      %v4683 = vor.u32 %v4678, %v4682
      %v4685 = vshll.u32 %v4652, 16
      %v4687 = vrot.slane %v4685, 1
      %v4688 = vsel %vm4442, %v4683, %v4687
      %v4690 = vshrl.u32 %v4653, 16
      %v4692 = vshll.u32 %v4653, 16
      %v4694 = vrot.slane %v4692, 1
      %v4695 = vor.u32 %v4690, %v4694
      %v4697 = vshll.u32 %v4654, 16
      %v4699 = vrot.slane %v4697, 1
      %v4700 = vsel %vm4442, %v4695, %v4699
      %v4702 = vshrl.u32 %v4655, 16
      %v4704 = vshll.u32 %v4655, 16
      %v4706 = vrot.slane %v4704, 1
      %v4707 = vor.u32 %v4702, %v4706
      %v4709 = vshll.u32 %v4656, 16
      %v4711 = vrot.slane %v4709, 1
      %v4712 = vsel %vm4442, %v4707, %v4711
      %v4714 = vshrl.u32 %v4657, 16
      %v4716 = vshll.u32 %v4657, 16
      %v4718 = vrot.slane %v4716, 1
      %v4719 = vor.u32 %v4714, %v4718
      %v4721 = vshll.u32 %v4658, 16
      %v4723 = vrot.slane %v4721, 1
      %v4724 = vsel %vm4442, %v4719, %v4723
      %v4726 = vshrl.u32 %v4659, 16
      %v4728 = vshll.u32 %v4659, 16
      %v4730 = vrot.slane %v4728, 1
      %v4731 = vor.u32 %v4726, %v4730
      %v4733 = vshll.u32 %v4660, 16
      %v4735 = vrot.slane %v4733, 1
      %v4736 = vsel %vm4442, %v4731, %v4735
      %v4738 = vshrl.u32 %v4661, 16
      %v4740 = vshll.u32 %v4661, 16
      %v4742 = vrot.slane %v4740, 1
      %v4743 = vor.u32 %v4738, %v4742
      %v4745 = vshll.u32 %v4662, 16
      %v4747 = vrot.slane %v4745, 1
      %v4748 = vsel %vm4442, %v4743, %v4747
      %v4750 = vshrl.u32 %v4663, 16
      %v4752 = vshll.u32 %v4663, 16
      %v4754 = vrot.slane %v4752, 1
      %v4755 = vor.u32 %v4750, %v4754
      %v4757 = vshll.u32 %v4664, 16
      %v4759 = vrot.slane %v4757, 1
      %v4760 = vsel %vm4442, %v4755, %v4759
      %v4777 = vrot.slane %v4649, 1
      %v4778 = vrot.slane %v4650, 1
      %v4779 = vsel %vm4555, %v4777, %v4778
      %v4780 = vrot.slane %v4651, 1
      %v4781 = vrot.slane %v4652, 1
      %v4782 = vsel %vm4555, %v4780, %v4781
      %v4783 = vrot.slane %v4653, 1
      %v4784 = vrot.slane %v4654, 1
      %v4785 = vsel %vm4555, %v4783, %v4784
      %v4786 = vrot.slane %v4655, 1
      %v4787 = vrot.slane %v4656, 1
      %v4788 = vsel %vm4555, %v4786, %v4787
      %v4789 = vrot.slane %v4657, 1
      %v4790 = vrot.slane %v4658, 1
      %v4791 = vsel %vm4555, %v4789, %v4790
      %v4792 = vrot.slane %v4659, 1
      %v4793 = vrot.slane %v4660, 1
      %v4794 = vsel %vm4555, %v4792, %v4793
      %v4795 = vrot.slane %v4661, 1
      %v4796 = vrot.slane %v4662, 1
      %v4797 = vsel %vm4555, %v4795, %v4796
      %v4798 = vrot.slane %v4663, 1
      %v4799 = vrot.slane %v4664, 1
      %v4800 = vsel %vm4555, %v4798, %v4799
      %4801 = vrot.lane.b32.xlu0 %v4676, 8
      %v4802 = vpop.permute.xlu0 %4801
      %4803 = vrot.lane.b32.xlu0 %v4688, 8
      %v4804 = vpop.permute.xlu0 %4803
      %4805 = vrot.lane.b32.xlu0 %v4700, 8
      %v4806 = vpop.permute.xlu0 %4805
      %4807 = vrot.lane.b32.xlu0 %v4712, 8
      %v4808 = vpop.permute.xlu0 %4807
      %4809 = vrot.lane.b32.xlu0 %v4724, 8
      %v4810 = vpop.permute.xlu0 %4809
      %4811 = vrot.lane.b32.xlu0 %v4736, 8
      %v4812 = vpop.permute.xlu0 %4811
      %4813 = vrot.lane.b32.xlu0 %v4748, 8
      %v4814 = vpop.permute.xlu0 %4813
      %4815 = vrot.lane.b32.xlu0 %v4760, 8
      %v4816 = vpop.permute.xlu0 %4815
      %4817 = vrot.lane.b32.xlu0 %v4779, 16
      %v4818 = vpop.permute.xlu0 %4817
      %4819 = vrot.lane.b32.xlu0 %v4782, 16
      %v4820 = vpop.permute.xlu0 %4819
      %4821 = vrot.lane.b32.xlu0 %v4785, 16
      %v4822 = vpop.permute.xlu0 %4821
      %4823 = vrot.lane.b32.xlu0 %v4788, 16
      %v4824 = vpop.permute.xlu0 %4823
      %4825 = vrot.lane.b32.xlu0 %v4791, 16
      %v4826 = vpop.permute.xlu0 %4825
      %4827 = vrot.lane.b32.xlu0 %v4794, 16
      %v4828 = vpop.permute.xlu0 %4827
      %4829 = vrot.lane.b32.xlu0 %v4797, 16
      %v4830 = vpop.permute.xlu0 %4829
      %4831 = vrot.lane.b32.xlu0 %v4800, 16
      %v4832 = vpop.permute.xlu0 %4831
      %v4834 = vsel %vm1250, %v4649, %v4802
      %v4836 = vsel %vm1250, %v4651, %v4804
      %v4838 = vsel %vm1250, %v4653, %v4806
      %v4840 = vsel %vm1250, %v4655, %v4808
      %v4842 = vsel %vm1250, %v4657, %v4810
      %v4844 = vsel %vm1250, %v4659, %v4812
      %v4846 = vsel %vm1250, %v4661, %v4814
      %v4848 = vsel %vm1250, %v4663, %v4816
      %v4850 = vsel %vm4628, %v4834, %v4818
      %v4852 = vsel %vm4628, %v4836, %v4820
      %v4854 = vsel %vm4628, %v4838, %v4822
      %v4856 = vsel %vm4628, %v4840, %v4824
      %v4858 = vsel %vm4628, %v4842, %v4826
      %v4860 = vsel %vm4628, %v4844, %v4828
      %v4862 = vsel %vm4628, %v4846, %v4830
      %v4864 = vsel %vm4628, %v4848, %v4832
      %s4865 = scalar_lea.vmem %s2, 12
      %v4866 = vld [vmem:[%s4865] sm:$0xf]
      %v4867 = vld [vmem:[%s4865 + $0x4] sm:$0xf]
      %v4868 = vld [vmem:[%s4865 + $0x8] sm:$0xf]
      %v4872 = vunpack.c.l.b16 %v4866
      %v4873 = vunpack.c.l.b16 %v4867
      %v4874 = vunpack.c.l.b16 %v4868
      %v4875 = vpack.c.b16 %v4873, %v4872
      %v4876 = vpack.c.b16 %v4874, %v4874
      %vm4878 = vcmask 195584
      %v4879 = vsel %vm4878, %v4850, 0
      %v4881 = vsel %vm4878, %v4852, 0
      %v4883 = vsel %vm4878, %v4854, 0
      %v4885 = vsel %vm4878, %v4856, 0
      %v4887 = vsel %vm4878, %v4858, 0
      %v4889 = vsel %vm4878, %v4860, 0
      %v4891 = vsel %vm4878, %v4862, 0
      %v4893 = vsel %vm4878, %v4864, 0
      %vm4895 = vcmask 1043456
      %v4897 = vsel %vm4895, %v4876, 0
      %4899 = vmatprep.subr.bf16.mxu0 0
      %4900 = vmatpush1.bf16.msra.mxu0 %v4875
      %4901 = vmatprep.subr.bf16.mxu0 0
      %4902 = vmatpush1.bf16.msra.mxu0 %v4897
      %4903 = vmatprep.subr.bf16.mxu0 0
      %4904 = vmatpush1.bf16.msra.mxu0 0
      %4905 = vmatprep.subr.bf16.mxu0 0
      %4906 = vmatpush1.bf16.msra.mxu0 0
      %4907 = vmatprep.subr.bf16.mxu0 0
      %4908 = vmatpush1.bf16.msra.mxu0 0
      %4909 = vmatprep.subr.bf16.mxu0 0
      %4910 = vmatpush1.bf16.msra.mxu0 0
      %4911 = vmatprep.subr.bf16.mxu0 0
      %4912 = vmatpush1.bf16.msra.mxu0 0
      %4913 = vmatprep.subr.bf16.mxu0 0
      %4914 = vmatpush1.bf16.msra.mxu0 0
      %4915 = vmatprep.subr.bf16.mxu0 0
      %4916 = vmatpush1.bf16.msra.mxu0 0
      %4917 = vmatprep.subr.bf16.mxu0 0
      %4918 = vmatpush1.bf16.msra.mxu0 0
      %4919 = vmatprep.subr.bf16.mxu0 0
      %4920 = vmatpush1.bf16.msra.mxu0 0
      %4921 = vmatprep.subr.bf16.mxu0 0
      %4922 = vmatpush1.bf16.msra.mxu0 0
      %4923 = vmatprep.subr.bf16.mxu0 0
      %4924 = vmatpush1.bf16.msra.mxu0 0
      %4925 = vmatprep.subr.bf16.mxu0 0
      %4926 = vmatpush1.bf16.msra.mxu0 0
      %4927 = vmatprep.subr.bf16.mxu0 0
      %4928 = vmatpush1.bf16.msra.mxu0 0
      %4929 = vmatprep.subr.bf16.mxu0 0
      %4930 = vmatpush1.bf16.msra.mxu0 0
      %4931 = vmatprep.mubr.bf16.mxu0 0
      %4932 = vmatmul.mubr.bf16.gmra.mrb[0].mxu0 %v4879
      %v4933 = vpop.f32.mrb[0].mxu0
      %v4934 = vadd.f32 0.0, %v4933
      %v4935 = vpop.f32.mrb[0].mxu0
      %v4936 = vpop.f32.mrb[0].mxu0
      %v4937 = vadd.f32 0.0, %v4936
      %v4938 = vpop.f32.mrb[0].mxu0
      %4939 = vmatprep.mubr.bf16.mxu0 0
      %4940 = vmatmul.mubr.bf16.gmra.mrb[0].mxu0 %v4881
      %v4941 = vpop.f32.mrb[0].mxu0
      %v4942 = vadd.f32 0.0, %v4941
      %v4943 = vpop.f32.mrb[0].mxu0
      %v4944 = vpop.f32.mrb[0].mxu0
      %v4945 = vadd.f32 0.0, %v4944
      %v4946 = vpop.f32.mrb[0].mxu0
      %4947 = vmatprep.mubr.bf16.mxu0 0
      %4948 = vmatmul.mubr.bf16.gmra.mrb[0].mxu0 %v4883
      %v4949 = vpop.f32.mrb[0].mxu0
      %v4950 = vadd.f32 0.0, %v4949
      %v4951 = vpop.f32.mrb[0].mxu0
      %v4952 = vpop.f32.mrb[0].mxu0
      %v4953 = vadd.f32 0.0, %v4952
      %v4954 = vpop.f32.mrb[0].mxu0
      %4955 = vmatprep.mubr.bf16.mxu0 0
      %4956 = vmatmul.mubr.bf16.gmra.mrb[0].mxu0 %v4885
      %v4957 = vpop.f32.mrb[0].mxu0
      %v4958 = vadd.f32 0.0, %v4957
      %v4959 = vpop.f32.mrb[0].mxu0
      %v4960 = vpop.f32.mrb[0].mxu0
      %v4961 = vadd.f32 0.0, %v4960
      %v4962 = vpop.f32.mrb[0].mxu0
      %4963 = vmatprep.mubr.bf16.mxu0 0
      %4964 = vmatmul.mubr.bf16.gmra.mrb[0].mxu0 %v4887
      %v4965 = vpop.f32.mrb[0].mxu0
      %v4966 = vadd.f32 0.0, %v4965
      %v4967 = vpop.f32.mrb[0].mxu0
      %v4968 = vpop.f32.mrb[0].mxu0
      %v4969 = vadd.f32 0.0, %v4968
      %v4970 = vpop.f32.mrb[0].mxu0
      %4971 = vmatprep.mubr.bf16.mxu0 0
      %4972 = vmatmul.mubr.bf16.gmra.mrb[0].mxu0 %v4889
      %v4973 = vpop.f32.mrb[0].mxu0
      %v4974 = vadd.f32 0.0, %v4973
      %v4975 = vpop.f32.mrb[0].mxu0
      %v4976 = vpop.f32.mrb[0].mxu0
      %v4977 = vadd.f32 0.0, %v4976
      %v4978 = vpop.f32.mrb[0].mxu0
      %4979 = vmatprep.mubr.bf16.mxu0 0
      %4980 = vmatmul.mubr.bf16.gmra.mrb[0].mxu0 %v4891
      %v4981 = vpop.f32.mrb[0].mxu0
      %v4982 = vadd.f32 0.0, %v4981
      %v4983 = vpop.f32.mrb[0].mxu0
      %v4984 = vpop.f32.mrb[0].mxu0
      %v4985 = vadd.f32 0.0, %v4984
      %v4986 = vpop.f32.mrb[0].mxu0
      %4987 = vmatprep.mubr.bf16.mxu0 0
      %4988 = vmatmul.mubr.bf16.gmra.mrb[0].mxu0 %v4893
      %v4989 = vpop.f32.mrb[0].mxu0
      %v4990 = vadd.f32 0.0, %v4989
      %v4991 = vpop.f32.mrb[0].mxu0
      %v4992 = vpop.f32.mrb[0].mxu0
      %v4993 = vadd.f32 0.0, %v4992
      %v4994 = vpop.f32.mrb[0].mxu0
      %4995 = vdwg.mxu0
      %v4999 = vunpack.c.l.b16 %v4645
      %v5000 = vunpack.c.l.b16 %v4646
      %v5001 = vunpack.c.l.b16 %v4647
      %v5002 = vpack.c.b16 %v5000, %v4999
      %v5003 = vpack.c.b16 %v5001, %v5001
      %v5005 = vsel %vm4878, %v4630, 0
      %v5007 = vsel %vm4878, %v4632, 0
      %v5009 = vsel %vm4878, %v4634, 0
      %v5011 = vsel %vm4878, %v4636, 0
      %v5013 = vsel %vm4878, %v4638, 0
      %v5015 = vsel %vm4878, %v4640, 0
      %v5017 = vsel %vm4878, %v4642, 0
      %v5019 = vsel %vm4878, %v4644, 0
      %v5022 = vsel %vm4895, %v5003, 0
      %5024 = vmatprep.subr.bf16.mxu0 0
      %5025 = vmatpush1.bf16.msra.mxu0 %v5002
      %5026 = vmatprep.subr.bf16.mxu0 0
      %5027 = vmatpush1.bf16.msra.mxu0 %v5022
      %5028 = vmatprep.subr.bf16.mxu0 0
      %5029 = vmatpush1.bf16.msra.mxu0 0
      %5030 = vmatprep.subr.bf16.mxu0 0
      %5031 = vmatpush1.bf16.msra.mxu0 0
      %5032 = vmatprep.subr.bf16.mxu0 0
      %5033 = vmatpush1.bf16.msra.mxu0 0
      %5034 = vmatprep.subr.bf16.mxu0 0
      %5035 = vmatpush1.bf16.msra.mxu0 0
      %5036 = vmatprep.subr.bf16.mxu0 0
      %5037 = vmatpush1.bf16.msra.mxu0 0
      %5038 = vmatprep.subr.bf16.mxu0 0
      %5039 = vmatpush1.bf16.msra.mxu0 0
      %5040 = vmatprep.subr.bf16.mxu0 0
      %5041 = vmatpush1.bf16.msra.mxu0 0
      %5042 = vmatprep.subr.bf16.mxu0 0
      %5043 = vmatpush1.bf16.msra.mxu0 0
      %5044 = vmatprep.subr.bf16.mxu0 0
      %5045 = vmatpush1.bf16.msra.mxu0 0
      %5046 = vmatprep.subr.bf16.mxu0 0
      %5047 = vmatpush1.bf16.msra.mxu0 0
      %5048 = vmatprep.subr.bf16.mxu0 0
      %5049 = vmatpush1.bf16.msra.mxu0 0
      %5050 = vmatprep.subr.bf16.mxu0 0
      %5051 = vmatpush1.bf16.msra.mxu0 0
      %5052 = vmatprep.subr.bf16.mxu0 0
      %5053 = vmatpush1.bf16.msra.mxu0 0
      %5054 = vmatprep.subr.bf16.mxu0 0
      %5055 = vmatpush1.bf16.msra.mxu0 0
      %5056 = vmatprep.mubr.bf16.mxu0 0
      %5057 = vmatmul.mubr.bf16.gmra.mrb[0].mxu0 %v5005
      %v5058 = vpop.f32.mrb[0].mxu0
      %v5059 = vadd.f32 %v4934, %v5058
      %v5060 = vpop.f32.mrb[0].mxu0
      %v5061 = vpop.f32.mrb[0].mxu0
      %v5062 = vadd.f32 %v4937, %v5061
      %v5063 = vpop.f32.mrb[0].mxu0
      %5064 = vmatprep.mubr.bf16.mxu0 0
      %5065 = vmatmul.mubr.bf16.gmra.mrb[0].mxu0 %v5007
      %v5066 = vpop.f32.mrb[0].mxu0
      %v5067 = vadd.f32 %v4942, %v5066
      %v5068 = vpop.f32.mrb[0].mxu0
      %v5069 = vpop.f32.mrb[0].mxu0
      %v5070 = vadd.f32 %v4945, %v5069
      %v5071 = vpop.f32.mrb[0].mxu0
      %5072 = vmatprep.mubr.bf16.mxu0 0
      %5073 = vmatmul.mubr.bf16.gmra.mrb[0].mxu0 %v5009
      %v5074 = vpop.f32.mrb[0].mxu0
      %v5075 = vadd.f32 %v4950, %v5074
      %v5076 = vpop.f32.mrb[0].mxu0
      %v5077 = vpop.f32.mrb[0].mxu0
      %v5078 = vadd.f32 %v4953, %v5077
      %v5079 = vpop.f32.mrb[0].mxu0
      %5080 = vmatprep.mubr.bf16.mxu0 0
      %5081 = vmatmul.mubr.bf16.gmra.mrb[0].mxu0 %v5011
      %v5082 = vpop.f32.mrb[0].mxu0
      %v5083 = vadd.f32 %v4958, %v5082
      %v5084 = vpop.f32.mrb[0].mxu0
      %v5085 = vpop.f32.mrb[0].mxu0
      %v5086 = vadd.f32 %v4961, %v5085
      %v5087 = vpop.f32.mrb[0].mxu0
      %5088 = vmatprep.mubr.bf16.mxu0 0
      %5089 = vmatmul.mubr.bf16.gmra.mrb[0].mxu0 %v5013
      %v5090 = vpop.f32.mrb[0].mxu0
      %v5091 = vadd.f32 %v4966, %v5090
      %v5092 = vpop.f32.mrb[0].mxu0
      %v5093 = vpop.f32.mrb[0].mxu0
      %v5094 = vadd.f32 %v4969, %v5093
      %v5095 = vpop.f32.mrb[0].mxu0
      %5096 = vmatprep.mubr.bf16.mxu0 0
      %5097 = vmatmul.mubr.bf16.gmra.mrb[0].mxu0 %v5015
      %v5098 = vpop.f32.mrb[0].mxu0
      %v5099 = vadd.f32 %v4974, %v5098
      %v5100 = vpop.f32.mrb[0].mxu0
      %v5101 = vpop.f32.mrb[0].mxu0
      %v5102 = vadd.f32 %v4977, %v5101
      %v5103 = vpop.f32.mrb[0].mxu0
      %5104 = vmatprep.mubr.bf16.mxu0 0
      %5105 = vmatmul.mubr.bf16.gmra.mrb[0].mxu0 %v5017
      %v5106 = vpop.f32.mrb[0].mxu0
      %v5107 = vadd.f32 %v4982, %v5106
      %v5108 = vpop.f32.mrb[0].mxu0
      %v5109 = vpop.f32.mrb[0].mxu0
      %v5110 = vadd.f32 %v4985, %v5109
      %v5111 = vpop.f32.mrb[0].mxu0
      %5112 = vmatprep.mubr.bf16.mxu0 0
      %5113 = vmatmul.mubr.bf16.gmra.mrb[0].mxu0 %v5019
      %v5114 = vpop.f32.mrb[0].mxu0
      %v5115 = vadd.f32 %v4990, %v5114
      %v5116 = vpop.f32.mrb[0].mxu0
      %v5117 = vpop.f32.mrb[0].mxu0
      %v5118 = vadd.f32 %v4993, %v5117
      %v5119 = vpop.f32.mrb[0].mxu0
      %5120 = vdwg.mxu0
      %s5121 = scalar_lea.vmem [#allocation2], 32
      %v5122 = vld [vmem:[%s5121] sm:$0xff]
      %v5123 = vld [vmem:[%s5121 + $0x8] sm:$0xff]
      %v5124 = vld [vmem:[%s5121 + $0x10] sm:$0xff]
      %v5125 = vld [vmem:[%s5121 + $0x18] sm:$0xff]
      %v5126 = vld [vmem:[%s5121 + $0x20] sm:$0xff]
      %v5127 = vld [vmem:[%s5121 + $0x28] sm:$0xff]
      %v5128 = vld [vmem:[%s5121 + $0x30] sm:$0xff]
      %v5129 = vld [vmem:[%s5121 + $0x38] sm:$0xff]
      %v5130 = vld [vmem:[%s5121 + $0x40] sm:$0xff]
      %v5131 = vld [vmem:[%s5121 + $0x48] sm:$0xff]
      %v5132 = vld [vmem:[%s5121 + $0x50] sm:$0xff]
      %v5133 = vld [vmem:[%s5121 + $0x58] sm:$0xff]
      %v5134 = vld [vmem:[%s5121 + $0x60] sm:$0xff]
      %v5135 = vld [vmem:[%s5121 + $0x68] sm:$0xff]
      %v5136 = vld [vmem:[%s5121 + $0x70] sm:$0xff]
      %v5137 = vld [vmem:[%s5121 + $0x78] sm:$0xff]
      %v5139 = vshrl.u32 %v5122, 16
      %v5141 = vshll.u32 %v5122, 16
      %v5143 = vrot.slane %v5141, 1
      %v5144 = vor.u32 %v5139, %v5143
      %v5146 = vshll.u32 %v5123, 16
      %v5148 = vrot.slane %v5146, 1
      %v5149 = vsel %vm4442, %v5144, %v5148
      %v5151 = vshrl.u32 %v5124, 16
      %v5153 = vshll.u32 %v5124, 16
      %v5155 = vrot.slane %v5153, 1
      %v5156 = vor.u32 %v5151, %v5155
      %v5158 = vshll.u32 %v5125, 16
      %v5160 = vrot.slane %v5158, 1
      %v5161 = vsel %vm4442, %v5156, %v5160
      %v5163 = vshrl.u32 %v5126, 16
      %v5165 = vshll.u32 %v5126, 16
      %v5167 = vrot.slane %v5165, 1
      %v5168 = vor.u32 %v5163, %v5167
      %v5170 = vshll.u32 %v5127, 16
      %v5172 = vrot.slane %v5170, 1
      %v5173 = vsel %vm4442, %v5168, %v5172
      %v5175 = vshrl.u32 %v5128, 16
      %v5177 = vshll.u32 %v5128, 16
      %v5179 = vrot.slane %v5177, 1
      %v5180 = vor.u32 %v5175, %v5179
      %v5182 = vshll.u32 %v5129, 16
      %v5184 = vrot.slane %v5182, 1
      %v5185 = vsel %vm4442, %v5180, %v5184
      %v5187 = vshrl.u32 %v5130, 16
      %v5189 = vshll.u32 %v5130, 16
      %v5191 = vrot.slane %v5189, 1
      %v5192 = vor.u32 %v5187, %v5191
      %v5194 = vshll.u32 %v5131, 16
      %v5196 = vrot.slane %v5194, 1
      %v5197 = vsel %vm4442, %v5192, %v5196
      %v5199 = vshrl.u32 %v5132, 16
      %v5201 = vshll.u32 %v5132, 16
      %v5203 = vrot.slane %v5201, 1
      %v5204 = vor.u32 %v5199, %v5203
      %v5206 = vshll.u32 %v5133, 16
      %v5208 = vrot.slane %v5206, 1
      %v5209 = vsel %vm4442, %v5204, %v5208
      %v5211 = vshrl.u32 %v5134, 16
      %v5213 = vshll.u32 %v5134, 16
      %v5215 = vrot.slane %v5213, 1
      %v5216 = vor.u32 %v5211, %v5215
      %v5218 = vshll.u32 %v5135, 16
      %v5220 = vrot.slane %v5218, 1
      %v5221 = vsel %vm4442, %v5216, %v5220
      %v5223 = vshrl.u32 %v5136, 16
      %v5225 = vshll.u32 %v5136, 16
      %v5227 = vrot.slane %v5225, 1
      %v5228 = vor.u32 %v5223, %v5227
      %v5230 = vshll.u32 %v5137, 16
      %v5232 = vrot.slane %v5230, 1
      %v5233 = vsel %vm4442, %v5228, %v5232
      %v5250 = vrot.slane %v5122, 1
      %v5251 = vrot.slane %v5123, 1
      %v5252 = vsel %vm4555, %v5250, %v5251
      %v5253 = vrot.slane %v5124, 1
      %v5254 = vrot.slane %v5125, 1
      %v5255 = vsel %vm4555, %v5253, %v5254
      %v5256 = vrot.slane %v5126, 1
      %v5257 = vrot.slane %v5127, 1
      %v5258 = vsel %vm4555, %v5256, %v5257
      %v5259 = vrot.slane %v5128, 1
      %v5260 = vrot.slane %v5129, 1
      %v5261 = vsel %vm4555, %v5259, %v5260
      %v5262 = vrot.slane %v5130, 1
      %v5263 = vrot.slane %v5131, 1
      %v5264 = vsel %vm4555, %v5262, %v5263
      %v5265 = vrot.slane %v5132, 1
      %v5266 = vrot.slane %v5133, 1
      %v5267 = vsel %vm4555, %v5265, %v5266
      %v5268 = vrot.slane %v5134, 1
      %v5269 = vrot.slane %v5135, 1
      %v5270 = vsel %vm4555, %v5268, %v5269
      %v5271 = vrot.slane %v5136, 1
      %v5272 = vrot.slane %v5137, 1
      %v5273 = vsel %vm4555, %v5271, %v5272
      %5274 = vrot.lane.b32.xlu0 %v5149, 8
      %v5275 = vpop.permute.xlu0 %5274
      %5276 = vrot.lane.b32.xlu0 %v5161, 8
      %v5277 = vpop.permute.xlu0 %5276
      %5278 = vrot.lane.b32.xlu0 %v5173, 8
      %v5279 = vpop.permute.xlu0 %5278
      %5280 = vrot.lane.b32.xlu0 %v5185, 8
      %v5281 = vpop.permute.xlu0 %5280
      %5282 = vrot.lane.b32.xlu0 %v5197, 8
      %v5283 = vpop.permute.xlu0 %5282
      %5284 = vrot.lane.b32.xlu0 %v5209, 8
      %v5285 = vpop.permute.xlu0 %5284
      %5286 = vrot.lane.b32.xlu0 %v5221, 8
      %v5287 = vpop.permute.xlu0 %5286
      %5288 = vrot.lane.b32.xlu0 %v5233, 8
      %v5289 = vpop.permute.xlu0 %5288
      %5290 = vrot.lane.b32.xlu0 %v5252, 16
      %v5291 = vpop.permute.xlu0 %5290
      %5292 = vrot.lane.b32.xlu0 %v5255, 16
      %v5293 = vpop.permute.xlu0 %5292
      %5294 = vrot.lane.b32.xlu0 %v5258, 16
      %v5295 = vpop.permute.xlu0 %5294
      %5296 = vrot.lane.b32.xlu0 %v5261, 16
      %v5297 = vpop.permute.xlu0 %5296
      %5298 = vrot.lane.b32.xlu0 %v5264, 16
      %v5299 = vpop.permute.xlu0 %5298
      %5300 = vrot.lane.b32.xlu0 %v5267, 16
      %v5301 = vpop.permute.xlu0 %5300
      %5302 = vrot.lane.b32.xlu0 %v5270, 16
      %v5303 = vpop.permute.xlu0 %5302
      %5304 = vrot.lane.b32.xlu0 %v5273, 16
      %v5305 = vpop.permute.xlu0 %5304
      %v5307 = vsel %vm1250, %v5122, %v5275
      %v5309 = vsel %vm1250, %v5124, %v5277
      %v5311 = vsel %vm1250, %v5126, %v5279
      %v5313 = vsel %vm1250, %v5128, %v5281
      %v5315 = vsel %vm1250, %v5130, %v5283
      %v5317 = vsel %vm1250, %v5132, %v5285
      %v5319 = vsel %vm1250, %v5134, %v5287
      %v5321 = vsel %vm1250, %v5136, %v5289
      %v5323 = vsel %vm4628, %v5307, %v5291
      %v5325 = vsel %vm4628, %v5309, %v5293
      %v5327 = vsel %vm4628, %v5311, %v5295
      %v5329 = vsel %vm4628, %v5313, %v5297
      %v5331 = vsel %vm4628, %v5315, %v5299
      %v5333 = vsel %vm4628, %v5317, %v5301
      %v5335 = vsel %vm4628, %v5319, %v5303
      %v5337 = vsel %vm4628, %v5321, %v5305
      %s5338 = scalar_lea.vmem %s2, 24
      %v5339 = vld [vmem:[%s5338] sm:$0xf]
      %v5340 = vld [vmem:[%s5338 + $0x4] sm:$0xf]
      %v5341 = vld [vmem:[%s5338 + $0x8] sm:$0xf]
      %v5345 = vunpack.c.l.b16 %v5339
      %v5346 = vunpack.c.l.b16 %v5340
      %v5347 = vunpack.c.l.b16 %v5341
      %v5348 = vpack.c.b16 %v5346, %v5345
      %v5349 = vpack.c.b16 %v5347, %v5347
      %v5351 = vsel %vm4878, %v5323, 0
      %v5353 = vsel %vm4878, %v5325, 0
      %v5355 = vsel %vm4878, %v5327, 0
      %v5357 = vsel %vm4878, %v5329, 0
      %v5359 = vsel %vm4878, %v5331, 0
      %v5361 = vsel %vm4878, %v5333, 0
      %v5363 = vsel %vm4878, %v5335, 0
      %v5365 = vsel %vm4878, %v5337, 0
      %v5368 = vsel %vm4895, %v5349, 0
      %5370 = vmatprep.subr.bf16.mxu0 0
      %5371 = vmatpush1.bf16.msra.mxu0 %v5348
      %5372 = vmatprep.subr.bf16.mxu0 0
      %5373 = vmatpush1.bf16.msra.mxu0 %v5368
      %5374 = vmatprep.subr.bf16.mxu0 0
      %5375 = vmatpush1.bf16.msra.mxu0 0
      %5376 = vmatprep.subr.bf16.mxu0 0
      %5377 = vmatpush1.bf16.msra.mxu0 0
      %5378 = vmatprep.subr.bf16.mxu0 0
      %5379 = vmatpush1.bf16.msra.mxu0 0
      %5380 = vmatprep.subr.bf16.mxu0 0
      %5381 = vmatpush1.bf16.msra.mxu0 0
      %5382 = vmatprep.subr.bf16.mxu0 0
      %5383 = vmatpush1.bf16.msra.mxu0 0
      %5384 = vmatprep.subr.bf16.mxu0 0
      %5385 = vmatpush1.bf16.msra.mxu0 0
      %5386 = vmatprep.subr.bf16.mxu0 0
      %5387 = vmatpush1.bf16.msra.mxu0 0
      %5388 = vmatprep.subr.bf16.mxu0 0
      %5389 = vmatpush1.bf16.msra.mxu0 0
      %5390 = vmatprep.subr.bf16.mxu0 0
      %5391 = vmatpush1.bf16.msra.mxu0 0
      %5392 = vmatprep.subr.bf16.mxu0 0
      %5393 = vmatpush1.bf16.msra.mxu0 0
      %5394 = vmatprep.subr.bf16.mxu0 0
      %5395 = vmatpush1.bf16.msra.mxu0 0
      %5396 = vmatprep.subr.bf16.mxu0 0
      %5397 = vmatpush1.bf16.msra.mxu0 0
      %5398 = vmatprep.subr.bf16.mxu0 0
      %5399 = vmatpush1.bf16.msra.mxu0 0
      %5400 = vmatprep.subr.bf16.mxu0 0
      %5401 = vmatpush1.bf16.msra.mxu0 0
      %5402 = vmatprep.mubr.bf16.mxu0 0
      %5403 = vmatmul.mubr.bf16.gmra.mrb[0].mxu0 %v5351
      %v5404 = vpop.f32.mrb[0].mxu0
      %v5405 = vadd.f32 0.0, %v5404
      %v5406 = vpop.f32.mrb[0].mxu0
      %v5407 = vpop.f32.mrb[0].mxu0
      %v5408 = vadd.f32 0.0, %v5407
      %v5409 = vpop.f32.mrb[0].mxu0
      %5410 = vmatprep.mubr.bf16.mxu0 0
      %5411 = vmatmul.mubr.bf16.gmra.mrb[0].mxu0 %v5353
      %v5412 = vpop.f32.mrb[0].mxu0
      %v5413 = vadd.f32 0.0, %v5412
      %v5414 = vpop.f32.mrb[0].mxu0
      %v5415 = vpop.f32.mrb[0].mxu0
      %v5416 = vadd.f32 0.0, %v5415
      %v5417 = vpop.f32.mrb[0].mxu0
      %5418 = vmatprep.mubr.bf16.mxu0 0
      %5419 = vmatmul.mubr.bf16.gmra.mrb[0].mxu0 %v5355
      %v5420 = vpop.f32.mrb[0].mxu0
      %v5421 = vadd.f32 0.0, %v5420
      %v5422 = vpop.f32.mrb[0].mxu0
      %v5423 = vpop.f32.mrb[0].mxu0
      %v5424 = vadd.f32 0.0, %v5423
      %v5425 = vpop.f32.mrb[0].mxu0
      %5426 = vmatprep.mubr.bf16.mxu0 0
      %5427 = vmatmul.mubr.bf16.gmra.mrb[0].mxu0 %v5357
      %v5428 = vpop.f32.mrb[0].mxu0
      %v5429 = vadd.f32 0.0, %v5428
      %v5430 = vpop.f32.mrb[0].mxu0
      %v5431 = vpop.f32.mrb[0].mxu0
      %v5432 = vadd.f32 0.0, %v5431
      %v5433 = vpop.f32.mrb[0].mxu0
      %5434 = vmatprep.mubr.bf16.mxu0 0
      %5435 = vmatmul.mubr.bf16.gmra.mrb[0].mxu0 %v5359
      %v5436 = vpop.f32.mrb[0].mxu0
      %v5437 = vadd.f32 0.0, %v5436
      %v5438 = vpop.f32.mrb[0].mxu0
      %v5439 = vpop.f32.mrb[0].mxu0
      %v5440 = vadd.f32 0.0, %v5439
      %v5441 = vpop.f32.mrb[0].mxu0
      %5442 = vmatprep.mubr.bf16.mxu0 0
      %5443 = vmatmul.mubr.bf16.gmra.mrb[0].mxu0 %v5361
      %v5444 = vpop.f32.mrb[0].mxu0
      %v5445 = vadd.f32 0.0, %v5444
      %v5446 = vpop.f32.mrb[0].mxu0
      %v5447 = vpop.f32.mrb[0].mxu0
      %v5448 = vadd.f32 0.0, %v5447
      %v5449 = vpop.f32.mrb[0].mxu0
      %5450 = vmatprep.mubr.bf16.mxu0 0
      %5451 = vmatmul.mubr.bf16.gmra.mrb[0].mxu0 %v5363
      %v5452 = vpop.f32.mrb[0].mxu0
      %v5453 = vadd.f32 0.0, %v5452
      %v5454 = vpop.f32.mrb[0].mxu0
      %v5455 = vpop.f32.mrb[0].mxu0
      %v5456 = vadd.f32 0.0, %v5455
      %v5457 = vpop.f32.mrb[0].mxu0
      %5458 = vmatprep.mubr.bf16.mxu0 0
      %5459 = vmatmul.mubr.bf16.gmra.mrb[0].mxu0 %v5365
      %v5460 = vpop.f32.mrb[0].mxu0
      %v5461 = vadd.f32 0.0, %v5460
      %v5462 = vpop.f32.mrb[0].mxu0
      %v5463 = vpop.f32.mrb[0].mxu0
      %v5464 = vadd.f32 0.0, %v5463
      %v5465 = vpop.f32.mrb[0].mxu0
      %5466 = vdwg.mxu0
      %v5467 = vadd.f32 %v5059, %v5405
      %v5468 = vadd.f32 %v5062, %v5408
      %v5469 = vadd.f32 %v5067, %v5413
      %v5470 = vadd.f32 %v5070, %v5416
      %v5471 = vadd.f32 %v5075, %v5421
      %v5472 = vadd.f32 %v5078, %v5424
      %v5473 = vadd.f32 %v5083, %v5429
      %v5474 = vadd.f32 %v5086, %v5432
      %v5475 = vadd.f32 %v5091, %v5437
      %v5476 = vadd.f32 %v5094, %v5440
      %v5477 = vadd.f32 %v5099, %v5445
      %v5478 = vadd.f32 %v5102, %v5448
      %v5479 = vadd.f32 %v5107, %v5453
      %v5480 = vadd.f32 %v5110, %v5456
      %v5481 = vadd.f32 %v5115, %v5461
      %v5482 = vadd.f32 %v5118, %v5464
      %v5483 = vld [vmem:[%s4] sm:$0x1]
      %v5484 = vlaneseq
      %v5485 = vshrl.u32 %v5484, 7
      %v5486 = vsub.s32 0, %v5485
      %v5487 = vrot.slane %v5483, %v5486
      %v5488 = vadd.f32 %v5467, %v5487
      %v5489 = vadd.f32 %v5468, %v5487
      %v5490 = vadd.f32 %v5469, %v5487
      %v5491 = vadd.f32 %v5470, %v5487
      %v5492 = vadd.f32 %v5471, %v5487
      %v5493 = vadd.f32 %v5472, %v5487
      %v5494 = vadd.f32 %v5473, %v5487
      %v5495 = vadd.f32 %v5474, %v5487
      %v5496 = vadd.f32 %v5475, %v5487
      %v5497 = vadd.f32 %v5476, %v5487
      %v5498 = vadd.f32 %v5477, %v5487
      %v5499 = vadd.f32 %v5478, %v5487
      %v5500 = vadd.f32 %v5479, %v5487
      %v5501 = vadd.f32 %v5480, %v5487
      %v5502 = vadd.f32 %v5481, %v5487
      %v5503 = vadd.f32 %v5482, %v5487
      %v5504 = vmax.f32 %v5488, 0.0
      %v5505 = vmax.f32 %v5489, 0.0
      %v5506 = vmax.f32 %v5490, 0.0
      %v5507 = vmax.f32 %v5491, 0.0
      %v5508 = vmax.f32 %v5492, 0.0
      %v5509 = vmax.f32 %v5493, 0.0
      %v5510 = vmax.f32 %v5494, 0.0
      %v5511 = vmax.f32 %v5495, 0.0
      %v5512 = vmax.f32 %v5496, 0.0
      %v5513 = vmax.f32 %v5497, 0.0
      %v5514 = vmax.f32 %v5498, 0.0
      %v5515 = vmax.f32 %v5499, 0.0
      %v5516 = vmax.f32 %v5500, 0.0
      %v5517 = vmax.f32 %v5501, 0.0
      %v5518 = vmax.f32 %v5502, 0.0
      %v5519 = vmax.f32 %v5503, 0.0
      %v5520 = vld [vmem:[%s4 + $0x1] sm:$0x1]
      %v5521 = vlaneseq
      %v5522 = vshrl.u32 %v5521, 7
      %v5523 = vsub.s32 0, %v5522
      %v5524 = vrot.slane %v5520, %v5523
      %v5525 = vmul.f32 %v5504, %v5524
      %v5526 = vmul.f32 %v5505, %v5524
      %v5527 = vmul.f32 %v5506, %v5524
      %v5528 = vmul.f32 %v5507, %v5524
      %v5529 = vmul.f32 %v5508, %v5524
      %v5530 = vmul.f32 %v5509, %v5524
      %v5531 = vmul.f32 %v5510, %v5524
      %v5532 = vmul.f32 %v5511, %v5524
      %v5533 = vmul.f32 %v5512, %v5524
      %v5534 = vmul.f32 %v5513, %v5524
      %v5535 = vmul.f32 %v5514, %v5524
      %v5536 = vmul.f32 %v5515, %v5524
      %v5537 = vmul.f32 %v5516, %v5524
      %v5538 = vmul.f32 %v5517, %v5524
      %v5539 = vmul.f32 %v5518, %v5524
      %v5540 = vmul.f32 %v5519, %v5524
      %v5541 = vld [vmem:[%s4 + $0x2] sm:$0x1]
      %v5542 = vlaneseq
      %v5543 = vshrl.u32 %v5542, 7
      %v5544 = vsub.s32 0, %v5543
      %v5545 = vrot.slane %v5541, %v5544
      %v5546 = vadd.f32 %v5525, %v5545
      %v5547 = vadd.f32 %v5526, %v5545
      %v5548 = vadd.f32 %v5527, %v5545
      %v5549 = vadd.f32 %v5528, %v5545
      %v5550 = vadd.f32 %v5529, %v5545
      %v5551 = vadd.f32 %v5530, %v5545
      %v5552 = vadd.f32 %v5531, %v5545
      %v5553 = vadd.f32 %v5532, %v5545
      %v5554 = vadd.f32 %v5533, %v5545
      %v5555 = vadd.f32 %v5534, %v5545
      %v5556 = vadd.f32 %v5535, %v5545
      %v5557 = vadd.f32 %v5536, %v5545
      %v5558 = vadd.f32 %v5537, %v5545
      %v5559 = vadd.f32 %v5538, %v5545
      %v5560 = vadd.f32 %v5539, %v5545
      %v5561 = vadd.f32 %v5540, %v5545
      %5562 = vst.msk [vmem:[%s246] sm:$0xff] %vm1250, %v5546
      %5563 = vst.msk [vmem:[%s246 + $0x8] sm:$0xff] %vm1250, %v5547
      %5564 = vst.msk [vmem:[%s246 + $0x10] sm:$0xff] %vm1250, %v5548
      %5565 = vst.msk [vmem:[%s246 + $0x18] sm:$0xff] %vm1250, %v5549
      %5566 = vst.msk [vmem:[%s246 + $0x20] sm:$0xff] %vm1250, %v5550
      %5567 = vst.msk [vmem:[%s246 + $0x28] sm:$0xff] %vm1250, %v5551
      %5568 = vst.msk [vmem:[%s246 + $0x30] sm:$0xff] %vm1250, %v5552
      %5569 = vst.msk [vmem:[%s246 + $0x38] sm:$0xff] %vm1250, %v5553
      %5570 = vst.msk [vmem:[%s246 + $0x40] sm:$0xff] %vm1250, %v5554
      %5571 = vst.msk [vmem:[%s246 + $0x48] sm:$0xff] %vm1250, %v5555
      %5572 = vst.msk [vmem:[%s246 + $0x50] sm:$0xff] %vm1250, %v5556
      %5573 = vst.msk [vmem:[%s246 + $0x58] sm:$0xff] %vm1250, %v5557
      %5574 = vst.msk [vmem:[%s246 + $0x60] sm:$0xff] %vm1250, %v5558
      %5575 = vst.msk [vmem:[%s246 + $0x68] sm:$0xff] %vm1250, %v5559
      %5576 = vst.msk [vmem:[%s246 + $0x70] sm:$0xff] %vm1250, %v5560
      %5577 = vst.msk [vmem:[%s246 + $0x78] sm:$0xff] %vm1250, %v5561
      %s5578 = smul.u32 16, %s21
      %p5579 = scmp.lt.s32.totalorder %s20, 1
      %s5580 = scalar_select %p5579, %s20, 1
      %p5581 = scmp.lt.s32.totalorder %s5578, 31
      %s5582 = scalar_select %p5581, %s5578, 31
      %s5583 = smul.addr %s5580, 32
      %s5584 = sadd.s32 %s5582, %s5583
      %s5585 = smul.addr %s5584, 8
      %s5586 = scalar_lea.vmem %s5, %s5585
      // Predicated region
      $region49: #{tpu_custom_call.1} parent=39 // pred_check
        %p5587 = pneg %p158
      $region50: #{tpu_custom_call.1} parent=39 // pred_check_branch
        %5589 = sbr.rel (%p5587) target = $region52
      $region51: #{tpu_custom_call.1} parent=39 // pred_region
        %s5590 = smul.u32 16, %s21
      $region52: #{tpu_custom_call.1} parent=39 // pred_fallthru
        _
    $region40: #{tpu_custom_call.1} parent=5 // pred_fallthru
      _
    %p5591 = scmp.le.s32.totalorder 2, %s11
    // Predicated region
    $region53: #{tpu_custom_call.1} parent=5 // pred_check
      %p5592 = pneg %p5591
    $region54: #{tpu_custom_call.1} parent=5 // pred_check_branch
      %5594 = sbr.rel (%p5592) target = $region56
    $region55: #{tpu_custom_call.1} parent=5 // pred_region
      %s5595 = ssub.s32 %s11, 2
      // Predicated region
      $region57: #{tpu_custom_call.1} parent=55 // pred_check
        %p5596 = pneg %p164
      $region58: #{tpu_custom_call.1} parent=55 // pred_check_branch
        %5598 = sbr.rel (%p5596) target = $region60
      $region59: #{tpu_custom_call.1} parent=55 // pred_region
        %s5599 = smul.u32 16, %s23
        %p5600 = scmp.lt.s32.totalorder %s22, 1
        %s5601 = scalar_select %p5600, %s22, 1
        %p5602 = scmp.lt.s32.totalorder %s5599, 31
        %s5603 = scalar_select %p5602, %s5599, 31
        %s5604 = smul.addr %s5601, 32
        %s5605 = sadd.s32 %s5603, %s5604
        %s5606 = smul.addr %s5605, 8
        %s5607 = scalar_lea.vmem %s5, %s5606
      $region60: #{tpu_custom_call.1} parent=55 // pred_fallthru
        _
    $region56: #{tpu_custom_call.1} parent=5 // pred_fallthru
      _
  $region6: #{tpu_custom_call.1} parent=0 // loop_footer
    %s15 = sadd.s32 1, %s11
  $region7: #{tpu_custom_call.1} parent=0 // loop_footer_branch
    %10 = sbr.rel target = $region3
  $region8: #{tpu_custom_call.1} parent=0 // loop_exit
    _

</llo_original>
